<compile_context>
chip_gen: v6e
topology: v6e:2x2x1
jax: 0.10.0
libtpu: 0.0.40
codegen_flags: <defaults>
</compile_context>

<pallas_src>
import functools

import jax
import jax.numpy as jnp
from jax.experimental import pallas as pl
from jax.experimental.pallas import tpu as pltpu


# ---------------------------------------------------------------------------
# Fused kernel: one image per grid step, everything resident in VMEM.
# ---------------------------------------------------------------------------
def _bottleneck_kernel(x_ref,
                       w1_ref, b1_ref, w2_ref, b2_ref, w3_ref, b3_ref,
                       w4_ref, b4_ref, w5_ref, b5_ref, w6_ref, b6_ref,
                       o_ref,
                       pad_ref,
                       *, H, W, C, Cm):
    """x_ref: (1, H*W, C).  1x1 weights: (Cin, Cout) bf16 (BN folded).
    3x3 weights: (9, Cm, Cm) bf16 per-tap (BN folded).  biases: (1, Cout) f32.
    pad_ref: VMEM (H+2, W+2, Cm) bf16 halo-padded 3x3-conv input scratch.
    """
    HW = H * W
    f32 = jnp.float32
    bf16 = jnp.bfloat16

    # Zero ONLY the 1-px halo border of the pad scratch (the interior is fully
    # overwritten by every conv3x3 call, so the border is the only part that
    # must be zero).  Done every grid step on purpose: with a "parallel" grid
    # axis each TensorCore has its own scratch and only one of them would ever
    # see program_id == 0, so a pl.when(program_id==0) gate would leave the
    # other core's border uninitialized.
    pad_ref[0:1, :, :] = jnp.zeros((1, W + 2, Cm), bf16)
    pad_ref[H + 1:H + 2, :, :] = jnp.zeros((1, W + 2, Cm), bf16)
    pad_ref[:, 0:1, :] = jnp.zeros((H + 2, 1, Cm), bf16)
    pad_ref[:, W + 1:W + 2, :] = jnp.zeros((H + 2, 1, Cm), bf16)

    x = x_ref[...][0].astype(f32)                       # (HW, C) f32 residual

    def mm(a_bf16, w_bf16):                             # bf16 MXU, f32 accum
        return jnp.dot(a_bf16, w_bf16, preferred_element_type=f32)

    def conv1x1(a_f32, w, b):                           # (rows,Cin)@(Cin,Cout)+bias
        return mm(a_f32.astype(bf16), w) + b

    def conv3x3(t_f32, w_taps_ref, b):
        # One bf16 store of the activation into the halo-padded scratch
        # (border stays zero: interior writes start at offset 1 and never
        # touch row/col 0 or H+1/W+1 -- keep it that way if tiling changes).
        pad_ref[1:H + 1, 1:W + 1, :] = t_f32.reshape(H, W, Cm).astype(bf16)
        # Nine per-tap MXU matmuls on shifted windows of pad_ref, accumulated
        # through a single f32 expression (no VMEM accumulator passes).
        acc = b
        for kh in range(3):
            for kw in range(3):
                tap = kh * 3 + kw
                win = pad_ref[kh:kh + H, kw:kw + W, :].reshape(HW, Cm)
                acc = acc + mm(win, w_taps_ref[tap])
        return acc

    def res_block(inp, wA_ref, bA_ref, wB_ref, bB_ref, wC_ref, bC_ref):
        t = jnp.maximum(conv1x1(inp, wA_ref[...], bA_ref[...]), 0.0)
        t = jnp.maximum(conv3x3(t, wB_ref, bB_ref[...]), 0.0)
        t = conv1x1(t, wC_ref[...], bC_ref[...]) + inp   # + residual (f32)
        return jnp.maximum(t, 0.0)

    y = res_block(x, w1_ref, b1_ref, w2_ref, b2_ref, w3_ref, b3_ref)
    y = res_block(y, w4_ref, b4_ref, w5_ref, b5_ref, w6_ref, b6_ref)
    o_ref[...] = y.reshape(1, HW, C).astype(o_ref.dtype)


# ---------------------------------------------------------------------------
# BN folding into conv weights (inference mode)
# ---------------------------------------------------------------------------
def _fold_params(params, eps):
    def fold1x1(w_oihw, bn):
        gamma, beta, mean, var = bn
        s = gamma / jnp.sqrt(var + eps)
        w = (w_oihw[:, :, 0, 0] * s[:, None]).T                # (Cin, Cout)
        bias = (beta - mean * s).reshape(1, -1)
        return w.astype(jnp.bfloat16), bias.astype(jnp.float32)

    def fold3x3(w_oihw, bn):
        gamma, beta, mean, var = bn
        s = gamma / jnp.sqrt(var + eps)
        w = w_oihw * s[:, None, None, None]                    # (Cout,Cin,3,3)
        cout, cin = w.shape[0], w.shape[1]
        w = jnp.transpose(w, (2, 3, 1, 0)).reshape(9, cin, cout)  # per-tap
        bias = (beta - mean * s).reshape(1, -1)
        return w.astype(jnp.bfloat16), bias.astype(jnp.float32)

    w1, b1 = fold1x1(params["w1"], params["bn1"])
    w2, b2 = fold3x3(params["w2"], params["bn2"])
    w3, b3 = fold1x1(params["w3"], params["bn3"])
    w4, b4 = fold1x1(params["w4"], params["bn4"])
    w5, b5 = fold3x3(params["w5"], params["bn5"])
    w6, b6 = fold1x1(params["w6"], params["bn6"])
    return (w1, b1, w2, b2, w3, b3, w4, b4, w5, b5, w6, b6)


# ---------------------------------------------------------------------------
# NHWC entry point (no layout transposes; preserves input dtype)
# ---------------------------------------------------------------------------
def bottleneck_conv_forward_nhwc(x_nhwc, params, eps=1e-5):
    N, H, W, C = x_nhwc.shape
    Cm = params["w1"].shape[0]                 # torch layout (Cout, Cin, kh, kw)

    consts = _fold_params(params, eps)
    x = x_nhwc.reshape(N, H * W, C)            # (N, HW, C) lane-dense slab

    flops = 4 * N * H * W * (2 * C * Cm + 9 * Cm * Cm)
    bytes_accessed = (2 * N * H * W * C * x.dtype.itemsize
                      + sum(int(a.size) * a.dtype.itemsize for a in consts))

    kern = functools.partial(_bottleneck_kernel, H=H, W=W, C=C, Cm=Cm)
    out = pl.pallas_call(
        kern,
        out_shape=jax.ShapeDtypeStruct((N, H * W, C), x.dtype),
        grid=(N,),
        in_specs=[pl.BlockSpec((1, H * W, C), lambda n: (n, 0, 0))]
                 + [pl.BlockSpec(a.shape, lambda n, nd=a.ndim: (0,) * nd)
                    for a in consts],
        out_specs=pl.BlockSpec((1, H * W, C), lambda n: (n, 0, 0)),
        scratch_shapes=[
            pltpu.VMEM((H + 2, W + 2, Cm), jnp.bfloat16),  # halo-padded 3x3 input
        ],
        compiler_params=pltpu.CompilerParams(
            dimension_semantics=("parallel",),
            vmem_limit_bytes=32 * 1024 * 1024),
        cost_estimate=pl.CostEstimate(flops=flops, transcendentals=0,
                                      bytes_accessed=bytes_accessed),
    )(x, *consts)

    return out.reshape(N, H, W, C)


# Thin NCHW shim only for drop-in parity with the PyTorch module interface.
# Production callers should stay NHWC end-to-end: these transposes are full
# extra HBM round trips of x / out on an HBM-bound kernel.
def bottleneck_conv_forward(x_nchw, params, eps=1e-5):
    x_nhwc = jnp.transpose(x_nchw, (0, 2, 3, 1))
    out = bottleneck_conv_forward_nhwc(x_nhwc, params, eps)
    return jnp.transpose(out, (0, 3, 1, 2))


# ---------------------------------------------------------------------------
# Reference (plain JAX, f32, NHWC) for sanity checking
# ---------------------------------------------------------------------------
def _reference_forward_nhwc(x_nhwc, params, eps=1e-5):
    def conv(inp, w_oihw, pad):
        w = jnp.transpose(w_oihw, (2, 3, 1, 0))            # HWIO
        dn = jax.lax.conv_dimension_numbers(inp.shape, w.shape,
                                            ("NHWC", "HWIO", "NHWC"))
        return jax.lax.conv_general_dilated(
            inp, w, (1, 1), ((pad, pad), (pad, pad)), dimension_numbers=dn)

    def bn(inp, p):
        gamma, beta, mean, var = p
        s = gamma / jnp.sqrt(var + eps)
        return inp * s + (beta - mean * s)

    def block(inp, wA, bnA, wB, bnB, wC_, bnC_):
        t = jnp.maximum(bn(conv(inp, wA, 0), bnA), 0.0)
        t = jnp.maximum(bn(conv(t, wB, 1), bnB), 0.0)
        t = bn(conv(t, wC_, 0), bnC_) + inp
        return jnp.maximum(t, 0.0)

    out = block(x_nhwc, params["w1"], params["bn1"], params["w2"],
                params["bn2"], params["w3"], params["bn3"])
    out = block(out, params["w4"], params["bn4"], params["w5"],
                params["bn5"], params["w6"], params["bn6"])
    return out


# ---------------------------------------------------------------------------
# Main
# ---------------------------------------------------------------------------
if __name__ == "__main__":
    key = jax.random.PRNGKey(0)
    keys = iter(jax.random.split(key, 13))

    # Small shapes consistent with the module: in_out_planes=32 -> mid=8.
    N, C, H, W = 2, 32, 16, 16
    Cm = C // 4

    x_nchw = jax.random.normal(next(keys), (N, C, H, W), jnp.float32)

    def conv_w(k, cout, cin, ksz):
        fan_in = cin * ksz * ksz
        return jax.random.normal(k, (cout, cin, ksz, ksz),
                                 jnp.float32) / jnp.sqrt(float(fan_in))

    def bn_params(k, c):
        kg, kb, km, kv = jax.random.split(k, 4)
        gamma = 1.0 + 0.1 * jax.random.normal(kg, (c,), jnp.float32)
        beta = 0.1 * jax.random.normal(kb, (c,), jnp.float32)
        mean = 0.1 * jax.random.normal(km, (c,), jnp.float32)
        var = 1.0 + 0.1 * jax.nn.softplus(
            jax.random.normal(kv, (c,), jnp.float32))
        return (gamma, beta, mean, var)

    params = {
        "w1": conv_w(next(keys), Cm, C, 1),  "bn1": bn_params(next(keys), Cm),
        "w2": conv_w(next(keys), Cm, Cm, 3), "bn2": bn_params(next(keys), Cm),
        "w3": conv_w(next(keys), C, Cm, 1),  "bn3": bn_params(next(keys), C),
        "w4": conv_w(next(keys), Cm, C, 1),  "bn4": bn_params(next(keys), Cm),
        "w5": conv_w(next(keys), Cm, Cm, 3), "bn5": bn_params(next(keys), Cm),
        "w6": conv_w(next(keys), C, Cm, 1),  "bn6": bn_params(next(keys), C),
    }

    # Layout conversion belongs at the graph boundary, outside the op.
    x_nhwc = jnp.transpose(x_nchw, (0, 2, 3, 1))

    out = jax.block_until_ready(bottleneck_conv_forward_nhwc(x_nhwc, params))
    ref = jax.block_until_ready(_reference_forward_nhwc(x_nhwc, params))

    assert out.shape == (N, H, W, C)
    # bf16 MXU operands (f32 accumulation) vs. an f32 reference: tolerance is
    # loosened accordingly (errors are O(1e-2) on O(1) outputs).  If tighter
    # parity with PyTorch is needed, keep the pre-residual Cm->C conv in f32.
    max_err = float(jnp.max(jnp.abs(out - ref)))
    assert jnp.allclose(out, ref, atol=5e-2, rtol=5e-2), max_err

    # NCHW shim (PyTorch-interface parity).
    out_nchw = jax.block_until_ready(bottleneck_conv_forward(x_nchw, params))
    assert out_nchw.shape == (N, C, H, W)
    assert jnp.allclose(out_nchw, jnp.transpose(ref, (0, 3, 1, 2)),
                        atol=5e-2, rtol=5e-2)

    print("KERNEL_OK")
</pallas_src>

<mosaic_0001>
module attributes {stable_mosaic.version = 11 : i64} {
  func.func @_bottleneck_kernel(%arg0: i32, %arg1: memref<1x256x32xf32, #tpu.memory_space<vmem>>, %arg2: memref<32x8xbf16, #tpu.memory_space<vmem>>, %arg3: memref<1x8xf32, #tpu.memory_space<vmem>>, %arg4: memref<9x8x8xbf16, #tpu.memory_space<vmem>>, %arg5: memref<1x8xf32, #tpu.memory_space<vmem>>, %arg6: memref<8x32xbf16, #tpu.memory_space<vmem>>, %arg7: memref<1x32xf32, #tpu.memory_space<vmem>>, %arg8: memref<32x8xbf16, #tpu.memory_space<vmem>>, %arg9: memref<1x8xf32, #tpu.memory_space<vmem>>, %arg10: memref<9x8x8xbf16, #tpu.memory_space<vmem>>, %arg11: memref<1x8xf32, #tpu.memory_space<vmem>>, %arg12: memref<8x32xbf16, #tpu.memory_space<vmem>>, %arg13: memref<1x32xf32, #tpu.memory_space<vmem>>, %arg14: memref<1x256x32xf32, #tpu.memory_space<vmem>>, %arg15: memref<18x18x8xbf16, #tpu.memory_space<vmem>>) attributes {dimension_semantics = [#tpu.dimension_semantics<parallel>], iteration_bounds = array<i64: 2>, scalar_prefetch = 0 : i64, scratch_operands = 1 : i64, tpu.core_type = #tpu.core_type<tc>, window_params = [{transform_indices = @transform_0, window_bounds = array<i64: 1, 256, 32>}, {pipeline_mode = #tpu.pipeline_mode<synchronous>, transform_indices = @transform_1, window_bounds = array<i64: 32, 8>}, {pipeline_mode = #tpu.pipeline_mode<synchronous>, transform_indices = @transform_2, window_bounds = array<i64: 1, 8>}, {pipeline_mode = #tpu.pipeline_mode<synchronous>, transform_indices = @transform_3, window_bounds = array<i64: 9, 8, 8>}, {pipeline_mode = #tpu.pipeline_mode<synchronous>, transform_indices = @transform_4, window_bounds = array<i64: 1, 8>}, {pipeline_mode = #tpu.pipeline_mode<synchronous>, transform_indices = @transform_5, window_bounds = array<i64: 8, 32>}, {pipeline_mode = #tpu.pipeline_mode<synchronous>, transform_indices = @transform_6, window_bounds = array<i64: 1, 32>}, {pipeline_mode = #tpu.pipeline_mode<synchronous>, transform_indices = @transform_7, window_bounds = array<i64: 32, 8>}, {pipeline_mode = #tpu.pipeline_mode<synchronous>, transform_indices = @transform_8, window_bounds = array<i64: 1, 8>}, {pipeline_mode = #tpu.pipeline_mode<synchronous>, transform_indices = @transform_9, window_bounds = array<i64: 9, 8, 8>}, {pipeline_mode = #tpu.pipeline_mode<synchronous>, transform_indices = @transform_10, window_bounds = array<i64: 1, 8>}, {pipeline_mode = #tpu.pipeline_mode<synchronous>, transform_indices = @transform_11, window_bounds = array<i64: 8, 32>}, {pipeline_mode = #tpu.pipeline_mode<synchronous>, transform_indices = @transform_12, window_bounds = array<i64: 1, 32>}, {transform_indices = @transform_13, window_bounds = array<i64: 1, 256, 32>}]} {
    %cst = arith.constant 0.000000e+00 : bf16
    %0 = vector.broadcast %cst : bf16 to vector<1x18x8xbf16>
    %c0 = arith.constant 0 : index
    %c0_0 = arith.constant 0 : index
    %c0_1 = arith.constant 0 : index
    %1 = vector.load %arg15[%c0, %c0_0, %c0_1] : memref<18x18x8xbf16, #tpu.memory_space<vmem>>, vector<1x18x8xbf16>
    tpu.vector_store %arg15[%c0, %c0_0, %c0_1], %0 {strides = array<i32>} : memref<18x18x8xbf16, #tpu.memory_space<vmem>>, vector<1x18x8xbf16>,
    %cst_2 = arith.constant 0.000000e+00 : bf16
    %2 = vector.broadcast %cst_2 : bf16 to vector<1x18x8xbf16>
    %c17 = arith.constant 17 : index
    %c0_3 = arith.constant 0 : index
    %c0_4 = arith.constant 0 : index
    %3 = vector.load %arg15[%c17, %c0_3, %c0_4] : memref<18x18x8xbf16, #tpu.memory_space<vmem>>, vector<1x18x8xbf16>
    tpu.vector_store %arg15[%c17, %c0_3, %c0_4], %2 {strides = array<i32>} : memref<18x18x8xbf16, #tpu.memory_space<vmem>>, vector<1x18x8xbf16>,
    %cst_5 = arith.constant 0.000000e+00 : bf16
    %4 = vector.broadcast %cst_5 : bf16 to vector<18x1x8xbf16>
    %c0_6 = arith.constant 0 : index
    %c0_7 = arith.constant 0 : index
    %c0_8 = arith.constant 0 : index
    %5 = vector.load %arg15[%c0_6, %c0_7, %c0_8] : memref<18x18x8xbf16, #tpu.memory_space<vmem>>, vector<18x1x8xbf16>
    tpu.vector_store %arg15[%c0_6, %c0_7, %c0_8], %4 {strides = array<i32>} : memref<18x18x8xbf16, #tpu.memory_space<vmem>>, vector<18x1x8xbf16>,
    %cst_9 = arith.constant 0.000000e+00 : bf16
    %6 = vector.broadcast %cst_9 : bf16 to vector<18x1x8xbf16>
    %c0_10 = arith.constant 0 : index
    %c17_11 = arith.constant 17 : index
    %c0_12 = arith.constant 0 : index
    %7 = vector.load %arg15[%c0_10, %c17_11, %c0_12] : memref<18x18x8xbf16, #tpu.memory_space<vmem>>, vector<18x1x8xbf16>
    tpu.vector_store %arg15[%c0_10, %c17_11, %c0_12], %6 {strides = array<i32>} : memref<18x18x8xbf16, #tpu.memory_space<vmem>>, vector<18x1x8xbf16>,
    %c0_13 = arith.constant 0 : index
    %c0_14 = arith.constant 0 : index
    %c0_15 = arith.constant 0 : index
    %8 = vector.load %arg1[%c0_13, %c0_14, %c0_15] : memref<1x256x32xf32, #tpu.memory_space<vmem>>, vector<1x256x32xf32>
    %9 = vector.shape_cast %8 : vector<1x256x32xf32> to vector<256x32xf32>
    %c0_16 = arith.constant 0 : index
    %c0_17 = arith.constant 0 : index
    %10 = vector.load %arg2[%c0_16, %c0_17] : memref<32x8xbf16, #tpu.memory_space<vmem>>, vector<32x8xbf16>
    %c0_18 = arith.constant 0 : index
    %c0_19 = arith.constant 0 : index
    %11 = vector.load %arg3[%c0_18, %c0_19] : memref<1x8xf32, #tpu.memory_space<vmem>>, vector<1x8xf32>
    %12 = arith.truncf %9 : vector<256x32xf32> to vector<256x32xbf16>
    %cst_20 = arith.constant dense<0.000000e+00> : vector<256x8xf32>
    %13 = tpu.matmul %12, %10, %cst_20 {dimension_numbers = #tpu.dot_dimension_numbers<[1], [0], [0], [1], [0, 0, 1, 1], [], []>} : vector<256x32xbf16>, vector<32x8xbf16>, vector<256x8xf32> -> vector<256x8xf32>
    %14 = vector.broadcast %11 : vector<1x8xf32> to vector<256x8xf32>
    %15 = arith.addf %13, %14 : vector<256x8xf32>
    %cst_21 = arith.constant 0.000000e+00 : f32
    %16 = vector.broadcast %cst_21 : f32 to vector<256x8xf32>
    %17 = arith.maximumf %15, %16 : vector<256x8xf32>
    %c0_22 = arith.constant 0 : index
    %c0_23 = arith.constant 0 : index
    %18 = vector.load %arg5[%c0_22, %c0_23] : memref<1x8xf32, #tpu.memory_space<vmem>>, vector<1x8xf32>
    %19 = vector.shape_cast %17 : vector<256x8xf32> to vector<16x16x8xf32>
    %20 = arith.truncf %19 : vector<16x16x8xf32> to vector<16x16x8xbf16>
    %c1 = arith.constant 1 : index
    %c1_24 = arith.constant 1 : index
    %c0_25 = arith.constant 0 : index
    %21 = vector.load %arg15[%c1, %c1_24, %c0_25] : memref<18x18x8xbf16, #tpu.memory_space<vmem>>, vector<16x16x8xbf16>
    tpu.vector_store %arg15[%c1, %c1_24, %c0_25], %20 {strides = array<i32>} : memref<18x18x8xbf16, #tpu.memory_space<vmem>>, vector<16x16x8xbf16>,
    %c0_26 = arith.constant 0 : index
    %c0_27 = arith.constant 0 : index
    %c0_28 = arith.constant 0 : index
    %22 = vector.load %arg15[%c0_26, %c0_27, %c0_28] : memref<18x18x8xbf16, #tpu.memory_space<vmem>>, vector<16x16x8xbf16>
    %23 = vector.shape_cast %22 : vector<16x16x8xbf16> to vector<256x8xbf16>
    %c0_29 = arith.constant 0 : index
    %c0_30 = arith.constant 0 : index
    %c0_31 = arith.constant 0 : index
    %24 = vector.load %arg4[%c0_29, %c0_30, %c0_31] : memref<9x8x8xbf16, #tpu.memory_space<vmem>>, vector<1x8x8xbf16>
    %25 = vector.shape_cast %24 : vector<1x8x8xbf16> to vector<8x8xbf16>
    %cst_32 = arith.constant dense<0.000000e+00> : vector<256x8xf32>
    %26 = tpu.matmul %23, %25, %cst_32 {dimension_numbers = #tpu.dot_dimension_numbers<[1], [0], [0], [1], [0, 0, 1, 1], [], []>} : vector<256x8xbf16>, vector<8x8xbf16>, vector<256x8xf32> -> vector<256x8xf32>
    %27 = vector.broadcast %18 : vector<1x8xf32> to vector<256x8xf32>
    %28 = arith.addf %27, %26 : vector<256x8xf32>
    %c0_33 = arith.constant 0 : index
    %c1_34 = arith.constant 1 : index
    %c0_35 = arith.constant 0 : index
    %29 = vector.load %arg15[%c0_33, %c1_34, %c0_35] : memref<18x18x8xbf16, #tpu.memory_space<vmem>>, vector<16x16x8xbf16>
    %30 = vector.shape_cast %29 : vector<16x16x8xbf16> to vector<256x8xbf16>
    %c1_36 = arith.constant 1 : index
    %c0_37 = arith.constant 0 : index
    %c0_38 = arith.constant 0 : index
    %31 = vector.load %arg4[%c1_36, %c0_37, %c0_38] : memref<9x8x8xbf16, #tpu.memory_space<vmem>>, vector<1x8x8xbf16>
    %32 = vector.shape_cast %31 : vector<1x8x8xbf16> to vector<8x8xbf16>
    %cst_39 = arith.constant dense<0.000000e+00> : vector<256x8xf32>
    %33 = tpu.matmul %30, %32, %cst_39 {dimension_numbers = #tpu.dot_dimension_numbers<[1], [0], [0], [1], [0, 0, 1, 1], [], []>} : vector<256x8xbf16>, vector<8x8xbf16>, vector<256x8xf32> -> vector<256x8xf32>
    %34 = arith.addf %28, %33 : vector<256x8xf32>
    %c0_40 = arith.constant 0 : index
    %c2 = arith.constant 2 : index
    %c0_41 = arith.constant 0 : index
    %35 = vector.load %arg15[%c0_40, %c2, %c0_41] : memref<18x18x8xbf16, #tpu.memory_space<vmem>>, vector<16x16x8xbf16>
    %36 = vector.shape_cast %35 : vector<16x16x8xbf16> to vector<256x8xbf16>
    %c2_42 = arith.constant 2 : index
    %c0_43 = arith.constant 0 : index
    %c0_44 = arith.constant 0 : index
    %37 = vector.load %arg4[%c2_42, %c0_43, %c0_44] : memref<9x8x8xbf16, #tpu.memory_space<vmem>>, vector<1x8x8xbf16>
    %38 = vector.shape_cast %37 : vector<1x8x8xbf16> to vector<8x8xbf16>
    %cst_45 = arith.constant dense<0.000000e+00> : vector<256x8xf32>
    %39 = tpu.matmul %36, %38, %cst_45 {dimension_numbers = #tpu.dot_dimension_numbers<[1], [0], [0], [1], [0, 0, 1, 1], [], []>} : vector<256x8xbf16>, vector<8x8xbf16>, vector<256x8xf32> -> vector<256x8xf32>
    %40 = arith.addf %34, %39 : vector<256x8xf32>
    %c1_46 = arith.constant 1 : index
    %c0_47 = arith.constant 0 : index
    %c0_48 = arith.constant 0 : index
    %41 = vector.load %arg15[%c1_46, %c0_47, %c0_48] : memref<18x18x8xbf16, #tpu.memory_space<vmem>>, vector<16x16x8xbf16>
    %42 = vector.shape_cast %41 : vector<16x16x8xbf16> to vector<256x8xbf16>
    %c3 = arith.constant 3 : index
    %c0_49 = arith.constant 0 : index
    %c0_50 = arith.constant 0 : index
    %43 = vector.load %arg4[%c3, %c0_49, %c0_50] : memref<9x8x8xbf16, #tpu.memory_space<vmem>>, vector<1x8x8xbf16>
    %44 = vector.shape_cast %43 : vector<1x8x8xbf16> to vector<8x8xbf16>
    %cst_51 = arith.constant dense<0.000000e+00> : vector<256x8xf32>
    %45 = tpu.matmul %42, %44, %cst_51 {dimension_numbers = #tpu.dot_dimension_numbers<[1], [0], [0], [1], [0, 0, 1, 1], [], []>} : vector<256x8xbf16>, vector<8x8xbf16>, vector<256x8xf32> -> vector<256x8xf32>
    %46 = arith.addf %40, %45 : vector<256x8xf32>
    %c1_52 = arith.constant 1 : index
    %c1_53 = arith.constant 1 : index
    %c0_54 = arith.constant 0 : index
    %47 = vector.load %arg15[%c1_52, %c1_53, %c0_54] : memref<18x18x8xbf16, #tpu.memory_space<vmem>>, vector<16x16x8xbf16>
    %48 = vector.shape_cast %47 : vector<16x16x8xbf16> to vector<256x8xbf16>
    %c4 = arith.constant 4 : index
    %c0_55 = arith.constant 0 : index
    %c0_56 = arith.constant 0 : index
    %49 = vector.load %arg4[%c4, %c0_55, %c0_56] : memref<9x8x8xbf16, #tpu.memory_space<vmem>>, vector<1x8x8xbf16>
    %50 = vector.shape_cast %49 : vector<1x8x8xbf16> to vector<8x8xbf16>
    %cst_57 = arith.constant dense<0.000000e+00> : vector<256x8xf32>
    %51 = tpu.matmul %48, %50, %cst_57 {dimension_numbers = #tpu.dot_dimension_numbers<[1], [0], [0], [1], [0, 0, 1, 1], [], []>} : vector<256x8xbf16>, vector<8x8xbf16>, vector<256x8xf32> -> vector<256x8xf32>
    %52 = arith.addf %46, %51 : vector<256x8xf32>
    %c1_58 = arith.constant 1 : index
    %c2_59 = arith.constant 2 : index
    %c0_60 = arith.constant 0 : index
    %53 = vector.load %arg15[%c1_58, %c2_59, %c0_60] : memref<18x18x8xbf16, #tpu.memory_space<vmem>>, vector<16x16x8xbf16>
    %54 = vector.shape_cast %53 : vector<16x16x8xbf16> to vector<256x8xbf16>
    %c5 = arith.constant 5 : index
    %c0_61 = arith.constant 0 : index
    %c0_62 = arith.constant 0 : index
    %55 = vector.load %arg4[%c5, %c0_61, %c0_62] : memref<9x8x8xbf16, #tpu.memory_space<vmem>>, vector<1x8x8xbf16>
    %56 = vector.shape_cast %55 : vector<1x8x8xbf16> to vector<8x8xbf16>
    %cst_63 = arith.constant dense<0.000000e+00> : vector<256x8xf32>
    %57 = tpu.matmul %54, %56, %cst_63 {dimension_numbers = #tpu.dot_dimension_numbers<[1], [0], [0], [1], [0, 0, 1, 1], [], []>} : vector<256x8xbf16>, vector<8x8xbf16>, vector<256x8xf32> -> vector<256x8xf32>
    %58 = arith.addf %52, %57 : vector<256x8xf32>
    %c2_64 = arith.constant 2 : index
    %c0_65 = arith.constant 0 : index
    %c0_66 = arith.constant 0 : index
    %59 = vector.load %arg15[%c2_64, %c0_65, %c0_66] : memref<18x18x8xbf16, #tpu.memory_space<vmem>>, vector<16x16x8xbf16>
    %60 = vector.shape_cast %59 : vector<16x16x8xbf16> to vector<256x8xbf16>
    %c6 = arith.constant 6 : index
    %c0_67 = arith.constant 0 : index
    %c0_68 = arith.constant 0 : index
    %61 = vector.load %arg4[%c6, %c0_67, %c0_68] : memref<9x8x8xbf16, #tpu.memory_space<vmem>>, vector<1x8x8xbf16>
    %62 = vector.shape_cast %61 : vector<1x8x8xbf16> to vector<8x8xbf16>
    %cst_69 = arith.constant dense<0.000000e+00> : vector<256x8xf32>
    %63 = tpu.matmul %60, %62, %cst_69 {dimension_numbers = #tpu.dot_dimension_numbers<[1], [0], [0], [1], [0, 0, 1, 1], [], []>} : vector<256x8xbf16>, vector<8x8xbf16>, vector<256x8xf32> -> vector<256x8xf32>
    %64 = arith.addf %58, %63 : vector<256x8xf32>
    %c2_70 = arith.constant 2 : index
    %c1_71 = arith.constant 1 : index
    %c0_72 = arith.constant 0 : index
    %65 = vector.load %arg15[%c2_70, %c1_71, %c0_72] : memref<18x18x8xbf16, #tpu.memory_space<vmem>>, vector<16x16x8xbf16>
    %66 = vector.shape_cast %65 : vector<16x16x8xbf16> to vector<256x8xbf16>
    %c7 = arith.constant 7 : index
    %c0_73 = arith.constant 0 : index
    %c0_74 = arith.constant 0 : index
    %67 = vector.load %arg4[%c7, %c0_73, %c0_74] : memref<9x8x8xbf16, #tpu.memory_space<vmem>>, vector<1x8x8xbf16>
    %68 = vector.shape_cast %67 : vector<1x8x8xbf16> to vector<8x8xbf16>
    %cst_75 = arith.constant dense<0.000000e+00> : vector<256x8xf32>
    %69 = tpu.matmul %66, %68, %cst_75 {dimension_numbers = #tpu.dot_dimension_numbers<[1], [0], [0], [1], [0, 0, 1, 1], [], []>} : vector<256x8xbf16>, vector<8x8xbf16>, vector<256x8xf32> -> vector<256x8xf32>
    %70 = arith.addf %64, %69 : vector<256x8xf32>
    %c2_76 = arith.constant 2 : index
    %c2_77 = arith.constant 2 : index
    %c0_78 = arith.constant 0 : index
    %71 = vector.load %arg15[%c2_76, %c2_77, %c0_78] : memref<18x18x8xbf16, #tpu.memory_space<vmem>>, vector<16x16x8xbf16>
    %72 = vector.shape_cast %71 : vector<16x16x8xbf16> to vector<256x8xbf16>
    %c8 = arith.constant 8 : index
    %c0_79 = arith.constant 0 : index
    %c0_80 = arith.constant 0 : index
    %73 = vector.load %arg4[%c8, %c0_79, %c0_80] : memref<9x8x8xbf16, #tpu.memory_space<vmem>>, vector<1x8x8xbf16>
    %74 = vector.shape_cast %73 : vector<1x8x8xbf16> to vector<8x8xbf16>
    %cst_81 = arith.constant dense<0.000000e+00> : vector<256x8xf32>
    %75 = tpu.matmul %72, %74, %cst_81 {dimension_numbers = #tpu.dot_dimension_numbers<[1], [0], [0], [1], [0, 0, 1, 1], [], []>} : vector<256x8xbf16>, vector<8x8xbf16>, vector<256x8xf32> -> vector<256x8xf32>
    %76 = arith.addf %70, %75 : vector<256x8xf32>
    %cst_82 = arith.constant 0.000000e+00 : f32
    %77 = vector.broadcast %cst_82 : f32 to vector<256x8xf32>
    %78 = arith.maximumf %76, %77 : vector<256x8xf32>
    %c0_83 = arith.constant 0 : index
    %c0_84 = arith.constant 0 : index
    %79 = vector.load %arg6[%c0_83, %c0_84] : memref<8x32xbf16, #tpu.memory_space<vmem>>, vector<8x32xbf16>
    %c0_85 = arith.constant 0 : index
    %c0_86 = arith.constant 0 : index
    %80 = vector.load %arg7[%c0_85, %c0_86] : memref<1x32xf32, #tpu.memory_space<vmem>>, vector<1x32xf32>
    %81 = arith.truncf %78 : vector<256x8xf32> to vector<256x8xbf16>
    %cst_87 = arith.constant dense<0.000000e+00> : vector<256x32xf32>
    %82 = tpu.matmul %81, %79, %cst_87 {dimension_numbers = #tpu.dot_dimension_numbers<[1], [0], [0], [1], [0, 0, 1, 1], [], []>} : vector<256x8xbf16>, vector<8x32xbf16>, vector<256x32xf32> -> vector<256x32xf32>
    %83 = vector.broadcast %80 : vector<1x32xf32> to vector<256x32xf32>
    %84 = arith.addf %82, %83 : vector<256x32xf32>
    %85 = arith.addf %84, %9 : vector<256x32xf32>
    %cst_88 = arith.constant 0.000000e+00 : f32
    %86 = vector.broadcast %cst_88 : f32 to vector<256x32xf32>
    %87 = arith.maximumf %85, %86 : vector<256x32xf32>
    %c0_89 = arith.constant 0 : index
    %c0_90 = arith.constant 0 : index
    %88 = vector.load %arg8[%c0_89, %c0_90] : memref<32x8xbf16, #tpu.memory_space<vmem>>, vector<32x8xbf16>
    %c0_91 = arith.constant 0 : index
    %c0_92 = arith.constant 0 : index
    %89 = vector.load %arg9[%c0_91, %c0_92] : memref<1x8xf32, #tpu.memory_space<vmem>>, vector<1x8xf32>
    %90 = arith.truncf %87 : vector<256x32xf32> to vector<256x32xbf16>
    %cst_93 = arith.constant dense<0.000000e+00> : vector<256x8xf32>
    %91 = tpu.matmul %90, %88, %cst_93 {dimension_numbers = #tpu.dot_dimension_numbers<[1], [0], [0], [1], [0, 0, 1, 1], [], []>} : vector<256x32xbf16>, vector<32x8xbf16>, vector<256x8xf32> -> vector<256x8xf32>
    %92 = vector.broadcast %89 : vector<1x8xf32> to vector<256x8xf32>
    %93 = arith.addf %91, %92 : vector<256x8xf32>
    %cst_94 = arith.constant 0.000000e+00 : f32
    %94 = vector.broadcast %cst_94 : f32 to vector<256x8xf32>
    %95 = arith.maximumf %93, %94 : vector<256x8xf32>
    %c0_95 = arith.constant 0 : index
    %c0_96 = arith.constant 0 : index
    %96 = vector.load %arg11[%c0_95, %c0_96] : memref<1x8xf32, #tpu.memory_space<vmem>>, vector<1x8xf32>
    %97 = vector.shape_cast %95 : vector<256x8xf32> to vector<16x16x8xf32>
    %98 = arith.truncf %97 : vector<16x16x8xf32> to vector<16x16x8xbf16>
    %c1_97 = arith.constant 1 : index
    %c1_98 = arith.constant 1 : index
    %c0_99 = arith.constant 0 : index
    %99 = vector.load %arg15[%c1_97, %c1_98, %c0_99] : memref<18x18x8xbf16, #tpu.memory_space<vmem>>, vector<16x16x8xbf16>
    tpu.vector_store %arg15[%c1_97, %c1_98, %c0_99], %98 {strides = array<i32>} : memref<18x18x8xbf16, #tpu.memory_space<vmem>>, vector<16x16x8xbf16>,
    %c0_100 = arith.constant 0 : index
    %c0_101 = arith.constant 0 : index
    %c0_102 = arith.constant 0 : index
    %100 = vector.load %arg15[%c0_100, %c0_101, %c0_102] : memref<18x18x8xbf16, #tpu.memory_space<vmem>>, vector<16x16x8xbf16>
    %101 = vector.shape_cast %100 : vector<16x16x8xbf16> to vector<256x8xbf16>
    %c0_103 = arith.constant 0 : index
    %c0_104 = arith.constant 0 : index
    %c0_105 = arith.constant 0 : index
    %102 = vector.load %arg10[%c0_103, %c0_104, %c0_105] : memref<9x8x8xbf16, #tpu.memory_space<vmem>>, vector<1x8x8xbf16>
    %103 = vector.shape_cast %102 : vector<1x8x8xbf16> to vector<8x8xbf16>
    %cst_106 = arith.constant dense<0.000000e+00> : vector<256x8xf32>
    %104 = tpu.matmul %101, %103, %cst_106 {dimension_numbers = #tpu.dot_dimension_numbers<[1], [0], [0], [1], [0, 0, 1, 1], [], []>} : vector<256x8xbf16>, vector<8x8xbf16>, vector<256x8xf32> -> vector<256x8xf32>
    %105 = vector.broadcast %96 : vector<1x8xf32> to vector<256x8xf32>
    %106 = arith.addf %105, %104 : vector<256x8xf32>
    %c0_107 = arith.constant 0 : index
    %c1_108 = arith.constant 1 : index
    %c0_109 = arith.constant 0 : index
    %107 = vector.load %arg15[%c0_107, %c1_108, %c0_109] : memref<18x18x8xbf16, #tpu.memory_space<vmem>>, vector<16x16x8xbf16>
    %108 = vector.shape_cast %107 : vector<16x16x8xbf16> to vector<256x8xbf16>
    %c1_110 = arith.constant 1 : index
    %c0_111 = arith.constant 0 : index
    %c0_112 = arith.constant 0 : index
    %109 = vector.load %arg10[%c1_110, %c0_111, %c0_112] : memref<9x8x8xbf16, #tpu.memory_space<vmem>>, vector<1x8x8xbf16>
    %110 = vector.shape_cast %109 : vector<1x8x8xbf16> to vector<8x8xbf16>
    %cst_113 = arith.constant dense<0.000000e+00> : vector<256x8xf32>
    %111 = tpu.matmul %108, %110, %cst_113 {dimension_numbers = #tpu.dot_dimension_numbers<[1], [0], [0], [1], [0, 0, 1, 1], [], []>} : vector<256x8xbf16>, vector<8x8xbf16>, vector<256x8xf32> -> vector<256x8xf32>
    %112 = arith.addf %106, %111 : vector<256x8xf32>
    %c0_114 = arith.constant 0 : index
    %c2_115 = arith.constant 2 : index
    %c0_116 = arith.constant 0 : index
    %113 = vector.load %arg15[%c0_114, %c2_115, %c0_116] : memref<18x18x8xbf16, #tpu.memory_space<vmem>>, vector<16x16x8xbf16>
    %114 = vector.shape_cast %113 : vector<16x16x8xbf16> to vector<256x8xbf16>
    %c2_117 = arith.constant 2 : index
    %c0_118 = arith.constant 0 : index
    %c0_119 = arith.constant 0 : index
    %115 = vector.load %arg10[%c2_117, %c0_118, %c0_119] : memref<9x8x8xbf16, #tpu.memory_space<vmem>>, vector<1x8x8xbf16>
    %116 = vector.shape_cast %115 : vector<1x8x8xbf16> to vector<8x8xbf16>
    %cst_120 = arith.constant dense<0.000000e+00> : vector<256x8xf32>
    %117 = tpu.matmul %114, %116, %cst_120 {dimension_numbers = #tpu.dot_dimension_numbers<[1], [0], [0], [1], [0, 0, 1, 1], [], []>} : vector<256x8xbf16>, vector<8x8xbf16>, vector<256x8xf32> -> vector<256x8xf32>
    %118 = arith.addf %112, %117 : vector<256x8xf32>
    %c1_121 = arith.constant 1 : index
    %c0_122 = arith.constant 0 : index
    %c0_123 = arith.constant 0 : index
    %119 = vector.load %arg15[%c1_121, %c0_122, %c0_123] : memref<18x18x8xbf16, #tpu.memory_space<vmem>>, vector<16x16x8xbf16>
    %120 = vector.shape_cast %119 : vector<16x16x8xbf16> to vector<256x8xbf16>
    %c3_124 = arith.constant 3 : index
    %c0_125 = arith.constant 0 : index
    %c0_126 = arith.constant 0 : index
    %121 = vector.load %arg10[%c3_124, %c0_125, %c0_126] : memref<9x8x8xbf16, #tpu.memory_space<vmem>>, vector<1x8x8xbf16>
    %122 = vector.shape_cast %121 : vector<1x8x8xbf16> to vector<8x8xbf16>
    %cst_127 = arith.constant dense<0.000000e+00> : vector<256x8xf32>
    %123 = tpu.matmul %120, %122, %cst_127 {dimension_numbers = #tpu.dot_dimension_numbers<[1], [0], [0], [1], [0, 0, 1, 1], [], []>} : vector<256x8xbf16>, vector<8x8xbf16>, vector<256x8xf32> -> vector<256x8xf32>
    %124 = arith.addf %118, %123 : vector<256x8xf32>
    %c1_128 = arith.constant 1 : index
    %c1_129 = arith.constant 1 : index
    %c0_130 = arith.constant 0 : index
    %125 = vector.load %arg15[%c1_128, %c1_129, %c0_130] : memref<18x18x8xbf16, #tpu.memory_space<vmem>>, vector<16x16x8xbf16>
    %126 = vector.shape_cast %125 : vector<16x16x8xbf16> to vector<256x8xbf16>
    %c4_131 = arith.constant 4 : index
    %c0_132 = arith.constant 0 : index
    %c0_133 = arith.constant 0 : index
    %127 = vector.load %arg10[%c4_131, %c0_132, %c0_133] : memref<9x8x8xbf16, #tpu.memory_space<vmem>>, vector<1x8x8xbf16>
    %128 = vector.shape_cast %127 : vector<1x8x8xbf16> to vector<8x8xbf16>
    %cst_134 = arith.constant dense<0.000000e+00> : vector<256x8xf32>
    %129 = tpu.matmul %126, %128, %cst_134 {dimension_numbers = #tpu.dot_dimension_numbers<[1], [0], [0], [1], [0, 0, 1, 1], [], []>} : vector<256x8xbf16>, vector<8x8xbf16>, vector<256x8xf32> -> vector<256x8xf32>
    %130 = arith.addf %124, %129 : vector<256x8xf32>
    %c1_135 = arith.constant 1 : index
    %c2_136 = arith.constant 2 : index
    %c0_137 = arith.constant 0 : index
    %131 = vector.load %arg15[%c1_135, %c2_136, %c0_137] : memref<18x18x8xbf16, #tpu.memory_space<vmem>>, vector<16x16x8xbf16>
    %132 = vector.shape_cast %131 : vector<16x16x8xbf16> to vector<256x8xbf16>
    %c5_138 = arith.constant 5 : index
    %c0_139 = arith.constant 0 : index
    %c0_140 = arith.constant 0 : index
    %133 = vector.load %arg10[%c5_138, %c0_139, %c0_140] : memref<9x8x8xbf16, #tpu.memory_space<vmem>>, vector<1x8x8xbf16>
    %134 = vector.shape_cast %133 : vector<1x8x8xbf16> to vector<8x8xbf16>
    %cst_141 = arith.constant dense<0.000000e+00> : vector<256x8xf32>
    %135 = tpu.matmul %132, %134, %cst_141 {dimension_numbers = #tpu.dot_dimension_numbers<[1], [0], [0], [1], [0, 0, 1, 1], [], []>} : vector<256x8xbf16>, vector<8x8xbf16>, vector<256x8xf32> -> vector<256x8xf32>
    %136 = arith.addf %130, %135 : vector<256x8xf32>
    %c2_142 = arith.constant 2 : index
    %c0_143 = arith.constant 0 : index
    %c0_144 = arith.constant 0 : index
    %137 = vector.load %arg15[%c2_142, %c0_143, %c0_144] : memref<18x18x8xbf16, #tpu.memory_space<vmem>>, vector<16x16x8xbf16>
    %138 = vector.shape_cast %137 : vector<16x16x8xbf16> to vector<256x8xbf16>
    %c6_145 = arith.constant 6 : index
    %c0_146 = arith.constant 0 : index
    %c0_147 = arith.constant 0 : index
    %139 = vector.load %arg10[%c6_145, %c0_146, %c0_147] : memref<9x8x8xbf16, #tpu.memory_space<vmem>>, vector<1x8x8xbf16>
    %140 = vector.shape_cast %139 : vector<1x8x8xbf16> to vector<8x8xbf16>
    %cst_148 = arith.constant dense<0.000000e+00> : vector<256x8xf32>
    %141 = tpu.matmul %138, %140, %cst_148 {dimension_numbers = #tpu.dot_dimension_numbers<[1], [0], [0], [1], [0, 0, 1, 1], [], []>} : vector<256x8xbf16>, vector<8x8xbf16>, vector<256x8xf32> -> vector<256x8xf32>
    %142 = arith.addf %136, %141 : vector<256x8xf32>
    %c2_149 = arith.constant 2 : index
    %c1_150 = arith.constant 1 : index
    %c0_151 = arith.constant 0 : index
    %143 = vector.load %arg15[%c2_149, %c1_150, %c0_151] : memref<18x18x8xbf16, #tpu.memory_space<vmem>>, vector<16x16x8xbf16>
    %144 = vector.shape_cast %143 : vector<16x16x8xbf16> to vector<256x8xbf16>
    %c7_152 = arith.constant 7 : index
    %c0_153 = arith.constant 0 : index
    %c0_154 = arith.constant 0 : index
    %145 = vector.load %arg10[%c7_152, %c0_153, %c0_154] : memref<9x8x8xbf16, #tpu.memory_space<vmem>>, vector<1x8x8xbf16>
    %146 = vector.shape_cast %145 : vector<1x8x8xbf16> to vector<8x8xbf16>
    %cst_155 = arith.constant dense<0.000000e+00> : vector<256x8xf32>
    %147 = tpu.matmul %144, %146, %cst_155 {dimension_numbers = #tpu.dot_dimension_numbers<[1], [0], [0], [1], [0, 0, 1, 1], [], []>} : vector<256x8xbf16>, vector<8x8xbf16>, vector<256x8xf32> -> vector<256x8xf32>
    %148 = arith.addf %142, %147 : vector<256x8xf32>
    %c2_156 = arith.constant 2 : index
    %c2_157 = arith.constant 2 : index
    %c0_158 = arith.constant 0 : index
    %149 = vector.load %arg15[%c2_156, %c2_157, %c0_158] : memref<18x18x8xbf16, #tpu.memory_space<vmem>>, vector<16x16x8xbf16>
    %150 = vector.shape_cast %149 : vector<16x16x8xbf16> to vector<256x8xbf16>
    %c8_159 = arith.constant 8 : index
    %c0_160 = arith.constant 0 : index
    %c0_161 = arith.constant 0 : index
    %151 = vector.load %arg10[%c8_159, %c0_160, %c0_161] : memref<9x8x8xbf16, #tpu.memory_space<vmem>>, vector<1x8x8xbf16>
    %152 = vector.shape_cast %151 : vector<1x8x8xbf16> to vector<8x8xbf16>
    %cst_162 = arith.constant dense<0.000000e+00> : vector<256x8xf32>
    %153 = tpu.matmul %150, %152, %cst_162 {dimension_numbers = #tpu.dot_dimension_numbers<[1], [0], [0], [1], [0, 0, 1, 1], [], []>} : vector<256x8xbf16>, vector<8x8xbf16>, vector<256x8xf32> -> vector<256x8xf32>
    %154 = arith.addf %148, %153 : vector<256x8xf32>
    %cst_163 = arith.constant 0.000000e+00 : f32
    %155 = vector.broadcast %cst_163 : f32 to vector<256x8xf32>
    %156 = arith.maximumf %154, %155 : vector<256x8xf32>
    %c0_164 = arith.constant 0 : index
    %c0_165 = arith.constant 0 : index
    %157 = vector.load %arg12[%c0_164, %c0_165] : memref<8x32xbf16, #tpu.memory_space<vmem>>, vector<8x32xbf16>
    %c0_166 = arith.constant 0 : index
    %c0_167 = arith.constant 0 : index
    %158 = vector.load %arg13[%c0_166, %c0_167] : memref<1x32xf32, #tpu.memory_space<vmem>>, vector<1x32xf32>
    %159 = arith.truncf %156 : vector<256x8xf32> to vector<256x8xbf16>
    %cst_168 = arith.constant dense<0.000000e+00> : vector<256x32xf32>
    %160 = tpu.matmul %159, %157, %cst_168 {dimension_numbers = #tpu.dot_dimension_numbers<[1], [0], [0], [1], [0, 0, 1, 1], [], []>} : vector<256x8xbf16>, vector<8x32xbf16>, vector<256x32xf32> -> vector<256x32xf32>
    %161 = vector.broadcast %158 : vector<1x32xf32> to vector<256x32xf32>
    %162 = arith.addf %160, %161 : vector<256x32xf32>
    %163 = arith.addf %162, %87 : vector<256x32xf32>
    %cst_169 = arith.constant 0.000000e+00 : f32
    %164 = vector.broadcast %cst_169 : f32 to vector<256x32xf32>
    %165 = arith.maximumf %163, %164 : vector<256x32xf32>
    %166 = vector.shape_cast %165 : vector<256x32xf32> to vector<1x256x32xf32>
    %c0_170 = arith.constant 0 : index
    %c0_171 = arith.constant 0 : index
    %c0_172 = arith.constant 0 : index
    %167 = vector.load %arg14[%c0_170, %c0_171, %c0_172] : memref<1x256x32xf32, #tpu.memory_space<vmem>>, vector<1x256x32xf32>
    tpu.vector_store %arg14[%c0_170, %c0_171, %c0_172], %166 {strides = array<i32>} : memref<1x256x32xf32, #tpu.memory_space<vmem>>, vector<1x256x32xf32>,
    return
  }
  func.func @transform_0(%arg0: i32) -> (i32, i32, i32) {
    %c0_i32 = arith.constant 0 : i32
    %c0_i32_0 = arith.constant 0 : i32
    %c0_i32_1 = arith.constant 0 : i32
    return %arg0, %c0_i32, %c0_i32_0 : i32, i32, i32
  }
  func.func @transform_1(%arg0: i32) -> (i32, i32) {
    %c0_i32 = arith.constant 0 : i32
    %c0_i32_0 = arith.constant 0 : i32
    %c0_i32_1 = arith.constant 0 : i32
    return %c0_i32, %c0_i32_0 : i32, i32
  }
  func.func @transform_2(%arg0: i32) -> (i32, i32) {
    %c0_i32 = arith.constant 0 : i32
    %c0_i32_0 = arith.constant 0 : i32
    %c0_i32_1 = arith.constant 0 : i32
    return %c0_i32, %c0_i32_0 : i32, i32
  }
  func.func @transform_3(%arg0: i32) -> (i32, i32, i32) {
    %c0_i32 = arith.constant 0 : i32
    %c0_i32_0 = arith.constant 0 : i32
    %c0_i32_1 = arith.constant 0 : i32
    %c0_i32_2 = arith.constant 0 : i32
    return %c0_i32, %c0_i32_0, %c0_i32_1 : i32, i32, i32
  }
  func.func @transform_4(%arg0: i32) -> (i32, i32) {
    %c0_i32 = arith.constant 0 : i32
    %c0_i32_0 = arith.constant 0 : i32
    %c0_i32_1 = arith.constant 0 : i32
    return %c0_i32, %c0_i32_0 : i32, i32
  }
  func.func @transform_5(%arg0: i32) -> (i32, i32) {
    %c0_i32 = arith.constant 0 : i32
    %c0_i32_0 = arith.constant 0 : i32
    %c0_i32_1 = arith.constant 0 : i32
    return %c0_i32, %c0_i32_0 : i32, i32
  }
  func.func @transform_6(%arg0: i32) -> (i32, i32) {
    %c0_i32 = arith.constant 0 : i32
    %c0_i32_0 = arith.constant 0 : i32
    %c0_i32_1 = arith.constant 0 : i32
    return %c0_i32, %c0_i32_0 : i32, i32
  }
  func.func @transform_7(%arg0: i32) -> (i32, i32) {
    %c0_i32 = arith.constant 0 : i32
    %c0_i32_0 = arith.constant 0 : i32
    %c0_i32_1 = arith.constant 0 : i32
    return %c0_i32, %c0_i32_0 : i32, i32
  }
  func.func @transform_8(%arg0: i32) -> (i32, i32) {
    %c0_i32 = arith.constant 0 : i32
    %c0_i32_0 = arith.constant 0 : i32
    %c0_i32_1 = arith.constant 0 : i32
    return %c0_i32, %c0_i32_0 : i32, i32
  }
  func.func @transform_9(%arg0: i32) -> (i32, i32, i32) {
    %c0_i32 = arith.constant 0 : i32
    %c0_i32_0 = arith.constant 0 : i32
    %c0_i32_1 = arith.constant 0 : i32
    %c0_i32_2 = arith.constant 0 : i32
    return %c0_i32, %c0_i32_0, %c0_i32_1 : i32, i32, i32
  }
  func.func @transform_10(%arg0: i32) -> (i32, i32) {
    %c0_i32 = arith.constant 0 : i32
    %c0_i32_0 = arith.constant 0 : i32
    %c0_i32_1 = arith.constant 0 : i32
    return %c0_i32, %c0_i32_0 : i32, i32
  }
  func.func @transform_11(%arg0: i32) -> (i32, i32) {
    %c0_i32 = arith.constant 0 : i32
    %c0_i32_0 = arith.constant 0 : i32
    %c0_i32_1 = arith.constant 0 : i32
    return %c0_i32, %c0_i32_0 : i32, i32
  }
  func.func @transform_12(%arg0: i32) -> (i32, i32) {
    %c0_i32 = arith.constant 0 : i32
    %c0_i32_0 = arith.constant 0 : i32
    %c0_i32_1 = arith.constant 0 : i32
    return %c0_i32, %c0_i32_0 : i32, i32
  }
  func.func @transform_13(%arg0: i32) -> (i32, i32, i32) {
    %c0_i32 = arith.constant 0 : i32
    %c0_i32_0 = arith.constant 0 : i32
    %c0_i32_1 = arith.constant 0 : i32
    return %arg0, %c0_i32, %c0_i32_0 : i32, i32, i32
  }
}

</mosaic_0001>

<llo_original>
// kernel: tpu_custom_call.1
$region0: #{tpu_custom_call.1}
  #allocation0 [shape = 'u32[]', space=smem, size = 0x4, offset = 0x4, fixed_abs, tag = 'smem constant byte address 0x4 - core index']
  #allocation1 [shape = 'u32[144,128]{1,0:T(1,128)}', space=vmem, size = 0x12000, scoped, tag = 'internal scratch']
  #allocation2 [shape = 'bf16[18,18,8]{2,1,0:T(8,128)(2,1)}', space=vmem, size = 0x1b000, scoped, tag = 'scratch operand']
  %s0 = inlined_call_operand.vmem [shape: f32[2,256,32], index: 0, kind: input, shape index: {}]
  %s1 = inlined_call_operand.vmem [shape: bf16[32,8], index: 1, kind: input, shape index: {}]
  %s2 = inlined_call_operand.vmem [shape: f32[1,8], index: 2, kind: input, shape index: {}]
  %s3 = inlined_call_operand.vmem [shape: bf16[9,8,8], index: 3, kind: input, shape index: {}]
  %s4 = inlined_call_operand.vmem [shape: f32[1,8], index: 4, kind: input, shape index: {}]
  %s5 = inlined_call_operand.vmem [shape: bf16[8,32], index: 5, kind: input, shape index: {}]
  %s6 = inlined_call_operand.vmem [shape: f32[1,32], index: 6, kind: input, shape index: {}]
  %s7 = inlined_call_operand.vmem [shape: bf16[32,8], index: 7, kind: input, shape index: {}]
  %s8 = inlined_call_operand.vmem [shape: f32[1,8], index: 8, kind: input, shape index: {}]
  %s9 = inlined_call_operand.vmem [shape: bf16[9,8,8], index: 9, kind: input, shape index: {}]
  %s10 = inlined_call_operand.vmem [shape: f32[1,8], index: 10, kind: input, shape index: {}]
  %s11 = inlined_call_operand.vmem [shape: bf16[8,32], index: 11, kind: input, shape index: {}]
  %s12 = inlined_call_operand.vmem [shape: f32[1,32], index: 12, kind: input, shape index: {}]
  %s13 = inlined_call_operand.vmem [shape: f32[2,256,32], index: 13, kind: output, shape index: {}]
  %s14 = sld [smem:[#allocation0]]
  $region85: #{tpu_custom_call.1} parent=0
    _
  %s16 = ssub.s32 1, %s14
  %s17 = scalar_select 0, %s16, %s14
  loop: start=0, step=1, limit=4
  $region2: #{tpu_custom_call.1} parent=0 // loop_pre_header
    _
  $region3: #{tpu_custom_call.1} parent=0 // loop_header
    %s19 = sphi 0, %s23
    %p20 = scmp.ge.s32.totalorder %s19, 4
    %s29 = sphi 0, %s31
    %s32 = sphi 0, %s29
    %s33 = sphi 0, %s32
    %s49 = sphi 0, %s33
    %s53 = sphi 0, %s53
    %s55 = sphi 0, %s53
    %s56 = sphi 0, %s55
    %s70 = sphi 0, %s56
    %s74 = sphi 0, %s74
    %s76 = sphi 0, %s74
    %s77 = sphi 0, %s76
    %s91 = sphi 0, %s77
    %s95 = sphi 0, %s95
    %s97 = sphi 0, %s95
    %s98 = sphi 0, %s97
    %s112 = sphi 0, %s98
    %s116 = sphi 0, %s116
    %s118 = sphi 0, %s116
    %s119 = sphi 0, %s118
    %s133 = sphi 0, %s119
    %s137 = sphi 0, %s137
    %s139 = sphi 0, %s137
    %s140 = sphi 0, %s139
    %s154 = sphi 0, %s140
    %s158 = sphi 0, %s158
    %s160 = sphi 0, %s158
    %s161 = sphi 0, %s160
    %s175 = sphi 0, %s161
    %s179 = sphi 0, %s179
    %s181 = sphi 0, %s179
    %s182 = sphi 0, %s181
    %s196 = sphi 0, %s182
    %s200 = sphi 0, %s200
    %s202 = sphi 0, %s200
    %s203 = sphi 0, %s202
    %s217 = sphi 0, %s203
    %s221 = sphi 0, %s221
    %s223 = sphi 0, %s221
    %s224 = sphi 0, %s223
    %s238 = sphi 0, %s224
    %s242 = sphi 0, %s242
    %s244 = sphi 0, %s242
    %s245 = sphi 0, %s244
    %s259 = sphi 0, %s245
    %s263 = sphi 0, %s263
    %s265 = sphi 0, %s263
    %s266 = sphi 0, %s265
    %s280 = sphi 0, %s266
    %s284 = sphi 0, %s284
    %s286 = sphi 0, %s284
    %s287 = sphi 0, %s286
    %s301 = sphi 0, %s287
    %s307 = sphi 0, %s309
    %s310 = sphi 0, %s307
    %s311 = sphi 0, %s310
    %s327 = sphi 0, %s311
  $region4: #{tpu_custom_call.1} parent=0 // loop_header_branch
    %22 = sbr.rel (%p20) target = $region8
  $region5: #{tpu_custom_call.1} parent=0 // loop_body
    %s24 = ssub.s32 %s19, 1
    %s25 = ssub.s32 %s19, 2
    %s26 = sadd.s32 %s19, 1
    %s27 = ssub.s32 %s19, %s26
    %p28 = scmp.eq.s32.totalorder %s27, 0
    %s30 = sadd.s32 %s29, 1
    %s31 = scalar_select %p28, %s29, %s30
    %p34 = pneg %p28
    %p35 = scmp.eq.s32.totalorder %s19, 1
    %p36 = por %p34, %p35
    %p37 = scmp.ne.s32.totalorder %s29, %s32
    %p38 = scmp.eq.s32.totalorder %s19, 0
    %p39 = por %p37, %p38
    %p40 = scmp.ne.s32.totalorder %s29, %s32
    %p41 = scmp.eq.s32.totalorder %s24, 1
    %p42 = por %p40, %p41
    %p43 = scmp.ne.s32.totalorder %s32, %s33
    %p44 = scmp.eq.s32.totalorder %s24, 0
    %p45 = por %p43, %p44
    %p46 = scmp.ne.s32.totalorder %s32, %s33
    %p47 = scmp.eq.s32.totalorder %s25, 1
    %p48 = por %p46, %p47
    %p50 = scmp.ne.s32.totalorder %s33, %s49
    %p51 = scmp.eq.s32.totalorder %s25, 0
    %p52 = por %p50, %p51
    %s54 = sadd.s32 %s53, 1
    %p57 = scmp.eq.s32.totalorder %s19, 1
    %p58 = scmp.ne.s32.totalorder %s53, %s55
    %p59 = scmp.eq.s32.totalorder %s19, 0
    %p60 = por %p58, %p59
    %p61 = scmp.ne.s32.totalorder %s53, %s55
    %p62 = scmp.eq.s32.totalorder %s24, 1
    %p63 = por %p61, %p62
    %p64 = scmp.ne.s32.totalorder %s55, %s56
    %p65 = scmp.eq.s32.totalorder %s24, 0
    %p66 = por %p64, %p65
    %p67 = scmp.ne.s32.totalorder %s55, %s56
    %p68 = scmp.eq.s32.totalorder %s25, 1
    %p69 = por %p67, %p68
    %p71 = scmp.ne.s32.totalorder %s56, %s70
    %p72 = scmp.eq.s32.totalorder %s25, 0
    %p73 = por %p71, %p72
    %s75 = sadd.s32 %s74, 1
    %p78 = scmp.eq.s32.totalorder %s19, 1
    %p79 = scmp.ne.s32.totalorder %s74, %s76
    %p80 = scmp.eq.s32.totalorder %s19, 0
    %p81 = por %p79, %p80
    %p82 = scmp.ne.s32.totalorder %s74, %s76
    %p83 = scmp.eq.s32.totalorder %s24, 1
    %p84 = por %p82, %p83
    %p85 = scmp.ne.s32.totalorder %s76, %s77
    %p86 = scmp.eq.s32.totalorder %s24, 0
    %p87 = por %p85, %p86
    %p88 = scmp.ne.s32.totalorder %s76, %s77
    %p89 = scmp.eq.s32.totalorder %s25, 1
    %p90 = por %p88, %p89
    %p92 = scmp.ne.s32.totalorder %s77, %s91
    %p93 = scmp.eq.s32.totalorder %s25, 0
    %p94 = por %p92, %p93
    %s96 = sadd.s32 %s95, 1
    %p99 = scmp.eq.s32.totalorder %s19, 1
    %p100 = scmp.ne.s32.totalorder %s95, %s97
    %p101 = scmp.eq.s32.totalorder %s19, 0
    %p102 = por %p100, %p101
    %p103 = scmp.ne.s32.totalorder %s95, %s97
    %p104 = scmp.eq.s32.totalorder %s24, 1
    %p105 = por %p103, %p104
    %p106 = scmp.ne.s32.totalorder %s97, %s98
    %p107 = scmp.eq.s32.totalorder %s24, 0
    %p108 = por %p106, %p107
    %p109 = scmp.ne.s32.totalorder %s97, %s98
    %p110 = scmp.eq.s32.totalorder %s25, 1
    %p111 = por %p109, %p110
    %p113 = scmp.ne.s32.totalorder %s98, %s112
    %p114 = scmp.eq.s32.totalorder %s25, 0
    %p115 = por %p113, %p114
    %s117 = sadd.s32 %s116, 1
    %p120 = scmp.eq.s32.totalorder %s19, 1
    %p121 = scmp.ne.s32.totalorder %s116, %s118
    %p122 = scmp.eq.s32.totalorder %s19, 0
    %p123 = por %p121, %p122
    %p124 = scmp.ne.s32.totalorder %s116, %s118
    %p125 = scmp.eq.s32.totalorder %s24, 1
    %p126 = por %p124, %p125
    %p127 = scmp.ne.s32.totalorder %s118, %s119
    %p128 = scmp.eq.s32.totalorder %s24, 0
    %p129 = por %p127, %p128
    %p130 = scmp.ne.s32.totalorder %s118, %s119
    %p131 = scmp.eq.s32.totalorder %s25, 1
    %p132 = por %p130, %p131
    %p134 = scmp.ne.s32.totalorder %s119, %s133
    %p135 = scmp.eq.s32.totalorder %s25, 0
    %p136 = por %p134, %p135
    %s138 = sadd.s32 %s137, 1
    %p141 = scmp.eq.s32.totalorder %s19, 1
    %p142 = scmp.ne.s32.totalorder %s137, %s139
    %p143 = scmp.eq.s32.totalorder %s19, 0
    %p144 = por %p142, %p143
    %p145 = scmp.ne.s32.totalorder %s137, %s139
    %p146 = scmp.eq.s32.totalorder %s24, 1
    %p147 = por %p145, %p146
    %p148 = scmp.ne.s32.totalorder %s139, %s140
    %p149 = scmp.eq.s32.totalorder %s24, 0
    %p150 = por %p148, %p149
    %p151 = scmp.ne.s32.totalorder %s139, %s140
    %p152 = scmp.eq.s32.totalorder %s25, 1
    %p153 = por %p151, %p152
    %p155 = scmp.ne.s32.totalorder %s140, %s154
    %p156 = scmp.eq.s32.totalorder %s25, 0
    %p157 = por %p155, %p156
    %s159 = sadd.s32 %s158, 1
    %p162 = scmp.eq.s32.totalorder %s19, 1
    %p163 = scmp.ne.s32.totalorder %s158, %s160
    %p164 = scmp.eq.s32.totalorder %s19, 0
    %p165 = por %p163, %p164
    %p166 = scmp.ne.s32.totalorder %s158, %s160
    %p167 = scmp.eq.s32.totalorder %s24, 1
    %p168 = por %p166, %p167
    %p169 = scmp.ne.s32.totalorder %s160, %s161
    %p170 = scmp.eq.s32.totalorder %s24, 0
    %p171 = por %p169, %p170
    %p172 = scmp.ne.s32.totalorder %s160, %s161
    %p173 = scmp.eq.s32.totalorder %s25, 1
    %p174 = por %p172, %p173
    %p176 = scmp.ne.s32.totalorder %s161, %s175
    %p177 = scmp.eq.s32.totalorder %s25, 0
    %p178 = por %p176, %p177
    %s180 = sadd.s32 %s179, 1
    %p183 = scmp.eq.s32.totalorder %s19, 1
    %p184 = scmp.ne.s32.totalorder %s179, %s181
    %p185 = scmp.eq.s32.totalorder %s19, 0
    %p186 = por %p184, %p185
    %p187 = scmp.ne.s32.totalorder %s179, %s181
    %p188 = scmp.eq.s32.totalorder %s24, 1
    %p189 = por %p187, %p188
    %p190 = scmp.ne.s32.totalorder %s181, %s182
    %p191 = scmp.eq.s32.totalorder %s24, 0
    %p192 = por %p190, %p191
    %p193 = scmp.ne.s32.totalorder %s181, %s182
    %p194 = scmp.eq.s32.totalorder %s25, 1
    %p195 = por %p193, %p194
    %p197 = scmp.ne.s32.totalorder %s182, %s196
    %p198 = scmp.eq.s32.totalorder %s25, 0
    %p199 = por %p197, %p198
    %s201 = sadd.s32 %s200, 1
    %p204 = scmp.eq.s32.totalorder %s19, 1
    %p205 = scmp.ne.s32.totalorder %s200, %s202
    %p206 = scmp.eq.s32.totalorder %s19, 0
    %p207 = por %p205, %p206
    %p208 = scmp.ne.s32.totalorder %s200, %s202
    %p209 = scmp.eq.s32.totalorder %s24, 1
    %p210 = por %p208, %p209
    %p211 = scmp.ne.s32.totalorder %s202, %s203
    %p212 = scmp.eq.s32.totalorder %s24, 0
    %p213 = por %p211, %p212
    %p214 = scmp.ne.s32.totalorder %s202, %s203
    %p215 = scmp.eq.s32.totalorder %s25, 1
    %p216 = por %p214, %p215
    %p218 = scmp.ne.s32.totalorder %s203, %s217
    %p219 = scmp.eq.s32.totalorder %s25, 0
    %p220 = por %p218, %p219
    %s222 = sadd.s32 %s221, 1
    %p225 = scmp.eq.s32.totalorder %s19, 1
    %p226 = scmp.ne.s32.totalorder %s221, %s223
    %p227 = scmp.eq.s32.totalorder %s19, 0
    %p228 = por %p226, %p227
    %p229 = scmp.ne.s32.totalorder %s221, %s223
    %p230 = scmp.eq.s32.totalorder %s24, 1
    %p231 = por %p229, %p230
    %p232 = scmp.ne.s32.totalorder %s223, %s224
    %p233 = scmp.eq.s32.totalorder %s24, 0
    %p234 = por %p232, %p233
    %p235 = scmp.ne.s32.totalorder %s223, %s224
    %p236 = scmp.eq.s32.totalorder %s25, 1
    %p237 = por %p235, %p236
    %p239 = scmp.ne.s32.totalorder %s224, %s238
    %p240 = scmp.eq.s32.totalorder %s25, 0
    %p241 = por %p239, %p240
    %s243 = sadd.s32 %s242, 1
    %p246 = scmp.eq.s32.totalorder %s19, 1
    %p247 = scmp.ne.s32.totalorder %s242, %s244
    %p248 = scmp.eq.s32.totalorder %s19, 0
    %p249 = por %p247, %p248
    %p250 = scmp.ne.s32.totalorder %s242, %s244
    %p251 = scmp.eq.s32.totalorder %s24, 1
    %p252 = por %p250, %p251
    %p253 = scmp.ne.s32.totalorder %s244, %s245
    %p254 = scmp.eq.s32.totalorder %s24, 0
    %p255 = por %p253, %p254
    %p256 = scmp.ne.s32.totalorder %s244, %s245
    %p257 = scmp.eq.s32.totalorder %s25, 1
    %p258 = por %p256, %p257
    %p260 = scmp.ne.s32.totalorder %s245, %s259
    %p261 = scmp.eq.s32.totalorder %s25, 0
    %p262 = por %p260, %p261
    %s264 = sadd.s32 %s263, 1
    %p267 = scmp.eq.s32.totalorder %s19, 1
    %p268 = scmp.ne.s32.totalorder %s263, %s265
    %p269 = scmp.eq.s32.totalorder %s19, 0
    %p270 = por %p268, %p269
    %p271 = scmp.ne.s32.totalorder %s263, %s265
    %p272 = scmp.eq.s32.totalorder %s24, 1
    %p273 = por %p271, %p272
    %p274 = scmp.ne.s32.totalorder %s265, %s266
    %p275 = scmp.eq.s32.totalorder %s24, 0
    %p276 = por %p274, %p275
    %p277 = scmp.ne.s32.totalorder %s265, %s266
    %p278 = scmp.eq.s32.totalorder %s25, 1
    %p279 = por %p277, %p278
    %p281 = scmp.ne.s32.totalorder %s266, %s280
    %p282 = scmp.eq.s32.totalorder %s25, 0
    %p283 = por %p281, %p282
    %s285 = sadd.s32 %s284, 1
    %p288 = scmp.eq.s32.totalorder %s19, 1
    %p289 = scmp.ne.s32.totalorder %s284, %s286
    %p290 = scmp.eq.s32.totalorder %s19, 0
    %p291 = por %p289, %p290
    %p292 = scmp.ne.s32.totalorder %s284, %s286
    %p293 = scmp.eq.s32.totalorder %s24, 1
    %p294 = por %p292, %p293
    %p295 = scmp.ne.s32.totalorder %s286, %s287
    %p296 = scmp.eq.s32.totalorder %s24, 0
    %p297 = por %p295, %p296
    %p298 = scmp.ne.s32.totalorder %s286, %s287
    %p299 = scmp.eq.s32.totalorder %s25, 1
    %p300 = por %p298, %p299
    %p302 = scmp.ne.s32.totalorder %s287, %s301
    %p303 = scmp.eq.s32.totalorder %s25, 0
    %p304 = por %p302, %p303
    %s305 = ssub.s32 %s19, %s26
    %p306 = scmp.eq.s32.totalorder %s305, 0
    %s308 = sadd.s32 %s307, 1
    %s309 = scalar_select %p306, %s307, %s308
    %p312 = pneg %p306
    %p313 = scmp.eq.s32.totalorder %s19, 1
    %p314 = por %p312, %p313
    %p315 = scmp.ne.s32.totalorder %s307, %s310
    %p316 = scmp.eq.s32.totalorder %s19, 0
    %p317 = por %p315, %p316
    %p318 = scmp.ne.s32.totalorder %s307, %s310
    %p319 = scmp.eq.s32.totalorder %s24, 1
    %p320 = por %p318, %p319
    %p321 = scmp.ne.s32.totalorder %s310, %s311
    %p322 = scmp.eq.s32.totalorder %s24, 0
    %p323 = por %p321, %p322
    %p324 = scmp.ne.s32.totalorder %s310, %s311
    %p325 = scmp.eq.s32.totalorder %s25, 1
    %p326 = por %p324, %p325
    %p328 = scmp.ne.s32.totalorder %s311, %s327
    %p329 = scmp.eq.s32.totalorder %s25, 0
    %p330 = por %p328, %p329
    %p331 = scmp.le.s32.totalorder 1, %s19
    %p332 = scmp.lt.s32.totalorder %s19, 3
    %p333 = pnand %p331, %p332
    %p334 = pneg %p333
    // Predicated region
    $region9: #{tpu_custom_call.1} parent=5 // pred_check
      _
    $region10: #{tpu_custom_call.1} parent=5 // pred_check_branch
      %336 = sbr.rel (%p333) target = $region12
    $region11: #{tpu_custom_call.1} parent=5 // pred_region
      %s337 = ssub.s32 %s19, 1
      // Predicated region
      $region13: #{tpu_custom_call.1} parent=11 // pred_check
        %p338 = pneg %p66
      $region14: #{tpu_custom_call.1} parent=11 // pred_check_branch
        %340 = sbr.rel (%p338) target = $region16
      $region15: #{tpu_custom_call.1} parent=11 // pred_region
        _
      $region16: #{tpu_custom_call.1} parent=11 // pred_fallthru
        _
      // Predicated region
      $region17: #{tpu_custom_call.1} parent=11 // pred_check
        %p341 = pneg %p87
      $region18: #{tpu_custom_call.1} parent=11 // pred_check_branch
        %343 = sbr.rel (%p341) target = $region20
      $region19: #{tpu_custom_call.1} parent=11 // pred_region
        _
      $region20: #{tpu_custom_call.1} parent=11 // pred_fallthru
        _
      // Predicated region
      $region21: #{tpu_custom_call.1} parent=11 // pred_check
        %p344 = pneg %p108
      $region22: #{tpu_custom_call.1} parent=11 // pred_check_branch
        %346 = sbr.rel (%p344) target = $region24
      $region23: #{tpu_custom_call.1} parent=11 // pred_region
        _
      $region24: #{tpu_custom_call.1} parent=11 // pred_fallthru
        _
      // Predicated region
      $region25: #{tpu_custom_call.1} parent=11 // pred_check
        %p347 = pneg %p129
      $region26: #{tpu_custom_call.1} parent=11 // pred_check_branch
        %349 = sbr.rel (%p347) target = $region28
      $region27: #{tpu_custom_call.1} parent=11 // pred_region
        _
      $region28: #{tpu_custom_call.1} parent=11 // pred_fallthru
        _
      // Predicated region
      $region29: #{tpu_custom_call.1} parent=11 // pred_check
        %p350 = pneg %p150
      $region30: #{tpu_custom_call.1} parent=11 // pred_check_branch
        %352 = sbr.rel (%p350) target = $region32
      $region31: #{tpu_custom_call.1} parent=11 // pred_region
        _
      $region32: #{tpu_custom_call.1} parent=11 // pred_fallthru
        _
      // Predicated region
      $region33: #{tpu_custom_call.1} parent=11 // pred_check
        %p353 = pneg %p171
      $region34: #{tpu_custom_call.1} parent=11 // pred_check_branch
        %355 = sbr.rel (%p353) target = $region36
      $region35: #{tpu_custom_call.1} parent=11 // pred_region
        _
      $region36: #{tpu_custom_call.1} parent=11 // pred_fallthru
        _
      // Predicated region
      $region37: #{tpu_custom_call.1} parent=11 // pred_check
        %p356 = pneg %p192
      $region38: #{tpu_custom_call.1} parent=11 // pred_check_branch
        %358 = sbr.rel (%p356) target = $region40
      $region39: #{tpu_custom_call.1} parent=11 // pred_region
        _
      $region40: #{tpu_custom_call.1} parent=11 // pred_fallthru
        _
      // Predicated region
      $region41: #{tpu_custom_call.1} parent=11 // pred_check
        %p359 = pneg %p213
      $region42: #{tpu_custom_call.1} parent=11 // pred_check_branch
        %361 = sbr.rel (%p359) target = $region44
      $region43: #{tpu_custom_call.1} parent=11 // pred_region
        _
      $region44: #{tpu_custom_call.1} parent=11 // pred_fallthru
        _
      // Predicated region
      $region45: #{tpu_custom_call.1} parent=11 // pred_check
        %p362 = pneg %p234
      $region46: #{tpu_custom_call.1} parent=11 // pred_check_branch
        %364 = sbr.rel (%p362) target = $region48
      $region47: #{tpu_custom_call.1} parent=11 // pred_region
        _
      $region48: #{tpu_custom_call.1} parent=11 // pred_fallthru
        _
      // Predicated region
      $region49: #{tpu_custom_call.1} parent=11 // pred_check
        %p365 = pneg %p255
      $region50: #{tpu_custom_call.1} parent=11 // pred_check_branch
        %367 = sbr.rel (%p365) target = $region52
      $region51: #{tpu_custom_call.1} parent=11 // pred_region
        _
      $region52: #{tpu_custom_call.1} parent=11 // pred_fallthru
        _
      // Predicated region
      $region53: #{tpu_custom_call.1} parent=11 // pred_check
        %p368 = pneg %p276
      $region54: #{tpu_custom_call.1} parent=11 // pred_check_branch
        %370 = sbr.rel (%p368) target = $region56
      $region55: #{tpu_custom_call.1} parent=11 // pred_region
        _
      $region56: #{tpu_custom_call.1} parent=11 // pred_fallthru
        _
      // Predicated region
      $region57: #{tpu_custom_call.1} parent=11 // pred_check
        %p371 = pneg %p297
      $region58: #{tpu_custom_call.1} parent=11 // pred_check_branch
        %373 = sbr.rel (%p371) target = $region60
      $region59: #{tpu_custom_call.1} parent=11 // pred_region
        _
      $region60: #{tpu_custom_call.1} parent=11 // pred_fallthru
        _
    $region12: #{tpu_custom_call.1} parent=5 // pred_fallthru
      _
    %p374 = scmp.lt.s32.totalorder %s19, 2
    // Predicated region
    $region61: #{tpu_custom_call.1} parent=5 // pred_check
      %p375 = pneg %p374
    $region62: #{tpu_custom_call.1} parent=5 // pred_check_branch
      %377 = sbr.rel (%p375) target = $region64
    $region63: #{tpu_custom_call.1} parent=5 // pred_region
      // Predicated region
      $region65: #{tpu_custom_call.1} parent=63 // pred_check
        %p378 = pneg %p39
      $region66: #{tpu_custom_call.1} parent=63 // pred_check_branch
        %380 = sbr.rel (%p378) target = $region68
      $region67: #{tpu_custom_call.1} parent=63 // pred_region
        %p381 = scmp.lt.s32.totalorder %s19, 1
        %s382 = scalar_select %p381, %s19, 1
        %s383 = smul.addr %s382, 32
        %s384 = smul.addr %s383, 8
        %s385 = scalar_lea.vmem %s0, %s384
      $region68: #{tpu_custom_call.1} parent=63 // pred_fallthru
        _
    $region64: #{tpu_custom_call.1} parent=5 // pred_fallthru
      _
    %p386 = scmp.le.s32.totalorder 1, %s19
    %p387 = scmp.lt.s32.totalorder %s19, 3
    %p388 = pnand %p386, %p387
    %p389 = pneg %p388
    // Predicated region
    $region69: #{tpu_custom_call.1} parent=5 // pred_check
      _
    $region70: #{tpu_custom_call.1} parent=5 // pred_check_branch
      %391 = sbr.rel (%p388) target = $region72
    $region71: #{tpu_custom_call.1} parent=5 // pred_region
      %s392 = ssub.s32 %s19, 1
      %p393 = scmp.lt.s32.totalorder %s24, 1
      %s394 = scalar_select %p393, %s24, 1
      %s395 = smul.addr %s394, 32
      %s396 = smul.addr %s395, 8
      %s397 = scalar_lea.vmem %s0, %s396
      %p398 = pneg %p45
      %p399 = pneg %p42
      %p400 = pneg %p66
      %p401 = pneg %p63
      %p402 = pneg %p87
      %p403 = pneg %p84
      %p404 = pneg %p108
      %p405 = pneg %p105
      %p406 = pneg %p129
      %p407 = pneg %p126
      %p408 = pneg %p150
      %p409 = pneg %p147
      %p410 = pneg %p171
      %p411 = pneg %p168
      %p412 = pneg %p192
      %p413 = pneg %p189
      %p414 = pneg %p213
      %p415 = pneg %p210
      %p416 = pneg %p234
      %p417 = pneg %p231
      %p418 = pneg %p255
      %p419 = pneg %p252
      %p420 = pneg %p276
      %p421 = pneg %p273
      %p422 = pneg %p297
      %p423 = pneg %p294
      %p424 = pneg %p323
      %p425 = pneg %p320
      %p426 = scmp.lt.s32.totalorder %s24, 1
      %s427 = scalar_select %p426, %s24, 1
      %s428 = smul.addr %s427, 32
      %s429 = smul.addr %s428, 8
      %s430 = scalar_lea.vmem %s13, %s429
      %p431 = scmp.lt.s32.totalorder %s24, 1
      %s432 = scalar_select %p431, %s24, 1
      %s433 = smul.addr %s432, 32
      %s434 = smul.addr %s433, 8
      %s435 = scalar_lea.vmem %s0, %s434
      %p436 = scmp.lt.s32.totalorder %s24, 1
      %s437 = scalar_select %p436, %s24, 1
      %s438 = smul.addr %s437, 32
      %s439 = smul.addr %s438, 8
      %s440 = scalar_lea.vmem %s13, %s439
      %vm442 = vcmask 60416
      %443 = vst.msk [vmem:[#allocation2] sm:$0xf] %vm442, 0
      %444 = vst.msk [vmem:[#allocation2 + $0x4] sm:$0xf] %vm442, 0
      %vm445 = vcmask 57344
      %446 = vst.msk [vmem:[#allocation2 + $0x8] sm:$0x1] %vm445, 0
      %s447 = scalar_lea.vmem [#allocation2], 204
      %448 = vst.msk [vmem:[%s447] sm:$0xf] %vm442, 0
      %449 = vst.msk [vmem:[%s447 + $0x4] sm:$0xf] %vm442, 0
      %450 = vst.msk [vmem:[%s447 + $0x8] sm:$0x1] %vm445, 0
      %vm451 = vcmask 57344
      %vm452 = vsmask.f32 256
      %vm453 = vmand %vm451, %vm452
      %v454 = vld [vmem:[#allocation2] sm:$0x1]
      %v455 = vsel %vm453, 0, %v454
      %456 = vst [vmem:[#allocation2] sm:$0x1] %v455
      %v457 = vld [vmem:[#allocation2 + $0xc] sm:$0x1]
      %v458 = vsel %vm453, 0, %v457
      %459 = vst [vmem:[#allocation2 + $0xc] sm:$0x1] %v458
      %v460 = vld [vmem:[#allocation2 + $0x18] sm:$0x1]
      %v461 = vsel %vm453, 0, %v460
      %462 = vst [vmem:[#allocation2 + $0x18] sm:$0x1] %v461
      %v463 = vld [vmem:[#allocation2 + $0x24] sm:$0x1]
      %v464 = vsel %vm453, 0, %v463
      %465 = vst [vmem:[#allocation2 + $0x24] sm:$0x1] %v464
      %v466 = vld [vmem:[#allocation2 + $0x30] sm:$0x1]
      %v467 = vsel %vm453, 0, %v466
      %468 = vst [vmem:[#allocation2 + $0x30] sm:$0x1] %v467
      %v469 = vld [vmem:[#allocation2 + $0x3c] sm:$0x1]
      %v470 = vsel %vm453, 0, %v469
      %471 = vst [vmem:[#allocation2 + $0x3c] sm:$0x1] %v470
      %v472 = vld [vmem:[#allocation2 + $0x48] sm:$0x1]
      %v473 = vsel %vm453, 0, %v472
      %474 = vst [vmem:[#allocation2 + $0x48] sm:$0x1] %v473
      %v475 = vld [vmem:[#allocation2 + $0x54] sm:$0x1]
      %v476 = vsel %vm453, 0, %v475
      %477 = vst [vmem:[#allocation2 + $0x54] sm:$0x1] %v476
      %v478 = vld [vmem:[#allocation2 + $0x60] sm:$0x1]
      %v479 = vsel %vm453, 0, %v478
      %480 = vst [vmem:[#allocation2 + $0x60] sm:$0x1] %v479
      %v481 = vld [vmem:[#allocation2 + $0x6c] sm:$0x1]
      %v482 = vsel %vm453, 0, %v481
      %483 = vst [vmem:[#allocation2 + $0x6c] sm:$0x1] %v482
      %v484 = vld [vmem:[#allocation2 + $0x78] sm:$0x1]
      %v485 = vsel %vm453, 0, %v484
      %486 = vst [vmem:[#allocation2 + $0x78] sm:$0x1] %v485
      %v487 = vld [vmem:[#allocation2 + $0x84] sm:$0x1]
      %v488 = vsel %vm453, 0, %v487
      %489 = vst [vmem:[#allocation2 + $0x84] sm:$0x1] %v488
      %v490 = vld [vmem:[#allocation2 + $0x90] sm:$0x1]
      %v491 = vsel %vm453, 0, %v490
      %492 = vst [vmem:[#allocation2 + $0x90] sm:$0x1] %v491
      %v493 = vld [vmem:[#allocation2 + $0x9c] sm:$0x1]
      %v494 = vsel %vm453, 0, %v493
      %495 = vst [vmem:[#allocation2 + $0x9c] sm:$0x1] %v494
      %v496 = vld [vmem:[#allocation2 + $0xa8] sm:$0x1]
      %v497 = vsel %vm453, 0, %v496
      %498 = vst [vmem:[#allocation2 + $0xa8] sm:$0x1] %v497
      %v499 = vld [vmem:[#allocation2 + $0xb4] sm:$0x1]
      %v500 = vsel %vm453, 0, %v499
      %501 = vst [vmem:[#allocation2 + $0xb4] sm:$0x1] %v500
      %v502 = vld [vmem:[#allocation2 + $0xc0] sm:$0x1]
      %v503 = vsel %vm453, 0, %v502
      %504 = vst [vmem:[#allocation2 + $0xc0] sm:$0x1] %v503
      %v505 = vld [vmem:[#allocation2 + $0xcc] sm:$0x1]
      %v506 = vsel %vm453, 0, %v505
      %507 = vst [vmem:[#allocation2 + $0xcc] sm:$0x1] %v506
      %vm508 = vsmask.f32 7938
      %vm509 = vmand %vm451, %vm508
      %v510 = vld [vmem:[#allocation2 + $0x8] sm:$0x1]
      %v511 = vsel %vm509, 0, %v510
      %512 = vst [vmem:[#allocation2 + $0x8] sm:$0x1] %v511
      %v513 = vld [vmem:[#allocation2 + $0x14] sm:$0x1]
      %v514 = vsel %vm509, 0, %v513
      %515 = vst [vmem:[#allocation2 + $0x14] sm:$0x1] %v514
      %v516 = vld [vmem:[#allocation2 + $0x20] sm:$0x1]
      %v517 = vsel %vm509, 0, %v516
      %518 = vst [vmem:[#allocation2 + $0x20] sm:$0x1] %v517
      %v519 = vld [vmem:[#allocation2 + $0x2c] sm:$0x1]
      %v520 = vsel %vm509, 0, %v519
      %521 = vst [vmem:[#allocation2 + $0x2c] sm:$0x1] %v520
      %v522 = vld [vmem:[#allocation2 + $0x38] sm:$0x1]
      %v523 = vsel %vm509, 0, %v522
      %524 = vst [vmem:[#allocation2 + $0x38] sm:$0x1] %v523
      %v525 = vld [vmem:[#allocation2 + $0x44] sm:$0x1]
      %v526 = vsel %vm509, 0, %v525
      %527 = vst [vmem:[#allocation2 + $0x44] sm:$0x1] %v526
      %v528 = vld [vmem:[#allocation2 + $0x50] sm:$0x1]
      %v529 = vsel %vm509, 0, %v528
      %530 = vst [vmem:[#allocation2 + $0x50] sm:$0x1] %v529
      %v531 = vld [vmem:[#allocation2 + $0x5c] sm:$0x1]
      %v532 = vsel %vm509, 0, %v531
      %533 = vst [vmem:[#allocation2 + $0x5c] sm:$0x1] %v532
      %v534 = vld [vmem:[#allocation2 + $0x68] sm:$0x1]
      %v535 = vsel %vm509, 0, %v534
      %536 = vst [vmem:[#allocation2 + $0x68] sm:$0x1] %v535
      %v537 = vld [vmem:[#allocation2 + $0x74] sm:$0x1]
      %v538 = vsel %vm509, 0, %v537
      %539 = vst [vmem:[#allocation2 + $0x74] sm:$0x1] %v538
      %v540 = vld [vmem:[#allocation2 + $0x80] sm:$0x1]
      %v541 = vsel %vm509, 0, %v540
      %542 = vst [vmem:[#allocation2 + $0x80] sm:$0x1] %v541
      %v543 = vld [vmem:[#allocation2 + $0x8c] sm:$0x1]
      %v544 = vsel %vm509, 0, %v543
      %545 = vst [vmem:[#allocation2 + $0x8c] sm:$0x1] %v544
      %v546 = vld [vmem:[#allocation2 + $0x98] sm:$0x1]
      %v547 = vsel %vm509, 0, %v546
      %548 = vst [vmem:[#allocation2 + $0x98] sm:$0x1] %v547
      %v549 = vld [vmem:[#allocation2 + $0xa4] sm:$0x1]
      %v550 = vsel %vm509, 0, %v549
      %551 = vst [vmem:[#allocation2 + $0xa4] sm:$0x1] %v550
      %v552 = vld [vmem:[#allocation2 + $0xb0] sm:$0x1]
      %v553 = vsel %vm509, 0, %v552
      %554 = vst [vmem:[#allocation2 + $0xb0] sm:$0x1] %v553
      %v555 = vld [vmem:[#allocation2 + $0xbc] sm:$0x1]
      %v556 = vsel %vm509, 0, %v555
      %557 = vst [vmem:[#allocation2 + $0xbc] sm:$0x1] %v556
      %v558 = vld [vmem:[#allocation2 + $0xc8] sm:$0x1]
      %v559 = vsel %vm509, 0, %v558
      %560 = vst [vmem:[#allocation2 + $0xc8] sm:$0x1] %v559
      %v561 = vld [vmem:[#allocation2 + $0xd4] sm:$0x1]
      %v562 = vsel %vm509, 0, %v561
      %563 = vst [vmem:[#allocation2 + $0xd4] sm:$0x1] %v562
      %v564 = vld [vmem:[%s435] sm:$0xff]
      %v565 = vld [vmem:[%s435 + $0x8] sm:$0xff]
      %v566 = vld [vmem:[%s435 + $0x10] sm:$0xff]
      %v567 = vld [vmem:[%s435 + $0x18] sm:$0xff]
      %v568 = vld [vmem:[%s435 + $0x20] sm:$0xff]
      %v569 = vld [vmem:[%s435 + $0x28] sm:$0xff]
      %v570 = vld [vmem:[%s435 + $0x30] sm:$0xff]
      %v571 = vld [vmem:[%s435 + $0x38] sm:$0xff]
      %v572 = vld [vmem:[%s435 + $0x40] sm:$0xff]
      %v573 = vld [vmem:[%s435 + $0x48] sm:$0xff]
      %v574 = vld [vmem:[%s435 + $0x50] sm:$0xff]
      %v575 = vld [vmem:[%s435 + $0x58] sm:$0xff]
      %v576 = vld [vmem:[%s435 + $0x60] sm:$0xff]
      %v577 = vld [vmem:[%s435 + $0x68] sm:$0xff]
      %v578 = vld [vmem:[%s435 + $0x70] sm:$0xff]
      %v579 = vld [vmem:[%s435 + $0x78] sm:$0xff]
      %v580 = vld [vmem:[%s435 + $0x80] sm:$0xff]
      %v581 = vld [vmem:[%s435 + $0x88] sm:$0xff]
      %v582 = vld [vmem:[%s435 + $0x90] sm:$0xff]
      %v583 = vld [vmem:[%s435 + $0x98] sm:$0xff]
      %v584 = vld [vmem:[%s435 + $0xa0] sm:$0xff]
      %v585 = vld [vmem:[%s435 + $0xa8] sm:$0xff]
      %v586 = vld [vmem:[%s435 + $0xb0] sm:$0xff]
      %v587 = vld [vmem:[%s435 + $0xb8] sm:$0xff]
      %v588 = vld [vmem:[%s435 + $0xc0] sm:$0xff]
      %v589 = vld [vmem:[%s435 + $0xc8] sm:$0xff]
      %v590 = vld [vmem:[%s435 + $0xd0] sm:$0xff]
      %v591 = vld [vmem:[%s435 + $0xd8] sm:$0xff]
      %v592 = vld [vmem:[%s435 + $0xe0] sm:$0xff]
      %v593 = vld [vmem:[%s435 + $0xe8] sm:$0xff]
      %v594 = vld [vmem:[%s435 + $0xf0] sm:$0xff]
      %v595 = vld [vmem:[%s435 + $0xf8] sm:$0xff]
      %v596 = vld [vmem:[%s1] sm:$0xf]
      %v597 = vld [vmem:[%s1 + $0x4] sm:$0xf]
      %v598 = vld [vmem:[%s1 + $0x8] sm:$0xf]
      %v599 = vld [vmem:[%s1 + $0xc] sm:$0xf]
      %v600 = vld [vmem:[%s2] sm:$0x1]
      %v601 = vpack.c.bf16 %v565, %v564
      %v602 = vpack.c.bf16 %v567, %v566
      %v603 = vpack.c.bf16 %v569, %v568
      %v604 = vpack.c.bf16 %v571, %v570
      %v605 = vpack.c.bf16 %v573, %v572
      %v606 = vpack.c.bf16 %v575, %v574
      %v607 = vpack.c.bf16 %v577, %v576
      %v608 = vpack.c.bf16 %v579, %v578
      %v609 = vpack.c.bf16 %v581, %v580
      %v610 = vpack.c.bf16 %v583, %v582
      %v611 = vpack.c.bf16 %v585, %v584
      %v612 = vpack.c.bf16 %v587, %v586
      %v613 = vpack.c.bf16 %v589, %v588
      %v614 = vpack.c.bf16 %v591, %v590
      %v615 = vpack.c.bf16 %v593, %v592
      %v616 = vpack.c.bf16 %v595, %v594
      %v618 = vlaneseq
      %v619 = vshrl.u32 %v618, 7
      %v620 = vsub.s32 0, %v619
      %v621 = vrot.slane %v600, %v620
      %v627 = vunpack.c.l.b16 %v596
      %v628 = vunpack.c.l.b16 %v597
      %v629 = vunpack.c.l.b16 %v598
      %v630 = vunpack.c.l.b16 %v599
      %v631 = vpack.c.b16 %v628, %v627
      %v632 = vpack.c.b16 %v630, %v629
      %vm635 = vcmask 261120
      %v637 = vsel %vm635, %v601, 0
      %v640 = vsel %vm635, %v602, 0
      %v643 = vsel %vm635, %v603, 0
      %v646 = vsel %vm635, %v604, 0
      %v649 = vsel %vm635, %v605, 0
      %v652 = vsel %vm635, %v606, 0
      %v655 = vsel %vm635, %v607, 0
      %v658 = vsel %vm635, %v608, 0
      %v661 = vsel %vm635, %v609, 0
      %v664 = vsel %vm635, %v610, 0
      %v667 = vsel %vm635, %v611, 0
      %v670 = vsel %vm635, %v612, 0
      %v673 = vsel %vm635, %v613, 0
      %v676 = vsel %vm635, %v614, 0
      %v679 = vsel %vm635, %v615, 0
      %v682 = vsel %vm635, %v616, 0
      %684 = vmatprep.subr.bf16.mxu0 0
      %685 = vmatpush1.bf16.msra.mxu0 0
      %686 = vmatprep.subr.bf16.mxu0 0
      %687 = vmatpush1.bf16.msra.mxu0 0
      %688 = vmatprep.subr.bf16.mxu0 0
      %689 = vmatpush1.bf16.msra.mxu0 0
      %690 = vmatprep.subr.bf16.mxu0 0
      %691 = vmatpush1.bf16.msra.mxu0 0
      %692 = vmatprep.subr.bf16.mxu0 0
      %693 = vmatpush1.bf16.msra.mxu0 0
      %694 = vmatprep.subr.bf16.mxu0 0
      %695 = vmatpush1.bf16.msra.mxu0 0
      %696 = vmatprep.subr.bf16.mxu0 0
      %697 = vmatpush1.bf16.msra.mxu0 %v632
      %698 = vmatprep.subr.bf16.mxu0 0
      %699 = vmatpush1.bf16.msra.mxu0 %v631
      %700 = vmatprep.subr.bf16.mxu0 0
      %701 = vmatpush2.bf16.msra.mxu0 0
      %702 = vmatprep.subr.bf16.mxu0 0
      %703 = vmatpush2.bf16.msra.mxu0 0
      %704 = vmatprep.subr.bf16.mxu0 0
      %705 = vmatpush2.bf16.msra.mxu0 0
      %706 = vmatprep.subr.bf16.mxu0 0
      %707 = vmatpush2.bf16.msra.mxu0 0
      %708 = vmatprep.subr.bf16.mxu0 0
      %709 = vmatpush2.bf16.msra.mxu0 0
      %710 = vmatprep.subr.bf16.mxu0 0
      %711 = vmatpush2.bf16.msra.mxu0 0
      %712 = vmatprep.subr.bf16.mxu0 0
      %713 = vmatpush2.bf16.msra.mxu0 0
      %714 = vmatprep.subr.bf16.mxu0 0
      %715 = vmatpush2.bf16.msra.mxu0 0
      %716 = vmatprep.mubr.bf16.mxu0 0
      %717 = vmatmul.mubr.bf16.gmra.mxu0 %v637
      %v718 = vpop.f32.mrf.mxu0
      %v719 = vadd.f32 %v621, %v718
      %v720 = vpop.f32.mrf.mxu0
      %v721 = vpop.f32.mrf.mxu0
      %v722 = vadd.f32 %v621, %v721
      %v723 = vpop.f32.mrf.mxu0
      %724 = vmatprep.mubr.bf16.mxu0 0
      %725 = vmatmul.mubr.bf16.gmra.mxu0 %v640
      %v726 = vpop.f32.mrf.mxu0
      %v727 = vadd.f32 %v621, %v726
      %v728 = vpop.f32.mrf.mxu0
      %v729 = vpop.f32.mrf.mxu0
      %v730 = vadd.f32 %v621, %v729
      %v731 = vpop.f32.mrf.mxu0
      %732 = vmatprep.mubr.bf16.mxu0 0
      %733 = vmatmul.mubr.bf16.gmra.mxu0 %v643
      %v734 = vpop.f32.mrf.mxu0
      %v735 = vadd.f32 %v621, %v734
      %v736 = vpop.f32.mrf.mxu0
      %v737 = vpop.f32.mrf.mxu0
      %v738 = vadd.f32 %v621, %v737
      %v739 = vpop.f32.mrf.mxu0
      %740 = vmatprep.mubr.bf16.mxu0 0
      %741 = vmatmul.mubr.bf16.gmra.mxu0 %v646
      %v742 = vpop.f32.mrf.mxu0
      %v743 = vadd.f32 %v621, %v742
      %v744 = vpop.f32.mrf.mxu0
      %v745 = vpop.f32.mrf.mxu0
      %v746 = vadd.f32 %v621, %v745
      %v747 = vpop.f32.mrf.mxu0
      %748 = vmatprep.mubr.bf16.mxu0 0
      %749 = vmatmul.mubr.bf16.gmra.mxu0 %v649
      %v750 = vpop.f32.mrf.mxu0
      %v751 = vadd.f32 %v621, %v750
      %v752 = vpop.f32.mrf.mxu0
      %v753 = vpop.f32.mrf.mxu0
      %v754 = vadd.f32 %v621, %v753
      %v755 = vpop.f32.mrf.mxu0
      %756 = vmatprep.mubr.bf16.mxu0 0
      %757 = vmatmul.mubr.bf16.gmra.mxu0 %v652
      %v758 = vpop.f32.mrf.mxu0
      %v759 = vadd.f32 %v621, %v758
      %v760 = vpop.f32.mrf.mxu0
      %v761 = vpop.f32.mrf.mxu0
      %v762 = vadd.f32 %v621, %v761
      %v763 = vpop.f32.mrf.mxu0
      %764 = vmatprep.mubr.bf16.mxu0 0
      %765 = vmatmul.mubr.bf16.gmra.mxu0 %v655
      %v766 = vpop.f32.mrf.mxu0
      %v767 = vadd.f32 %v621, %v766
      %v768 = vpop.f32.mrf.mxu0
      %v769 = vpop.f32.mrf.mxu0
      %v770 = vadd.f32 %v621, %v769
      %v771 = vpop.f32.mrf.mxu0
      %772 = vmatprep.mubr.bf16.mxu0 0
      %773 = vmatmul.mubr.bf16.gmra.mxu0 %v658
      %v774 = vpop.f32.mrf.mxu0
      %v775 = vadd.f32 %v621, %v774
      %v776 = vpop.f32.mrf.mxu0
      %v777 = vpop.f32.mrf.mxu0
      %v778 = vadd.f32 %v621, %v777
      %v779 = vpop.f32.mrf.mxu0
      %780 = vmatprep.mubr.bf16.mxu0 0
      %781 = vmatmul.mubr.bf16.gmra.mxu0 %v661
      %v782 = vpop.f32.mrf.mxu0
      %v783 = vadd.f32 %v621, %v782
      %v784 = vpop.f32.mrf.mxu0
      %v785 = vpop.f32.mrf.mxu0
      %v786 = vadd.f32 %v621, %v785
      %v787 = vpop.f32.mrf.mxu0
      %788 = vmatprep.mubr.bf16.mxu0 0
      %789 = vmatmul.mubr.bf16.gmra.mxu0 %v664
      %v790 = vpop.f32.mrf.mxu0
      %v791 = vadd.f32 %v621, %v790
      %v792 = vpop.f32.mrf.mxu0
      %v793 = vpop.f32.mrf.mxu0
      %v794 = vadd.f32 %v621, %v793
      %v795 = vpop.f32.mrf.mxu0
      %796 = vmatprep.mubr.bf16.mxu0 0
      %797 = vmatmul.mubr.bf16.gmra.mxu0 %v667
      %v798 = vpop.f32.mrf.mxu0
      %v799 = vadd.f32 %v621, %v798
      %v800 = vpop.f32.mrf.mxu0
      %v801 = vpop.f32.mrf.mxu0
      %v802 = vadd.f32 %v621, %v801
      %v803 = vpop.f32.mrf.mxu0
      %804 = vmatprep.mubr.bf16.mxu0 0
      %805 = vmatmul.mubr.bf16.gmra.mxu0 %v670
      %v806 = vpop.f32.mrf.mxu0
      %v807 = vadd.f32 %v621, %v806
      %v808 = vpop.f32.mrf.mxu0
      %v809 = vpop.f32.mrf.mxu0
      %v810 = vadd.f32 %v621, %v809
      %v811 = vpop.f32.mrf.mxu0
      %812 = vmatprep.mubr.bf16.mxu0 0
      %813 = vmatmul.mubr.bf16.gmra.mxu0 %v673
      %v814 = vpop.f32.mrf.mxu0
      %v815 = vadd.f32 %v621, %v814
      %v816 = vpop.f32.mrf.mxu0
      %v817 = vpop.f32.mrf.mxu0
      %v818 = vadd.f32 %v621, %v817
      %v819 = vpop.f32.mrf.mxu0
      %820 = vmatprep.mubr.bf16.mxu0 0
      %821 = vmatmul.mubr.bf16.gmra.mxu0 %v676
      %v822 = vpop.f32.mrf.mxu0
      %v823 = vadd.f32 %v621, %v822
      %v824 = vpop.f32.mrf.mxu0
      %v825 = vpop.f32.mrf.mxu0
      %v826 = vadd.f32 %v621, %v825
      %v827 = vpop.f32.mrf.mxu0
      %828 = vmatprep.mubr.bf16.mxu0 0
      %829 = vmatmul.mubr.bf16.gmra.mxu0 %v679
      %v830 = vpop.f32.mrf.mxu0
      %v831 = vadd.f32 %v621, %v830
      %v832 = vpop.f32.mrf.mxu0
      %v833 = vpop.f32.mrf.mxu0
      %v834 = vadd.f32 %v621, %v833
      %v835 = vpop.f32.mrf.mxu0
      %836 = vmatprep.mubr.bf16.mxu0 0
      %837 = vmatmul.mubr.bf16.gmra.mxu0 %v682
      %v838 = vpop.f32.mrf.mxu0
      %v839 = vadd.f32 %v621, %v838
      %v840 = vpop.f32.mrf.mxu0
      %v841 = vpop.f32.mrf.mxu0
      %v842 = vadd.f32 %v621, %v841
      %v843 = vpop.f32.mrf.mxu0
      %844 = vdwg.mxu0
      %v845 = vmax.f32 %v719, 0.0
      %v846 = vmax.f32 %v722, 0.0
      %v847 = vmax.f32 %v727, 0.0
      %v848 = vmax.f32 %v730, 0.0
      %v849 = vmax.f32 %v735, 0.0
      %v850 = vmax.f32 %v738, 0.0
      %v851 = vmax.f32 %v743, 0.0
      %v852 = vmax.f32 %v746, 0.0
      %v853 = vmax.f32 %v751, 0.0
      %v854 = vmax.f32 %v754, 0.0
      %v855 = vmax.f32 %v759, 0.0
      %v856 = vmax.f32 %v762, 0.0
      %v857 = vmax.f32 %v767, 0.0
      %v858 = vmax.f32 %v770, 0.0
      %v859 = vmax.f32 %v775, 0.0
      %v860 = vmax.f32 %v778, 0.0
      %v861 = vmax.f32 %v783, 0.0
      %v862 = vmax.f32 %v786, 0.0
      %v863 = vmax.f32 %v791, 0.0
      %v864 = vmax.f32 %v794, 0.0
      %v865 = vmax.f32 %v799, 0.0
      %v866 = vmax.f32 %v802, 0.0
      %v867 = vmax.f32 %v807, 0.0
      %v868 = vmax.f32 %v810, 0.0
      %v869 = vmax.f32 %v815, 0.0
      %v870 = vmax.f32 %v818, 0.0
      %v871 = vmax.f32 %v823, 0.0
      %v872 = vmax.f32 %v826, 0.0
      %v873 = vmax.f32 %v831, 0.0
      %v874 = vmax.f32 %v834, 0.0
      %v875 = vmax.f32 %v839, 0.0
      %v876 = vmax.f32 %v842, 0.0
      %v877 = vld [vmem:[%s4] sm:$0x1]
      %v878 = vpack.c.bf16 %v846, %v845
      %v879 = vpack.c.bf16 %v848, %v847
      %v880 = vpack.c.bf16 %v850, %v849
      %v881 = vpack.c.bf16 %v852, %v851
      %v882 = vpack.c.bf16 %v854, %v853
      %v883 = vpack.c.bf16 %v856, %v855
      %v884 = vpack.c.bf16 %v858, %v857
      %v885 = vpack.c.bf16 %v860, %v859
      %v886 = vpack.c.bf16 %v862, %v861
      %v887 = vpack.c.bf16 %v864, %v863
      %v888 = vpack.c.bf16 %v866, %v865
      %v889 = vpack.c.bf16 %v868, %v867
      %v890 = vpack.c.bf16 %v870, %v869
      %v891 = vpack.c.bf16 %v872, %v871
      %v892 = vpack.c.bf16 %v874, %v873
      %v893 = vpack.c.bf16 %v876, %v875
      %v910 = vunpack.c.l.b16 %v878
      %v911 = vunpack.c.h.b16 %v878
      %v912 = vunpack.c.l.b16 %v879
      %v913 = vunpack.c.h.b16 %v879
      %v914 = vunpack.c.l.b16 %v880
      %v915 = vunpack.c.h.b16 %v880
      %v916 = vunpack.c.l.b16 %v881
      %v917 = vunpack.c.h.b16 %v881
      %v918 = vunpack.c.l.b16 %v882
      %v919 = vunpack.c.h.b16 %v882
      %v920 = vunpack.c.l.b16 %v883
      %v921 = vunpack.c.h.b16 %v883
      %v922 = vunpack.c.l.b16 %v884
      %v923 = vunpack.c.h.b16 %v884
      %v924 = vunpack.c.l.b16 %v885
      %v925 = vunpack.c.h.b16 %v885
      %v926 = vunpack.c.l.b16 %v886
      %v927 = vunpack.c.h.b16 %v886
      %v928 = vunpack.c.l.b16 %v887
      %v929 = vunpack.c.h.b16 %v887
      %v930 = vunpack.c.l.b16 %v888
      %v931 = vunpack.c.h.b16 %v888
      %v932 = vunpack.c.l.b16 %v889
      %v933 = vunpack.c.h.b16 %v889
      %v934 = vunpack.c.l.b16 %v890
      %v935 = vunpack.c.h.b16 %v890
      %v936 = vunpack.c.l.b16 %v891
      %v937 = vunpack.c.h.b16 %v891
      %v938 = vunpack.c.l.b16 %v892
      %v939 = vunpack.c.h.b16 %v892
      %v940 = vunpack.c.l.b16 %v893
      %v941 = vunpack.c.h.b16 %v893
      %v942 = vpack.c.b16 %v910, %v910
      %v943 = vpack.c.b16 %v911, %v911
      %v944 = vpack.c.b16 %v912, %v912
      %v945 = vpack.c.b16 %v913, %v913
      %v946 = vpack.c.b16 %v914, %v914
      %v947 = vpack.c.b16 %v915, %v915
      %v948 = vpack.c.b16 %v916, %v916
      %v949 = vpack.c.b16 %v917, %v917
      %v950 = vpack.c.b16 %v918, %v918
      %v951 = vpack.c.b16 %v919, %v919
      %v952 = vpack.c.b16 %v920, %v920
      %v953 = vpack.c.b16 %v921, %v921
      %v954 = vpack.c.b16 %v922, %v922
      %v955 = vpack.c.b16 %v923, %v923
      %v956 = vpack.c.b16 %v924, %v924
      %v957 = vpack.c.b16 %v925, %v925
      %v958 = vpack.c.b16 %v926, %v926
      %v959 = vpack.c.b16 %v927, %v927
      %v960 = vpack.c.b16 %v928, %v928
      %v961 = vpack.c.b16 %v929, %v929
      %v962 = vpack.c.b16 %v930, %v930
      %v963 = vpack.c.b16 %v931, %v931
      %v964 = vpack.c.b16 %v932, %v932
      %v965 = vpack.c.b16 %v933, %v933
      %v966 = vpack.c.b16 %v934, %v934
      %v967 = vpack.c.b16 %v935, %v935
      %v968 = vpack.c.b16 %v936, %v936
      %v969 = vpack.c.b16 %v937, %v937
      %v970 = vpack.c.b16 %v938, %v938
      %v971 = vpack.c.b16 %v939, %v939
      %v972 = vpack.c.b16 %v940, %v940
      %v973 = vpack.c.b16 %v941, %v941
      %vm974 = vsmask.f32 4368
      %vm975 = vmor %vm452, %vm974
      %v977 = vshrl.u32 %v942, 16
      %v979 = vrot.slane %v977, 7
      %v980 = vshll.u32 %v942, 16
      %v982 = vor.u32 %v979, %v980
      %v983 = vrot.slane %v979, 4
      %v985 = vshrl.u32 %v943, 16
      %v987 = vrot.slane %v985, 7
      %v988 = vshll.u32 %v943, 16
      %v990 = vor.u32 %v987, %v988
      %v991 = vsel %vm975, %v983, %v990
      %v992 = vrot.slane %v987, 4
      %v994 = vshrl.u32 %v944, 16
      %v996 = vrot.slane %v994, 7
      %v997 = vshll.u32 %v944, 16
      %v999 = vor.u32 %v996, %v997
      %v1000 = vrot.slane %v996, 4
      %v1002 = vshrl.u32 %v945, 16
      %v1004 = vrot.slane %v1002, 7
      %v1005 = vshll.u32 %v945, 16
      %v1007 = vor.u32 %v1004, %v1005
      %v1008 = vsel %vm975, %v1000, %v1007
      %v1009 = vrot.slane %v1004, 4
      %v1011 = vshrl.u32 %v946, 16
      %v1013 = vrot.slane %v1011, 7
      %v1014 = vshll.u32 %v946, 16
      %v1016 = vor.u32 %v1013, %v1014
      %v1017 = vrot.slane %v1013, 4
      %v1019 = vshrl.u32 %v947, 16
      %v1021 = vrot.slane %v1019, 7
      %v1022 = vshll.u32 %v947, 16
      %v1024 = vor.u32 %v1021, %v1022
      %v1025 = vsel %vm975, %v1017, %v1024
      %v1026 = vrot.slane %v1021, 4
      %v1028 = vshrl.u32 %v948, 16
      %v1030 = vrot.slane %v1028, 7
      %v1031 = vshll.u32 %v948, 16
      %v1033 = vor.u32 %v1030, %v1031
      %v1034 = vrot.slane %v1030, 4
      %v1036 = vshrl.u32 %v949, 16
      %v1038 = vrot.slane %v1036, 7
      %v1039 = vshll.u32 %v949, 16
      %v1041 = vor.u32 %v1038, %v1039
      %v1042 = vsel %vm975, %v1034, %v1041
      %v1043 = vrot.slane %v1038, 4
      %v1045 = vshrl.u32 %v950, 16
      %v1047 = vrot.slane %v1045, 7
      %v1048 = vshll.u32 %v950, 16
      %v1050 = vor.u32 %v1047, %v1048
      %v1051 = vrot.slane %v1047, 4
      %v1053 = vshrl.u32 %v951, 16
      %v1055 = vrot.slane %v1053, 7
      %v1056 = vshll.u32 %v951, 16
      %v1058 = vor.u32 %v1055, %v1056
      %v1059 = vsel %vm975, %v1051, %v1058
      %v1060 = vrot.slane %v1055, 4
      %v1062 = vshrl.u32 %v952, 16
      %v1064 = vrot.slane %v1062, 7
      %v1065 = vshll.u32 %v952, 16
      %v1067 = vor.u32 %v1064, %v1065
      %v1068 = vrot.slane %v1064, 4
      %v1070 = vshrl.u32 %v953, 16
      %v1072 = vrot.slane %v1070, 7
      %v1073 = vshll.u32 %v953, 16
      %v1075 = vor.u32 %v1072, %v1073
      %v1076 = vsel %vm975, %v1068, %v1075
      %v1077 = vrot.slane %v1072, 4
      %v1079 = vshrl.u32 %v954, 16
      %v1081 = vrot.slane %v1079, 7
      %v1082 = vshll.u32 %v954, 16
      %v1084 = vor.u32 %v1081, %v1082
      %v1085 = vrot.slane %v1081, 4
      %v1087 = vshrl.u32 %v955, 16
      %v1089 = vrot.slane %v1087, 7
      %v1090 = vshll.u32 %v955, 16
      %v1092 = vor.u32 %v1089, %v1090
      %v1093 = vsel %vm975, %v1085, %v1092
      %v1094 = vrot.slane %v1089, 4
      %v1096 = vshrl.u32 %v956, 16
      %v1098 = vrot.slane %v1096, 7
      %v1099 = vshll.u32 %v956, 16
      %v1101 = vor.u32 %v1098, %v1099
      %v1102 = vrot.slane %v1098, 4
      %v1104 = vshrl.u32 %v957, 16
      %v1106 = vrot.slane %v1104, 7
      %v1107 = vshll.u32 %v957, 16
      %v1109 = vor.u32 %v1106, %v1107
      %v1110 = vsel %vm975, %v1102, %v1109
      %v1111 = vrot.slane %v1106, 4
      %v1113 = vshrl.u32 %v958, 16
      %v1115 = vrot.slane %v1113, 7
      %v1116 = vshll.u32 %v958, 16
      %v1118 = vor.u32 %v1115, %v1116
      %v1119 = vrot.slane %v1115, 4
      %v1121 = vshrl.u32 %v959, 16
      %v1123 = vrot.slane %v1121, 7
      %v1124 = vshll.u32 %v959, 16
      %v1126 = vor.u32 %v1123, %v1124
      %v1127 = vsel %vm975, %v1119, %v1126
      %v1128 = vrot.slane %v1123, 4
      %v1130 = vshrl.u32 %v960, 16
      %v1132 = vrot.slane %v1130, 7
      %v1133 = vshll.u32 %v960, 16
      %v1135 = vor.u32 %v1132, %v1133
      %v1136 = vrot.slane %v1132, 4
      %v1138 = vshrl.u32 %v961, 16
      %v1140 = vrot.slane %v1138, 7
      %v1141 = vshll.u32 %v961, 16
      %v1143 = vor.u32 %v1140, %v1141
      %v1144 = vsel %vm975, %v1136, %v1143
      %v1145 = vrot.slane %v1140, 4
      %v1147 = vshrl.u32 %v962, 16
      %v1149 = vrot.slane %v1147, 7
      %v1150 = vshll.u32 %v962, 16
      %v1152 = vor.u32 %v1149, %v1150
      %v1153 = vrot.slane %v1149, 4
      %v1155 = vshrl.u32 %v963, 16
      %v1157 = vrot.slane %v1155, 7
      %v1158 = vshll.u32 %v963, 16
      %v1160 = vor.u32 %v1157, %v1158
      %v1161 = vsel %vm975, %v1153, %v1160
      %v1162 = vrot.slane %v1157, 4
      %v1164 = vshrl.u32 %v964, 16
      %v1166 = vrot.slane %v1164, 7
      %v1167 = vshll.u32 %v964, 16
      %v1169 = vor.u32 %v1166, %v1167
      %v1170 = vrot.slane %v1166, 4
      %v1172 = vshrl.u32 %v965, 16
      %v1174 = vrot.slane %v1172, 7
      %v1175 = vshll.u32 %v965, 16
      %v1177 = vor.u32 %v1174, %v1175
      %v1178 = vsel %vm975, %v1170, %v1177
      %v1179 = vrot.slane %v1174, 4
      %v1181 = vshrl.u32 %v966, 16
      %v1183 = vrot.slane %v1181, 7
      %v1184 = vshll.u32 %v966, 16
      %v1186 = vor.u32 %v1183, %v1184
      %v1187 = vrot.slane %v1183, 4
      %v1189 = vshrl.u32 %v967, 16
      %v1191 = vrot.slane %v1189, 7
      %v1192 = vshll.u32 %v967, 16
      %v1194 = vor.u32 %v1191, %v1192
      %v1195 = vsel %vm975, %v1187, %v1194
      %v1196 = vrot.slane %v1191, 4
      %v1198 = vshrl.u32 %v968, 16
      %v1200 = vrot.slane %v1198, 7
      %v1201 = vshll.u32 %v968, 16
      %v1203 = vor.u32 %v1200, %v1201
      %v1204 = vrot.slane %v1200, 4
      %v1206 = vshrl.u32 %v969, 16
      %v1208 = vrot.slane %v1206, 7
      %v1209 = vshll.u32 %v969, 16
      %v1211 = vor.u32 %v1208, %v1209
      %v1212 = vsel %vm975, %v1204, %v1211
      %v1213 = vrot.slane %v1208, 4
      %v1215 = vshrl.u32 %v970, 16
      %v1217 = vrot.slane %v1215, 7
      %v1218 = vshll.u32 %v970, 16
      %v1220 = vor.u32 %v1217, %v1218
      %v1221 = vrot.slane %v1217, 4
      %v1223 = vshrl.u32 %v971, 16
      %v1225 = vrot.slane %v1223, 7
      %v1226 = vshll.u32 %v971, 16
      %v1228 = vor.u32 %v1225, %v1226
      %v1229 = vsel %vm975, %v1221, %v1228
      %v1230 = vrot.slane %v1225, 4
      %v1232 = vshrl.u32 %v972, 16
      %v1234 = vrot.slane %v1232, 7
      %v1235 = vshll.u32 %v972, 16
      %v1237 = vor.u32 %v1234, %v1235
      %v1238 = vrot.slane %v1234, 4
      %v1240 = vshrl.u32 %v973, 16
      %v1242 = vrot.slane %v1240, 7
      %v1243 = vshll.u32 %v973, 16
      %v1245 = vor.u32 %v1242, %v1243
      %v1246 = vsel %vm975, %v1238, %v1245
      %v1247 = vrot.slane %v1242, 4
      %s1296 = scalar_lea.vmem [#allocation2], 12
      %vm1297 = vcmask 60416
      %vm1298 = vmand %vm1297, %vm508
      %v1299 = vld [vmem:[%s1296] sm:$0xf]
      %v1300 = vsel %vm1298, %v982, %v1299
      %1301 = vst [vmem:[%s1296] sm:$0xf] %v1300
      %1302 = vst.msk [vmem:[%s1296 + $0x4] sm:$0xf] %vm442, %v991
      %v1303 = vld [vmem:[%s1296 + $0x8] sm:$0x1]
      %v1304 = vsel %vm453, %v992, %v1303
      %1305 = vst [vmem:[%s1296 + $0x8] sm:$0x1] %v1304
      %v1306 = vld [vmem:[%s1296 + $0xc] sm:$0xf]
      %v1307 = vsel %vm1298, %v999, %v1306
      %1308 = vst [vmem:[%s1296 + $0xc] sm:$0xf] %v1307
      %1309 = vst.msk [vmem:[%s1296 + $0x10] sm:$0xf] %vm442, %v1008
      %v1310 = vld [vmem:[%s1296 + $0x14] sm:$0x1]
      %v1311 = vsel %vm453, %v1009, %v1310
      %1312 = vst [vmem:[%s1296 + $0x14] sm:$0x1] %v1311
      %v1313 = vld [vmem:[%s1296 + $0x18] sm:$0xf]
      %v1314 = vsel %vm1298, %v1016, %v1313
      %1315 = vst [vmem:[%s1296 + $0x18] sm:$0xf] %v1314
      %1316 = vst.msk [vmem:[%s1296 + $0x1c] sm:$0xf] %vm442, %v1025
      %v1317 = vld [vmem:[%s1296 + $0x20] sm:$0x1]
      %v1318 = vsel %vm453, %v1026, %v1317
      %1319 = vst [vmem:[%s1296 + $0x20] sm:$0x1] %v1318
      %v1320 = vld [vmem:[%s1296 + $0x24] sm:$0xf]
      %v1321 = vsel %vm1298, %v1033, %v1320
      %1322 = vst [vmem:[%s1296 + $0x24] sm:$0xf] %v1321
      %1323 = vst.msk [vmem:[%s1296 + $0x28] sm:$0xf] %vm442, %v1042
      %v1324 = vld [vmem:[%s1296 + $0x2c] sm:$0x1]
      %v1325 = vsel %vm453, %v1043, %v1324
      %1326 = vst [vmem:[%s1296 + $0x2c] sm:$0x1] %v1325
      %v1327 = vld [vmem:[%s1296 + $0x30] sm:$0xf]
      %v1328 = vsel %vm1298, %v1050, %v1327
      %1329 = vst [vmem:[%s1296 + $0x30] sm:$0xf] %v1328
      %1330 = vst.msk [vmem:[%s1296 + $0x34] sm:$0xf] %vm442, %v1059
      %v1331 = vld [vmem:[%s1296 + $0x38] sm:$0x1]
      %v1332 = vsel %vm453, %v1060, %v1331
      %1333 = vst [vmem:[%s1296 + $0x38] sm:$0x1] %v1332
      %v1334 = vld [vmem:[%s1296 + $0x3c] sm:$0xf]
      %v1335 = vsel %vm1298, %v1067, %v1334
      %1336 = vst [vmem:[%s1296 + $0x3c] sm:$0xf] %v1335
      %1337 = vst.msk [vmem:[%s1296 + $0x40] sm:$0xf] %vm442, %v1076
      %v1338 = vld [vmem:[%s1296 + $0x44] sm:$0x1]
      %v1339 = vsel %vm453, %v1077, %v1338
      %1340 = vst [vmem:[%s1296 + $0x44] sm:$0x1] %v1339
      %v1341 = vld [vmem:[%s1296 + $0x48] sm:$0xf]
      %v1342 = vsel %vm1298, %v1084, %v1341
      %1343 = vst [vmem:[%s1296 + $0x48] sm:$0xf] %v1342
      %1344 = vst.msk [vmem:[%s1296 + $0x4c] sm:$0xf] %vm442, %v1093
      %v1345 = vld [vmem:[%s1296 + $0x50] sm:$0x1]
      %v1346 = vsel %vm453, %v1094, %v1345
      %1347 = vst [vmem:[%s1296 + $0x50] sm:$0x1] %v1346
      %v1348 = vld [vmem:[%s1296 + $0x54] sm:$0xf]
      %v1349 = vsel %vm1298, %v1101, %v1348
      %1350 = vst [vmem:[%s1296 + $0x54] sm:$0xf] %v1349
      %1351 = vst.msk [vmem:[%s1296 + $0x58] sm:$0xf] %vm442, %v1110
      %v1352 = vld [vmem:[%s1296 + $0x5c] sm:$0x1]
      %v1353 = vsel %vm453, %v1111, %v1352
      %1354 = vst [vmem:[%s1296 + $0x5c] sm:$0x1] %v1353
      %v1355 = vld [vmem:[%s1296 + $0x60] sm:$0xf]
      %v1356 = vsel %vm1298, %v1118, %v1355
      %1357 = vst [vmem:[%s1296 + $0x60] sm:$0xf] %v1356
      %1358 = vst.msk [vmem:[%s1296 + $0x64] sm:$0xf] %vm442, %v1127
      %v1359 = vld [vmem:[%s1296 + $0x68] sm:$0x1]
      %v1360 = vsel %vm453, %v1128, %v1359
      %1361 = vst [vmem:[%s1296 + $0x68] sm:$0x1] %v1360
      %v1362 = vld [vmem:[%s1296 + $0x6c] sm:$0xf]
      %v1363 = vsel %vm1298, %v1135, %v1362
      %1364 = vst [vmem:[%s1296 + $0x6c] sm:$0xf] %v1363
      %1365 = vst.msk [vmem:[%s1296 + $0x70] sm:$0xf] %vm442, %v1144
      %v1366 = vld [vmem:[%s1296 + $0x74] sm:$0x1]
      %v1367 = vsel %vm453, %v1145, %v1366
      %1368 = vst [vmem:[%s1296 + $0x74] sm:$0x1] %v1367
      %v1369 = vld [vmem:[%s1296 + $0x78] sm:$0xf]
      %v1370 = vsel %vm1298, %v1152, %v1369
      %1371 = vst [vmem:[%s1296 + $0x78] sm:$0xf] %v1370
      %1372 = vst.msk [vmem:[%s1296 + $0x7c] sm:$0xf] %vm442, %v1161
      %v1373 = vld [vmem:[%s1296 + $0x80] sm:$0x1]
      %v1374 = vsel %vm453, %v1162, %v1373
      %1375 = vst [vmem:[%s1296 + $0x80] sm:$0x1] %v1374
      %v1376 = vld [vmem:[%s1296 + $0x84] sm:$0xf]
      %v1377 = vsel %vm1298, %v1169, %v1376
      %1378 = vst [vmem:[%s1296 + $0x84] sm:$0xf] %v1377
      %1379 = vst.msk [vmem:[%s1296 + $0x88] sm:$0xf] %vm442, %v1178
      %v1380 = vld [vmem:[%s1296 + $0x8c] sm:$0x1]
      %v1381 = vsel %vm453, %v1179, %v1380
      %1382 = vst [vmem:[%s1296 + $0x8c] sm:$0x1] %v1381
      %v1383 = vld [vmem:[%s1296 + $0x90] sm:$0xf]
      %v1384 = vsel %vm1298, %v1186, %v1383
      %1385 = vst [vmem:[%s1296 + $0x90] sm:$0xf] %v1384
      %1386 = vst.msk [vmem:[%s1296 + $0x94] sm:$0xf] %vm442, %v1195
      %v1387 = vld [vmem:[%s1296 + $0x98] sm:$0x1]
      %v1388 = vsel %vm453, %v1196, %v1387
      %1389 = vst [vmem:[%s1296 + $0x98] sm:$0x1] %v1388
      %v1390 = vld [vmem:[%s1296 + $0x9c] sm:$0xf]
      %v1391 = vsel %vm1298, %v1203, %v1390
      %1392 = vst [vmem:[%s1296 + $0x9c] sm:$0xf] %v1391
      %1393 = vst.msk [vmem:[%s1296 + $0xa0] sm:$0xf] %vm442, %v1212
      %v1394 = vld [vmem:[%s1296 + $0xa4] sm:$0x1]
      %v1395 = vsel %vm453, %v1213, %v1394
      %1396 = vst [vmem:[%s1296 + $0xa4] sm:$0x1] %v1395
      %v1397 = vld [vmem:[%s1296 + $0xa8] sm:$0xf]
      %v1398 = vsel %vm1298, %v1220, %v1397
      %1399 = vst [vmem:[%s1296 + $0xa8] sm:$0xf] %v1398
      %1400 = vst.msk [vmem:[%s1296 + $0xac] sm:$0xf] %vm442, %v1229
      %v1401 = vld [vmem:[%s1296 + $0xb0] sm:$0x1]
      %v1402 = vsel %vm453, %v1230, %v1401
      %1403 = vst [vmem:[%s1296 + $0xb0] sm:$0x1] %v1402
      %v1404 = vld [vmem:[%s1296 + $0xb4] sm:$0xf]
      %v1405 = vsel %vm1298, %v1237, %v1404
      %1406 = vst [vmem:[%s1296 + $0xb4] sm:$0xf] %v1405
      %1407 = vst.msk [vmem:[%s1296 + $0xb8] sm:$0xf] %vm442, %v1246
      %v1408 = vld [vmem:[%s1296 + $0xbc] sm:$0x1]
      %v1409 = vsel %vm453, %v1247, %v1408
      %1410 = vst [vmem:[%s1296 + $0xbc] sm:$0x1] %v1409
      %v1411 = vld [vmem:[#allocation2] sm:$0xf]
      %v1412 = vld [vmem:[#allocation2 + $0x4] sm:$0xf]
      %v1413 = vld [vmem:[#allocation2 + $0xc] sm:$0xf]
      %v1414 = vld [vmem:[#allocation2 + $0x10] sm:$0xf]
      %v1415 = vld [vmem:[#allocation2 + $0x18] sm:$0xf]
      %v1416 = vld [vmem:[#allocation2 + $0x1c] sm:$0xf]
      %v1417 = vld [vmem:[#allocation2 + $0x24] sm:$0xf]
      %v1418 = vld [vmem:[#allocation2 + $0x28] sm:$0xf]
      %v1419 = vld [vmem:[#allocation2 + $0x30] sm:$0xf]
      %v1420 = vld [vmem:[#allocation2 + $0x34] sm:$0xf]
      %v1421 = vld [vmem:[#allocation2 + $0x3c] sm:$0xf]
      %v1422 = vld [vmem:[#allocation2 + $0x40] sm:$0xf]
      %v1423 = vld [vmem:[#allocation2 + $0x48] sm:$0xf]
      %v1424 = vld [vmem:[#allocation2 + $0x4c] sm:$0xf]
      %v1425 = vld [vmem:[#allocation2 + $0x54] sm:$0xf]
      %v1426 = vld [vmem:[#allocation2 + $0x58] sm:$0xf]
      %v1427 = vld [vmem:[#allocation2 + $0x60] sm:$0xf]
      %v1428 = vld [vmem:[#allocation2 + $0x64] sm:$0xf]
      %v1429 = vld [vmem:[#allocation2 + $0x6c] sm:$0xf]
      %v1430 = vld [vmem:[#allocation2 + $0x70] sm:$0xf]
      %v1431 = vld [vmem:[#allocation2 + $0x78] sm:$0xf]
      %v1432 = vld [vmem:[#allocation2 + $0x7c] sm:$0xf]
      %v1433 = vld [vmem:[#allocation2 + $0x84] sm:$0xf]
      %v1434 = vld [vmem:[#allocation2 + $0x88] sm:$0xf]
      %v1435 = vld [vmem:[#allocation2 + $0x90] sm:$0xf]
      %v1436 = vld [vmem:[#allocation2 + $0x94] sm:$0xf]
      %v1437 = vld [vmem:[#allocation2 + $0x9c] sm:$0xf]
      %v1438 = vld [vmem:[#allocation2 + $0xa0] sm:$0xf]
      %v1439 = vld [vmem:[#allocation2 + $0xa8] sm:$0xf]
      %v1440 = vld [vmem:[#allocation2 + $0xac] sm:$0xf]
      %v1441 = vld [vmem:[#allocation2 + $0xb4] sm:$0xf]
      %v1442 = vld [vmem:[#allocation2 + $0xb8] sm:$0xf]
      %v1443 = vld [vmem:[%s3] sm:$0xf]
      %v1476 = vunpack.c.l.b16 %v1411
      %v1477 = vunpack.c.l.b16 %v1412
      %v1478 = vunpack.c.l.b16 %v1413
      %v1479 = vunpack.c.l.b16 %v1414
      %v1480 = vunpack.c.l.b16 %v1415
      %v1481 = vunpack.c.l.b16 %v1416
      %v1482 = vunpack.c.l.b16 %v1417
      %v1483 = vunpack.c.l.b16 %v1418
      %v1484 = vunpack.c.l.b16 %v1419
      %v1485 = vunpack.c.l.b16 %v1420
      %v1486 = vunpack.c.l.b16 %v1421
      %v1487 = vunpack.c.l.b16 %v1422
      %v1488 = vunpack.c.l.b16 %v1423
      %v1489 = vunpack.c.l.b16 %v1424
      %v1490 = vunpack.c.l.b16 %v1425
      %v1491 = vunpack.c.l.b16 %v1426
      %v1492 = vunpack.c.l.b16 %v1427
      %v1493 = vunpack.c.l.b16 %v1428
      %v1494 = vunpack.c.l.b16 %v1429
      %v1495 = vunpack.c.l.b16 %v1430
      %v1496 = vunpack.c.l.b16 %v1431
      %v1497 = vunpack.c.l.b16 %v1432
      %v1498 = vunpack.c.l.b16 %v1433
      %v1499 = vunpack.c.l.b16 %v1434
      %v1500 = vunpack.c.l.b16 %v1435
      %v1501 = vunpack.c.l.b16 %v1436
      %v1502 = vunpack.c.l.b16 %v1437
      %v1503 = vunpack.c.l.b16 %v1438
      %v1504 = vunpack.c.l.b16 %v1439
      %v1505 = vunpack.c.l.b16 %v1440
      %v1506 = vunpack.c.l.b16 %v1441
      %v1507 = vunpack.c.l.b16 %v1442
      %v1508 = vpack.c.b16 %v1477, %v1476
      %v1509 = vpack.c.b16 %v1479, %v1478
      %v1510 = vpack.c.b16 %v1481, %v1480
      %v1511 = vpack.c.b16 %v1483, %v1482
      %v1512 = vpack.c.b16 %v1485, %v1484
      %v1513 = vpack.c.b16 %v1487, %v1486
      %v1514 = vpack.c.b16 %v1489, %v1488
      %v1515 = vpack.c.b16 %v1491, %v1490
      %v1516 = vpack.c.b16 %v1493, %v1492
      %v1517 = vpack.c.b16 %v1495, %v1494
      %v1518 = vpack.c.b16 %v1497, %v1496
      %v1519 = vpack.c.b16 %v1499, %v1498
      %v1520 = vpack.c.b16 %v1501, %v1500
      %v1521 = vpack.c.b16 %v1503, %v1502
      %v1522 = vpack.c.b16 %v1505, %v1504
      %v1523 = vpack.c.b16 %v1507, %v1506
      %vm1524 = vcmask 64512
      %v1526 = vsel %vm1524, %v1508, 0
      %v1529 = vsel %vm1524, %v1509, 0
      %v1532 = vsel %vm1524, %v1510, 0
      %v1535 = vsel %vm1524, %v1511, 0
      %v1538 = vsel %vm1524, %v1512, 0
      %v1541 = vsel %vm1524, %v1513, 0
      %v1544 = vsel %vm1524, %v1514, 0
      %v1547 = vsel %vm1524, %v1515, 0
      %v1550 = vsel %vm1524, %v1516, 0
      %v1553 = vsel %vm1524, %v1517, 0
      %v1556 = vsel %vm1524, %v1518, 0
      %v1559 = vsel %vm1524, %v1519, 0
      %v1562 = vsel %vm1524, %v1520, 0
      %v1565 = vsel %vm1524, %v1521, 0
      %v1568 = vsel %vm1524, %v1522, 0
      %v1571 = vsel %vm1524, %v1523, 0
      %vm1573 = vcmask 1043456
      %v1575 = vsel %vm1573, %v1443, 0
      %1577 = vmatprep.subr.bf16.mxu0 0
      %1578 = vmatpush1.bf16.msra.mxu0 0
      %1579 = vmatprep.subr.bf16.mxu0 0
      %1580 = vmatpush1.bf16.msra.mxu0 0
      %1581 = vmatprep.subr.bf16.mxu0 0
      %1582 = vmatpush1.bf16.msra.mxu0 0
      %1583 = vmatprep.subr.bf16.mxu0 0
      %1584 = vmatpush1.bf16.msra.mxu0 0
      %1585 = vmatprep.subr.bf16.mxu0 0
      %1586 = vmatpush1.bf16.msra.mxu0 0
      %1587 = vmatprep.subr.bf16.mxu0 0
      %1588 = vmatpush1.bf16.msra.mxu0 0
      %1589 = vmatprep.subr.bf16.mxu0 0
      %1590 = vmatpush1.bf16.msra.mxu0 0
      %1591 = vmatprep.subr.bf16.mxu0 0
      %1592 = vmatpush1.bf16.msra.mxu0 %v1575
      %1593 = vmatprep.subr.bf16.mxu0 0
      %1594 = vmatpush2.bf16.msra.mxu0 0
      %1595 = vmatprep.subr.bf16.mxu0 0
      %1596 = vmatpush2.bf16.msra.mxu0 0
      %1597 = vmatprep.subr.bf16.mxu0 0
      %1598 = vmatpush2.bf16.msra.mxu0 0
      %1599 = vmatprep.subr.bf16.mxu0 0
      %1600 = vmatpush2.bf16.msra.mxu0 0
      %1601 = vmatprep.subr.bf16.mxu0 0
      %1602 = vmatpush2.bf16.msra.mxu0 0
      %1603 = vmatprep.subr.bf16.mxu0 0
      %1604 = vmatpush2.bf16.msra.mxu0 0
      %1605 = vmatprep.subr.bf16.mxu0 0
      %1606 = vmatpush2.bf16.msra.mxu0 0
      %1607 = vmatprep.subr.bf16.mxu0 0
      %1608 = vmatpush2.bf16.msra.mxu0 0
      %1609 = vmatprep.mubr.bf16.mxu0 0
      %1610 = vmatmul.mubr.bf16.gmra.mxu0 %v1526
      %v1611 = vpop.f32.mrf.mxu0
      %v1612 = vadd.f32 0.0, %v1611
      %v1613 = vpop.f32.mrf.mxu0
      %v1614 = vpop.f32.mrf.mxu0
      %v1615 = vadd.f32 0.0, %v1614
      %v1616 = vpop.f32.mrf.mxu0
      %1617 = vmatprep.mubr.bf16.mxu0 0
      %1618 = vmatmul.mubr.bf16.gmra.mxu0 %v1529
      %v1619 = vpop.f32.mrf.mxu0
      %v1620 = vadd.f32 0.0, %v1619
      %v1621 = vpop.f32.mrf.mxu0
      %v1622 = vpop.f32.mrf.mxu0
      %v1623 = vadd.f32 0.0, %v1622
      %v1624 = vpop.f32.mrf.mxu0
      %1625 = vmatprep.mubr.bf16.mxu0 0
      %1626 = vmatmul.mubr.bf16.gmra.mxu0 %v1532
      %v1627 = vpop.f32.mrf.mxu0
      %v1628 = vadd.f32 0.0, %v1627
      %v1629 = vpop.f32.mrf.mxu0
      %v1630 = vpop.f32.mrf.mxu0
      %v1631 = vadd.f32 0.0, %v1630
      %v1632 = vpop.f32.mrf.mxu0
      %1633 = vmatprep.mubr.bf16.mxu0 0
      %1634 = vmatmul.mubr.bf16.gmra.mxu0 %v1535
      %v1635 = vpop.f32.mrf.mxu0
      %v1636 = vadd.f32 0.0, %v1635
      %v1637 = vpop.f32.mrf.mxu0
      %v1638 = vpop.f32.mrf.mxu0
      %v1639 = vadd.f32 0.0, %v1638
      %v1640 = vpop.f32.mrf.mxu0
      %1641 = vmatprep.mubr.bf16.mxu0 0
      %1642 = vmatmul.mubr.bf16.gmra.mxu0 %v1538
      %v1643 = vpop.f32.mrf.mxu0
      %v1644 = vadd.f32 0.0, %v1643
      %v1645 = vpop.f32.mrf.mxu0
      %v1646 = vpop.f32.mrf.mxu0
      %v1647 = vadd.f32 0.0, %v1646
      %v1648 = vpop.f32.mrf.mxu0
      %1649 = vmatprep.mubr.bf16.mxu0 0
      %1650 = vmatmul.mubr.bf16.gmra.mxu0 %v1541
      %v1651 = vpop.f32.mrf.mxu0
      %v1652 = vadd.f32 0.0, %v1651
      %v1653 = vpop.f32.mrf.mxu0
      %v1654 = vpop.f32.mrf.mxu0
      %v1655 = vadd.f32 0.0, %v1654
      %v1656 = vpop.f32.mrf.mxu0
      %1657 = vmatprep.mubr.bf16.mxu0 0
      %1658 = vmatmul.mubr.bf16.gmra.mxu0 %v1544
      %v1659 = vpop.f32.mrf.mxu0
      %v1660 = vadd.f32 0.0, %v1659
      %v1661 = vpop.f32.mrf.mxu0
      %v1662 = vpop.f32.mrf.mxu0
      %v1663 = vadd.f32 0.0, %v1662
      %v1664 = vpop.f32.mrf.mxu0
      %1665 = vmatprep.mubr.bf16.mxu0 0
      %1666 = vmatmul.mubr.bf16.gmra.mxu0 %v1547
      %v1667 = vpop.f32.mrf.mxu0
      %v1668 = vadd.f32 0.0, %v1667
      %v1669 = vpop.f32.mrf.mxu0
      %v1670 = vpop.f32.mrf.mxu0
      %v1671 = vadd.f32 0.0, %v1670
      %v1672 = vpop.f32.mrf.mxu0
      %1673 = vmatprep.mubr.bf16.mxu0 0
      %1674 = vmatmul.mubr.bf16.gmra.mxu0 %v1550
      %v1675 = vpop.f32.mrf.mxu0
      %v1676 = vadd.f32 0.0, %v1675
      %v1677 = vpop.f32.mrf.mxu0
      %v1678 = vpop.f32.mrf.mxu0
      %v1679 = vadd.f32 0.0, %v1678
      %v1680 = vpop.f32.mrf.mxu0
      %1681 = vmatprep.mubr.bf16.mxu0 0
      %1682 = vmatmul.mubr.bf16.gmra.mxu0 %v1553
      %v1683 = vpop.f32.mrf.mxu0
      %v1684 = vadd.f32 0.0, %v1683
      %v1685 = vpop.f32.mrf.mxu0
      %v1686 = vpop.f32.mrf.mxu0
      %v1687 = vadd.f32 0.0, %v1686
      %v1688 = vpop.f32.mrf.mxu0
      %1689 = vmatprep.mubr.bf16.mxu0 0
      %1690 = vmatmul.mubr.bf16.gmra.mxu0 %v1556
      %v1691 = vpop.f32.mrf.mxu0
      %v1692 = vadd.f32 0.0, %v1691
      %v1693 = vpop.f32.mrf.mxu0
      %v1694 = vpop.f32.mrf.mxu0
      %v1695 = vadd.f32 0.0, %v1694
      %v1696 = vpop.f32.mrf.mxu0
      %1697 = vmatprep.mubr.bf16.mxu0 0
      %1698 = vmatmul.mubr.bf16.gmra.mxu0 %v1559
      %v1699 = vpop.f32.mrf.mxu0
      %v1700 = vadd.f32 0.0, %v1699
      %v1701 = vpop.f32.mrf.mxu0
      %v1702 = vpop.f32.mrf.mxu0
      %v1703 = vadd.f32 0.0, %v1702
      %v1704 = vpop.f32.mrf.mxu0
      %1705 = vmatprep.mubr.bf16.mxu0 0
      %1706 = vmatmul.mubr.bf16.gmra.mxu0 %v1562
      %v1707 = vpop.f32.mrf.mxu0
      %v1708 = vadd.f32 0.0, %v1707
      %v1709 = vpop.f32.mrf.mxu0
      %v1710 = vpop.f32.mrf.mxu0
      %v1711 = vadd.f32 0.0, %v1710
      %v1712 = vpop.f32.mrf.mxu0
      %1713 = vmatprep.mubr.bf16.mxu0 0
      %1714 = vmatmul.mubr.bf16.gmra.mxu0 %v1565
      %v1715 = vpop.f32.mrf.mxu0
      %v1716 = vadd.f32 0.0, %v1715
      %v1717 = vpop.f32.mrf.mxu0
      %v1718 = vpop.f32.mrf.mxu0
      %v1719 = vadd.f32 0.0, %v1718
      %v1720 = vpop.f32.mrf.mxu0
      %1721 = vmatprep.mubr.bf16.mxu0 0
      %1722 = vmatmul.mubr.bf16.gmra.mxu0 %v1568
      %v1723 = vpop.f32.mrf.mxu0
      %v1724 = vadd.f32 0.0, %v1723
      %v1725 = vpop.f32.mrf.mxu0
      %v1726 = vpop.f32.mrf.mxu0
      %v1727 = vadd.f32 0.0, %v1726
      %v1728 = vpop.f32.mrf.mxu0
      %1729 = vmatprep.mubr.bf16.mxu0 0
      %1730 = vmatmul.mubr.bf16.gmra.mxu0 %v1571
      %v1731 = vpop.f32.mrf.mxu0
      %v1732 = vadd.f32 0.0, %v1731
      %v1733 = vpop.f32.mrf.mxu0
      %v1734 = vpop.f32.mrf.mxu0
      %v1735 = vadd.f32 0.0, %v1734
      %v1736 = vpop.f32.mrf.mxu0
      %1737 = vdwg.mxu0
      %v1739 = vlaneseq
      %v1740 = vshrl.u32 %v1739, 7
      %v1741 = vsub.s32 0, %v1740
      %v1742 = vrot.slane %v877, %v1741
      %v1744 = vadd.f32 %v1742, %v1612
      %v1745 = vadd.f32 %v1742, %v1615
      %v1746 = vadd.f32 %v1742, %v1620
      %v1747 = vadd.f32 %v1742, %v1623
      %v1748 = vadd.f32 %v1742, %v1628
      %v1749 = vadd.f32 %v1742, %v1631
      %v1750 = vadd.f32 %v1742, %v1636
      %v1751 = vadd.f32 %v1742, %v1639
      %v1752 = vadd.f32 %v1742, %v1644
      %v1753 = vadd.f32 %v1742, %v1647
      %v1754 = vadd.f32 %v1742, %v1652
      %v1755 = vadd.f32 %v1742, %v1655
      %v1756 = vadd.f32 %v1742, %v1660
      %v1757 = vadd.f32 %v1742, %v1663
      %v1758 = vadd.f32 %v1742, %v1668
      %v1759 = vadd.f32 %v1742, %v1671
      %v1760 = vadd.f32 %v1742, %v1676
      %v1761 = vadd.f32 %v1742, %v1679
      %v1762 = vadd.f32 %v1742, %v1684
      %v1763 = vadd.f32 %v1742, %v1687
      %v1764 = vadd.f32 %v1742, %v1692
      %v1765 = vadd.f32 %v1742, %v1695
      %v1766 = vadd.f32 %v1742, %v1700
      %v1767 = vadd.f32 %v1742, %v1703
      %v1768 = vadd.f32 %v1742, %v1708
      %v1769 = vadd.f32 %v1742, %v1711
      %v1770 = vadd.f32 %v1742, %v1716
      %v1771 = vadd.f32 %v1742, %v1719
      %v1772 = vadd.f32 %v1742, %v1724
      %v1773 = vadd.f32 %v1742, %v1727
      %v1774 = vadd.f32 %v1742, %v1732
      %v1775 = vadd.f32 %v1742, %v1735
      %v1776 = vld [vmem:[#allocation2] sm:$0xf]
      %v1777 = vld [vmem:[#allocation2 + $0x4] sm:$0xf]
      %v1778 = vld [vmem:[#allocation2 + $0x8] sm:$0x1]
      %v1779 = vld [vmem:[#allocation2 + $0xc] sm:$0xf]
      %v1780 = vld [vmem:[#allocation2 + $0x10] sm:$0xf]
      %v1781 = vld [vmem:[#allocation2 + $0x14] sm:$0x1]
      %v1782 = vld [vmem:[#allocation2 + $0x18] sm:$0xf]
      %v1783 = vld [vmem:[#allocation2 + $0x1c] sm:$0xf]
      %v1784 = vld [vmem:[#allocation2 + $0x20] sm:$0x1]
      %v1785 = vld [vmem:[#allocation2 + $0x24] sm:$0xf]
      %v1786 = vld [vmem:[#allocation2 + $0x28] sm:$0xf]
      %v1787 = vld [vmem:[#allocation2 + $0x2c] sm:$0x1]
      %v1788 = vld [vmem:[#allocation2 + $0x30] sm:$0xf]
      %v1789 = vld [vmem:[#allocation2 + $0x34] sm:$0xf]
      %v1790 = vld [vmem:[#allocation2 + $0x38] sm:$0x1]
      %v1791 = vld [vmem:[#allocation2 + $0x3c] sm:$0xf]
      %v1792 = vld [vmem:[#allocation2 + $0x40] sm:$0xf]
      %v1793 = vld [vmem:[#allocation2 + $0x44] sm:$0x1]
      %v1794 = vld [vmem:[#allocation2 + $0x48] sm:$0xf]
      %v1795 = vld [vmem:[#allocation2 + $0x4c] sm:$0xf]
      %v1796 = vld [vmem:[#allocation2 + $0x50] sm:$0x1]
      %v1797 = vld [vmem:[#allocation2 + $0x54] sm:$0xf]
      %v1798 = vld [vmem:[#allocation2 + $0x58] sm:$0xf]
      %v1799 = vld [vmem:[#allocation2 + $0x5c] sm:$0x1]
      %v1800 = vld [vmem:[#allocation2 + $0x60] sm:$0xf]
      %v1801 = vld [vmem:[#allocation2 + $0x64] sm:$0xf]
      %v1802 = vld [vmem:[#allocation2 + $0x68] sm:$0x1]
      %v1803 = vld [vmem:[#allocation2 + $0x6c] sm:$0xf]
      %v1804 = vld [vmem:[#allocation2 + $0x70] sm:$0xf]
      %v1805 = vld [vmem:[#allocation2 + $0x74] sm:$0x1]
      %v1806 = vld [vmem:[#allocation2 + $0x78] sm:$0xf]
      %v1807 = vld [vmem:[#allocation2 + $0x7c] sm:$0xf]
      %v1808 = vld [vmem:[#allocation2 + $0x80] sm:$0x1]
      %v1809 = vld [vmem:[#allocation2 + $0x84] sm:$0xf]
      %v1810 = vld [vmem:[#allocation2 + $0x88] sm:$0xf]
      %v1811 = vld [vmem:[#allocation2 + $0x8c] sm:$0x1]
      %v1812 = vld [vmem:[#allocation2 + $0x90] sm:$0xf]
      %v1813 = vld [vmem:[#allocation2 + $0x94] sm:$0xf]
      %v1814 = vld [vmem:[#allocation2 + $0x98] sm:$0x1]
      %v1815 = vld [vmem:[#allocation2 + $0x9c] sm:$0xf]
      %v1816 = vld [vmem:[#allocation2 + $0xa0] sm:$0xf]
      %v1817 = vld [vmem:[#allocation2 + $0xa4] sm:$0x1]
      %v1818 = vld [vmem:[#allocation2 + $0xa8] sm:$0xf]
      %v1819 = vld [vmem:[#allocation2 + $0xac] sm:$0xf]
      %v1820 = vld [vmem:[#allocation2 + $0xb0] sm:$0x1]
      %v1821 = vld [vmem:[#allocation2 + $0xb4] sm:$0xf]
      %v1822 = vld [vmem:[#allocation2 + $0xb8] sm:$0xf]
      %v1823 = vld [vmem:[#allocation2 + $0xbc] sm:$0x1]
      %vm1824 = vsmask.f32 3328
      %vm1825 = vsmask.f32 7440
      %vm1826 = vmor %vm1824, %vm1825
      %v1828 = vshrl.u32 %v1776, 16
      %v1830 = vrot.slane %v1828, 4
      %v1831 = vshll.u32 %v1776, 16
      %v1833 = vrot.slane %v1831, 5
      %v1834 = vor.u32 %v1830, %v1833
      %v1835 = vrot.slane %v1834, 4
      %v1837 = vshll.u32 %v1777, 16
      %v1839 = vrot.slane %v1837, 5
      %v1840 = vsel %vm1826, %v1835, %v1839
      %v1841 = vshrl.u32 %v1777, 16
      %v1843 = vrot.slane %v1841, 4
      %v1844 = vor.u32 %v1843, %v1839
      %v1845 = vrot.slane %v1844, 4
      %v1847 = vshll.u32 %v1778, 16
      %v1849 = vrot.slane %v1847, 5
      %v1850 = vsel %vm1826, %v1845, %v1849
      %v1852 = vshrl.u32 %v1779, 16
      %v1854 = vrot.slane %v1852, 4
      %v1855 = vshll.u32 %v1779, 16
      %v1857 = vrot.slane %v1855, 5
      %v1858 = vor.u32 %v1854, %v1857
      %v1859 = vrot.slane %v1858, 4
      %v1861 = vshll.u32 %v1780, 16
      %v1863 = vrot.slane %v1861, 5
      %v1864 = vsel %vm1826, %v1859, %v1863
      %v1865 = vshrl.u32 %v1780, 16
      %v1867 = vrot.slane %v1865, 4
      %v1868 = vor.u32 %v1867, %v1863
      %v1869 = vrot.slane %v1868, 4
      %v1871 = vshll.u32 %v1781, 16
      %v1873 = vrot.slane %v1871, 5
      %v1874 = vsel %vm1826, %v1869, %v1873
      %v1876 = vshrl.u32 %v1782, 16
      %v1878 = vrot.slane %v1876, 4
      %v1879 = vshll.u32 %v1782, 16
      %v1881 = vrot.slane %v1879, 5
      %v1882 = vor.u32 %v1878, %v1881
      %v1883 = vrot.slane %v1882, 4
      %v1885 = vshll.u32 %v1783, 16
      %v1887 = vrot.slane %v1885, 5
      %v1888 = vsel %vm1826, %v1883, %v1887
      %v1889 = vshrl.u32 %v1783, 16
      %v1891 = vrot.slane %v1889, 4
      %v1892 = vor.u32 %v1891, %v1887
      %v1893 = vrot.slane %v1892, 4
      %v1895 = vshll.u32 %v1784, 16
      %v1897 = vrot.slane %v1895, 5
      %v1898 = vsel %vm1826, %v1893, %v1897
      %v1900 = vshrl.u32 %v1785, 16
      %v1902 = vrot.slane %v1900, 4
      %v1903 = vshll.u32 %v1785, 16
      %v1905 = vrot.slane %v1903, 5
      %v1906 = vor.u32 %v1902, %v1905
      %v1907 = vrot.slane %v1906, 4
      %v1909 = vshll.u32 %v1786, 16
      %v1911 = vrot.slane %v1909, 5
      %v1912 = vsel %vm1826, %v1907, %v1911
      %v1913 = vshrl.u32 %v1786, 16
      %v1915 = vrot.slane %v1913, 4
      %v1916 = vor.u32 %v1915, %v1911
      %v1917 = vrot.slane %v1916, 4
      %v1919 = vshll.u32 %v1787, 16
      %v1921 = vrot.slane %v1919, 5
      %v1922 = vsel %vm1826, %v1917, %v1921
      %v1924 = vshrl.u32 %v1788, 16
      %v1926 = vrot.slane %v1924, 4
      %v1927 = vshll.u32 %v1788, 16
      %v1929 = vrot.slane %v1927, 5
      %v1930 = vor.u32 %v1926, %v1929
      %v1931 = vrot.slane %v1930, 4
      %v1933 = vshll.u32 %v1789, 16
      %v1935 = vrot.slane %v1933, 5
      %v1936 = vsel %vm1826, %v1931, %v1935
      %v1937 = vshrl.u32 %v1789, 16
      %v1939 = vrot.slane %v1937, 4
      %v1940 = vor.u32 %v1939, %v1935
      %v1941 = vrot.slane %v1940, 4
      %v1943 = vshll.u32 %v1790, 16
      %v1945 = vrot.slane %v1943, 5
      %v1946 = vsel %vm1826, %v1941, %v1945
      %v1948 = vshrl.u32 %v1791, 16
      %v1950 = vrot.slane %v1948, 4
      %v1951 = vshll.u32 %v1791, 16
      %v1953 = vrot.slane %v1951, 5
      %v1954 = vor.u32 %v1950, %v1953
      %v1955 = vrot.slane %v1954, 4
      %v1957 = vshll.u32 %v1792, 16
      %v1959 = vrot.slane %v1957, 5
      %v1960 = vsel %vm1826, %v1955, %v1959
      %v1961 = vshrl.u32 %v1792, 16
      %v1963 = vrot.slane %v1961, 4
      %v1964 = vor.u32 %v1963, %v1959
      %v1965 = vrot.slane %v1964, 4
      %v1967 = vshll.u32 %v1793, 16
      %v1969 = vrot.slane %v1967, 5
      %v1970 = vsel %vm1826, %v1965, %v1969
      %v1972 = vshrl.u32 %v1794, 16
      %v1974 = vrot.slane %v1972, 4
      %v1975 = vshll.u32 %v1794, 16
      %v1977 = vrot.slane %v1975, 5
      %v1978 = vor.u32 %v1974, %v1977
      %v1979 = vrot.slane %v1978, 4
      %v1981 = vshll.u32 %v1795, 16
      %v1983 = vrot.slane %v1981, 5
      %v1984 = vsel %vm1826, %v1979, %v1983
      %v1985 = vshrl.u32 %v1795, 16
      %v1987 = vrot.slane %v1985, 4
      %v1988 = vor.u32 %v1987, %v1983
      %v1989 = vrot.slane %v1988, 4
      %v1991 = vshll.u32 %v1796, 16
      %v1993 = vrot.slane %v1991, 5
      %v1994 = vsel %vm1826, %v1989, %v1993
      %v1996 = vshrl.u32 %v1797, 16
      %v1998 = vrot.slane %v1996, 4
      %v1999 = vshll.u32 %v1797, 16
      %v2001 = vrot.slane %v1999, 5
      %v2002 = vor.u32 %v1998, %v2001
      %v2003 = vrot.slane %v2002, 4
      %v2005 = vshll.u32 %v1798, 16
      %v2007 = vrot.slane %v2005, 5
      %v2008 = vsel %vm1826, %v2003, %v2007
      %v2009 = vshrl.u32 %v1798, 16
      %v2011 = vrot.slane %v2009, 4
      %v2012 = vor.u32 %v2011, %v2007
      %v2013 = vrot.slane %v2012, 4
      %v2015 = vshll.u32 %v1799, 16
      %v2017 = vrot.slane %v2015, 5
      %v2018 = vsel %vm1826, %v2013, %v2017
      %v2020 = vshrl.u32 %v1800, 16
      %v2022 = vrot.slane %v2020, 4
      %v2023 = vshll.u32 %v1800, 16
      %v2025 = vrot.slane %v2023, 5
      %v2026 = vor.u32 %v2022, %v2025
      %v2027 = vrot.slane %v2026, 4
      %v2029 = vshll.u32 %v1801, 16
      %v2031 = vrot.slane %v2029, 5
      %v2032 = vsel %vm1826, %v2027, %v2031
      %v2033 = vshrl.u32 %v1801, 16
      %v2035 = vrot.slane %v2033, 4
      %v2036 = vor.u32 %v2035, %v2031
      %v2037 = vrot.slane %v2036, 4
      %v2039 = vshll.u32 %v1802, 16
      %v2041 = vrot.slane %v2039, 5
      %v2042 = vsel %vm1826, %v2037, %v2041
      %v2044 = vshrl.u32 %v1803, 16
      %v2046 = vrot.slane %v2044, 4
      %v2047 = vshll.u32 %v1803, 16
      %v2049 = vrot.slane %v2047, 5
      %v2050 = vor.u32 %v2046, %v2049
      %v2051 = vrot.slane %v2050, 4
      %v2053 = vshll.u32 %v1804, 16
      %v2055 = vrot.slane %v2053, 5
      %v2056 = vsel %vm1826, %v2051, %v2055
      %v2057 = vshrl.u32 %v1804, 16
      %v2059 = vrot.slane %v2057, 4
      %v2060 = vor.u32 %v2059, %v2055
      %v2061 = vrot.slane %v2060, 4
      %v2063 = vshll.u32 %v1805, 16
      %v2065 = vrot.slane %v2063, 5
      %v2066 = vsel %vm1826, %v2061, %v2065
      %v2068 = vshrl.u32 %v1806, 16
      %v2070 = vrot.slane %v2068, 4
      %v2071 = vshll.u32 %v1806, 16
      %v2073 = vrot.slane %v2071, 5
      %v2074 = vor.u32 %v2070, %v2073
      %v2075 = vrot.slane %v2074, 4
      %v2077 = vshll.u32 %v1807, 16
      %v2079 = vrot.slane %v2077, 5
      %v2080 = vsel %vm1826, %v2075, %v2079
      %v2081 = vshrl.u32 %v1807, 16
      %v2083 = vrot.slane %v2081, 4
      %v2084 = vor.u32 %v2083, %v2079
      %v2085 = vrot.slane %v2084, 4
      %v2087 = vshll.u32 %v1808, 16
      %v2089 = vrot.slane %v2087, 5
      %v2090 = vsel %vm1826, %v2085, %v2089
      %v2092 = vshrl.u32 %v1809, 16
      %v2094 = vrot.slane %v2092, 4
      %v2095 = vshll.u32 %v1809, 16
      %v2097 = vrot.slane %v2095, 5
      %v2098 = vor.u32 %v2094, %v2097
      %v2099 = vrot.slane %v2098, 4
      %v2101 = vshll.u32 %v1810, 16
      %v2103 = vrot.slane %v2101, 5
      %v2104 = vsel %vm1826, %v2099, %v2103
      %v2105 = vshrl.u32 %v1810, 16
      %v2107 = vrot.slane %v2105, 4
      %v2108 = vor.u32 %v2107, %v2103
      %v2109 = vrot.slane %v2108, 4
      %v2111 = vshll.u32 %v1811, 16
      %v2113 = vrot.slane %v2111, 5
      %v2114 = vsel %vm1826, %v2109, %v2113
      %v2116 = vshrl.u32 %v1812, 16
      %v2118 = vrot.slane %v2116, 4
      %v2119 = vshll.u32 %v1812, 16
      %v2121 = vrot.slane %v2119, 5
      %v2122 = vor.u32 %v2118, %v2121
      %v2123 = vrot.slane %v2122, 4
      %v2125 = vshll.u32 %v1813, 16
      %v2127 = vrot.slane %v2125, 5
      %v2128 = vsel %vm1826, %v2123, %v2127
      %v2129 = vshrl.u32 %v1813, 16
      %v2131 = vrot.slane %v2129, 4
      %v2132 = vor.u32 %v2131, %v2127
      %v2133 = vrot.slane %v2132, 4
      %v2135 = vshll.u32 %v1814, 16
      %v2137 = vrot.slane %v2135, 5
      %v2138 = vsel %vm1826, %v2133, %v2137
      %v2140 = vshrl.u32 %v1815, 16
      %v2142 = vrot.slane %v2140, 4
      %v2143 = vshll.u32 %v1815, 16
      %v2145 = vrot.slane %v2143, 5
      %v2146 = vor.u32 %v2142, %v2145
      %v2147 = vrot.slane %v2146, 4
      %v2149 = vshll.u32 %v1816, 16
      %v2151 = vrot.slane %v2149, 5
      %v2152 = vsel %vm1826, %v2147, %v2151
      %v2153 = vshrl.u32 %v1816, 16
      %v2155 = vrot.slane %v2153, 4
      %v2156 = vor.u32 %v2155, %v2151
      %v2157 = vrot.slane %v2156, 4
      %v2159 = vshll.u32 %v1817, 16
      %v2161 = vrot.slane %v2159, 5
      %v2162 = vsel %vm1826, %v2157, %v2161
      %v2164 = vshrl.u32 %v1818, 16
      %v2166 = vrot.slane %v2164, 4
      %v2167 = vshll.u32 %v1818, 16
      %v2169 = vrot.slane %v2167, 5
      %v2170 = vor.u32 %v2166, %v2169
      %v2171 = vrot.slane %v2170, 4
      %v2173 = vshll.u32 %v1819, 16
      %v2175 = vrot.slane %v2173, 5
      %v2176 = vsel %vm1826, %v2171, %v2175
      %v2177 = vshrl.u32 %v1819, 16
      %v2179 = vrot.slane %v2177, 4
      %v2180 = vor.u32 %v2179, %v2175
      %v2181 = vrot.slane %v2180, 4
      %v2183 = vshll.u32 %v1820, 16
      %v2185 = vrot.slane %v2183, 5
      %v2186 = vsel %vm1826, %v2181, %v2185
      %v2188 = vshrl.u32 %v1821, 16
      %v2190 = vrot.slane %v2188, 4
      %v2191 = vshll.u32 %v1821, 16
      %v2193 = vrot.slane %v2191, 5
      %v2194 = vor.u32 %v2190, %v2193
      %v2195 = vrot.slane %v2194, 4
      %v2197 = vshll.u32 %v1822, 16
      %v2199 = vrot.slane %v2197, 5
      %v2200 = vsel %vm1826, %v2195, %v2199
      %v2201 = vshrl.u32 %v1822, 16
      %v2203 = vrot.slane %v2201, 4
      %v2204 = vor.u32 %v2203, %v2199
      %v2205 = vrot.slane %v2204, 4
      %v2207 = vshll.u32 %v1823, 16
      %v2209 = vrot.slane %v2207, 5
      %v2210 = vsel %vm1826, %v2205, %v2209
      %s2211 = scalar_lea.vmem %s3, 4
      %v2212 = vld [vmem:[%s2211] sm:$0xf]
      %v2213 = vunpack.c.l.b16 %v1840
      %v2214 = vunpack.c.l.b16 %v1850
      %v2215 = vunpack.c.l.b16 %v1864
      %v2216 = vunpack.c.l.b16 %v1874
      %v2217 = vunpack.c.l.b16 %v1888
      %v2218 = vunpack.c.l.b16 %v1898
      %v2219 = vunpack.c.l.b16 %v1912
      %v2220 = vunpack.c.l.b16 %v1922
      %v2221 = vunpack.c.l.b16 %v1936
      %v2222 = vunpack.c.l.b16 %v1946
      %v2223 = vunpack.c.l.b16 %v1960
      %v2224 = vunpack.c.l.b16 %v1970
      %v2225 = vunpack.c.l.b16 %v1984
      %v2226 = vunpack.c.l.b16 %v1994
      %v2227 = vunpack.c.l.b16 %v2008
      %v2228 = vunpack.c.l.b16 %v2018
      %v2229 = vunpack.c.l.b16 %v2032
      %v2230 = vunpack.c.l.b16 %v2042
      %v2231 = vunpack.c.l.b16 %v2056
      %v2232 = vunpack.c.l.b16 %v2066
      %v2233 = vunpack.c.l.b16 %v2080
      %v2234 = vunpack.c.l.b16 %v2090
      %v2235 = vunpack.c.l.b16 %v2104
      %v2236 = vunpack.c.l.b16 %v2114
      %v2237 = vunpack.c.l.b16 %v2128
      %v2238 = vunpack.c.l.b16 %v2138
      %v2239 = vunpack.c.l.b16 %v2152
      %v2240 = vunpack.c.l.b16 %v2162
      %v2241 = vunpack.c.l.b16 %v2176
      %v2242 = vunpack.c.l.b16 %v2186
      %v2243 = vunpack.c.l.b16 %v2200
      %v2244 = vunpack.c.l.b16 %v2210
      %v2245 = vpack.c.b16 %v2214, %v2213
      %v2246 = vpack.c.b16 %v2216, %v2215
      %v2247 = vpack.c.b16 %v2218, %v2217
      %v2248 = vpack.c.b16 %v2220, %v2219
      %v2249 = vpack.c.b16 %v2222, %v2221
      %v2250 = vpack.c.b16 %v2224, %v2223
      %v2251 = vpack.c.b16 %v2226, %v2225
      %v2252 = vpack.c.b16 %v2228, %v2227
      %v2253 = vpack.c.b16 %v2230, %v2229
      %v2254 = vpack.c.b16 %v2232, %v2231
      %v2255 = vpack.c.b16 %v2234, %v2233
      %v2256 = vpack.c.b16 %v2236, %v2235
      %v2257 = vpack.c.b16 %v2238, %v2237
      %v2258 = vpack.c.b16 %v2240, %v2239
      %v2259 = vpack.c.b16 %v2242, %v2241
      %v2260 = vpack.c.b16 %v2244, %v2243
      %v2262 = vsel %vm1524, %v2245, 0
      %v2265 = vsel %vm1524, %v2246, 0
      %v2268 = vsel %vm1524, %v2247, 0
      %v2271 = vsel %vm1524, %v2248, 0
      %v2274 = vsel %vm1524, %v2249, 0
      %v2277 = vsel %vm1524, %v2250, 0
      %v2280 = vsel %vm1524, %v2251, 0
      %v2283 = vsel %vm1524, %v2252, 0
      %v2286 = vsel %vm1524, %v2253, 0
      %v2289 = vsel %vm1524, %v2254, 0
      %v2292 = vsel %vm1524, %v2255, 0
      %v2295 = vsel %vm1524, %v2256, 0
      %v2298 = vsel %vm1524, %v2257, 0
      %v2301 = vsel %vm1524, %v2258, 0
      %v2304 = vsel %vm1524, %v2259, 0
      %v2307 = vsel %vm1524, %v2260, 0
      %v2310 = vsel %vm1573, %v2212, 0
      %2312 = vmatprep.subr.bf16.mxu0 0
      %2313 = vmatpush1.bf16.msra.mxu0 0
      %2314 = vmatprep.subr.bf16.mxu0 0
      %2315 = vmatpush1.bf16.msra.mxu0 0
      %2316 = vmatprep.subr.bf16.mxu0 0
      %2317 = vmatpush1.bf16.msra.mxu0 0
      %2318 = vmatprep.subr.bf16.mxu0 0
      %2319 = vmatpush1.bf16.msra.mxu0 0
      %2320 = vmatprep.subr.bf16.mxu0 0
      %2321 = vmatpush1.bf16.msra.mxu0 0
      %2322 = vmatprep.subr.bf16.mxu0 0
      %2323 = vmatpush1.bf16.msra.mxu0 0
      %2324 = vmatprep.subr.bf16.mxu0 0
      %2325 = vmatpush1.bf16.msra.mxu0 0
      %2326 = vmatprep.subr.bf16.mxu0 0
      %2327 = vmatpush1.bf16.msra.mxu0 %v2310
      %2328 = vmatprep.subr.bf16.mxu0 0
      %2329 = vmatpush2.bf16.msra.mxu0 0
      %2330 = vmatprep.subr.bf16.mxu0 0
      %2331 = vmatpush2.bf16.msra.mxu0 0
      %2332 = vmatprep.subr.bf16.mxu0 0
      %2333 = vmatpush2.bf16.msra.mxu0 0
      %2334 = vmatprep.subr.bf16.mxu0 0
      %2335 = vmatpush2.bf16.msra.mxu0 0
      %2336 = vmatprep.subr.bf16.mxu0 0
      %2337 = vmatpush2.bf16.msra.mxu0 0
      %2338 = vmatprep.subr.bf16.mxu0 0
      %2339 = vmatpush2.bf16.msra.mxu0 0
      %2340 = vmatprep.subr.bf16.mxu0 0
      %2341 = vmatpush2.bf16.msra.mxu0 0
      %2342 = vmatprep.subr.bf16.mxu0 0
      %2343 = vmatpush2.bf16.msra.mxu0 0
      %2344 = vmatprep.mubr.bf16.mxu0 0
      %2345 = vmatmul.mubr.bf16.gmra.mxu0 %v2262
      %v2346 = vpop.f32.mrf.mxu0
      %v2347 = vadd.f32 0.0, %v2346
      %v2348 = vpop.f32.mrf.mxu0
      %v2349 = vpop.f32.mrf.mxu0
      %v2350 = vadd.f32 0.0, %v2349
      %v2351 = vpop.f32.mrf.mxu0
      %2352 = vmatprep.mubr.bf16.mxu0 0
      %2353 = vmatmul.mubr.bf16.gmra.mxu0 %v2265
      %v2354 = vpop.f32.mrf.mxu0
      %v2355 = vadd.f32 0.0, %v2354
      %v2356 = vpop.f32.mrf.mxu0
      %v2357 = vpop.f32.mrf.mxu0
      %v2358 = vadd.f32 0.0, %v2357
      %v2359 = vpop.f32.mrf.mxu0
      %2360 = vmatprep.mubr.bf16.mxu0 0
      %2361 = vmatmul.mubr.bf16.gmra.mxu0 %v2268
      %v2362 = vpop.f32.mrf.mxu0
      %v2363 = vadd.f32 0.0, %v2362
      %v2364 = vpop.f32.mrf.mxu0
      %v2365 = vpop.f32.mrf.mxu0
      %v2366 = vadd.f32 0.0, %v2365
      %v2367 = vpop.f32.mrf.mxu0
      %2368 = vmatprep.mubr.bf16.mxu0 0
      %2369 = vmatmul.mubr.bf16.gmra.mxu0 %v2271
      %v2370 = vpop.f32.mrf.mxu0
      %v2371 = vadd.f32 0.0, %v2370
      %v2372 = vpop.f32.mrf.mxu0
      %v2373 = vpop.f32.mrf.mxu0
      %v2374 = vadd.f32 0.0, %v2373
      %v2375 = vpop.f32.mrf.mxu0
      %2376 = vmatprep.mubr.bf16.mxu0 0
      %2377 = vmatmul.mubr.bf16.gmra.mxu0 %v2274
      %v2378 = vpop.f32.mrf.mxu0
      %v2379 = vadd.f32 0.0, %v2378
      %v2380 = vpop.f32.mrf.mxu0
      %v2381 = vpop.f32.mrf.mxu0
      %v2382 = vadd.f32 0.0, %v2381
      %v2383 = vpop.f32.mrf.mxu0
      %2384 = vmatprep.mubr.bf16.mxu0 0
      %2385 = vmatmul.mubr.bf16.gmra.mxu0 %v2277
      %v2386 = vpop.f32.mrf.mxu0
      %v2387 = vadd.f32 0.0, %v2386
      %v2388 = vpop.f32.mrf.mxu0
      %v2389 = vpop.f32.mrf.mxu0
      %v2390 = vadd.f32 0.0, %v2389
      %v2391 = vpop.f32.mrf.mxu0
      %2392 = vmatprep.mubr.bf16.mxu0 0
      %2393 = vmatmul.mubr.bf16.gmra.mxu0 %v2280
      %v2394 = vpop.f32.mrf.mxu0
      %v2395 = vadd.f32 0.0, %v2394
      %v2396 = vpop.f32.mrf.mxu0
      %v2397 = vpop.f32.mrf.mxu0
      %v2398 = vadd.f32 0.0, %v2397
      %v2399 = vpop.f32.mrf.mxu0
      %2400 = vmatprep.mubr.bf16.mxu0 0
      %2401 = vmatmul.mubr.bf16.gmra.mxu0 %v2283
      %v2402 = vpop.f32.mrf.mxu0
      %v2403 = vadd.f32 0.0, %v2402
      %v2404 = vpop.f32.mrf.mxu0
      %v2405 = vpop.f32.mrf.mxu0
      %v2406 = vadd.f32 0.0, %v2405
      %v2407 = vpop.f32.mrf.mxu0
      %2408 = vmatprep.mubr.bf16.mxu0 0
      %2409 = vmatmul.mubr.bf16.gmra.mxu0 %v2286
      %v2410 = vpop.f32.mrf.mxu0
      %v2411 = vadd.f32 0.0, %v2410
      %v2412 = vpop.f32.mrf.mxu0
      %v2413 = vpop.f32.mrf.mxu0
      %v2414 = vadd.f32 0.0, %v2413
      %v2415 = vpop.f32.mrf.mxu0
      %2416 = vmatprep.mubr.bf16.mxu0 0
      %2417 = vmatmul.mubr.bf16.gmra.mxu0 %v2289
      %v2418 = vpop.f32.mrf.mxu0
      %v2419 = vadd.f32 0.0, %v2418
      %v2420 = vpop.f32.mrf.mxu0
      %v2421 = vpop.f32.mrf.mxu0
      %v2422 = vadd.f32 0.0, %v2421
      %v2423 = vpop.f32.mrf.mxu0
      %2424 = vmatprep.mubr.bf16.mxu0 0
      %2425 = vmatmul.mubr.bf16.gmra.mxu0 %v2292
      %v2426 = vpop.f32.mrf.mxu0
      %v2427 = vadd.f32 0.0, %v2426
      %v2428 = vpop.f32.mrf.mxu0
      %v2429 = vpop.f32.mrf.mxu0
      %v2430 = vadd.f32 0.0, %v2429
      %v2431 = vpop.f32.mrf.mxu0
      %2432 = vmatprep.mubr.bf16.mxu0 0
      %2433 = vmatmul.mubr.bf16.gmra.mxu0 %v2295
      %v2434 = vpop.f32.mrf.mxu0
      %v2435 = vadd.f32 0.0, %v2434
      %v2436 = vpop.f32.mrf.mxu0
      %v2437 = vpop.f32.mrf.mxu0
      %v2438 = vadd.f32 0.0, %v2437
      %v2439 = vpop.f32.mrf.mxu0
      %2440 = vmatprep.mubr.bf16.mxu0 0
      %2441 = vmatmul.mubr.bf16.gmra.mxu0 %v2298
      %v2442 = vpop.f32.mrf.mxu0
      %v2443 = vadd.f32 0.0, %v2442
      %v2444 = vpop.f32.mrf.mxu0
      %v2445 = vpop.f32.mrf.mxu0
      %v2446 = vadd.f32 0.0, %v2445
      %v2447 = vpop.f32.mrf.mxu0
      %2448 = vmatprep.mubr.bf16.mxu0 0
      %2449 = vmatmul.mubr.bf16.gmra.mxu0 %v2301
      %v2450 = vpop.f32.mrf.mxu0
      %v2451 = vadd.f32 0.0, %v2450
      %v2452 = vpop.f32.mrf.mxu0
      %v2453 = vpop.f32.mrf.mxu0
      %v2454 = vadd.f32 0.0, %v2453
      %v2455 = vpop.f32.mrf.mxu0
      %2456 = vmatprep.mubr.bf16.mxu0 0
      %2457 = vmatmul.mubr.bf16.gmra.mxu0 %v2304
      %v2458 = vpop.f32.mrf.mxu0
      %v2459 = vadd.f32 0.0, %v2458
      %v2460 = vpop.f32.mrf.mxu0
      %v2461 = vpop.f32.mrf.mxu0
      %v2462 = vadd.f32 0.0, %v2461
      %v2463 = vpop.f32.mrf.mxu0
      %2464 = vmatprep.mubr.bf16.mxu0 0
      %2465 = vmatmul.mubr.bf16.gmra.mxu0 %v2307
      %v2466 = vpop.f32.mrf.mxu0
      %v2467 = vadd.f32 0.0, %v2466
      %v2468 = vpop.f32.mrf.mxu0
      %v2469 = vpop.f32.mrf.mxu0
      %v2470 = vadd.f32 0.0, %v2469
      %v2471 = vpop.f32.mrf.mxu0
      %2472 = vdwg.mxu0
      %v2473 = vadd.f32 %v1744, %v2347
      %v2474 = vadd.f32 %v1745, %v2350
      %v2475 = vadd.f32 %v1746, %v2355
      %v2476 = vadd.f32 %v1747, %v2358
      %v2477 = vadd.f32 %v1748, %v2363
      %v2478 = vadd.f32 %v1749, %v2366
      %v2479 = vadd.f32 %v1750, %v2371
      %v2480 = vadd.f32 %v1751, %v2374
      %v2481 = vadd.f32 %v1752, %v2379
      %v2482 = vadd.f32 %v1753, %v2382
      %v2483 = vadd.f32 %v1754, %v2387
      %v2484 = vadd.f32 %v1755, %v2390
      %v2485 = vadd.f32 %v1756, %v2395
      %v2486 = vadd.f32 %v1757, %v2398
      %v2487 = vadd.f32 %v1758, %v2403
      %v2488 = vadd.f32 %v1759, %v2406
      %v2489 = vadd.f32 %v1760, %v2411
      %v2490 = vadd.f32 %v1761, %v2414
      %v2491 = vadd.f32 %v1762, %v2419
      %v2492 = vadd.f32 %v1763, %v2422
      %v2493 = vadd.f32 %v1764, %v2427
      %v2494 = vadd.f32 %v1765, %v2430
      %v2495 = vadd.f32 %v1766, %v2435
      %v2496 = vadd.f32 %v1767, %v2438
      %v2497 = vadd.f32 %v1768, %v2443
      %v2498 = vadd.f32 %v1769, %v2446
      %v2499 = vadd.f32 %v1770, %v2451
      %v2500 = vadd.f32 %v1771, %v2454
      %v2501 = vadd.f32 %v1772, %v2459
      %v2502 = vadd.f32 %v1773, %v2462
      %v2503 = vadd.f32 %v1774, %v2467
      %v2504 = vadd.f32 %v1775, %v2470
      %v2505 = vld [vmem:[#allocation2] sm:$0xe]
      %v2506 = vld [vmem:[#allocation2 + $0xc] sm:$0xe]
      %v2507 = vld [vmem:[#allocation2 + $0x18] sm:$0xe]
      %v2508 = vld [vmem:[#allocation2 + $0x24] sm:$0xe]
      %v2509 = vld [vmem:[#allocation2 + $0x30] sm:$0xe]
      %v2510 = vld [vmem:[#allocation2 + $0x3c] sm:$0xe]
      %v2511 = vld [vmem:[#allocation2 + $0x48] sm:$0xe]
      %v2512 = vld [vmem:[#allocation2 + $0x54] sm:$0xe]
      %v2513 = vld [vmem:[#allocation2 + $0x60] sm:$0xe]
      %v2514 = vld [vmem:[#allocation2 + $0x6c] sm:$0xe]
      %v2515 = vld [vmem:[#allocation2 + $0x78] sm:$0xe]
      %v2516 = vld [vmem:[#allocation2 + $0x84] sm:$0xe]
      %v2517 = vld [vmem:[#allocation2 + $0x90] sm:$0xe]
      %v2518 = vld [vmem:[#allocation2 + $0x9c] sm:$0xe]
      %v2519 = vld [vmem:[#allocation2 + $0xa8] sm:$0xe]
      %v2520 = vld [vmem:[#allocation2 + $0xb4] sm:$0xe]
      %vm2569 = vcmask 1042432
      %vm2570 = vcmask 1046532
      %vm2571 = vmor %vm2569, %vm2570
      %v2572 = vrot.slane %v2505, 5
      %v2573 = vrot.slane %v2572, 4
      %v2574 = vrot.slane %v1777, 5
      %v2575 = vsel %vm2571, %v2573, %v2574
      %v2576 = vrot.slane %v2574, 4
      %v2577 = vrot.slane %v1778, 5
      %v2578 = vsel %vm2571, %v2576, %v2577
      %v2579 = vrot.slane %v2506, 5
      %v2580 = vrot.slane %v2579, 4
      %v2581 = vrot.slane %v1780, 5
      %v2582 = vsel %vm2571, %v2580, %v2581
      %v2583 = vrot.slane %v2581, 4
      %v2584 = vrot.slane %v1781, 5
      %v2585 = vsel %vm2571, %v2583, %v2584
      %v2586 = vrot.slane %v2507, 5
      %v2587 = vrot.slane %v2586, 4
      %v2588 = vrot.slane %v1783, 5
      %v2589 = vsel %vm2571, %v2587, %v2588
      %v2590 = vrot.slane %v2588, 4
      %v2591 = vrot.slane %v1784, 5
      %v2592 = vsel %vm2571, %v2590, %v2591
      %v2593 = vrot.slane %v2508, 5
      %v2594 = vrot.slane %v2593, 4
      %v2595 = vrot.slane %v1786, 5
      %v2596 = vsel %vm2571, %v2594, %v2595
      %v2597 = vrot.slane %v2595, 4
      %v2598 = vrot.slane %v1787, 5
      %v2599 = vsel %vm2571, %v2597, %v2598
      %v2600 = vrot.slane %v2509, 5
      %v2601 = vrot.slane %v2600, 4
      %v2602 = vrot.slane %v1789, 5
      %v2603 = vsel %vm2571, %v2601, %v2602
      %v2604 = vrot.slane %v2602, 4
      %v2605 = vrot.slane %v1790, 5
      %v2606 = vsel %vm2571, %v2604, %v2605
      %v2607 = vrot.slane %v2510, 5
      %v2608 = vrot.slane %v2607, 4
      %v2609 = vrot.slane %v1792, 5
      %v2610 = vsel %vm2571, %v2608, %v2609
      %v2611 = vrot.slane %v2609, 4
      %v2612 = vrot.slane %v1793, 5
      %v2613 = vsel %vm2571, %v2611, %v2612
      %v2614 = vrot.slane %v2511, 5
      %v2615 = vrot.slane %v2614, 4
      %v2616 = vrot.slane %v1795, 5
      %v2617 = vsel %vm2571, %v2615, %v2616
      %v2618 = vrot.slane %v2616, 4
      %v2619 = vrot.slane %v1796, 5
      %v2620 = vsel %vm2571, %v2618, %v2619
      %v2621 = vrot.slane %v2512, 5
      %v2622 = vrot.slane %v2621, 4
      %v2623 = vrot.slane %v1798, 5
      %v2624 = vsel %vm2571, %v2622, %v2623
      %v2625 = vrot.slane %v2623, 4
      %v2626 = vrot.slane %v1799, 5
      %v2627 = vsel %vm2571, %v2625, %v2626
      %v2628 = vrot.slane %v2513, 5
      %v2629 = vrot.slane %v2628, 4
      %v2630 = vrot.slane %v1801, 5
      %v2631 = vsel %vm2571, %v2629, %v2630
      %v2632 = vrot.slane %v2630, 4
      %v2633 = vrot.slane %v1802, 5
      %v2634 = vsel %vm2571, %v2632, %v2633
      %v2635 = vrot.slane %v2514, 5
      %v2636 = vrot.slane %v2635, 4
      %v2637 = vrot.slane %v1804, 5
      %v2638 = vsel %vm2571, %v2636, %v2637
      %v2639 = vrot.slane %v2637, 4
      %v2640 = vrot.slane %v1805, 5
      %v2641 = vsel %vm2571, %v2639, %v2640
      %v2642 = vrot.slane %v2515, 5
      %v2643 = vrot.slane %v2642, 4
      %v2644 = vrot.slane %v1807, 5
      %v2645 = vsel %vm2571, %v2643, %v2644
      %v2646 = vrot.slane %v2644, 4
      %v2647 = vrot.slane %v1808, 5
      %v2648 = vsel %vm2571, %v2646, %v2647
      %v2649 = vrot.slane %v2516, 5
      %v2650 = vrot.slane %v2649, 4
      %v2651 = vrot.slane %v1810, 5
      %v2652 = vsel %vm2571, %v2650, %v2651
      %v2653 = vrot.slane %v2651, 4
      %v2654 = vrot.slane %v1811, 5
      %v2655 = vsel %vm2571, %v2653, %v2654
      %v2656 = vrot.slane %v2517, 5
      %v2657 = vrot.slane %v2656, 4
      %v2658 = vrot.slane %v1813, 5
      %v2659 = vsel %vm2571, %v2657, %v2658
      %v2660 = vrot.slane %v2658, 4
      %v2661 = vrot.slane %v1814, 5
      %v2662 = vsel %vm2571, %v2660, %v2661
      %v2663 = vrot.slane %v2518, 5
      %v2664 = vrot.slane %v2663, 4
      %v2665 = vrot.slane %v1816, 5
      %v2666 = vsel %vm2571, %v2664, %v2665
      %v2667 = vrot.slane %v2665, 4
      %v2668 = vrot.slane %v1817, 5
      %v2669 = vsel %vm2571, %v2667, %v2668
      %v2670 = vrot.slane %v2519, 5
      %v2671 = vrot.slane %v2670, 4
      %v2672 = vrot.slane %v1819, 5
      %v2673 = vsel %vm2571, %v2671, %v2672
      %v2674 = vrot.slane %v2672, 4
      %v2675 = vrot.slane %v1820, 5
      %v2676 = vsel %vm2571, %v2674, %v2675
      %v2677 = vrot.slane %v2520, 5
      %v2678 = vrot.slane %v2677, 4
      %v2679 = vrot.slane %v1822, 5
      %v2680 = vsel %vm2571, %v2678, %v2679
      %v2681 = vrot.slane %v2679, 4
      %v2682 = vrot.slane %v1823, 5
      %v2683 = vsel %vm2571, %v2681, %v2682
      %s2684 = scalar_lea.vmem %s3, 8
      %v2685 = vld [vmem:[%s2684] sm:$0xf]
      %v2686 = vunpack.c.l.b16 %v2575
      %v2687 = vunpack.c.l.b16 %v2578
      %v2688 = vunpack.c.l.b16 %v2582
      %v2689 = vunpack.c.l.b16 %v2585
      %v2690 = vunpack.c.l.b16 %v2589
      %v2691 = vunpack.c.l.b16 %v2592
      %v2692 = vunpack.c.l.b16 %v2596
      %v2693 = vunpack.c.l.b16 %v2599
      %v2694 = vunpack.c.l.b16 %v2603
      %v2695 = vunpack.c.l.b16 %v2606
      %v2696 = vunpack.c.l.b16 %v2610
      %v2697 = vunpack.c.l.b16 %v2613
      %v2698 = vunpack.c.l.b16 %v2617
      %v2699 = vunpack.c.l.b16 %v2620
      %v2700 = vunpack.c.l.b16 %v2624
      %v2701 = vunpack.c.l.b16 %v2627
      %v2702 = vunpack.c.l.b16 %v2631
      %v2703 = vunpack.c.l.b16 %v2634
      %v2704 = vunpack.c.l.b16 %v2638
      %v2705 = vunpack.c.l.b16 %v2641
      %v2706 = vunpack.c.l.b16 %v2645
      %v2707 = vunpack.c.l.b16 %v2648
      %v2708 = vunpack.c.l.b16 %v2652
      %v2709 = vunpack.c.l.b16 %v2655
      %v2710 = vunpack.c.l.b16 %v2659
      %v2711 = vunpack.c.l.b16 %v2662
      %v2712 = vunpack.c.l.b16 %v2666
      %v2713 = vunpack.c.l.b16 %v2669
      %v2714 = vunpack.c.l.b16 %v2673
      %v2715 = vunpack.c.l.b16 %v2676
      %v2716 = vunpack.c.l.b16 %v2680
      %v2717 = vunpack.c.l.b16 %v2683
      %v2718 = vpack.c.b16 %v2687, %v2686
      %v2719 = vpack.c.b16 %v2689, %v2688
      %v2720 = vpack.c.b16 %v2691, %v2690
      %v2721 = vpack.c.b16 %v2693, %v2692
      %v2722 = vpack.c.b16 %v2695, %v2694
      %v2723 = vpack.c.b16 %v2697, %v2696
      %v2724 = vpack.c.b16 %v2699, %v2698
      %v2725 = vpack.c.b16 %v2701, %v2700
      %v2726 = vpack.c.b16 %v2703, %v2702
      %v2727 = vpack.c.b16 %v2705, %v2704
      %v2728 = vpack.c.b16 %v2707, %v2706
      %v2729 = vpack.c.b16 %v2709, %v2708
      %v2730 = vpack.c.b16 %v2711, %v2710
      %v2731 = vpack.c.b16 %v2713, %v2712
      %v2732 = vpack.c.b16 %v2715, %v2714
      %v2733 = vpack.c.b16 %v2717, %v2716
      %v2735 = vsel %vm1524, %v2718, 0
      %v2738 = vsel %vm1524, %v2719, 0
      %v2741 = vsel %vm1524, %v2720, 0
      %v2744 = vsel %vm1524, %v2721, 0
      %v2747 = vsel %vm1524, %v2722, 0
      %v2750 = vsel %vm1524, %v2723, 0
      %v2753 = vsel %vm1524, %v2724, 0
      %v2756 = vsel %vm1524, %v2725, 0
      %v2759 = vsel %vm1524, %v2726, 0
      %v2762 = vsel %vm1524, %v2727, 0
      %v2765 = vsel %vm1524, %v2728, 0
      %v2768 = vsel %vm1524, %v2729, 0
      %v2771 = vsel %vm1524, %v2730, 0
      %v2774 = vsel %vm1524, %v2731, 0
      %v2777 = vsel %vm1524, %v2732, 0
      %v2780 = vsel %vm1524, %v2733, 0
      %v2783 = vsel %vm1573, %v2685, 0
      %2785 = vmatprep.subr.bf16.mxu0 0
      %2786 = vmatpush1.bf16.msra.mxu0 0
      %2787 = vmatprep.subr.bf16.mxu0 0
      %2788 = vmatpush1.bf16.msra.mxu0 0
      %2789 = vmatprep.subr.bf16.mxu0 0
      %2790 = vmatpush1.bf16.msra.mxu0 0
      %2791 = vmatprep.subr.bf16.mxu0 0
      %2792 = vmatpush1.bf16.msra.mxu0 0
      %2793 = vmatprep.subr.bf16.mxu0 0
      %2794 = vmatpush1.bf16.msra.mxu0 0
      %2795 = vmatprep.subr.bf16.mxu0 0
      %2796 = vmatpush1.bf16.msra.mxu0 0
      %2797 = vmatprep.subr.bf16.mxu0 0
      %2798 = vmatpush1.bf16.msra.mxu0 0
      %2799 = vmatprep.subr.bf16.mxu0 0
      %2800 = vmatpush1.bf16.msra.mxu0 %v2783
      %2801 = vmatprep.subr.bf16.mxu0 0
      %2802 = vmatpush2.bf16.msra.mxu0 0
      %2803 = vmatprep.subr.bf16.mxu0 0
      %2804 = vmatpush2.bf16.msra.mxu0 0
      %2805 = vmatprep.subr.bf16.mxu0 0
      %2806 = vmatpush2.bf16.msra.mxu0 0
      %2807 = vmatprep.subr.bf16.mxu0 0
      %2808 = vmatpush2.bf16.msra.mxu0 0
      %2809 = vmatprep.subr.bf16.mxu0 0
      %2810 = vmatpush2.bf16.msra.mxu0 0
      %2811 = vmatprep.subr.bf16.mxu0 0
      %2812 = vmatpush2.bf16.msra.mxu0 0
      %2813 = vmatprep.subr.bf16.mxu0 0
      %2814 = vmatpush2.bf16.msra.mxu0 0
      %2815 = vmatprep.subr.bf16.mxu0 0
      %2816 = vmatpush2.bf16.msra.mxu0 0
      %2817 = vmatprep.mubr.bf16.mxu0 0
      %2818 = vmatmul.mubr.bf16.gmra.mxu0 %v2735
      %v2819 = vpop.f32.mrf.mxu0
      %v2820 = vadd.f32 0.0, %v2819
      %v2821 = vpop.f32.mrf.mxu0
      %v2822 = vpop.f32.mrf.mxu0
      %v2823 = vadd.f32 0.0, %v2822
      %v2824 = vpop.f32.mrf.mxu0
      %2825 = vmatprep.mubr.bf16.mxu0 0
      %2826 = vmatmul.mubr.bf16.gmra.mxu0 %v2738
      %v2827 = vpop.f32.mrf.mxu0
      %v2828 = vadd.f32 0.0, %v2827
      %v2829 = vpop.f32.mrf.mxu0
      %v2830 = vpop.f32.mrf.mxu0
      %v2831 = vadd.f32 0.0, %v2830
      %v2832 = vpop.f32.mrf.mxu0
      %2833 = vmatprep.mubr.bf16.mxu0 0
      %2834 = vmatmul.mubr.bf16.gmra.mxu0 %v2741
      %v2835 = vpop.f32.mrf.mxu0
      %v2836 = vadd.f32 0.0, %v2835
      %v2837 = vpop.f32.mrf.mxu0
      %v2838 = vpop.f32.mrf.mxu0
      %v2839 = vadd.f32 0.0, %v2838
      %v2840 = vpop.f32.mrf.mxu0
      %2841 = vmatprep.mubr.bf16.mxu0 0
      %2842 = vmatmul.mubr.bf16.gmra.mxu0 %v2744
      %v2843 = vpop.f32.mrf.mxu0
      %v2844 = vadd.f32 0.0, %v2843
      %v2845 = vpop.f32.mrf.mxu0
      %v2846 = vpop.f32.mrf.mxu0
      %v2847 = vadd.f32 0.0, %v2846
      %v2848 = vpop.f32.mrf.mxu0
      %2849 = vmatprep.mubr.bf16.mxu0 0
      %2850 = vmatmul.mubr.bf16.gmra.mxu0 %v2747
      %v2851 = vpop.f32.mrf.mxu0
      %v2852 = vadd.f32 0.0, %v2851
      %v2853 = vpop.f32.mrf.mxu0
      %v2854 = vpop.f32.mrf.mxu0
      %v2855 = vadd.f32 0.0, %v2854
      %v2856 = vpop.f32.mrf.mxu0
      %2857 = vmatprep.mubr.bf16.mxu0 0
      %2858 = vmatmul.mubr.bf16.gmra.mxu0 %v2750
      %v2859 = vpop.f32.mrf.mxu0
      %v2860 = vadd.f32 0.0, %v2859
      %v2861 = vpop.f32.mrf.mxu0
      %v2862 = vpop.f32.mrf.mxu0
      %v2863 = vadd.f32 0.0, %v2862
      %v2864 = vpop.f32.mrf.mxu0
      %2865 = vmatprep.mubr.bf16.mxu0 0
      %2866 = vmatmul.mubr.bf16.gmra.mxu0 %v2753
      %v2867 = vpop.f32.mrf.mxu0
      %v2868 = vadd.f32 0.0, %v2867
      %v2869 = vpop.f32.mrf.mxu0
      %v2870 = vpop.f32.mrf.mxu0
      %v2871 = vadd.f32 0.0, %v2870
      %v2872 = vpop.f32.mrf.mxu0
      %2873 = vmatprep.mubr.bf16.mxu0 0
      %2874 = vmatmul.mubr.bf16.gmra.mxu0 %v2756
      %v2875 = vpop.f32.mrf.mxu0
      %v2876 = vadd.f32 0.0, %v2875
      %v2877 = vpop.f32.mrf.mxu0
      %v2878 = vpop.f32.mrf.mxu0
      %v2879 = vadd.f32 0.0, %v2878
      %v2880 = vpop.f32.mrf.mxu0
      %2881 = vmatprep.mubr.bf16.mxu0 0
      %2882 = vmatmul.mubr.bf16.gmra.mxu0 %v2759
      %v2883 = vpop.f32.mrf.mxu0
      %v2884 = vadd.f32 0.0, %v2883
      %v2885 = vpop.f32.mrf.mxu0
      %v2886 = vpop.f32.mrf.mxu0
      %v2887 = vadd.f32 0.0, %v2886
      %v2888 = vpop.f32.mrf.mxu0
      %2889 = vmatprep.mubr.bf16.mxu0 0
      %2890 = vmatmul.mubr.bf16.gmra.mxu0 %v2762
      %v2891 = vpop.f32.mrf.mxu0
      %v2892 = vadd.f32 0.0, %v2891
      %v2893 = vpop.f32.mrf.mxu0
      %v2894 = vpop.f32.mrf.mxu0
      %v2895 = vadd.f32 0.0, %v2894
      %v2896 = vpop.f32.mrf.mxu0
      %2897 = vmatprep.mubr.bf16.mxu0 0
      %2898 = vmatmul.mubr.bf16.gmra.mxu0 %v2765
      %v2899 = vpop.f32.mrf.mxu0
      %v2900 = vadd.f32 0.0, %v2899
      %v2901 = vpop.f32.mrf.mxu0
      %v2902 = vpop.f32.mrf.mxu0
      %v2903 = vadd.f32 0.0, %v2902
      %v2904 = vpop.f32.mrf.mxu0
      %2905 = vmatprep.mubr.bf16.mxu0 0
      %2906 = vmatmul.mubr.bf16.gmra.mxu0 %v2768
      %v2907 = vpop.f32.mrf.mxu0
      %v2908 = vadd.f32 0.0, %v2907
      %v2909 = vpop.f32.mrf.mxu0
      %v2910 = vpop.f32.mrf.mxu0
      %v2911 = vadd.f32 0.0, %v2910
      %v2912 = vpop.f32.mrf.mxu0
      %2913 = vmatprep.mubr.bf16.mxu0 0
      %2914 = vmatmul.mubr.bf16.gmra.mxu0 %v2771
      %v2915 = vpop.f32.mrf.mxu0
      %v2916 = vadd.f32 0.0, %v2915
      %v2917 = vpop.f32.mrf.mxu0
      %v2918 = vpop.f32.mrf.mxu0
      %v2919 = vadd.f32 0.0, %v2918
      %v2920 = vpop.f32.mrf.mxu0
      %2921 = vmatprep.mubr.bf16.mxu0 0
      %2922 = vmatmul.mubr.bf16.gmra.mxu0 %v2774
      %v2923 = vpop.f32.mrf.mxu0
      %v2924 = vadd.f32 0.0, %v2923
      %v2925 = vpop.f32.mrf.mxu0
      %v2926 = vpop.f32.mrf.mxu0
      %v2927 = vadd.f32 0.0, %v2926
      %v2928 = vpop.f32.mrf.mxu0
      %2929 = vmatprep.mubr.bf16.mxu0 0
      %2930 = vmatmul.mubr.bf16.gmra.mxu0 %v2777
      %v2931 = vpop.f32.mrf.mxu0
      %v2932 = vadd.f32 0.0, %v2931
      %v2933 = vpop.f32.mrf.mxu0
      %v2934 = vpop.f32.mrf.mxu0
      %v2935 = vadd.f32 0.0, %v2934
      %v2936 = vpop.f32.mrf.mxu0
      %2937 = vmatprep.mubr.bf16.mxu0 0
      %2938 = vmatmul.mubr.bf16.gmra.mxu0 %v2780
      %v2939 = vpop.f32.mrf.mxu0
      %v2940 = vadd.f32 0.0, %v2939
      %v2941 = vpop.f32.mrf.mxu0
      %v2942 = vpop.f32.mrf.mxu0
      %v2943 = vadd.f32 0.0, %v2942
      %v2944 = vpop.f32.mrf.mxu0
      %2945 = vdwg.mxu0
      %v2946 = vadd.f32 %v2473, %v2820
      %v2947 = vadd.f32 %v2474, %v2823
      %v2948 = vadd.f32 %v2475, %v2828
      %v2949 = vadd.f32 %v2476, %v2831
      %v2950 = vadd.f32 %v2477, %v2836
      %v2951 = vadd.f32 %v2478, %v2839
      %v2952 = vadd.f32 %v2479, %v2844
      %v2953 = vadd.f32 %v2480, %v2847
      %v2954 = vadd.f32 %v2481, %v2852
      %v2955 = vadd.f32 %v2482, %v2855
      %v2956 = vadd.f32 %v2483, %v2860
      %v2957 = vadd.f32 %v2484, %v2863
      %v2958 = vadd.f32 %v2485, %v2868
      %v2959 = vadd.f32 %v2486, %v2871
      %v2960 = vadd.f32 %v2487, %v2876
      %v2961 = vadd.f32 %v2488, %v2879
      %v2962 = vadd.f32 %v2489, %v2884
      %v2963 = vadd.f32 %v2490, %v2887
      %v2964 = vadd.f32 %v2491, %v2892
      %v2965 = vadd.f32 %v2492, %v2895
      %v2966 = vadd.f32 %v2493, %v2900
      %v2967 = vadd.f32 %v2494, %v2903
      %v2968 = vadd.f32 %v2495, %v2908
      %v2969 = vadd.f32 %v2496, %v2911
      %v2970 = vadd.f32 %v2497, %v2916
      %v2971 = vadd.f32 %v2498, %v2919
      %v2972 = vadd.f32 %v2499, %v2924
      %v2973 = vadd.f32 %v2500, %v2927
      %v2974 = vadd.f32 %v2501, %v2932
      %v2975 = vadd.f32 %v2502, %v2935
      %v2976 = vadd.f32 %v2503, %v2940
      %v2977 = vadd.f32 %v2504, %v2943
      %v2978 = vld [vmem:[%s1296] sm:$0xf]
      %v2979 = vld [vmem:[%s1296 + $0x4] sm:$0xf]
      %v2980 = vld [vmem:[%s1296 + $0xc] sm:$0xf]
      %v2981 = vld [vmem:[%s1296 + $0x10] sm:$0xf]
      %v2982 = vld [vmem:[%s1296 + $0x18] sm:$0xf]
      %v2983 = vld [vmem:[%s1296 + $0x1c] sm:$0xf]
      %v2984 = vld [vmem:[%s1296 + $0x24] sm:$0xf]
      %v2985 = vld [vmem:[%s1296 + $0x28] sm:$0xf]
      %v2986 = vld [vmem:[%s1296 + $0x30] sm:$0xf]
      %v2987 = vld [vmem:[%s1296 + $0x34] sm:$0xf]
      %v2988 = vld [vmem:[%s1296 + $0x3c] sm:$0xf]
      %v2989 = vld [vmem:[%s1296 + $0x40] sm:$0xf]
      %v2990 = vld [vmem:[%s1296 + $0x48] sm:$0xf]
      %v2991 = vld [vmem:[%s1296 + $0x4c] sm:$0xf]
      %v2992 = vld [vmem:[%s1296 + $0x54] sm:$0xf]
      %v2993 = vld [vmem:[%s1296 + $0x58] sm:$0xf]
      %v2994 = vld [vmem:[%s1296 + $0x60] sm:$0xf]
      %v2995 = vld [vmem:[%s1296 + $0x64] sm:$0xf]
      %v2996 = vld [vmem:[%s1296 + $0x6c] sm:$0xf]
      %v2997 = vld [vmem:[%s1296 + $0x70] sm:$0xf]
      %v2998 = vld [vmem:[%s1296 + $0x78] sm:$0xf]
      %v2999 = vld [vmem:[%s1296 + $0x7c] sm:$0xf]
      %v3000 = vld [vmem:[%s1296 + $0x84] sm:$0xf]
      %v3001 = vld [vmem:[%s1296 + $0x88] sm:$0xf]
      %v3002 = vld [vmem:[%s1296 + $0x90] sm:$0xf]
      %v3003 = vld [vmem:[%s1296 + $0x94] sm:$0xf]
      %v3004 = vld [vmem:[%s1296 + $0x9c] sm:$0xf]
      %v3005 = vld [vmem:[%s1296 + $0xa0] sm:$0xf]
      %v3006 = vld [vmem:[%s1296 + $0xa8] sm:$0xf]
      %v3007 = vld [vmem:[%s1296 + $0xac] sm:$0xf]
      %v3008 = vld [vmem:[%s1296 + $0xb4] sm:$0xf]
      %v3009 = vld [vmem:[%s1296 + $0xb8] sm:$0xf]
      %s3010 = scalar_lea.vmem %s3, 12
      %v3011 = vld [vmem:[%s3010] sm:$0xf]
      %v3044 = vunpack.c.l.b16 %v2978
      %v3045 = vunpack.c.l.b16 %v2979
      %v3046 = vunpack.c.l.b16 %v2980
      %v3047 = vunpack.c.l.b16 %v2981
      %v3048 = vunpack.c.l.b16 %v2982
      %v3049 = vunpack.c.l.b16 %v2983
      %v3050 = vunpack.c.l.b16 %v2984
      %v3051 = vunpack.c.l.b16 %v2985
      %v3052 = vunpack.c.l.b16 %v2986
      %v3053 = vunpack.c.l.b16 %v2987
      %v3054 = vunpack.c.l.b16 %v2988
      %v3055 = vunpack.c.l.b16 %v2989
      %v3056 = vunpack.c.l.b16 %v2990
      %v3057 = vunpack.c.l.b16 %v2991
      %v3058 = vunpack.c.l.b16 %v2992
      %v3059 = vunpack.c.l.b16 %v2993
      %v3060 = vunpack.c.l.b16 %v2994
      %v3061 = vunpack.c.l.b16 %v2995
      %v3062 = vunpack.c.l.b16 %v2996
      %v3063 = vunpack.c.l.b16 %v2997
      %v3064 = vunpack.c.l.b16 %v2998
      %v3065 = vunpack.c.l.b16 %v2999
      %v3066 = vunpack.c.l.b16 %v3000
      %v3067 = vunpack.c.l.b16 %v3001
      %v3068 = vunpack.c.l.b16 %v3002
      %v3069 = vunpack.c.l.b16 %v3003
      %v3070 = vunpack.c.l.b16 %v3004
      %v3071 = vunpack.c.l.b16 %v3005
      %v3072 = vunpack.c.l.b16 %v3006
      %v3073 = vunpack.c.l.b16 %v3007
      %v3074 = vunpack.c.l.b16 %v3008
      %v3075 = vunpack.c.l.b16 %v3009
      %v3076 = vpack.c.b16 %v3045, %v3044
      %v3077 = vpack.c.b16 %v3047, %v3046
      %v3078 = vpack.c.b16 %v3049, %v3048
      %v3079 = vpack.c.b16 %v3051, %v3050
      %v3080 = vpack.c.b16 %v3053, %v3052
      %v3081 = vpack.c.b16 %v3055, %v3054
      %v3082 = vpack.c.b16 %v3057, %v3056
      %v3083 = vpack.c.b16 %v3059, %v3058
      %v3084 = vpack.c.b16 %v3061, %v3060
      %v3085 = vpack.c.b16 %v3063, %v3062
      %v3086 = vpack.c.b16 %v3065, %v3064
      %v3087 = vpack.c.b16 %v3067, %v3066
      %v3088 = vpack.c.b16 %v3069, %v3068
      %v3089 = vpack.c.b16 %v3071, %v3070
      %v3090 = vpack.c.b16 %v3073, %v3072
      %v3091 = vpack.c.b16 %v3075, %v3074
      %v3093 = vsel %vm1524, %v3076, 0
      %v3096 = vsel %vm1524, %v3077, 0
      %v3099 = vsel %vm1524, %v3078, 0
      %v3102 = vsel %vm1524, %v3079, 0
      %v3105 = vsel %vm1524, %v3080, 0
      %v3108 = vsel %vm1524, %v3081, 0
      %v3111 = vsel %vm1524, %v3082, 0
      %v3114 = vsel %vm1524, %v3083, 0
      %v3117 = vsel %vm1524, %v3084, 0
      %v3120 = vsel %vm1524, %v3085, 0
      %v3123 = vsel %vm1524, %v3086, 0
      %v3126 = vsel %vm1524, %v3087, 0
      %v3129 = vsel %vm1524, %v3088, 0
      %v3132 = vsel %vm1524, %v3089, 0
      %v3135 = vsel %vm1524, %v3090, 0
      %v3138 = vsel %vm1524, %v3091, 0
      %v3141 = vsel %vm1573, %v3011, 0
      %3143 = vmatprep.subr.bf16.mxu0 0
      %3144 = vmatpush1.bf16.msra.mxu0 0
      %3145 = vmatprep.subr.bf16.mxu0 0
      %3146 = vmatpush1.bf16.msra.mxu0 0
      %3147 = vmatprep.subr.bf16.mxu0 0
      %3148 = vmatpush1.bf16.msra.mxu0 0
      %3149 = vmatprep.subr.bf16.mxu0 0
      %3150 = vmatpush1.bf16.msra.mxu0 0
      %3151 = vmatprep.subr.bf16.mxu0 0
      %3152 = vmatpush1.bf16.msra.mxu0 0
      %3153 = vmatprep.subr.bf16.mxu0 0
      %3154 = vmatpush1.bf16.msra.mxu0 0
      %3155 = vmatprep.subr.bf16.mxu0 0
      %3156 = vmatpush1.bf16.msra.mxu0 0
      %3157 = vmatprep.subr.bf16.mxu0 0
      %3158 = vmatpush1.bf16.msra.mxu0 %v3141
      %3159 = vmatprep.subr.bf16.mxu0 0
      %3160 = vmatpush2.bf16.msra.mxu0 0
      %3161 = vmatprep.subr.bf16.mxu0 0
      %3162 = vmatpush2.bf16.msra.mxu0 0
      %3163 = vmatprep.subr.bf16.mxu0 0
      %3164 = vmatpush2.bf16.msra.mxu0 0
      %3165 = vmatprep.subr.bf16.mxu0 0
      %3166 = vmatpush2.bf16.msra.mxu0 0
      %3167 = vmatprep.subr.bf16.mxu0 0
      %3168 = vmatpush2.bf16.msra.mxu0 0
      %3169 = vmatprep.subr.bf16.mxu0 0
      %3170 = vmatpush2.bf16.msra.mxu0 0
      %3171 = vmatprep.subr.bf16.mxu0 0
      %3172 = vmatpush2.bf16.msra.mxu0 0
      %3173 = vmatprep.subr.bf16.mxu0 0
      %3174 = vmatpush2.bf16.msra.mxu0 0
      %3175 = vmatprep.mubr.bf16.mxu0 0
      %3176 = vmatmul.mubr.bf16.gmra.mxu0 %v3093
      %v3177 = vpop.f32.mrf.mxu0
      %v3178 = vadd.f32 0.0, %v3177
      %v3179 = vpop.f32.mrf.mxu0
      %v3180 = vpop.f32.mrf.mxu0
      %v3181 = vadd.f32 0.0, %v3180
      %v3182 = vpop.f32.mrf.mxu0
      %3183 = vmatprep.mubr.bf16.mxu0 0
      %3184 = vmatmul.mubr.bf16.gmra.mxu0 %v3096
      %v3185 = vpop.f32.mrf.mxu0
      %v3186 = vadd.f32 0.0, %v3185
      %v3187 = vpop.f32.mrf.mxu0
      %v3188 = vpop.f32.mrf.mxu0
      %v3189 = vadd.f32 0.0, %v3188
      %v3190 = vpop.f32.mrf.mxu0
      %3191 = vmatprep.mubr.bf16.mxu0 0
      %3192 = vmatmul.mubr.bf16.gmra.mxu0 %v3099
      %v3193 = vpop.f32.mrf.mxu0
      %v3194 = vadd.f32 0.0, %v3193
      %v3195 = vpop.f32.mrf.mxu0
      %v3196 = vpop.f32.mrf.mxu0
      %v3197 = vadd.f32 0.0, %v3196
      %v3198 = vpop.f32.mrf.mxu0
      %3199 = vmatprep.mubr.bf16.mxu0 0
      %3200 = vmatmul.mubr.bf16.gmra.mxu0 %v3102
      %v3201 = vpop.f32.mrf.mxu0
      %v3202 = vadd.f32 0.0, %v3201
      %v3203 = vpop.f32.mrf.mxu0
      %v3204 = vpop.f32.mrf.mxu0
      %v3205 = vadd.f32 0.0, %v3204
      %v3206 = vpop.f32.mrf.mxu0
      %3207 = vmatprep.mubr.bf16.mxu0 0
      %3208 = vmatmul.mubr.bf16.gmra.mxu0 %v3105
      %v3209 = vpop.f32.mrf.mxu0
      %v3210 = vadd.f32 0.0, %v3209
      %v3211 = vpop.f32.mrf.mxu0
      %v3212 = vpop.f32.mrf.mxu0
      %v3213 = vadd.f32 0.0, %v3212
      %v3214 = vpop.f32.mrf.mxu0
      %3215 = vmatprep.mubr.bf16.mxu0 0
      %3216 = vmatmul.mubr.bf16.gmra.mxu0 %v3108
      %v3217 = vpop.f32.mrf.mxu0
      %v3218 = vadd.f32 0.0, %v3217
      %v3219 = vpop.f32.mrf.mxu0
      %v3220 = vpop.f32.mrf.mxu0
      %v3221 = vadd.f32 0.0, %v3220
      %v3222 = vpop.f32.mrf.mxu0
      %3223 = vmatprep.mubr.bf16.mxu0 0
      %3224 = vmatmul.mubr.bf16.gmra.mxu0 %v3111
      %v3225 = vpop.f32.mrf.mxu0
      %v3226 = vadd.f32 0.0, %v3225
      %v3227 = vpop.f32.mrf.mxu0
      %v3228 = vpop.f32.mrf.mxu0
      %v3229 = vadd.f32 0.0, %v3228
      %v3230 = vpop.f32.mrf.mxu0
      %3231 = vmatprep.mubr.bf16.mxu0 0
      %3232 = vmatmul.mubr.bf16.gmra.mxu0 %v3114
      %v3233 = vpop.f32.mrf.mxu0
      %v3234 = vadd.f32 0.0, %v3233
      %v3235 = vpop.f32.mrf.mxu0
      %v3236 = vpop.f32.mrf.mxu0
      %v3237 = vadd.f32 0.0, %v3236
      %v3238 = vpop.f32.mrf.mxu0
      %3239 = vmatprep.mubr.bf16.mxu0 0
      %3240 = vmatmul.mubr.bf16.gmra.mxu0 %v3117
      %v3241 = vpop.f32.mrf.mxu0
      %v3242 = vadd.f32 0.0, %v3241
      %v3243 = vpop.f32.mrf.mxu0
      %v3244 = vpop.f32.mrf.mxu0
      %v3245 = vadd.f32 0.0, %v3244
      %v3246 = vpop.f32.mrf.mxu0
      %3247 = vmatprep.mubr.bf16.mxu0 0
      %3248 = vmatmul.mubr.bf16.gmra.mxu0 %v3120
      %v3249 = vpop.f32.mrf.mxu0
      %v3250 = vadd.f32 0.0, %v3249
      %v3251 = vpop.f32.mrf.mxu0
      %v3252 = vpop.f32.mrf.mxu0
      %v3253 = vadd.f32 0.0, %v3252
      %v3254 = vpop.f32.mrf.mxu0
      %3255 = vmatprep.mubr.bf16.mxu0 0
      %3256 = vmatmul.mubr.bf16.gmra.mxu0 %v3123
      %v3257 = vpop.f32.mrf.mxu0
      %v3258 = vadd.f32 0.0, %v3257
      %v3259 = vpop.f32.mrf.mxu0
      %v3260 = vpop.f32.mrf.mxu0
      %v3261 = vadd.f32 0.0, %v3260
      %v3262 = vpop.f32.mrf.mxu0
      %3263 = vmatprep.mubr.bf16.mxu0 0
      %3264 = vmatmul.mubr.bf16.gmra.mxu0 %v3126
      %v3265 = vpop.f32.mrf.mxu0
      %v3266 = vadd.f32 0.0, %v3265
      %v3267 = vpop.f32.mrf.mxu0
      %v3268 = vpop.f32.mrf.mxu0
      %v3269 = vadd.f32 0.0, %v3268
      %v3270 = vpop.f32.mrf.mxu0
      %3271 = vmatprep.mubr.bf16.mxu0 0
      %3272 = vmatmul.mubr.bf16.gmra.mxu0 %v3129
      %v3273 = vpop.f32.mrf.mxu0
      %v3274 = vadd.f32 0.0, %v3273
      %v3275 = vpop.f32.mrf.mxu0
      %v3276 = vpop.f32.mrf.mxu0
      %v3277 = vadd.f32 0.0, %v3276
      %v3278 = vpop.f32.mrf.mxu0
      %3279 = vmatprep.mubr.bf16.mxu0 0
      %3280 = vmatmul.mubr.bf16.gmra.mxu0 %v3132
      %v3281 = vpop.f32.mrf.mxu0
      %v3282 = vadd.f32 0.0, %v3281
      %v3283 = vpop.f32.mrf.mxu0
      %v3284 = vpop.f32.mrf.mxu0
      %v3285 = vadd.f32 0.0, %v3284
      %v3286 = vpop.f32.mrf.mxu0
      %3287 = vmatprep.mubr.bf16.mxu0 0
      %3288 = vmatmul.mubr.bf16.gmra.mxu0 %v3135
      %v3289 = vpop.f32.mrf.mxu0
      %v3290 = vadd.f32 0.0, %v3289
      %v3291 = vpop.f32.mrf.mxu0
      %v3292 = vpop.f32.mrf.mxu0
      %v3293 = vadd.f32 0.0, %v3292
      %v3294 = vpop.f32.mrf.mxu0
      %3295 = vmatprep.mubr.bf16.mxu0 0
      %3296 = vmatmul.mubr.bf16.gmra.mxu0 %v3138
      %v3297 = vpop.f32.mrf.mxu0
      %v3298 = vadd.f32 0.0, %v3297
      %v3299 = vpop.f32.mrf.mxu0
      %v3300 = vpop.f32.mrf.mxu0
      %v3301 = vadd.f32 0.0, %v3300
      %v3302 = vpop.f32.mrf.mxu0
      %3303 = vdwg.mxu0
      %v3304 = vadd.f32 %v2946, %v3178
      %v3305 = vadd.f32 %v2947, %v3181
      %v3306 = vadd.f32 %v2948, %v3186
      %v3307 = vadd.f32 %v2949, %v3189
      %v3308 = vadd.f32 %v2950, %v3194
      %v3309 = vadd.f32 %v2951, %v3197
      %v3310 = vadd.f32 %v2952, %v3202
      %v3311 = vadd.f32 %v2953, %v3205
      %v3312 = vadd.f32 %v2954, %v3210
      %v3313 = vadd.f32 %v2955, %v3213
      %v3314 = vadd.f32 %v2956, %v3218
      %v3315 = vadd.f32 %v2957, %v3221
      %v3316 = vadd.f32 %v2958, %v3226
      %v3317 = vadd.f32 %v2959, %v3229
      %v3318 = vadd.f32 %v2960, %v3234
      %v3319 = vadd.f32 %v2961, %v3237
      %v3320 = vadd.f32 %v2962, %v3242
      %v3321 = vadd.f32 %v2963, %v3245
      %v3322 = vadd.f32 %v2964, %v3250
      %v3323 = vadd.f32 %v2965, %v3253
      %v3324 = vadd.f32 %v2966, %v3258
      %v3325 = vadd.f32 %v2967, %v3261
      %v3326 = vadd.f32 %v2968, %v3266
      %v3327 = vadd.f32 %v2969, %v3269
      %v3328 = vadd.f32 %v2970, %v3274
      %v3329 = vadd.f32 %v2971, %v3277
      %v3330 = vadd.f32 %v2972, %v3282
      %v3331 = vadd.f32 %v2973, %v3285
      %v3332 = vadd.f32 %v2974, %v3290
      %v3333 = vadd.f32 %v2975, %v3293
      %v3334 = vadd.f32 %v2976, %v3298
      %v3335 = vadd.f32 %v2977, %v3301
      %v3336 = vld [vmem:[%s1296] sm:$0xf]
      %v3337 = vld [vmem:[%s1296 + $0x4] sm:$0xf]
      %v3338 = vld [vmem:[%s1296 + $0x8] sm:$0x1]
      %v3339 = vld [vmem:[%s1296 + $0xc] sm:$0xf]
      %v3340 = vld [vmem:[%s1296 + $0x10] sm:$0xf]
      %v3341 = vld [vmem:[%s1296 + $0x14] sm:$0x1]
      %v3342 = vld [vmem:[%s1296 + $0x18] sm:$0xf]
      %v3343 = vld [vmem:[%s1296 + $0x1c] sm:$0xf]
      %v3344 = vld [vmem:[%s1296 + $0x20] sm:$0x1]
      %v3345 = vld [vmem:[%s1296 + $0x24] sm:$0xf]
      %v3346 = vld [vmem:[%s1296 + $0x28] sm:$0xf]
      %v3347 = vld [vmem:[%s1296 + $0x2c] sm:$0x1]
      %v3348 = vld [vmem:[%s1296 + $0x30] sm:$0xf]
      %v3349 = vld [vmem:[%s1296 + $0x34] sm:$0xf]
      %v3350 = vld [vmem:[%s1296 + $0x38] sm:$0x1]
      %v3351 = vld [vmem:[%s1296 + $0x3c] sm:$0xf]
      %v3352 = vld [vmem:[%s1296 + $0x40] sm:$0xf]
      %v3353 = vld [vmem:[%s1296 + $0x44] sm:$0x1]
      %v3354 = vld [vmem:[%s1296 + $0x48] sm:$0xf]
      %v3355 = vld [vmem:[%s1296 + $0x4c] sm:$0xf]
      %v3356 = vld [vmem:[%s1296 + $0x50] sm:$0x1]
      %v3357 = vld [vmem:[%s1296 + $0x54] sm:$0xf]
      %v3358 = vld [vmem:[%s1296 + $0x58] sm:$0xf]
      %v3359 = vld [vmem:[%s1296 + $0x5c] sm:$0x1]
      %v3360 = vld [vmem:[%s1296 + $0x60] sm:$0xf]
      %v3361 = vld [vmem:[%s1296 + $0x64] sm:$0xf]
      %v3362 = vld [vmem:[%s1296 + $0x68] sm:$0x1]
      %v3363 = vld [vmem:[%s1296 + $0x6c] sm:$0xf]
      %v3364 = vld [vmem:[%s1296 + $0x70] sm:$0xf]
      %v3365 = vld [vmem:[%s1296 + $0x74] sm:$0x1]
      %v3366 = vld [vmem:[%s1296 + $0x78] sm:$0xf]
      %v3367 = vld [vmem:[%s1296 + $0x7c] sm:$0xf]
      %v3368 = vld [vmem:[%s1296 + $0x80] sm:$0x1]
      %v3369 = vld [vmem:[%s1296 + $0x84] sm:$0xf]
      %v3370 = vld [vmem:[%s1296 + $0x88] sm:$0xf]
      %v3371 = vld [vmem:[%s1296 + $0x8c] sm:$0x1]
      %v3372 = vld [vmem:[%s1296 + $0x90] sm:$0xf]
      %v3373 = vld [vmem:[%s1296 + $0x94] sm:$0xf]
      %v3374 = vld [vmem:[%s1296 + $0x98] sm:$0x1]
      %v3375 = vld [vmem:[%s1296 + $0x9c] sm:$0xf]
      %v3376 = vld [vmem:[%s1296 + $0xa0] sm:$0xf]
      %v3377 = vld [vmem:[%s1296 + $0xa4] sm:$0x1]
      %v3378 = vld [vmem:[%s1296 + $0xa8] sm:$0xf]
      %v3379 = vld [vmem:[%s1296 + $0xac] sm:$0xf]
      %v3380 = vld [vmem:[%s1296 + $0xb0] sm:$0x1]
      %v3381 = vld [vmem:[%s1296 + $0xb4] sm:$0xf]
      %v3382 = vld [vmem:[%s1296 + $0xb8] sm:$0xf]
      %v3383 = vld [vmem:[%s1296 + $0xbc] sm:$0x1]
      %v3385 = vshrl.u32 %v3336, 16
      %v3387 = vrot.slane %v3385, 4
      %v3388 = vshll.u32 %v3336, 16
      %v3390 = vrot.slane %v3388, 5
      %v3391 = vor.u32 %v3387, %v3390
      %v3392 = vrot.slane %v3391, 4
      %v3394 = vshll.u32 %v3337, 16
      %v3396 = vrot.slane %v3394, 5
      %v3397 = vsel %vm1826, %v3392, %v3396
      %v3398 = vshrl.u32 %v3337, 16
      %v3400 = vrot.slane %v3398, 4
      %v3401 = vor.u32 %v3400, %v3396
      %v3402 = vrot.slane %v3401, 4
      %v3404 = vshll.u32 %v3338, 16
      %v3406 = vrot.slane %v3404, 5
      %v3407 = vsel %vm1826, %v3402, %v3406
      %v3409 = vshrl.u32 %v3339, 16
      %v3411 = vrot.slane %v3409, 4
      %v3412 = vshll.u32 %v3339, 16
      %v3414 = vrot.slane %v3412, 5
      %v3415 = vor.u32 %v3411, %v3414
      %v3416 = vrot.slane %v3415, 4
      %v3418 = vshll.u32 %v3340, 16
      %v3420 = vrot.slane %v3418, 5
      %v3421 = vsel %vm1826, %v3416, %v3420
      %v3422 = vshrl.u32 %v3340, 16
      %v3424 = vrot.slane %v3422, 4
      %v3425 = vor.u32 %v3424, %v3420
      %v3426 = vrot.slane %v3425, 4
      %v3428 = vshll.u32 %v3341, 16
      %v3430 = vrot.slane %v3428, 5
      %v3431 = vsel %vm1826, %v3426, %v3430
      %v3433 = vshrl.u32 %v3342, 16
      %v3435 = vrot.slane %v3433, 4
      %v3436 = vshll.u32 %v3342, 16
      %v3438 = vrot.slane %v3436, 5
      %v3439 = vor.u32 %v3435, %v3438
      %v3440 = vrot.slane %v3439, 4
      %v3442 = vshll.u32 %v3343, 16
      %v3444 = vrot.slane %v3442, 5
      %v3445 = vsel %vm1826, %v3440, %v3444
      %v3446 = vshrl.u32 %v3343, 16
      %v3448 = vrot.slane %v3446, 4
      %v3449 = vor.u32 %v3448, %v3444
      %v3450 = vrot.slane %v3449, 4
      %v3452 = vshll.u32 %v3344, 16
      %v3454 = vrot.slane %v3452, 5
      %v3455 = vsel %vm1826, %v3450, %v3454
      %v3457 = vshrl.u32 %v3345, 16
      %v3459 = vrot.slane %v3457, 4
      %v3460 = vshll.u32 %v3345, 16
      %v3462 = vrot.slane %v3460, 5
      %v3463 = vor.u32 %v3459, %v3462
      %v3464 = vrot.slane %v3463, 4
      %v3466 = vshll.u32 %v3346, 16
      %v3468 = vrot.slane %v3466, 5
      %v3469 = vsel %vm1826, %v3464, %v3468
      %v3470 = vshrl.u32 %v3346, 16
      %v3472 = vrot.slane %v3470, 4
      %v3473 = vor.u32 %v3472, %v3468
      %v3474 = vrot.slane %v3473, 4
      %v3476 = vshll.u32 %v3347, 16
      %v3478 = vrot.slane %v3476, 5
      %v3479 = vsel %vm1826, %v3474, %v3478
      %v3481 = vshrl.u32 %v3348, 16
      %v3483 = vrot.slane %v3481, 4
      %v3484 = vshll.u32 %v3348, 16
      %v3486 = vrot.slane %v3484, 5
      %v3487 = vor.u32 %v3483, %v3486
      %v3488 = vrot.slane %v3487, 4
      %v3490 = vshll.u32 %v3349, 16
      %v3492 = vrot.slane %v3490, 5
      %v3493 = vsel %vm1826, %v3488, %v3492
      %v3494 = vshrl.u32 %v3349, 16
      %v3496 = vrot.slane %v3494, 4
      %v3497 = vor.u32 %v3496, %v3492
      %v3498 = vrot.slane %v3497, 4
      %v3500 = vshll.u32 %v3350, 16
      %v3502 = vrot.slane %v3500, 5
      %v3503 = vsel %vm1826, %v3498, %v3502
      %v3505 = vshrl.u32 %v3351, 16
      %v3507 = vrot.slane %v3505, 4
      %v3508 = vshll.u32 %v3351, 16
      %v3510 = vrot.slane %v3508, 5
      %v3511 = vor.u32 %v3507, %v3510
      %v3512 = vrot.slane %v3511, 4
      %v3514 = vshll.u32 %v3352, 16
      %v3516 = vrot.slane %v3514, 5
      %v3517 = vsel %vm1826, %v3512, %v3516
      %v3518 = vshrl.u32 %v3352, 16
      %v3520 = vrot.slane %v3518, 4
      %v3521 = vor.u32 %v3520, %v3516
      %v3522 = vrot.slane %v3521, 4
      %v3524 = vshll.u32 %v3353, 16
      %v3526 = vrot.slane %v3524, 5
      %v3527 = vsel %vm1826, %v3522, %v3526
      %v3529 = vshrl.u32 %v3354, 16
      %v3531 = vrot.slane %v3529, 4
      %v3532 = vshll.u32 %v3354, 16
      %v3534 = vrot.slane %v3532, 5
      %v3535 = vor.u32 %v3531, %v3534
      %v3536 = vrot.slane %v3535, 4
      %v3538 = vshll.u32 %v3355, 16
      %v3540 = vrot.slane %v3538, 5
      %v3541 = vsel %vm1826, %v3536, %v3540
      %v3542 = vshrl.u32 %v3355, 16
      %v3544 = vrot.slane %v3542, 4
      %v3545 = vor.u32 %v3544, %v3540
      %v3546 = vrot.slane %v3545, 4
      %v3548 = vshll.u32 %v3356, 16
      %v3550 = vrot.slane %v3548, 5
      %v3551 = vsel %vm1826, %v3546, %v3550
      %v3553 = vshrl.u32 %v3357, 16
      %v3555 = vrot.slane %v3553, 4
      %v3556 = vshll.u32 %v3357, 16
      %v3558 = vrot.slane %v3556, 5
      %v3559 = vor.u32 %v3555, %v3558
      %v3560 = vrot.slane %v3559, 4
      %v3562 = vshll.u32 %v3358, 16
      %v3564 = vrot.slane %v3562, 5
      %v3565 = vsel %vm1826, %v3560, %v3564
      %v3566 = vshrl.u32 %v3358, 16
      %v3568 = vrot.slane %v3566, 4
      %v3569 = vor.u32 %v3568, %v3564
      %v3570 = vrot.slane %v3569, 4
      %v3572 = vshll.u32 %v3359, 16
      %v3574 = vrot.slane %v3572, 5
      %v3575 = vsel %vm1826, %v3570, %v3574
      %v3577 = vshrl.u32 %v3360, 16
      %v3579 = vrot.slane %v3577, 4
      %v3580 = vshll.u32 %v3360, 16
      %v3582 = vrot.slane %v3580, 5
      %v3583 = vor.u32 %v3579, %v3582
      %v3584 = vrot.slane %v3583, 4
      %v3586 = vshll.u32 %v3361, 16
      %v3588 = vrot.slane %v3586, 5
      %v3589 = vsel %vm1826, %v3584, %v3588
      %v3590 = vshrl.u32 %v3361, 16
      %v3592 = vrot.slane %v3590, 4
      %v3593 = vor.u32 %v3592, %v3588
      %v3594 = vrot.slane %v3593, 4
      %v3596 = vshll.u32 %v3362, 16
      %v3598 = vrot.slane %v3596, 5
      %v3599 = vsel %vm1826, %v3594, %v3598
      %v3601 = vshrl.u32 %v3363, 16
      %v3603 = vrot.slane %v3601, 4
      %v3604 = vshll.u32 %v3363, 16
      %v3606 = vrot.slane %v3604, 5
      %v3607 = vor.u32 %v3603, %v3606
      %v3608 = vrot.slane %v3607, 4
      %v3610 = vshll.u32 %v3364, 16
      %v3612 = vrot.slane %v3610, 5
      %v3613 = vsel %vm1826, %v3608, %v3612
      %v3614 = vshrl.u32 %v3364, 16
      %v3616 = vrot.slane %v3614, 4
      %v3617 = vor.u32 %v3616, %v3612
      %v3618 = vrot.slane %v3617, 4
      %v3620 = vshll.u32 %v3365, 16
      %v3622 = vrot.slane %v3620, 5
      %v3623 = vsel %vm1826, %v3618, %v3622
      %v3625 = vshrl.u32 %v3366, 16
      %v3627 = vrot.slane %v3625, 4
      %v3628 = vshll.u32 %v3366, 16
      %v3630 = vrot.slane %v3628, 5
      %v3631 = vor.u32 %v3627, %v3630
      %v3632 = vrot.slane %v3631, 4
      %v3634 = vshll.u32 %v3367, 16
      %v3636 = vrot.slane %v3634, 5
      %v3637 = vsel %vm1826, %v3632, %v3636
      %v3638 = vshrl.u32 %v3367, 16
      %v3640 = vrot.slane %v3638, 4
      %v3641 = vor.u32 %v3640, %v3636
      %v3642 = vrot.slane %v3641, 4
      %v3644 = vshll.u32 %v3368, 16
      %v3646 = vrot.slane %v3644, 5
      %v3647 = vsel %vm1826, %v3642, %v3646
      %v3649 = vshrl.u32 %v3369, 16
      %v3651 = vrot.slane %v3649, 4
      %v3652 = vshll.u32 %v3369, 16
      %v3654 = vrot.slane %v3652, 5
      %v3655 = vor.u32 %v3651, %v3654
      %v3656 = vrot.slane %v3655, 4
      %v3658 = vshll.u32 %v3370, 16
      %v3660 = vrot.slane %v3658, 5
      %v3661 = vsel %vm1826, %v3656, %v3660
      %v3662 = vshrl.u32 %v3370, 16
      %v3664 = vrot.slane %v3662, 4
      %v3665 = vor.u32 %v3664, %v3660
      %v3666 = vrot.slane %v3665, 4
      %v3668 = vshll.u32 %v3371, 16
      %v3670 = vrot.slane %v3668, 5
      %v3671 = vsel %vm1826, %v3666, %v3670
      %v3673 = vshrl.u32 %v3372, 16
      %v3675 = vrot.slane %v3673, 4
      %v3676 = vshll.u32 %v3372, 16
      %v3678 = vrot.slane %v3676, 5
      %v3679 = vor.u32 %v3675, %v3678
      %v3680 = vrot.slane %v3679, 4
      %v3682 = vshll.u32 %v3373, 16
      %v3684 = vrot.slane %v3682, 5
      %v3685 = vsel %vm1826, %v3680, %v3684
      %v3686 = vshrl.u32 %v3373, 16
      %v3688 = vrot.slane %v3686, 4
      %v3689 = vor.u32 %v3688, %v3684
      %v3690 = vrot.slane %v3689, 4
      %v3692 = vshll.u32 %v3374, 16
      %v3694 = vrot.slane %v3692, 5
      %v3695 = vsel %vm1826, %v3690, %v3694
      %v3697 = vshrl.u32 %v3375, 16
      %v3699 = vrot.slane %v3697, 4
      %v3700 = vshll.u32 %v3375, 16
      %v3702 = vrot.slane %v3700, 5
      %v3703 = vor.u32 %v3699, %v3702
      %v3704 = vrot.slane %v3703, 4
      %v3706 = vshll.u32 %v3376, 16
      %v3708 = vrot.slane %v3706, 5
      %v3709 = vsel %vm1826, %v3704, %v3708
      %v3710 = vshrl.u32 %v3376, 16
      %v3712 = vrot.slane %v3710, 4
      %v3713 = vor.u32 %v3712, %v3708
      %v3714 = vrot.slane %v3713, 4
      %v3716 = vshll.u32 %v3377, 16
      %v3718 = vrot.slane %v3716, 5
      %v3719 = vsel %vm1826, %v3714, %v3718
      %v3721 = vshrl.u32 %v3378, 16
      %v3723 = vrot.slane %v3721, 4
      %v3724 = vshll.u32 %v3378, 16
      %v3726 = vrot.slane %v3724, 5
      %v3727 = vor.u32 %v3723, %v3726
      %v3728 = vrot.slane %v3727, 4
      %v3730 = vshll.u32 %v3379, 16
      %v3732 = vrot.slane %v3730, 5
      %v3733 = vsel %vm1826, %v3728, %v3732
      %v3734 = vshrl.u32 %v3379, 16
      %v3736 = vrot.slane %v3734, 4
      %v3737 = vor.u32 %v3736, %v3732
      %v3738 = vrot.slane %v3737, 4
      %v3740 = vshll.u32 %v3380, 16
      %v3742 = vrot.slane %v3740, 5
      %v3743 = vsel %vm1826, %v3738, %v3742
      %v3745 = vshrl.u32 %v3381, 16
      %v3747 = vrot.slane %v3745, 4
      %v3748 = vshll.u32 %v3381, 16
      %v3750 = vrot.slane %v3748, 5
      %v3751 = vor.u32 %v3747, %v3750
      %v3752 = vrot.slane %v3751, 4
      %v3754 = vshll.u32 %v3382, 16
      %v3756 = vrot.slane %v3754, 5
      %v3757 = vsel %vm1826, %v3752, %v3756
      %v3758 = vshrl.u32 %v3382, 16
      %v3760 = vrot.slane %v3758, 4
      %v3761 = vor.u32 %v3760, %v3756
      %v3762 = vrot.slane %v3761, 4
      %v3764 = vshll.u32 %v3383, 16
      %v3766 = vrot.slane %v3764, 5
      %v3767 = vsel %vm1826, %v3762, %v3766
      %s3768 = scalar_lea.vmem %s3, 16
      %v3769 = vld [vmem:[%s3768] sm:$0xf]
      %v3770 = vunpack.c.l.b16 %v3397
      %v3771 = vunpack.c.l.b16 %v3407
      %v3772 = vunpack.c.l.b16 %v3421
      %v3773 = vunpack.c.l.b16 %v3431
      %v3774 = vunpack.c.l.b16 %v3445
      %v3775 = vunpack.c.l.b16 %v3455
      %v3776 = vunpack.c.l.b16 %v3469
      %v3777 = vunpack.c.l.b16 %v3479
      %v3778 = vunpack.c.l.b16 %v3493
      %v3779 = vunpack.c.l.b16 %v3503
      %v3780 = vunpack.c.l.b16 %v3517
      %v3781 = vunpack.c.l.b16 %v3527
      %v3782 = vunpack.c.l.b16 %v3541
      %v3783 = vunpack.c.l.b16 %v3551
      %v3784 = vunpack.c.l.b16 %v3565
      %v3785 = vunpack.c.l.b16 %v3575
      %v3786 = vunpack.c.l.b16 %v3589
      %v3787 = vunpack.c.l.b16 %v3599
      %v3788 = vunpack.c.l.b16 %v3613
      %v3789 = vunpack.c.l.b16 %v3623
      %v3790 = vunpack.c.l.b16 %v3637
      %v3791 = vunpack.c.l.b16 %v3647
      %v3792 = vunpack.c.l.b16 %v3661
      %v3793 = vunpack.c.l.b16 %v3671
      %v3794 = vunpack.c.l.b16 %v3685
      %v3795 = vunpack.c.l.b16 %v3695
      %v3796 = vunpack.c.l.b16 %v3709
      %v3797 = vunpack.c.l.b16 %v3719
      %v3798 = vunpack.c.l.b16 %v3733
      %v3799 = vunpack.c.l.b16 %v3743
      %v3800 = vunpack.c.l.b16 %v3757
      %v3801 = vunpack.c.l.b16 %v3767
      %v3802 = vpack.c.b16 %v3771, %v3770
      %v3803 = vpack.c.b16 %v3773, %v3772
      %v3804 = vpack.c.b16 %v3775, %v3774
      %v3805 = vpack.c.b16 %v3777, %v3776
      %v3806 = vpack.c.b16 %v3779, %v3778
      %v3807 = vpack.c.b16 %v3781, %v3780
      %v3808 = vpack.c.b16 %v3783, %v3782
      %v3809 = vpack.c.b16 %v3785, %v3784
      %v3810 = vpack.c.b16 %v3787, %v3786
      %v3811 = vpack.c.b16 %v3789, %v3788
      %v3812 = vpack.c.b16 %v3791, %v3790
      %v3813 = vpack.c.b16 %v3793, %v3792
      %v3814 = vpack.c.b16 %v3795, %v3794
      %v3815 = vpack.c.b16 %v3797, %v3796
      %v3816 = vpack.c.b16 %v3799, %v3798
      %v3817 = vpack.c.b16 %v3801, %v3800
      %v3819 = vsel %vm1524, %v3802, 0
      %v3822 = vsel %vm1524, %v3803, 0
      %v3825 = vsel %vm1524, %v3804, 0
      %v3828 = vsel %vm1524, %v3805, 0
      %v3831 = vsel %vm1524, %v3806, 0
      %v3834 = vsel %vm1524, %v3807, 0
      %v3837 = vsel %vm1524, %v3808, 0
      %v3840 = vsel %vm1524, %v3809, 0
      %v3843 = vsel %vm1524, %v3810, 0
      %v3846 = vsel %vm1524, %v3811, 0
      %v3849 = vsel %vm1524, %v3812, 0
      %v3852 = vsel %vm1524, %v3813, 0
      %v3855 = vsel %vm1524, %v3814, 0
      %v3858 = vsel %vm1524, %v3815, 0
      %v3861 = vsel %vm1524, %v3816, 0
      %v3864 = vsel %vm1524, %v3817, 0
      %v3867 = vsel %vm1573, %v3769, 0
      %3869 = vmatprep.subr.bf16.mxu0 0
      %3870 = vmatpush1.bf16.msra.mxu0 0
      %3871 = vmatprep.subr.bf16.mxu0 0
      %3872 = vmatpush1.bf16.msra.mxu0 0
      %3873 = vmatprep.subr.bf16.mxu0 0
      %3874 = vmatpush1.bf16.msra.mxu0 0
      %3875 = vmatprep.subr.bf16.mxu0 0
      %3876 = vmatpush1.bf16.msra.mxu0 0
      %3877 = vmatprep.subr.bf16.mxu0 0
      %3878 = vmatpush1.bf16.msra.mxu0 0
      %3879 = vmatprep.subr.bf16.mxu0 0
      %3880 = vmatpush1.bf16.msra.mxu0 0
      %3881 = vmatprep.subr.bf16.mxu0 0
      %3882 = vmatpush1.bf16.msra.mxu0 0
      %3883 = vmatprep.subr.bf16.mxu0 0
      %3884 = vmatpush1.bf16.msra.mxu0 %v3867
      %3885 = vmatprep.subr.bf16.mxu0 0
      %3886 = vmatpush2.bf16.msra.mxu0 0
      %3887 = vmatprep.subr.bf16.mxu0 0
      %3888 = vmatpush2.bf16.msra.mxu0 0
      %3889 = vmatprep.subr.bf16.mxu0 0
      %3890 = vmatpush2.bf16.msra.mxu0 0
      %3891 = vmatprep.subr.bf16.mxu0 0
      %3892 = vmatpush2.bf16.msra.mxu0 0
      %3893 = vmatprep.subr.bf16.mxu0 0
      %3894 = vmatpush2.bf16.msra.mxu0 0
      %3895 = vmatprep.subr.bf16.mxu0 0
      %3896 = vmatpush2.bf16.msra.mxu0 0
      %3897 = vmatprep.subr.bf16.mxu0 0
      %3898 = vmatpush2.bf16.msra.mxu0 0
      %3899 = vmatprep.subr.bf16.mxu0 0
      %3900 = vmatpush2.bf16.msra.mxu0 0
      %3901 = vmatprep.mubr.bf16.mxu0 0
      %3902 = vmatmul.mubr.bf16.gmra.mxu0 %v3819
      %v3903 = vpop.f32.mrf.mxu0
      %v3904 = vadd.f32 0.0, %v3903
      %v3905 = vpop.f32.mrf.mxu0
      %v3906 = vpop.f32.mrf.mxu0
      %v3907 = vadd.f32 0.0, %v3906
      %v3908 = vpop.f32.mrf.mxu0
      %3909 = vmatprep.mubr.bf16.mxu0 0
      %3910 = vmatmul.mubr.bf16.gmra.mxu0 %v3822
      %v3911 = vpop.f32.mrf.mxu0
      %v3912 = vadd.f32 0.0, %v3911
      %v3913 = vpop.f32.mrf.mxu0
      %v3914 = vpop.f32.mrf.mxu0
      %v3915 = vadd.f32 0.0, %v3914
      %v3916 = vpop.f32.mrf.mxu0
      %3917 = vmatprep.mubr.bf16.mxu0 0
      %3918 = vmatmul.mubr.bf16.gmra.mxu0 %v3825
      %v3919 = vpop.f32.mrf.mxu0
      %v3920 = vadd.f32 0.0, %v3919
      %v3921 = vpop.f32.mrf.mxu0
      %v3922 = vpop.f32.mrf.mxu0
      %v3923 = vadd.f32 0.0, %v3922
      %v3924 = vpop.f32.mrf.mxu0
      %3925 = vmatprep.mubr.bf16.mxu0 0
      %3926 = vmatmul.mubr.bf16.gmra.mxu0 %v3828
      %v3927 = vpop.f32.mrf.mxu0
      %v3928 = vadd.f32 0.0, %v3927
      %v3929 = vpop.f32.mrf.mxu0
      %v3930 = vpop.f32.mrf.mxu0
      %v3931 = vadd.f32 0.0, %v3930
      %v3932 = vpop.f32.mrf.mxu0
      %3933 = vmatprep.mubr.bf16.mxu0 0
      %3934 = vmatmul.mubr.bf16.gmra.mxu0 %v3831
      %v3935 = vpop.f32.mrf.mxu0
      %v3936 = vadd.f32 0.0, %v3935
      %v3937 = vpop.f32.mrf.mxu0
      %v3938 = vpop.f32.mrf.mxu0
      %v3939 = vadd.f32 0.0, %v3938
      %v3940 = vpop.f32.mrf.mxu0
      %3941 = vmatprep.mubr.bf16.mxu0 0
      %3942 = vmatmul.mubr.bf16.gmra.mxu0 %v3834
      %v3943 = vpop.f32.mrf.mxu0
      %v3944 = vadd.f32 0.0, %v3943
      %v3945 = vpop.f32.mrf.mxu0
      %v3946 = vpop.f32.mrf.mxu0
      %v3947 = vadd.f32 0.0, %v3946
      %v3948 = vpop.f32.mrf.mxu0
      %3949 = vmatprep.mubr.bf16.mxu0 0
      %3950 = vmatmul.mubr.bf16.gmra.mxu0 %v3837
      %v3951 = vpop.f32.mrf.mxu0
      %v3952 = vadd.f32 0.0, %v3951
      %v3953 = vpop.f32.mrf.mxu0
      %v3954 = vpop.f32.mrf.mxu0
      %v3955 = vadd.f32 0.0, %v3954
      %v3956 = vpop.f32.mrf.mxu0
      %3957 = vmatprep.mubr.bf16.mxu0 0
      %3958 = vmatmul.mubr.bf16.gmra.mxu0 %v3840
      %v3959 = vpop.f32.mrf.mxu0
      %v3960 = vadd.f32 0.0, %v3959
      %v3961 = vpop.f32.mrf.mxu0
      %v3962 = vpop.f32.mrf.mxu0
      %v3963 = vadd.f32 0.0, %v3962
      %v3964 = vpop.f32.mrf.mxu0
      %3965 = vmatprep.mubr.bf16.mxu0 0
      %3966 = vmatmul.mubr.bf16.gmra.mxu0 %v3843
      %v3967 = vpop.f32.mrf.mxu0
      %v3968 = vadd.f32 0.0, %v3967
      %v3969 = vpop.f32.mrf.mxu0
      %v3970 = vpop.f32.mrf.mxu0
      %v3971 = vadd.f32 0.0, %v3970
      %v3972 = vpop.f32.mrf.mxu0
      %3973 = vmatprep.mubr.bf16.mxu0 0
      %3974 = vmatmul.mubr.bf16.gmra.mxu0 %v3846
      %v3975 = vpop.f32.mrf.mxu0
      %v3976 = vadd.f32 0.0, %v3975
      %v3977 = vpop.f32.mrf.mxu0
      %v3978 = vpop.f32.mrf.mxu0
      %v3979 = vadd.f32 0.0, %v3978
      %v3980 = vpop.f32.mrf.mxu0
      %3981 = vmatprep.mubr.bf16.mxu0 0
      %3982 = vmatmul.mubr.bf16.gmra.mxu0 %v3849
      %v3983 = vpop.f32.mrf.mxu0
      %v3984 = vadd.f32 0.0, %v3983
      %v3985 = vpop.f32.mrf.mxu0
      %v3986 = vpop.f32.mrf.mxu0
      %v3987 = vadd.f32 0.0, %v3986
      %v3988 = vpop.f32.mrf.mxu0
      %3989 = vmatprep.mubr.bf16.mxu0 0
      %3990 = vmatmul.mubr.bf16.gmra.mxu0 %v3852
      %v3991 = vpop.f32.mrf.mxu0
      %v3992 = vadd.f32 0.0, %v3991
      %v3993 = vpop.f32.mrf.mxu0
      %v3994 = vpop.f32.mrf.mxu0
      %v3995 = vadd.f32 0.0, %v3994
      %v3996 = vpop.f32.mrf.mxu0
      %3997 = vmatprep.mubr.bf16.mxu0 0
      %3998 = vmatmul.mubr.bf16.gmra.mxu0 %v3855
      %v3999 = vpop.f32.mrf.mxu0
      %v4000 = vadd.f32 0.0, %v3999
      %v4001 = vpop.f32.mrf.mxu0
      %v4002 = vpop.f32.mrf.mxu0
      %v4003 = vadd.f32 0.0, %v4002
      %v4004 = vpop.f32.mrf.mxu0
      %4005 = vmatprep.mubr.bf16.mxu0 0
      %4006 = vmatmul.mubr.bf16.gmra.mxu0 %v3858
      %v4007 = vpop.f32.mrf.mxu0
      %v4008 = vadd.f32 0.0, %v4007
      %v4009 = vpop.f32.mrf.mxu0
      %v4010 = vpop.f32.mrf.mxu0
      %v4011 = vadd.f32 0.0, %v4010
      %v4012 = vpop.f32.mrf.mxu0
      %4013 = vmatprep.mubr.bf16.mxu0 0
      %4014 = vmatmul.mubr.bf16.gmra.mxu0 %v3861
      %v4015 = vpop.f32.mrf.mxu0
      %v4016 = vadd.f32 0.0, %v4015
      %v4017 = vpop.f32.mrf.mxu0
      %v4018 = vpop.f32.mrf.mxu0
      %v4019 = vadd.f32 0.0, %v4018
      %v4020 = vpop.f32.mrf.mxu0
      %4021 = vmatprep.mubr.bf16.mxu0 0
      %4022 = vmatmul.mubr.bf16.gmra.mxu0 %v3864
      %v4023 = vpop.f32.mrf.mxu0
      %v4024 = vadd.f32 0.0, %v4023
      %v4025 = vpop.f32.mrf.mxu0
      %v4026 = vpop.f32.mrf.mxu0
      %v4027 = vadd.f32 0.0, %v4026
      %v4028 = vpop.f32.mrf.mxu0
      %4029 = vdwg.mxu0
      %v4030 = vadd.f32 %v3304, %v3904
      %v4031 = vadd.f32 %v3305, %v3907
      %v4032 = vadd.f32 %v3306, %v3912
      %v4033 = vadd.f32 %v3307, %v3915
      %v4034 = vadd.f32 %v3308, %v3920
      %v4035 = vadd.f32 %v3309, %v3923
      %v4036 = vadd.f32 %v3310, %v3928
      %v4037 = vadd.f32 %v3311, %v3931
      %v4038 = vadd.f32 %v3312, %v3936
      %v4039 = vadd.f32 %v3313, %v3939
      %v4040 = vadd.f32 %v3314, %v3944
      %v4041 = vadd.f32 %v3315, %v3947
      %v4042 = vadd.f32 %v3316, %v3952
      %v4043 = vadd.f32 %v3317, %v3955
      %v4044 = vadd.f32 %v3318, %v3960
      %v4045 = vadd.f32 %v3319, %v3963
      %v4046 = vadd.f32 %v3320, %v3968
      %v4047 = vadd.f32 %v3321, %v3971
      %v4048 = vadd.f32 %v3322, %v3976
      %v4049 = vadd.f32 %v3323, %v3979
      %v4050 = vadd.f32 %v3324, %v3984
      %v4051 = vadd.f32 %v3325, %v3987
      %v4052 = vadd.f32 %v3326, %v3992
      %v4053 = vadd.f32 %v3327, %v3995
      %v4054 = vadd.f32 %v3328, %v4000
      %v4055 = vadd.f32 %v3329, %v4003
      %v4056 = vadd.f32 %v3330, %v4008
      %v4057 = vadd.f32 %v3331, %v4011
      %v4058 = vadd.f32 %v3332, %v4016
      %v4059 = vadd.f32 %v3333, %v4019
      %v4060 = vadd.f32 %v3334, %v4024
      %v4061 = vadd.f32 %v3335, %v4027
      %v4062 = vld [vmem:[%s1296] sm:$0xe]
      %v4063 = vld [vmem:[%s1296 + $0xc] sm:$0xe]
      %v4064 = vld [vmem:[%s1296 + $0x18] sm:$0xe]
      %v4065 = vld [vmem:[%s1296 + $0x24] sm:$0xe]
      %v4066 = vld [vmem:[%s1296 + $0x30] sm:$0xe]
      %v4067 = vld [vmem:[%s1296 + $0x3c] sm:$0xe]
      %v4068 = vld [vmem:[%s1296 + $0x48] sm:$0xe]
      %v4069 = vld [vmem:[%s1296 + $0x54] sm:$0xe]
      %v4070 = vld [vmem:[%s1296 + $0x60] sm:$0xe]
      %v4071 = vld [vmem:[%s1296 + $0x6c] sm:$0xe]
      %v4072 = vld [vmem:[%s1296 + $0x78] sm:$0xe]
      %v4073 = vld [vmem:[%s1296 + $0x84] sm:$0xe]
      %v4074 = vld [vmem:[%s1296 + $0x90] sm:$0xe]
      %v4075 = vld [vmem:[%s1296 + $0x9c] sm:$0xe]
      %v4076 = vld [vmem:[%s1296 + $0xa8] sm:$0xe]
      %v4077 = vld [vmem:[%s1296 + $0xb4] sm:$0xe]
      %v4126 = vrot.slane %v4062, 5
      %v4127 = vrot.slane %v4126, 4
      %v4128 = vrot.slane %v3337, 5
      %v4129 = vsel %vm2571, %v4127, %v4128
      %v4130 = vrot.slane %v4128, 4
      %v4131 = vrot.slane %v3338, 5
      %v4132 = vsel %vm2571, %v4130, %v4131
      %v4133 = vrot.slane %v4063, 5
      %v4134 = vrot.slane %v4133, 4
      %v4135 = vrot.slane %v3340, 5
      %v4136 = vsel %vm2571, %v4134, %v4135
      %v4137 = vrot.slane %v4135, 4
      %v4138 = vrot.slane %v3341, 5
      %v4139 = vsel %vm2571, %v4137, %v4138
      %v4140 = vrot.slane %v4064, 5
      %v4141 = vrot.slane %v4140, 4
      %v4142 = vrot.slane %v3343, 5
      %v4143 = vsel %vm2571, %v4141, %v4142
      %v4144 = vrot.slane %v4142, 4
      %v4145 = vrot.slane %v3344, 5
      %v4146 = vsel %vm2571, %v4144, %v4145
      %v4147 = vrot.slane %v4065, 5
      %v4148 = vrot.slane %v4147, 4
      %v4149 = vrot.slane %v3346, 5
      %v4150 = vsel %vm2571, %v4148, %v4149
      %v4151 = vrot.slane %v4149, 4
      %v4152 = vrot.slane %v3347, 5
      %v4153 = vsel %vm2571, %v4151, %v4152
      %v4154 = vrot.slane %v4066, 5
      %v4155 = vrot.slane %v4154, 4
      %v4156 = vrot.slane %v3349, 5
      %v4157 = vsel %vm2571, %v4155, %v4156
      %v4158 = vrot.slane %v4156, 4
      %v4159 = vrot.slane %v3350, 5
      %v4160 = vsel %vm2571, %v4158, %v4159
      %v4161 = vrot.slane %v4067, 5
      %v4162 = vrot.slane %v4161, 4
      %v4163 = vrot.slane %v3352, 5
      %v4164 = vsel %vm2571, %v4162, %v4163
      %v4165 = vrot.slane %v4163, 4
      %v4166 = vrot.slane %v3353, 5
      %v4167 = vsel %vm2571, %v4165, %v4166
      %v4168 = vrot.slane %v4068, 5
      %v4169 = vrot.slane %v4168, 4
      %v4170 = vrot.slane %v3355, 5
      %v4171 = vsel %vm2571, %v4169, %v4170
      %v4172 = vrot.slane %v4170, 4
      %v4173 = vrot.slane %v3356, 5
      %v4174 = vsel %vm2571, %v4172, %v4173
      %v4175 = vrot.slane %v4069, 5
      %v4176 = vrot.slane %v4175, 4
      %v4177 = vrot.slane %v3358, 5
      %v4178 = vsel %vm2571, %v4176, %v4177
      %v4179 = vrot.slane %v4177, 4
      %v4180 = vrot.slane %v3359, 5
      %v4181 = vsel %vm2571, %v4179, %v4180
      %v4182 = vrot.slane %v4070, 5
      %v4183 = vrot.slane %v4182, 4
      %v4184 = vrot.slane %v3361, 5
      %v4185 = vsel %vm2571, %v4183, %v4184
      %v4186 = vrot.slane %v4184, 4
      %v4187 = vrot.slane %v3362, 5
      %v4188 = vsel %vm2571, %v4186, %v4187
      %v4189 = vrot.slane %v4071, 5
      %v4190 = vrot.slane %v4189, 4
      %v4191 = vrot.slane %v3364, 5
      %v4192 = vsel %vm2571, %v4190, %v4191
      %v4193 = vrot.slane %v4191, 4
      %v4194 = vrot.slane %v3365, 5
      %v4195 = vsel %vm2571, %v4193, %v4194
      %v4196 = vrot.slane %v4072, 5
      %v4197 = vrot.slane %v4196, 4
      %v4198 = vrot.slane %v3367, 5
      %v4199 = vsel %vm2571, %v4197, %v4198
      %v4200 = vrot.slane %v4198, 4
      %v4201 = vrot.slane %v3368, 5
      %v4202 = vsel %vm2571, %v4200, %v4201
      %v4203 = vrot.slane %v4073, 5
      %v4204 = vrot.slane %v4203, 4
      %v4205 = vrot.slane %v3370, 5
      %v4206 = vsel %vm2571, %v4204, %v4205
      %v4207 = vrot.slane %v4205, 4
      %v4208 = vrot.slane %v3371, 5
      %v4209 = vsel %vm2571, %v4207, %v4208
      %v4210 = vrot.slane %v4074, 5
      %v4211 = vrot.slane %v4210, 4
      %v4212 = vrot.slane %v3373, 5
      %v4213 = vsel %vm2571, %v4211, %v4212
      %v4214 = vrot.slane %v4212, 4
      %v4215 = vrot.slane %v3374, 5
      %v4216 = vsel %vm2571, %v4214, %v4215
      %v4217 = vrot.slane %v4075, 5
      %v4218 = vrot.slane %v4217, 4
      %v4219 = vrot.slane %v3376, 5
      %v4220 = vsel %vm2571, %v4218, %v4219
      %v4221 = vrot.slane %v4219, 4
      %v4222 = vrot.slane %v3377, 5
      %v4223 = vsel %vm2571, %v4221, %v4222
      %v4224 = vrot.slane %v4076, 5
      %v4225 = vrot.slane %v4224, 4
      %v4226 = vrot.slane %v3379, 5
      %v4227 = vsel %vm2571, %v4225, %v4226
      %v4228 = vrot.slane %v4226, 4
      %v4229 = vrot.slane %v3380, 5
      %v4230 = vsel %vm2571, %v4228, %v4229
      %v4231 = vrot.slane %v4077, 5
      %v4232 = vrot.slane %v4231, 4
      %v4233 = vrot.slane %v3382, 5
      %v4234 = vsel %vm2571, %v4232, %v4233
      %v4235 = vrot.slane %v4233, 4
      %v4236 = vrot.slane %v3383, 5
      %v4237 = vsel %vm2571, %v4235, %v4236
      %s4238 = scalar_lea.vmem %s3, 20
      %v4239 = vld [vmem:[%s4238] sm:$0xf]
      %v4240 = vunpack.c.l.b16 %v4129
      %v4241 = vunpack.c.l.b16 %v4132
      %v4242 = vunpack.c.l.b16 %v4136
      %v4243 = vunpack.c.l.b16 %v4139
      %v4244 = vunpack.c.l.b16 %v4143
      %v4245 = vunpack.c.l.b16 %v4146
      %v4246 = vunpack.c.l.b16 %v4150
      %v4247 = vunpack.c.l.b16 %v4153
      %v4248 = vunpack.c.l.b16 %v4157
      %v4249 = vunpack.c.l.b16 %v4160
      %v4250 = vunpack.c.l.b16 %v4164
      %v4251 = vunpack.c.l.b16 %v4167
      %v4252 = vunpack.c.l.b16 %v4171
      %v4253 = vunpack.c.l.b16 %v4174
      %v4254 = vunpack.c.l.b16 %v4178
      %v4255 = vunpack.c.l.b16 %v4181
      %v4256 = vunpack.c.l.b16 %v4185
      %v4257 = vunpack.c.l.b16 %v4188
      %v4258 = vunpack.c.l.b16 %v4192
      %v4259 = vunpack.c.l.b16 %v4195
      %v4260 = vunpack.c.l.b16 %v4199
      %v4261 = vunpack.c.l.b16 %v4202
      %v4262 = vunpack.c.l.b16 %v4206
      %v4263 = vunpack.c.l.b16 %v4209
      %v4264 = vunpack.c.l.b16 %v4213
      %v4265 = vunpack.c.l.b16 %v4216
      %v4266 = vunpack.c.l.b16 %v4220
      %v4267 = vunpack.c.l.b16 %v4223
      %v4268 = vunpack.c.l.b16 %v4227
      %v4269 = vunpack.c.l.b16 %v4230
      %v4270 = vunpack.c.l.b16 %v4234
      %v4271 = vunpack.c.l.b16 %v4237
      %v4272 = vpack.c.b16 %v4241, %v4240
      %v4273 = vpack.c.b16 %v4243, %v4242
      %v4274 = vpack.c.b16 %v4245, %v4244
      %v4275 = vpack.c.b16 %v4247, %v4246
      %v4276 = vpack.c.b16 %v4249, %v4248
      %v4277 = vpack.c.b16 %v4251, %v4250
      %v4278 = vpack.c.b16 %v4253, %v4252
      %v4279 = vpack.c.b16 %v4255, %v4254
      %v4280 = vpack.c.b16 %v4257, %v4256
      %v4281 = vpack.c.b16 %v4259, %v4258
      %v4282 = vpack.c.b16 %v4261, %v4260
      %v4283 = vpack.c.b16 %v4263, %v4262
      %v4284 = vpack.c.b16 %v4265, %v4264
      %v4285 = vpack.c.b16 %v4267, %v4266
      %v4286 = vpack.c.b16 %v4269, %v4268
      %v4287 = vpack.c.b16 %v4271, %v4270
      %v4289 = vsel %vm1524, %v4272, 0
      %v4292 = vsel %vm1524, %v4273, 0
      %v4295 = vsel %vm1524, %v4274, 0
      %v4298 = vsel %vm1524, %v4275, 0
      %v4301 = vsel %vm1524, %v4276, 0
      %v4304 = vsel %vm1524, %v4277, 0
      %v4307 = vsel %vm1524, %v4278, 0
      %v4310 = vsel %vm1524, %v4279, 0
      %v4313 = vsel %vm1524, %v4280, 0
      %v4316 = vsel %vm1524, %v4281, 0
      %v4319 = vsel %vm1524, %v4282, 0
      %v4322 = vsel %vm1524, %v4283, 0
      %v4325 = vsel %vm1524, %v4284, 0
      %v4328 = vsel %vm1524, %v4285, 0
      %v4331 = vsel %vm1524, %v4286, 0
      %v4334 = vsel %vm1524, %v4287, 0
      %v4337 = vsel %vm1573, %v4239, 0
      %4339 = vmatprep.subr.bf16.mxu0 0
      %4340 = vmatpush1.bf16.msra.mxu0 0
      %4341 = vmatprep.subr.bf16.mxu0 0
      %4342 = vmatpush1.bf16.msra.mxu0 0
      %4343 = vmatprep.subr.bf16.mxu0 0
      %4344 = vmatpush1.bf16.msra.mxu0 0
      %4345 = vmatprep.subr.bf16.mxu0 0
      %4346 = vmatpush1.bf16.msra.mxu0 0
      %4347 = vmatprep.subr.bf16.mxu0 0
      %4348 = vmatpush1.bf16.msra.mxu0 0
      %4349 = vmatprep.subr.bf16.mxu0 0
      %4350 = vmatpush1.bf16.msra.mxu0 0
      %4351 = vmatprep.subr.bf16.mxu0 0
      %4352 = vmatpush1.bf16.msra.mxu0 0
      %4353 = vmatprep.subr.bf16.mxu0 0
      %4354 = vmatpush1.bf16.msra.mxu0 %v4337
      %4355 = vmatprep.subr.bf16.mxu0 0
      %4356 = vmatpush2.bf16.msra.mxu0 0
      %4357 = vmatprep.subr.bf16.mxu0 0
      %4358 = vmatpush2.bf16.msra.mxu0 0
      %4359 = vmatprep.subr.bf16.mxu0 0
      %4360 = vmatpush2.bf16.msra.mxu0 0
      %4361 = vmatprep.subr.bf16.mxu0 0
      %4362 = vmatpush2.bf16.msra.mxu0 0
      %4363 = vmatprep.subr.bf16.mxu0 0
      %4364 = vmatpush2.bf16.msra.mxu0 0
      %4365 = vmatprep.subr.bf16.mxu0 0
      %4366 = vmatpush2.bf16.msra.mxu0 0
      %4367 = vmatprep.subr.bf16.mxu0 0
      %4368 = vmatpush2.bf16.msra.mxu0 0
      %4369 = vmatprep.subr.bf16.mxu0 0
      %4370 = vmatpush2.bf16.msra.mxu0 0
      %4371 = vmatprep.mubr.bf16.mxu0 0
      %4372 = vmatmul.mubr.bf16.gmra.mxu0 %v4289
      %v4373 = vpop.f32.mrf.mxu0
      %v4374 = vadd.f32 0.0, %v4373
      %v4375 = vpop.f32.mrf.mxu0
      %v4376 = vpop.f32.mrf.mxu0
      %v4377 = vadd.f32 0.0, %v4376
      %v4378 = vpop.f32.mrf.mxu0
      %4379 = vmatprep.mubr.bf16.mxu0 0
      %4380 = vmatmul.mubr.bf16.gmra.mxu0 %v4292
      %v4381 = vpop.f32.mrf.mxu0
      %v4382 = vadd.f32 0.0, %v4381
      %v4383 = vpop.f32.mrf.mxu0
      %v4384 = vpop.f32.mrf.mxu0
      %v4385 = vadd.f32 0.0, %v4384
      %v4386 = vpop.f32.mrf.mxu0
      %4387 = vmatprep.mubr.bf16.mxu0 0
      %4388 = vmatmul.mubr.bf16.gmra.mxu0 %v4295
      %v4389 = vpop.f32.mrf.mxu0
      %v4390 = vadd.f32 0.0, %v4389
      %v4391 = vpop.f32.mrf.mxu0
      %v4392 = vpop.f32.mrf.mxu0
      %v4393 = vadd.f32 0.0, %v4392
      %v4394 = vpop.f32.mrf.mxu0
      %4395 = vmatprep.mubr.bf16.mxu0 0
      %4396 = vmatmul.mubr.bf16.gmra.mxu0 %v4298
      %v4397 = vpop.f32.mrf.mxu0
      %v4398 = vadd.f32 0.0, %v4397
      %v4399 = vpop.f32.mrf.mxu0
      %v4400 = vpop.f32.mrf.mxu0
      %v4401 = vadd.f32 0.0, %v4400
      %v4402 = vpop.f32.mrf.mxu0
      %4403 = vmatprep.mubr.bf16.mxu0 0
      %4404 = vmatmul.mubr.bf16.gmra.mxu0 %v4301
      %v4405 = vpop.f32.mrf.mxu0
      %v4406 = vadd.f32 0.0, %v4405
      %v4407 = vpop.f32.mrf.mxu0
      %v4408 = vpop.f32.mrf.mxu0
      %v4409 = vadd.f32 0.0, %v4408
      %v4410 = vpop.f32.mrf.mxu0
      %4411 = vmatprep.mubr.bf16.mxu0 0
      %4412 = vmatmul.mubr.bf16.gmra.mxu0 %v4304
      %v4413 = vpop.f32.mrf.mxu0
      %v4414 = vadd.f32 0.0, %v4413
      %v4415 = vpop.f32.mrf.mxu0
      %v4416 = vpop.f32.mrf.mxu0
      %v4417 = vadd.f32 0.0, %v4416
      %v4418 = vpop.f32.mrf.mxu0
      %4419 = vmatprep.mubr.bf16.mxu0 0
      %4420 = vmatmul.mubr.bf16.gmra.mxu0 %v4307
      %v4421 = vpop.f32.mrf.mxu0
      %v4422 = vadd.f32 0.0, %v4421
      %v4423 = vpop.f32.mrf.mxu0
      %v4424 = vpop.f32.mrf.mxu0
      %v4425 = vadd.f32 0.0, %v4424
      %v4426 = vpop.f32.mrf.mxu0
      %4427 = vmatprep.mubr.bf16.mxu0 0
      %4428 = vmatmul.mubr.bf16.gmra.mxu0 %v4310
      %v4429 = vpop.f32.mrf.mxu0
      %v4430 = vadd.f32 0.0, %v4429
      %v4431 = vpop.f32.mrf.mxu0
      %v4432 = vpop.f32.mrf.mxu0
      %v4433 = vadd.f32 0.0, %v4432
      %v4434 = vpop.f32.mrf.mxu0
      %4435 = vmatprep.mubr.bf16.mxu0 0
      %4436 = vmatmul.mubr.bf16.gmra.mxu0 %v4313
      %v4437 = vpop.f32.mrf.mxu0
      %v4438 = vadd.f32 0.0, %v4437
      %v4439 = vpop.f32.mrf.mxu0
      %v4440 = vpop.f32.mrf.mxu0
      %v4441 = vadd.f32 0.0, %v4440
      %v4442 = vpop.f32.mrf.mxu0
      %4443 = vmatprep.mubr.bf16.mxu0 0
      %4444 = vmatmul.mubr.bf16.gmra.mxu0 %v4316
      %v4445 = vpop.f32.mrf.mxu0
      %v4446 = vadd.f32 0.0, %v4445
      %v4447 = vpop.f32.mrf.mxu0
      %v4448 = vpop.f32.mrf.mxu0
      %v4449 = vadd.f32 0.0, %v4448
      %v4450 = vpop.f32.mrf.mxu0
      %4451 = vmatprep.mubr.bf16.mxu0 0
      %4452 = vmatmul.mubr.bf16.gmra.mxu0 %v4319
      %v4453 = vpop.f32.mrf.mxu0
      %v4454 = vadd.f32 0.0, %v4453
      %v4455 = vpop.f32.mrf.mxu0
      %v4456 = vpop.f32.mrf.mxu0
      %v4457 = vadd.f32 0.0, %v4456
      %v4458 = vpop.f32.mrf.mxu0
      %4459 = vmatprep.mubr.bf16.mxu0 0
      %4460 = vmatmul.mubr.bf16.gmra.mxu0 %v4322
      %v4461 = vpop.f32.mrf.mxu0
      %v4462 = vadd.f32 0.0, %v4461
      %v4463 = vpop.f32.mrf.mxu0
      %v4464 = vpop.f32.mrf.mxu0
      %v4465 = vadd.f32 0.0, %v4464
      %v4466 = vpop.f32.mrf.mxu0
      %4467 = vmatprep.mubr.bf16.mxu0 0
      %4468 = vmatmul.mubr.bf16.gmra.mxu0 %v4325
      %v4469 = vpop.f32.mrf.mxu0
      %v4470 = vadd.f32 0.0, %v4469
      %v4471 = vpop.f32.mrf.mxu0
      %v4472 = vpop.f32.mrf.mxu0
      %v4473 = vadd.f32 0.0, %v4472
      %v4474 = vpop.f32.mrf.mxu0
      %4475 = vmatprep.mubr.bf16.mxu0 0
      %4476 = vmatmul.mubr.bf16.gmra.mxu0 %v4328
      %v4477 = vpop.f32.mrf.mxu0
      %v4478 = vadd.f32 0.0, %v4477
      %v4479 = vpop.f32.mrf.mxu0
      %v4480 = vpop.f32.mrf.mxu0
      %v4481 = vadd.f32 0.0, %v4480
      %v4482 = vpop.f32.mrf.mxu0
      %4483 = vmatprep.mubr.bf16.mxu0 0
      %4484 = vmatmul.mubr.bf16.gmra.mxu0 %v4331
      %v4485 = vpop.f32.mrf.mxu0
      %v4486 = vadd.f32 0.0, %v4485
      %v4487 = vpop.f32.mrf.mxu0
      %v4488 = vpop.f32.mrf.mxu0
      %v4489 = vadd.f32 0.0, %v4488
      %v4490 = vpop.f32.mrf.mxu0
      %4491 = vmatprep.mubr.bf16.mxu0 0
      %4492 = vmatmul.mubr.bf16.gmra.mxu0 %v4334
      %v4493 = vpop.f32.mrf.mxu0
      %v4494 = vadd.f32 0.0, %v4493
      %v4495 = vpop.f32.mrf.mxu0
      %v4496 = vpop.f32.mrf.mxu0
      %v4497 = vadd.f32 0.0, %v4496
      %v4498 = vpop.f32.mrf.mxu0
      %4499 = vdwg.mxu0
      %v4500 = vadd.f32 %v4030, %v4374
      %v4501 = vadd.f32 %v4031, %v4377
      %v4502 = vadd.f32 %v4032, %v4382
      %v4503 = vadd.f32 %v4033, %v4385
      %v4504 = vadd.f32 %v4034, %v4390
      %v4505 = vadd.f32 %v4035, %v4393
      %v4506 = vadd.f32 %v4036, %v4398
      %v4507 = vadd.f32 %v4037, %v4401
      %v4508 = vadd.f32 %v4038, %v4406
      %v4509 = vadd.f32 %v4039, %v4409
      %v4510 = vadd.f32 %v4040, %v4414
      %v4511 = vadd.f32 %v4041, %v4417
      %v4512 = vadd.f32 %v4042, %v4422
      %v4513 = vadd.f32 %v4043, %v4425
      %v4514 = vadd.f32 %v4044, %v4430
      %v4515 = vadd.f32 %v4045, %v4433
      %v4516 = vadd.f32 %v4046, %v4438
      %v4517 = vadd.f32 %v4047, %v4441
      %v4518 = vadd.f32 %v4048, %v4446
      %v4519 = vadd.f32 %v4049, %v4449
      %v4520 = vadd.f32 %v4050, %v4454
      %v4521 = vadd.f32 %v4051, %v4457
      %v4522 = vadd.f32 %v4052, %v4462
      %v4523 = vadd.f32 %v4053, %v4465
      %v4524 = vadd.f32 %v4054, %v4470
      %v4525 = vadd.f32 %v4055, %v4473
      %v4526 = vadd.f32 %v4056, %v4478
      %v4527 = vadd.f32 %v4057, %v4481
      %v4528 = vadd.f32 %v4058, %v4486
      %v4529 = vadd.f32 %v4059, %v4489
      %v4530 = vadd.f32 %v4060, %v4494
      %v4531 = vadd.f32 %v4061, %v4497
      %s4532 = scalar_lea.vmem [#allocation2], 24
      %v4533 = vld [vmem:[%s4532] sm:$0xf]
      %v4534 = vld [vmem:[%s4532 + $0x4] sm:$0xf]
      %v4535 = vld [vmem:[%s4532 + $0xc] sm:$0xf]
      %v4536 = vld [vmem:[%s4532 + $0x10] sm:$0xf]
      %v4537 = vld [vmem:[%s4532 + $0x18] sm:$0xf]
      %v4538 = vld [vmem:[%s4532 + $0x1c] sm:$0xf]
      %v4539 = vld [vmem:[%s4532 + $0x24] sm:$0xf]
      %v4540 = vld [vmem:[%s4532 + $0x28] sm:$0xf]
      %v4541 = vld [vmem:[%s4532 + $0x30] sm:$0xf]
      %v4542 = vld [vmem:[%s4532 + $0x34] sm:$0xf]
      %v4543 = vld [vmem:[%s4532 + $0x3c] sm:$0xf]
      %v4544 = vld [vmem:[%s4532 + $0x40] sm:$0xf]
      %v4545 = vld [vmem:[%s4532 + $0x48] sm:$0xf]
      %v4546 = vld [vmem:[%s4532 + $0x4c] sm:$0xf]
      %v4547 = vld [vmem:[%s4532 + $0x54] sm:$0xf]
      %v4548 = vld [vmem:[%s4532 + $0x58] sm:$0xf]
      %v4549 = vld [vmem:[%s4532 + $0x60] sm:$0xf]
      %v4550 = vld [vmem:[%s4532 + $0x64] sm:$0xf]
      %v4551 = vld [vmem:[%s4532 + $0x6c] sm:$0xf]
      %v4552 = vld [vmem:[%s4532 + $0x70] sm:$0xf]
      %v4553 = vld [vmem:[%s4532 + $0x78] sm:$0xf]
      %v4554 = vld [vmem:[%s4532 + $0x7c] sm:$0xf]
      %v4555 = vld [vmem:[%s4532 + $0x84] sm:$0xf]
      %v4556 = vld [vmem:[%s4532 + $0x88] sm:$0xf]
      %v4557 = vld [vmem:[%s4532 + $0x90] sm:$0xf]
      %v4558 = vld [vmem:[%s4532 + $0x94] sm:$0xf]
      %v4559 = vld [vmem:[%s4532 + $0x9c] sm:$0xf]
      %v4560 = vld [vmem:[%s4532 + $0xa0] sm:$0xf]
      %v4561 = vld [vmem:[%s4532 + $0xa8] sm:$0xf]
      %v4562 = vld [vmem:[%s4532 + $0xac] sm:$0xf]
      %v4563 = vld [vmem:[%s4532 + $0xb4] sm:$0xf]
      %v4564 = vld [vmem:[%s4532 + $0xb8] sm:$0xf]
      %s4565 = scalar_lea.vmem %s3, 24
      %v4566 = vld [vmem:[%s4565] sm:$0xf]
      %v4599 = vunpack.c.l.b16 %v4533
      %v4600 = vunpack.c.l.b16 %v4534
      %v4601 = vunpack.c.l.b16 %v4535
      %v4602 = vunpack.c.l.b16 %v4536
      %v4603 = vunpack.c.l.b16 %v4537
      %v4604 = vunpack.c.l.b16 %v4538
      %v4605 = vunpack.c.l.b16 %v4539
      %v4606 = vunpack.c.l.b16 %v4540
      %v4607 = vunpack.c.l.b16 %v4541
      %v4608 = vunpack.c.l.b16 %v4542
      %v4609 = vunpack.c.l.b16 %v4543
      %v4610 = vunpack.c.l.b16 %v4544
      %v4611 = vunpack.c.l.b16 %v4545
      %v4612 = vunpack.c.l.b16 %v4546
      %v4613 = vunpack.c.l.b16 %v4547
      %v4614 = vunpack.c.l.b16 %v4548
      %v4615 = vunpack.c.l.b16 %v4549
      %v4616 = vunpack.c.l.b16 %v4550
      %v4617 = vunpack.c.l.b16 %v4551
      %v4618 = vunpack.c.l.b16 %v4552
      %v4619 = vunpack.c.l.b16 %v4553
      %v4620 = vunpack.c.l.b16 %v4554
      %v4621 = vunpack.c.l.b16 %v4555
      %v4622 = vunpack.c.l.b16 %v4556
      %v4623 = vunpack.c.l.b16 %v4557
      %v4624 = vunpack.c.l.b16 %v4558
      %v4625 = vunpack.c.l.b16 %v4559
      %v4626 = vunpack.c.l.b16 %v4560
      %v4627 = vunpack.c.l.b16 %v4561
      %v4628 = vunpack.c.l.b16 %v4562
      %v4629 = vunpack.c.l.b16 %v4563
      %v4630 = vunpack.c.l.b16 %v4564
      %v4631 = vpack.c.b16 %v4600, %v4599
      %v4632 = vpack.c.b16 %v4602, %v4601
      %v4633 = vpack.c.b16 %v4604, %v4603
      %v4634 = vpack.c.b16 %v4606, %v4605
      %v4635 = vpack.c.b16 %v4608, %v4607
      %v4636 = vpack.c.b16 %v4610, %v4609
      %v4637 = vpack.c.b16 %v4612, %v4611
      %v4638 = vpack.c.b16 %v4614, %v4613
      %v4639 = vpack.c.b16 %v4616, %v4615
      %v4640 = vpack.c.b16 %v4618, %v4617
      %v4641 = vpack.c.b16 %v4620, %v4619
      %v4642 = vpack.c.b16 %v4622, %v4621
      %v4643 = vpack.c.b16 %v4624, %v4623
      %v4644 = vpack.c.b16 %v4626, %v4625
      %v4645 = vpack.c.b16 %v4628, %v4627
      %v4646 = vpack.c.b16 %v4630, %v4629
      %v4648 = vsel %vm1524, %v4631, 0
      %v4651 = vsel %vm1524, %v4632, 0
      %v4654 = vsel %vm1524, %v4633, 0
      %v4657 = vsel %vm1524, %v4634, 0
      %v4660 = vsel %vm1524, %v4635, 0
      %v4663 = vsel %vm1524, %v4636, 0
      %v4666 = vsel %vm1524, %v4637, 0
      %v4669 = vsel %vm1524, %v4638, 0
      %v4672 = vsel %vm1524, %v4639, 0
      %v4675 = vsel %vm1524, %v4640, 0
      %v4678 = vsel %vm1524, %v4641, 0
      %v4681 = vsel %vm1524, %v4642, 0
      %v4684 = vsel %vm1524, %v4643, 0
      %v4687 = vsel %vm1524, %v4644, 0
      %v4690 = vsel %vm1524, %v4645, 0
      %v4693 = vsel %vm1524, %v4646, 0
      %v4696 = vsel %vm1573, %v4566, 0
      %4698 = vmatprep.subr.bf16.mxu0 0
      %4699 = vmatpush1.bf16.msra.mxu0 0
      %4700 = vmatprep.subr.bf16.mxu0 0
      %4701 = vmatpush1.bf16.msra.mxu0 0
      %4702 = vmatprep.subr.bf16.mxu0 0
      %4703 = vmatpush1.bf16.msra.mxu0 0
      %4704 = vmatprep.subr.bf16.mxu0 0
      %4705 = vmatpush1.bf16.msra.mxu0 0
      %4706 = vmatprep.subr.bf16.mxu0 0
      %4707 = vmatpush1.bf16.msra.mxu0 0
      %4708 = vmatprep.subr.bf16.mxu0 0
      %4709 = vmatpush1.bf16.msra.mxu0 0
      %4710 = vmatprep.subr.bf16.mxu0 0
      %4711 = vmatpush1.bf16.msra.mxu0 0
      %4712 = vmatprep.subr.bf16.mxu0 0
      %4713 = vmatpush1.bf16.msra.mxu0 %v4696
      %4714 = vmatprep.subr.bf16.mxu0 0
      %4715 = vmatpush2.bf16.msra.mxu0 0
      %4716 = vmatprep.subr.bf16.mxu0 0
      %4717 = vmatpush2.bf16.msra.mxu0 0
      %4718 = vmatprep.subr.bf16.mxu0 0
      %4719 = vmatpush2.bf16.msra.mxu0 0
      %4720 = vmatprep.subr.bf16.mxu0 0
      %4721 = vmatpush2.bf16.msra.mxu0 0
      %4722 = vmatprep.subr.bf16.mxu0 0
      %4723 = vmatpush2.bf16.msra.mxu0 0
      %4724 = vmatprep.subr.bf16.mxu0 0
      %4725 = vmatpush2.bf16.msra.mxu0 0
      %4726 = vmatprep.subr.bf16.mxu0 0
      %4727 = vmatpush2.bf16.msra.mxu0 0
      %4728 = vmatprep.subr.bf16.mxu0 0
      %4729 = vmatpush2.bf16.msra.mxu0 0
      %4730 = vmatprep.mubr.bf16.mxu0 0
      %4731 = vmatmul.mubr.bf16.gmra.mxu0 %v4648
      %v4732 = vpop.f32.mrf.mxu0
      %v4733 = vadd.f32 0.0, %v4732
      %v4734 = vpop.f32.mrf.mxu0
      %v4735 = vpop.f32.mrf.mxu0
      %v4736 = vadd.f32 0.0, %v4735
      %v4737 = vpop.f32.mrf.mxu0
      %4738 = vmatprep.mubr.bf16.mxu0 0
      %4739 = vmatmul.mubr.bf16.gmra.mxu0 %v4651
      %v4740 = vpop.f32.mrf.mxu0
      %v4741 = vadd.f32 0.0, %v4740
      %v4742 = vpop.f32.mrf.mxu0
      %v4743 = vpop.f32.mrf.mxu0
      %v4744 = vadd.f32 0.0, %v4743
      %v4745 = vpop.f32.mrf.mxu0
      %4746 = vmatprep.mubr.bf16.mxu0 0
      %4747 = vmatmul.mubr.bf16.gmra.mxu0 %v4654
      %v4748 = vpop.f32.mrf.mxu0
      %v4749 = vadd.f32 0.0, %v4748
      %v4750 = vpop.f32.mrf.mxu0
      %v4751 = vpop.f32.mrf.mxu0
      %v4752 = vadd.f32 0.0, %v4751
      %v4753 = vpop.f32.mrf.mxu0
      %4754 = vmatprep.mubr.bf16.mxu0 0
      %4755 = vmatmul.mubr.bf16.gmra.mxu0 %v4657
      %v4756 = vpop.f32.mrf.mxu0
      %v4757 = vadd.f32 0.0, %v4756
      %v4758 = vpop.f32.mrf.mxu0
      %v4759 = vpop.f32.mrf.mxu0
      %v4760 = vadd.f32 0.0, %v4759
      %v4761 = vpop.f32.mrf.mxu0
      %4762 = vmatprep.mubr.bf16.mxu0 0
      %4763 = vmatmul.mubr.bf16.gmra.mxu0 %v4660
      %v4764 = vpop.f32.mrf.mxu0
      %v4765 = vadd.f32 0.0, %v4764
      %v4766 = vpop.f32.mrf.mxu0
      %v4767 = vpop.f32.mrf.mxu0
      %v4768 = vadd.f32 0.0, %v4767
      %v4769 = vpop.f32.mrf.mxu0
      %4770 = vmatprep.mubr.bf16.mxu0 0
      %4771 = vmatmul.mubr.bf16.gmra.mxu0 %v4663
      %v4772 = vpop.f32.mrf.mxu0
      %v4773 = vadd.f32 0.0, %v4772
      %v4774 = vpop.f32.mrf.mxu0
      %v4775 = vpop.f32.mrf.mxu0
      %v4776 = vadd.f32 0.0, %v4775
      %v4777 = vpop.f32.mrf.mxu0
      %4778 = vmatprep.mubr.bf16.mxu0 0
      %4779 = vmatmul.mubr.bf16.gmra.mxu0 %v4666
      %v4780 = vpop.f32.mrf.mxu0
      %v4781 = vadd.f32 0.0, %v4780
      %v4782 = vpop.f32.mrf.mxu0
      %v4783 = vpop.f32.mrf.mxu0
      %v4784 = vadd.f32 0.0, %v4783
      %v4785 = vpop.f32.mrf.mxu0
      %4786 = vmatprep.mubr.bf16.mxu0 0
      %4787 = vmatmul.mubr.bf16.gmra.mxu0 %v4669
      %v4788 = vpop.f32.mrf.mxu0
      %v4789 = vadd.f32 0.0, %v4788
      %v4790 = vpop.f32.mrf.mxu0
      %v4791 = vpop.f32.mrf.mxu0
      %v4792 = vadd.f32 0.0, %v4791
      %v4793 = vpop.f32.mrf.mxu0
      %4794 = vmatprep.mubr.bf16.mxu0 0
      %4795 = vmatmul.mubr.bf16.gmra.mxu0 %v4672
      %v4796 = vpop.f32.mrf.mxu0
      %v4797 = vadd.f32 0.0, %v4796
      %v4798 = vpop.f32.mrf.mxu0
      %v4799 = vpop.f32.mrf.mxu0
      %v4800 = vadd.f32 0.0, %v4799
      %v4801 = vpop.f32.mrf.mxu0
      %4802 = vmatprep.mubr.bf16.mxu0 0
      %4803 = vmatmul.mubr.bf16.gmra.mxu0 %v4675
      %v4804 = vpop.f32.mrf.mxu0
      %v4805 = vadd.f32 0.0, %v4804
      %v4806 = vpop.f32.mrf.mxu0
      %v4807 = vpop.f32.mrf.mxu0
      %v4808 = vadd.f32 0.0, %v4807
      %v4809 = vpop.f32.mrf.mxu0
      %4810 = vmatprep.mubr.bf16.mxu0 0
      %4811 = vmatmul.mubr.bf16.gmra.mxu0 %v4678
      %v4812 = vpop.f32.mrf.mxu0
      %v4813 = vadd.f32 0.0, %v4812
      %v4814 = vpop.f32.mrf.mxu0
      %v4815 = vpop.f32.mrf.mxu0
      %v4816 = vadd.f32 0.0, %v4815
      %v4817 = vpop.f32.mrf.mxu0
      %4818 = vmatprep.mubr.bf16.mxu0 0
      %4819 = vmatmul.mubr.bf16.gmra.mxu0 %v4681
      %v4820 = vpop.f32.mrf.mxu0
      %v4821 = vadd.f32 0.0, %v4820
      %v4822 = vpop.f32.mrf.mxu0
      %v4823 = vpop.f32.mrf.mxu0
      %v4824 = vadd.f32 0.0, %v4823
      %v4825 = vpop.f32.mrf.mxu0
      %4826 = vmatprep.mubr.bf16.mxu0 0
      %4827 = vmatmul.mubr.bf16.gmra.mxu0 %v4684
      %v4828 = vpop.f32.mrf.mxu0
      %v4829 = vadd.f32 0.0, %v4828
      %v4830 = vpop.f32.mrf.mxu0
      %v4831 = vpop.f32.mrf.mxu0
      %v4832 = vadd.f32 0.0, %v4831
      %v4833 = vpop.f32.mrf.mxu0
      %4834 = vmatprep.mubr.bf16.mxu0 0
      %4835 = vmatmul.mubr.bf16.gmra.mxu0 %v4687
      %v4836 = vpop.f32.mrf.mxu0
      %v4837 = vadd.f32 0.0, %v4836
      %v4838 = vpop.f32.mrf.mxu0
      %v4839 = vpop.f32.mrf.mxu0
      %v4840 = vadd.f32 0.0, %v4839
      %v4841 = vpop.f32.mrf.mxu0
      %4842 = vmatprep.mubr.bf16.mxu0 0
      %4843 = vmatmul.mubr.bf16.gmra.mxu0 %v4690
      %v4844 = vpop.f32.mrf.mxu0
      %v4845 = vadd.f32 0.0, %v4844
      %v4846 = vpop.f32.mrf.mxu0
      %v4847 = vpop.f32.mrf.mxu0
      %v4848 = vadd.f32 0.0, %v4847
      %v4849 = vpop.f32.mrf.mxu0
      %4850 = vmatprep.mubr.bf16.mxu0 0
      %4851 = vmatmul.mubr.bf16.gmra.mxu0 %v4693
      %v4852 = vpop.f32.mrf.mxu0
      %v4853 = vadd.f32 0.0, %v4852
      %v4854 = vpop.f32.mrf.mxu0
      %v4855 = vpop.f32.mrf.mxu0
      %v4856 = vadd.f32 0.0, %v4855
      %v4857 = vpop.f32.mrf.mxu0
      %4858 = vdwg.mxu0
      %v4859 = vadd.f32 %v4500, %v4733
      %v4860 = vadd.f32 %v4501, %v4736
      %v4861 = vadd.f32 %v4502, %v4741
      %v4862 = vadd.f32 %v4503, %v4744
      %v4863 = vadd.f32 %v4504, %v4749
      %v4864 = vadd.f32 %v4505, %v4752
      %v4865 = vadd.f32 %v4506, %v4757
      %v4866 = vadd.f32 %v4507, %v4760
      %v4867 = vadd.f32 %v4508, %v4765
      %v4868 = vadd.f32 %v4509, %v4768
      %v4869 = vadd.f32 %v4510, %v4773
      %v4870 = vadd.f32 %v4511, %v4776
      %v4871 = vadd.f32 %v4512, %v4781
      %v4872 = vadd.f32 %v4513, %v4784
      %v4873 = vadd.f32 %v4514, %v4789
      %v4874 = vadd.f32 %v4515, %v4792
      %v4875 = vadd.f32 %v4516, %v4797
      %v4876 = vadd.f32 %v4517, %v4800
      %v4877 = vadd.f32 %v4518, %v4805
      %v4878 = vadd.f32 %v4519, %v4808
      %v4879 = vadd.f32 %v4520, %v4813
      %v4880 = vadd.f32 %v4521, %v4816
      %v4881 = vadd.f32 %v4522, %v4821
      %v4882 = vadd.f32 %v4523, %v4824
      %v4883 = vadd.f32 %v4524, %v4829
      %v4884 = vadd.f32 %v4525, %v4832
      %v4885 = vadd.f32 %v4526, %v4837
      %v4886 = vadd.f32 %v4527, %v4840
      %v4887 = vadd.f32 %v4528, %v4845
      %v4888 = vadd.f32 %v4529, %v4848
      %v4889 = vadd.f32 %v4530, %v4853
      %v4890 = vadd.f32 %v4531, %v4856
      %v4891 = vld [vmem:[%s4532] sm:$0xf]
      %v4892 = vld [vmem:[%s4532 + $0x4] sm:$0xf]
      %v4893 = vld [vmem:[%s4532 + $0x8] sm:$0x1]
      %v4894 = vld [vmem:[%s4532 + $0xc] sm:$0xf]
      %v4895 = vld [vmem:[%s4532 + $0x10] sm:$0xf]
      %v4896 = vld [vmem:[%s4532 + $0x14] sm:$0x1]
      %v4897 = vld [vmem:[%s4532 + $0x18] sm:$0xf]
      %v4898 = vld [vmem:[%s4532 + $0x1c] sm:$0xf]
      %v4899 = vld [vmem:[%s4532 + $0x20] sm:$0x1]
      %v4900 = vld [vmem:[%s4532 + $0x24] sm:$0xf]
      %v4901 = vld [vmem:[%s4532 + $0x28] sm:$0xf]
      %v4902 = vld [vmem:[%s4532 + $0x2c] sm:$0x1]
      %v4903 = vld [vmem:[%s4532 + $0x30] sm:$0xf]
      %v4904 = vld [vmem:[%s4532 + $0x34] sm:$0xf]
      %v4905 = vld [vmem:[%s4532 + $0x38] sm:$0x1]
      %v4906 = vld [vmem:[%s4532 + $0x3c] sm:$0xf]
      %v4907 = vld [vmem:[%s4532 + $0x40] sm:$0xf]
      %v4908 = vld [vmem:[%s4532 + $0x44] sm:$0x1]
      %v4909 = vld [vmem:[%s4532 + $0x48] sm:$0xf]
      %v4910 = vld [vmem:[%s4532 + $0x4c] sm:$0xf]
      %v4911 = vld [vmem:[%s4532 + $0x50] sm:$0x1]
      %v4912 = vld [vmem:[%s4532 + $0x54] sm:$0xf]
      %v4913 = vld [vmem:[%s4532 + $0x58] sm:$0xf]
      %v4914 = vld [vmem:[%s4532 + $0x5c] sm:$0x1]
      %v4915 = vld [vmem:[%s4532 + $0x60] sm:$0xf]
      %v4916 = vld [vmem:[%s4532 + $0x64] sm:$0xf]
      %v4917 = vld [vmem:[%s4532 + $0x68] sm:$0x1]
      %v4918 = vld [vmem:[%s4532 + $0x6c] sm:$0xf]
      %v4919 = vld [vmem:[%s4532 + $0x70] sm:$0xf]
      %v4920 = vld [vmem:[%s4532 + $0x74] sm:$0x1]
      %v4921 = vld [vmem:[%s4532 + $0x78] sm:$0xf]
      %v4922 = vld [vmem:[%s4532 + $0x7c] sm:$0xf]
      %v4923 = vld [vmem:[%s4532 + $0x80] sm:$0x1]
      %v4924 = vld [vmem:[%s4532 + $0x84] sm:$0xf]
      %v4925 = vld [vmem:[%s4532 + $0x88] sm:$0xf]
      %v4926 = vld [vmem:[%s4532 + $0x8c] sm:$0x1]
      %v4927 = vld [vmem:[%s4532 + $0x90] sm:$0xf]
      %v4928 = vld [vmem:[%s4532 + $0x94] sm:$0xf]
      %v4929 = vld [vmem:[%s4532 + $0x98] sm:$0x1]
      %v4930 = vld [vmem:[%s4532 + $0x9c] sm:$0xf]
      %v4931 = vld [vmem:[%s4532 + $0xa0] sm:$0xf]
      %v4932 = vld [vmem:[%s4532 + $0xa4] sm:$0x1]
      %v4933 = vld [vmem:[%s4532 + $0xa8] sm:$0xf]
      %v4934 = vld [vmem:[%s4532 + $0xac] sm:$0xf]
      %v4935 = vld [vmem:[%s4532 + $0xb0] sm:$0x1]
      %v4936 = vld [vmem:[%s4532 + $0xb4] sm:$0xf]
      %v4937 = vld [vmem:[%s4532 + $0xb8] sm:$0xf]
      %v4938 = vld [vmem:[%s4532 + $0xbc] sm:$0x1]
      %v4940 = vshrl.u32 %v4891, 16
      %v4942 = vrot.slane %v4940, 4
      %v4943 = vshll.u32 %v4891, 16
      %v4945 = vrot.slane %v4943, 5
      %v4946 = vor.u32 %v4942, %v4945
      %v4947 = vrot.slane %v4946, 4
      %v4949 = vshll.u32 %v4892, 16
      %v4951 = vrot.slane %v4949, 5
      %v4952 = vsel %vm1826, %v4947, %v4951
      %v4953 = vshrl.u32 %v4892, 16
      %v4955 = vrot.slane %v4953, 4
      %v4956 = vor.u32 %v4955, %v4951
      %v4957 = vrot.slane %v4956, 4
      %v4959 = vshll.u32 %v4893, 16
      %v4961 = vrot.slane %v4959, 5
      %v4962 = vsel %vm1826, %v4957, %v4961
      %v4964 = vshrl.u32 %v4894, 16
      %v4966 = vrot.slane %v4964, 4
      %v4967 = vshll.u32 %v4894, 16
      %v4969 = vrot.slane %v4967, 5
      %v4970 = vor.u32 %v4966, %v4969
      %v4971 = vrot.slane %v4970, 4
      %v4973 = vshll.u32 %v4895, 16
      %v4975 = vrot.slane %v4973, 5
      %v4976 = vsel %vm1826, %v4971, %v4975
      %v4977 = vshrl.u32 %v4895, 16
      %v4979 = vrot.slane %v4977, 4
      %v4980 = vor.u32 %v4979, %v4975
      %v4981 = vrot.slane %v4980, 4
      %v4983 = vshll.u32 %v4896, 16
      %v4985 = vrot.slane %v4983, 5
      %v4986 = vsel %vm1826, %v4981, %v4985
      %v4988 = vshrl.u32 %v4897, 16
      %v4990 = vrot.slane %v4988, 4
      %v4991 = vshll.u32 %v4897, 16
      %v4993 = vrot.slane %v4991, 5
      %v4994 = vor.u32 %v4990, %v4993
      %v4995 = vrot.slane %v4994, 4
      %v4997 = vshll.u32 %v4898, 16
      %v4999 = vrot.slane %v4997, 5
      %v5000 = vsel %vm1826, %v4995, %v4999
      %v5001 = vshrl.u32 %v4898, 16
      %v5003 = vrot.slane %v5001, 4
      %v5004 = vor.u32 %v5003, %v4999
      %v5005 = vrot.slane %v5004, 4
      %v5007 = vshll.u32 %v4899, 16
      %v5009 = vrot.slane %v5007, 5
      %v5010 = vsel %vm1826, %v5005, %v5009
      %v5012 = vshrl.u32 %v4900, 16
      %v5014 = vrot.slane %v5012, 4
      %v5015 = vshll.u32 %v4900, 16
      %v5017 = vrot.slane %v5015, 5
      %v5018 = vor.u32 %v5014, %v5017
      %v5019 = vrot.slane %v5018, 4
      %v5021 = vshll.u32 %v4901, 16
      %v5023 = vrot.slane %v5021, 5
      %v5024 = vsel %vm1826, %v5019, %v5023
      %v5025 = vshrl.u32 %v4901, 16
      %v5027 = vrot.slane %v5025, 4
      %v5028 = vor.u32 %v5027, %v5023
      %v5029 = vrot.slane %v5028, 4
      %v5031 = vshll.u32 %v4902, 16
      %v5033 = vrot.slane %v5031, 5
      %v5034 = vsel %vm1826, %v5029, %v5033
      %v5036 = vshrl.u32 %v4903, 16
      %v5038 = vrot.slane %v5036, 4
      %v5039 = vshll.u32 %v4903, 16
      %v5041 = vrot.slane %v5039, 5
      %v5042 = vor.u32 %v5038, %v5041
      %v5043 = vrot.slane %v5042, 4
      %v5045 = vshll.u32 %v4904, 16
      %v5047 = vrot.slane %v5045, 5
      %v5048 = vsel %vm1826, %v5043, %v5047
      %v5049 = vshrl.u32 %v4904, 16
      %v5051 = vrot.slane %v5049, 4
      %v5052 = vor.u32 %v5051, %v5047
      %v5053 = vrot.slane %v5052, 4
      %v5055 = vshll.u32 %v4905, 16
      %v5057 = vrot.slane %v5055, 5
      %v5058 = vsel %vm1826, %v5053, %v5057
      %v5060 = vshrl.u32 %v4906, 16
      %v5062 = vrot.slane %v5060, 4
      %v5063 = vshll.u32 %v4906, 16
      %v5065 = vrot.slane %v5063, 5
      %v5066 = vor.u32 %v5062, %v5065
      %v5067 = vrot.slane %v5066, 4
      %v5069 = vshll.u32 %v4907, 16
      %v5071 = vrot.slane %v5069, 5
      %v5072 = vsel %vm1826, %v5067, %v5071
      %v5073 = vshrl.u32 %v4907, 16
      %v5075 = vrot.slane %v5073, 4
      %v5076 = vor.u32 %v5075, %v5071
      %v5077 = vrot.slane %v5076, 4
      %v5079 = vshll.u32 %v4908, 16
      %v5081 = vrot.slane %v5079, 5
      %v5082 = vsel %vm1826, %v5077, %v5081
      %v5084 = vshrl.u32 %v4909, 16
      %v5086 = vrot.slane %v5084, 4
      %v5087 = vshll.u32 %v4909, 16
      %v5089 = vrot.slane %v5087, 5
      %v5090 = vor.u32 %v5086, %v5089
      %v5091 = vrot.slane %v5090, 4
      %v5093 = vshll.u32 %v4910, 16
      %v5095 = vrot.slane %v5093, 5
      %v5096 = vsel %vm1826, %v5091, %v5095
      %v5097 = vshrl.u32 %v4910, 16
      %v5099 = vrot.slane %v5097, 4
      %v5100 = vor.u32 %v5099, %v5095
      %v5101 = vrot.slane %v5100, 4
      %v5103 = vshll.u32 %v4911, 16
      %v5105 = vrot.slane %v5103, 5
      %v5106 = vsel %vm1826, %v5101, %v5105
      %v5108 = vshrl.u32 %v4912, 16
      %v5110 = vrot.slane %v5108, 4
      %v5111 = vshll.u32 %v4912, 16
      %v5113 = vrot.slane %v5111, 5
      %v5114 = vor.u32 %v5110, %v5113
      %v5115 = vrot.slane %v5114, 4
      %v5117 = vshll.u32 %v4913, 16
      %v5119 = vrot.slane %v5117, 5
      %v5120 = vsel %vm1826, %v5115, %v5119
      %v5121 = vshrl.u32 %v4913, 16
      %v5123 = vrot.slane %v5121, 4
      %v5124 = vor.u32 %v5123, %v5119
      %v5125 = vrot.slane %v5124, 4
      %v5127 = vshll.u32 %v4914, 16
      %v5129 = vrot.slane %v5127, 5
      %v5130 = vsel %vm1826, %v5125, %v5129
      %v5132 = vshrl.u32 %v4915, 16
      %v5134 = vrot.slane %v5132, 4
      %v5135 = vshll.u32 %v4915, 16
      %v5137 = vrot.slane %v5135, 5
      %v5138 = vor.u32 %v5134, %v5137
      %v5139 = vrot.slane %v5138, 4
      %v5141 = vshll.u32 %v4916, 16
      %v5143 = vrot.slane %v5141, 5
      %v5144 = vsel %vm1826, %v5139, %v5143
      %v5145 = vshrl.u32 %v4916, 16
      %v5147 = vrot.slane %v5145, 4
      %v5148 = vor.u32 %v5147, %v5143
      %v5149 = vrot.slane %v5148, 4
      %v5151 = vshll.u32 %v4917, 16
      %v5153 = vrot.slane %v5151, 5
      %v5154 = vsel %vm1826, %v5149, %v5153
      %v5156 = vshrl.u32 %v4918, 16
      %v5158 = vrot.slane %v5156, 4
      %v5159 = vshll.u32 %v4918, 16
      %v5161 = vrot.slane %v5159, 5
      %v5162 = vor.u32 %v5158, %v5161
      %v5163 = vrot.slane %v5162, 4
      %v5165 = vshll.u32 %v4919, 16
      %v5167 = vrot.slane %v5165, 5
      %v5168 = vsel %vm1826, %v5163, %v5167
      %v5169 = vshrl.u32 %v4919, 16
      %v5171 = vrot.slane %v5169, 4
      %v5172 = vor.u32 %v5171, %v5167
      %v5173 = vrot.slane %v5172, 4
      %v5175 = vshll.u32 %v4920, 16
      %v5177 = vrot.slane %v5175, 5
      %v5178 = vsel %vm1826, %v5173, %v5177
      %v5180 = vshrl.u32 %v4921, 16
      %v5182 = vrot.slane %v5180, 4
      %v5183 = vshll.u32 %v4921, 16
      %v5185 = vrot.slane %v5183, 5
      %v5186 = vor.u32 %v5182, %v5185
      %v5187 = vrot.slane %v5186, 4
      %v5189 = vshll.u32 %v4922, 16
      %v5191 = vrot.slane %v5189, 5
      %v5192 = vsel %vm1826, %v5187, %v5191
      %v5193 = vshrl.u32 %v4922, 16
      %v5195 = vrot.slane %v5193, 4
      %v5196 = vor.u32 %v5195, %v5191
      %v5197 = vrot.slane %v5196, 4
      %v5199 = vshll.u32 %v4923, 16
      %v5201 = vrot.slane %v5199, 5
      %v5202 = vsel %vm1826, %v5197, %v5201
      %v5204 = vshrl.u32 %v4924, 16
      %v5206 = vrot.slane %v5204, 4
      %v5207 = vshll.u32 %v4924, 16
      %v5209 = vrot.slane %v5207, 5
      %v5210 = vor.u32 %v5206, %v5209
      %v5211 = vrot.slane %v5210, 4
      %v5213 = vshll.u32 %v4925, 16
      %v5215 = vrot.slane %v5213, 5
      %v5216 = vsel %vm1826, %v5211, %v5215
      %v5217 = vshrl.u32 %v4925, 16
      %v5219 = vrot.slane %v5217, 4
      %v5220 = vor.u32 %v5219, %v5215
      %v5221 = vrot.slane %v5220, 4
      %v5223 = vshll.u32 %v4926, 16
      %v5225 = vrot.slane %v5223, 5
      %v5226 = vsel %vm1826, %v5221, %v5225
      %v5228 = vshrl.u32 %v4927, 16
      %v5230 = vrot.slane %v5228, 4
      %v5231 = vshll.u32 %v4927, 16
      %v5233 = vrot.slane %v5231, 5
      %v5234 = vor.u32 %v5230, %v5233
      %v5235 = vrot.slane %v5234, 4
      %v5237 = vshll.u32 %v4928, 16
      %v5239 = vrot.slane %v5237, 5
      %v5240 = vsel %vm1826, %v5235, %v5239
      %v5241 = vshrl.u32 %v4928, 16
      %v5243 = vrot.slane %v5241, 4
      %v5244 = vor.u32 %v5243, %v5239
      %v5245 = vrot.slane %v5244, 4
      %v5247 = vshll.u32 %v4929, 16
      %v5249 = vrot.slane %v5247, 5
      %v5250 = vsel %vm1826, %v5245, %v5249
      %v5252 = vshrl.u32 %v4930, 16
      %v5254 = vrot.slane %v5252, 4
      %v5255 = vshll.u32 %v4930, 16
      %v5257 = vrot.slane %v5255, 5
      %v5258 = vor.u32 %v5254, %v5257
      %v5259 = vrot.slane %v5258, 4
      %v5261 = vshll.u32 %v4931, 16
      %v5263 = vrot.slane %v5261, 5
      %v5264 = vsel %vm1826, %v5259, %v5263
      %v5265 = vshrl.u32 %v4931, 16
      %v5267 = vrot.slane %v5265, 4
      %v5268 = vor.u32 %v5267, %v5263
      %v5269 = vrot.slane %v5268, 4
      %v5271 = vshll.u32 %v4932, 16
      %v5273 = vrot.slane %v5271, 5
      %v5274 = vsel %vm1826, %v5269, %v5273
      %v5276 = vshrl.u32 %v4933, 16
      %v5278 = vrot.slane %v5276, 4
      %v5279 = vshll.u32 %v4933, 16
      %v5281 = vrot.slane %v5279, 5
      %v5282 = vor.u32 %v5278, %v5281
      %v5283 = vrot.slane %v5282, 4
      %v5285 = vshll.u32 %v4934, 16
      %v5287 = vrot.slane %v5285, 5
      %v5288 = vsel %vm1826, %v5283, %v5287
      %v5289 = vshrl.u32 %v4934, 16
      %v5291 = vrot.slane %v5289, 4
      %v5292 = vor.u32 %v5291, %v5287
      %v5293 = vrot.slane %v5292, 4
      %v5295 = vshll.u32 %v4935, 16
      %v5297 = vrot.slane %v5295, 5
      %v5298 = vsel %vm1826, %v5293, %v5297
      %v5300 = vshrl.u32 %v4936, 16
      %v5302 = vrot.slane %v5300, 4
      %v5303 = vshll.u32 %v4936, 16
      %v5305 = vrot.slane %v5303, 5
      %v5306 = vor.u32 %v5302, %v5305
      %v5307 = vrot.slane %v5306, 4
      %v5309 = vshll.u32 %v4937, 16
      %v5311 = vrot.slane %v5309, 5
      %v5312 = vsel %vm1826, %v5307, %v5311
      %v5313 = vshrl.u32 %v4937, 16
      %v5315 = vrot.slane %v5313, 4
      %v5316 = vor.u32 %v5315, %v5311
      %v5317 = vrot.slane %v5316, 4
      %v5319 = vshll.u32 %v4938, 16
      %v5321 = vrot.slane %v5319, 5
      %v5322 = vsel %vm1826, %v5317, %v5321
      %s5323 = scalar_lea.vmem %s3, 28
      %v5324 = vld [vmem:[%s5323] sm:$0xf]
      %v5325 = vunpack.c.l.b16 %v4952
      %v5326 = vunpack.c.l.b16 %v4962
      %v5327 = vunpack.c.l.b16 %v4976
      %v5328 = vunpack.c.l.b16 %v4986
      %v5329 = vunpack.c.l.b16 %v5000
      %v5330 = vunpack.c.l.b16 %v5010
      %v5331 = vunpack.c.l.b16 %v5024
      %v5332 = vunpack.c.l.b16 %v5034
      %v5333 = vunpack.c.l.b16 %v5048
      %v5334 = vunpack.c.l.b16 %v5058
      %v5335 = vunpack.c.l.b16 %v5072
      %v5336 = vunpack.c.l.b16 %v5082
      %v5337 = vunpack.c.l.b16 %v5096
      %v5338 = vunpack.c.l.b16 %v5106
      %v5339 = vunpack.c.l.b16 %v5120
      %v5340 = vunpack.c.l.b16 %v5130
      %v5341 = vunpack.c.l.b16 %v5144
      %v5342 = vunpack.c.l.b16 %v5154
      %v5343 = vunpack.c.l.b16 %v5168
      %v5344 = vunpack.c.l.b16 %v5178
      %v5345 = vunpack.c.l.b16 %v5192
      %v5346 = vunpack.c.l.b16 %v5202
      %v5347 = vunpack.c.l.b16 %v5216
      %v5348 = vunpack.c.l.b16 %v5226
      %v5349 = vunpack.c.l.b16 %v5240
      %v5350 = vunpack.c.l.b16 %v5250
      %v5351 = vunpack.c.l.b16 %v5264
      %v5352 = vunpack.c.l.b16 %v5274
      %v5353 = vunpack.c.l.b16 %v5288
      %v5354 = vunpack.c.l.b16 %v5298
      %v5355 = vunpack.c.l.b16 %v5312
      %v5356 = vunpack.c.l.b16 %v5322
      %v5357 = vpack.c.b16 %v5326, %v5325
      %v5358 = vpack.c.b16 %v5328, %v5327
      %v5359 = vpack.c.b16 %v5330, %v5329
      %v5360 = vpack.c.b16 %v5332, %v5331
      %v5361 = vpack.c.b16 %v5334, %v5333
      %v5362 = vpack.c.b16 %v5336, %v5335
      %v5363 = vpack.c.b16 %v5338, %v5337
      %v5364 = vpack.c.b16 %v5340, %v5339
      %v5365 = vpack.c.b16 %v5342, %v5341
      %v5366 = vpack.c.b16 %v5344, %v5343
      %v5367 = vpack.c.b16 %v5346, %v5345
      %v5368 = vpack.c.b16 %v5348, %v5347
      %v5369 = vpack.c.b16 %v5350, %v5349
      %v5370 = vpack.c.b16 %v5352, %v5351
      %v5371 = vpack.c.b16 %v5354, %v5353
      %v5372 = vpack.c.b16 %v5356, %v5355
      %v5374 = vsel %vm1524, %v5357, 0
      %v5377 = vsel %vm1524, %v5358, 0
      %v5380 = vsel %vm1524, %v5359, 0
      %v5383 = vsel %vm1524, %v5360, 0
      %v5386 = vsel %vm1524, %v5361, 0
      %v5389 = vsel %vm1524, %v5362, 0
      %v5392 = vsel %vm1524, %v5363, 0
      %v5395 = vsel %vm1524, %v5364, 0
      %v5398 = vsel %vm1524, %v5365, 0
      %v5401 = vsel %vm1524, %v5366, 0
      %v5404 = vsel %vm1524, %v5367, 0
      %v5407 = vsel %vm1524, %v5368, 0
      %v5410 = vsel %vm1524, %v5369, 0
      %v5413 = vsel %vm1524, %v5370, 0
      %v5416 = vsel %vm1524, %v5371, 0
      %v5419 = vsel %vm1524, %v5372, 0
      %v5422 = vsel %vm1573, %v5324, 0
      %5424 = vmatprep.subr.bf16.mxu0 0
      %5425 = vmatpush1.bf16.msra.mxu0 0
      %5426 = vmatprep.subr.bf16.mxu0 0
      %5427 = vmatpush1.bf16.msra.mxu0 0
      %5428 = vmatprep.subr.bf16.mxu0 0
      %5429 = vmatpush1.bf16.msra.mxu0 0
      %5430 = vmatprep.subr.bf16.mxu0 0
      %5431 = vmatpush1.bf16.msra.mxu0 0
      %5432 = vmatprep.subr.bf16.mxu0 0
      %5433 = vmatpush1.bf16.msra.mxu0 0
      %5434 = vmatprep.subr.bf16.mxu0 0
      %5435 = vmatpush1.bf16.msra.mxu0 0
      %5436 = vmatprep.subr.bf16.mxu0 0
      %5437 = vmatpush1.bf16.msra.mxu0 0
      %5438 = vmatprep.subr.bf16.mxu0 0
      %5439 = vmatpush1.bf16.msra.mxu0 %v5422
      %5440 = vmatprep.subr.bf16.mxu0 0
      %5441 = vmatpush2.bf16.msra.mxu0 0
      %5442 = vmatprep.subr.bf16.mxu0 0
      %5443 = vmatpush2.bf16.msra.mxu0 0
      %5444 = vmatprep.subr.bf16.mxu0 0
      %5445 = vmatpush2.bf16.msra.mxu0 0
      %5446 = vmatprep.subr.bf16.mxu0 0
      %5447 = vmatpush2.bf16.msra.mxu0 0
      %5448 = vmatprep.subr.bf16.mxu0 0
      %5449 = vmatpush2.bf16.msra.mxu0 0
      %5450 = vmatprep.subr.bf16.mxu0 0
      %5451 = vmatpush2.bf16.msra.mxu0 0
      %5452 = vmatprep.subr.bf16.mxu0 0
      %5453 = vmatpush2.bf16.msra.mxu0 0
      %5454 = vmatprep.subr.bf16.mxu0 0
      %5455 = vmatpush2.bf16.msra.mxu0 0
      %5456 = vmatprep.mubr.bf16.mxu0 0
      %5457 = vmatmul.mubr.bf16.gmra.mxu0 %v5374
      %v5458 = vpop.f32.mrf.mxu0
      %v5459 = vadd.f32 0.0, %v5458
      %v5460 = vpop.f32.mrf.mxu0
      %v5461 = vpop.f32.mrf.mxu0
      %v5462 = vadd.f32 0.0, %v5461
      %v5463 = vpop.f32.mrf.mxu0
      %5464 = vmatprep.mubr.bf16.mxu0 0
      %5465 = vmatmul.mubr.bf16.gmra.mxu0 %v5377
      %v5466 = vpop.f32.mrf.mxu0
      %v5467 = vadd.f32 0.0, %v5466
      %v5468 = vpop.f32.mrf.mxu0
      %v5469 = vpop.f32.mrf.mxu0
      %v5470 = vadd.f32 0.0, %v5469
      %v5471 = vpop.f32.mrf.mxu0
      %5472 = vmatprep.mubr.bf16.mxu0 0
      %5473 = vmatmul.mubr.bf16.gmra.mxu0 %v5380
      %v5474 = vpop.f32.mrf.mxu0
      %v5475 = vadd.f32 0.0, %v5474
      %v5476 = vpop.f32.mrf.mxu0
      %v5477 = vpop.f32.mrf.mxu0
      %v5478 = vadd.f32 0.0, %v5477
      %v5479 = vpop.f32.mrf.mxu0
      %5480 = vmatprep.mubr.bf16.mxu0 0
      %5481 = vmatmul.mubr.bf16.gmra.mxu0 %v5383
      %v5482 = vpop.f32.mrf.mxu0
      %v5483 = vadd.f32 0.0, %v5482
      %v5484 = vpop.f32.mrf.mxu0
      %v5485 = vpop.f32.mrf.mxu0
      %v5486 = vadd.f32 0.0, %v5485
      %v5487 = vpop.f32.mrf.mxu0
      %5488 = vmatprep.mubr.bf16.mxu0 0
      %5489 = vmatmul.mubr.bf16.gmra.mxu0 %v5386
      %v5490 = vpop.f32.mrf.mxu0
      %v5491 = vadd.f32 0.0, %v5490
      %v5492 = vpop.f32.mrf.mxu0
      %v5493 = vpop.f32.mrf.mxu0
      %v5494 = vadd.f32 0.0, %v5493
      %v5495 = vpop.f32.mrf.mxu0
      %5496 = vmatprep.mubr.bf16.mxu0 0
      %5497 = vmatmul.mubr.bf16.gmra.mxu0 %v5389
      %v5498 = vpop.f32.mrf.mxu0
      %v5499 = vadd.f32 0.0, %v5498
      %v5500 = vpop.f32.mrf.mxu0
      %v5501 = vpop.f32.mrf.mxu0
      %v5502 = vadd.f32 0.0, %v5501
      %v5503 = vpop.f32.mrf.mxu0
      %5504 = vmatprep.mubr.bf16.mxu0 0
      %5505 = vmatmul.mubr.bf16.gmra.mxu0 %v5392
      %v5506 = vpop.f32.mrf.mxu0
      %v5507 = vadd.f32 0.0, %v5506
      %v5508 = vpop.f32.mrf.mxu0
      %v5509 = vpop.f32.mrf.mxu0
      %v5510 = vadd.f32 0.0, %v5509
      %v5511 = vpop.f32.mrf.mxu0
      %5512 = vmatprep.mubr.bf16.mxu0 0
      %5513 = vmatmul.mubr.bf16.gmra.mxu0 %v5395
      %v5514 = vpop.f32.mrf.mxu0
      %v5515 = vadd.f32 0.0, %v5514
      %v5516 = vpop.f32.mrf.mxu0
      %v5517 = vpop.f32.mrf.mxu0
      %v5518 = vadd.f32 0.0, %v5517
      %v5519 = vpop.f32.mrf.mxu0
      %5520 = vmatprep.mubr.bf16.mxu0 0
      %5521 = vmatmul.mubr.bf16.gmra.mxu0 %v5398
      %v5522 = vpop.f32.mrf.mxu0
      %v5523 = vadd.f32 0.0, %v5522
      %v5524 = vpop.f32.mrf.mxu0
      %v5525 = vpop.f32.mrf.mxu0
      %v5526 = vadd.f32 0.0, %v5525
      %v5527 = vpop.f32.mrf.mxu0
      %5528 = vmatprep.mubr.bf16.mxu0 0
      %5529 = vmatmul.mubr.bf16.gmra.mxu0 %v5401
      %v5530 = vpop.f32.mrf.mxu0
      %v5531 = vadd.f32 0.0, %v5530
      %v5532 = vpop.f32.mrf.mxu0
      %v5533 = vpop.f32.mrf.mxu0
      %v5534 = vadd.f32 0.0, %v5533
      %v5535 = vpop.f32.mrf.mxu0
      %5536 = vmatprep.mubr.bf16.mxu0 0
      %5537 = vmatmul.mubr.bf16.gmra.mxu0 %v5404
      %v5538 = vpop.f32.mrf.mxu0
      %v5539 = vadd.f32 0.0, %v5538
      %v5540 = vpop.f32.mrf.mxu0
      %v5541 = vpop.f32.mrf.mxu0
      %v5542 = vadd.f32 0.0, %v5541
      %v5543 = vpop.f32.mrf.mxu0
      %5544 = vmatprep.mubr.bf16.mxu0 0
      %5545 = vmatmul.mubr.bf16.gmra.mxu0 %v5407
      %v5546 = vpop.f32.mrf.mxu0
      %v5547 = vadd.f32 0.0, %v5546
      %v5548 = vpop.f32.mrf.mxu0
      %v5549 = vpop.f32.mrf.mxu0
      %v5550 = vadd.f32 0.0, %v5549
      %v5551 = vpop.f32.mrf.mxu0
      %5552 = vmatprep.mubr.bf16.mxu0 0
      %5553 = vmatmul.mubr.bf16.gmra.mxu0 %v5410
      %v5554 = vpop.f32.mrf.mxu0
      %v5555 = vadd.f32 0.0, %v5554
      %v5556 = vpop.f32.mrf.mxu0
      %v5557 = vpop.f32.mrf.mxu0
      %v5558 = vadd.f32 0.0, %v5557
      %v5559 = vpop.f32.mrf.mxu0
      %5560 = vmatprep.mubr.bf16.mxu0 0
      %5561 = vmatmul.mubr.bf16.gmra.mxu0 %v5413
      %v5562 = vpop.f32.mrf.mxu0
      %v5563 = vadd.f32 0.0, %v5562
      %v5564 = vpop.f32.mrf.mxu0
      %v5565 = vpop.f32.mrf.mxu0
      %v5566 = vadd.f32 0.0, %v5565
      %v5567 = vpop.f32.mrf.mxu0
      %5568 = vmatprep.mubr.bf16.mxu0 0
      %5569 = vmatmul.mubr.bf16.gmra.mxu0 %v5416
      %v5570 = vpop.f32.mrf.mxu0
      %v5571 = vadd.f32 0.0, %v5570
      %v5572 = vpop.f32.mrf.mxu0
      %v5573 = vpop.f32.mrf.mxu0
      %v5574 = vadd.f32 0.0, %v5573
      %v5575 = vpop.f32.mrf.mxu0
      %5576 = vmatprep.mubr.bf16.mxu0 0
      %5577 = vmatmul.mubr.bf16.gmra.mxu0 %v5419
      %v5578 = vpop.f32.mrf.mxu0
      %v5579 = vadd.f32 0.0, %v5578
      %v5580 = vpop.f32.mrf.mxu0
      %v5581 = vpop.f32.mrf.mxu0
      %v5582 = vadd.f32 0.0, %v5581
      %v5583 = vpop.f32.mrf.mxu0
      %5584 = vdwg.mxu0
      %v5585 = vadd.f32 %v4859, %v5459
      %v5586 = vadd.f32 %v4860, %v5462
      %v5587 = vadd.f32 %v4861, %v5467
      %v5588 = vadd.f32 %v4862, %v5470
      %v5589 = vadd.f32 %v4863, %v5475
      %v5590 = vadd.f32 %v4864, %v5478
      %v5591 = vadd.f32 %v4865, %v5483
      %v5592 = vadd.f32 %v4866, %v5486
      %v5593 = vadd.f32 %v4867, %v5491
      %v5594 = vadd.f32 %v4868, %v5494
      %v5595 = vadd.f32 %v4869, %v5499
      %v5596 = vadd.f32 %v4870, %v5502
      %v5597 = vadd.f32 %v4871, %v5507
      %v5598 = vadd.f32 %v4872, %v5510
      %v5599 = vadd.f32 %v4873, %v5515
      %v5600 = vadd.f32 %v4874, %v5518
      %v5601 = vadd.f32 %v4875, %v5523
      %v5602 = vadd.f32 %v4876, %v5526
      %v5603 = vadd.f32 %v4877, %v5531
      %v5604 = vadd.f32 %v4878, %v5534
      %v5605 = vadd.f32 %v4879, %v5539
      %v5606 = vadd.f32 %v4880, %v5542
      %v5607 = vadd.f32 %v4881, %v5547
      %v5608 = vadd.f32 %v4882, %v5550
      %v5609 = vadd.f32 %v4883, %v5555
      %v5610 = vadd.f32 %v4884, %v5558
      %v5611 = vadd.f32 %v4885, %v5563
      %v5612 = vadd.f32 %v4886, %v5566
      %v5613 = vadd.f32 %v4887, %v5571
      %v5614 = vadd.f32 %v4888, %v5574
      %v5615 = vadd.f32 %v4889, %v5579
      %v5616 = vadd.f32 %v4890, %v5582
      %v5617 = vld [vmem:[%s4532] sm:$0xe]
      %v5618 = vld [vmem:[%s4532 + $0xc] sm:$0xe]
      %v5619 = vld [vmem:[%s4532 + $0x18] sm:$0xe]
      %v5620 = vld [vmem:[%s4532 + $0x24] sm:$0xe]
      %v5621 = vld [vmem:[%s4532 + $0x30] sm:$0xe]
      %v5622 = vld [vmem:[%s4532 + $0x3c] sm:$0xe]
      %v5623 = vld [vmem:[%s4532 + $0x48] sm:$0xe]
      %v5624 = vld [vmem:[%s4532 + $0x54] sm:$0xe]
      %v5625 = vld [vmem:[%s4532 + $0x60] sm:$0xe]
      %v5626 = vld [vmem:[%s4532 + $0x6c] sm:$0xe]
      %v5627 = vld [vmem:[%s4532 + $0x78] sm:$0xe]
      %v5628 = vld [vmem:[%s4532 + $0x84] sm:$0xe]
      %v5629 = vld [vmem:[%s4532 + $0x90] sm:$0xe]
      %v5630 = vld [vmem:[%s4532 + $0x9c] sm:$0xe]
      %v5631 = vld [vmem:[%s4532 + $0xa8] sm:$0xe]
      %v5632 = vld [vmem:[%s4532 + $0xb4] sm:$0xe]
      %v5681 = vrot.slane %v5617, 5
      %v5682 = vrot.slane %v5681, 4
      %v5683 = vrot.slane %v4892, 5
      %v5684 = vsel %vm2571, %v5682, %v5683
      %v5685 = vrot.slane %v5683, 4
      %v5686 = vrot.slane %v4893, 5
      %v5687 = vsel %vm2571, %v5685, %v5686
      %v5688 = vrot.slane %v5618, 5
      %v5689 = vrot.slane %v5688, 4
      %v5690 = vrot.slane %v4895, 5
      %v5691 = vsel %vm2571, %v5689, %v5690
      %v5692 = vrot.slane %v5690, 4
      %v5693 = vrot.slane %v4896, 5
      %v5694 = vsel %vm2571, %v5692, %v5693
      %v5695 = vrot.slane %v5619, 5
      %v5696 = vrot.slane %v5695, 4
      %v5697 = vrot.slane %v4898, 5
      %v5698 = vsel %vm2571, %v5696, %v5697
      %v5699 = vrot.slane %v5697, 4
      %v5700 = vrot.slane %v4899, 5
      %v5701 = vsel %vm2571, %v5699, %v5700
      %v5702 = vrot.slane %v5620, 5
      %v5703 = vrot.slane %v5702, 4
      %v5704 = vrot.slane %v4901, 5
      %v5705 = vsel %vm2571, %v5703, %v5704
      %v5706 = vrot.slane %v5704, 4
      %v5707 = vrot.slane %v4902, 5
      %v5708 = vsel %vm2571, %v5706, %v5707
      %v5709 = vrot.slane %v5621, 5
      %v5710 = vrot.slane %v5709, 4
      %v5711 = vrot.slane %v4904, 5
      %v5712 = vsel %vm2571, %v5710, %v5711
      %v5713 = vrot.slane %v5711, 4
      %v5714 = vrot.slane %v4905, 5
      %v5715 = vsel %vm2571, %v5713, %v5714
      %v5716 = vrot.slane %v5622, 5
      %v5717 = vrot.slane %v5716, 4
      %v5718 = vrot.slane %v4907, 5
      %v5719 = vsel %vm2571, %v5717, %v5718
      %v5720 = vrot.slane %v5718, 4
      %v5721 = vrot.slane %v4908, 5
      %v5722 = vsel %vm2571, %v5720, %v5721
      %v5723 = vrot.slane %v5623, 5
      %v5724 = vrot.slane %v5723, 4
      %v5725 = vrot.slane %v4910, 5
      %v5726 = vsel %vm2571, %v5724, %v5725
      %v5727 = vrot.slane %v5725, 4
      %v5728 = vrot.slane %v4911, 5
      %v5729 = vsel %vm2571, %v5727, %v5728
      %v5730 = vrot.slane %v5624, 5
      %v5731 = vrot.slane %v5730, 4
      %v5732 = vrot.slane %v4913, 5
      %v5733 = vsel %vm2571, %v5731, %v5732
      %v5734 = vrot.slane %v5732, 4
      %v5735 = vrot.slane %v4914, 5
      %v5736 = vsel %vm2571, %v5734, %v5735
      %v5737 = vrot.slane %v5625, 5
      %v5738 = vrot.slane %v5737, 4
      %v5739 = vrot.slane %v4916, 5
      %v5740 = vsel %vm2571, %v5738, %v5739
      %v5741 = vrot.slane %v5739, 4
      %v5742 = vrot.slane %v4917, 5
      %v5743 = vsel %vm2571, %v5741, %v5742
      %v5744 = vrot.slane %v5626, 5
      %v5745 = vrot.slane %v5744, 4
      %v5746 = vrot.slane %v4919, 5
      %v5747 = vsel %vm2571, %v5745, %v5746
      %v5748 = vrot.slane %v5746, 4
      %v5749 = vrot.slane %v4920, 5
      %v5750 = vsel %vm2571, %v5748, %v5749
      %v5751 = vrot.slane %v5627, 5
      %v5752 = vrot.slane %v5751, 4
      %v5753 = vrot.slane %v4922, 5
      %v5754 = vsel %vm2571, %v5752, %v5753
      %v5755 = vrot.slane %v5753, 4
      %v5756 = vrot.slane %v4923, 5
      %v5757 = vsel %vm2571, %v5755, %v5756
      %v5758 = vrot.slane %v5628, 5
      %v5759 = vrot.slane %v5758, 4
      %v5760 = vrot.slane %v4925, 5
      %v5761 = vsel %vm2571, %v5759, %v5760
      %v5762 = vrot.slane %v5760, 4
      %v5763 = vrot.slane %v4926, 5
      %v5764 = vsel %vm2571, %v5762, %v5763
      %v5765 = vrot.slane %v5629, 5
      %v5766 = vrot.slane %v5765, 4
      %v5767 = vrot.slane %v4928, 5
      %v5768 = vsel %vm2571, %v5766, %v5767
      %v5769 = vrot.slane %v5767, 4
      %v5770 = vrot.slane %v4929, 5
      %v5771 = vsel %vm2571, %v5769, %v5770
      %v5772 = vrot.slane %v5630, 5
      %v5773 = vrot.slane %v5772, 4
      %v5774 = vrot.slane %v4931, 5
      %v5775 = vsel %vm2571, %v5773, %v5774
      %v5776 = vrot.slane %v5774, 4
      %v5777 = vrot.slane %v4932, 5
      %v5778 = vsel %vm2571, %v5776, %v5777
      %v5779 = vrot.slane %v5631, 5
      %v5780 = vrot.slane %v5779, 4
      %v5781 = vrot.slane %v4934, 5
      %v5782 = vsel %vm2571, %v5780, %v5781
      %v5783 = vrot.slane %v5781, 4
      %v5784 = vrot.slane %v4935, 5
      %v5785 = vsel %vm2571, %v5783, %v5784
      %v5786 = vrot.slane %v5632, 5
      %v5787 = vrot.slane %v5786, 4
      %v5788 = vrot.slane %v4937, 5
      %v5789 = vsel %vm2571, %v5787, %v5788
      %v5790 = vrot.slane %v5788, 4
      %v5791 = vrot.slane %v4938, 5
      %v5792 = vsel %vm2571, %v5790, %v5791
      %s5793 = scalar_lea.vmem %s3, 32
      %v5794 = vld [vmem:[%s5793] sm:$0xf]
      %v5795 = vunpack.c.l.b16 %v5684
      %v5796 = vunpack.c.l.b16 %v5687
      %v5797 = vunpack.c.l.b16 %v5691
      %v5798 = vunpack.c.l.b16 %v5694
      %v5799 = vunpack.c.l.b16 %v5698
      %v5800 = vunpack.c.l.b16 %v5701
      %v5801 = vunpack.c.l.b16 %v5705
      %v5802 = vunpack.c.l.b16 %v5708
      %v5803 = vunpack.c.l.b16 %v5712
      %v5804 = vunpack.c.l.b16 %v5715
      %v5805 = vunpack.c.l.b16 %v5719
      %v5806 = vunpack.c.l.b16 %v5722
      %v5807 = vunpack.c.l.b16 %v5726
      %v5808 = vunpack.c.l.b16 %v5729
      %v5809 = vunpack.c.l.b16 %v5733
      %v5810 = vunpack.c.l.b16 %v5736
      %v5811 = vunpack.c.l.b16 %v5740
      %v5812 = vunpack.c.l.b16 %v5743
      %v5813 = vunpack.c.l.b16 %v5747
      %v5814 = vunpack.c.l.b16 %v5750
      %v5815 = vunpack.c.l.b16 %v5754
      %v5816 = vunpack.c.l.b16 %v5757
      %v5817 = vunpack.c.l.b16 %v5761
      %v5818 = vunpack.c.l.b16 %v5764
      %v5819 = vunpack.c.l.b16 %v5768
      %v5820 = vunpack.c.l.b16 %v5771
      %v5821 = vunpack.c.l.b16 %v5775
      %v5822 = vunpack.c.l.b16 %v5778
      %v5823 = vunpack.c.l.b16 %v5782
      %v5824 = vunpack.c.l.b16 %v5785
      %v5825 = vunpack.c.l.b16 %v5789
      %v5826 = vunpack.c.l.b16 %v5792
      %v5827 = vpack.c.b16 %v5796, %v5795
      %v5828 = vpack.c.b16 %v5798, %v5797
      %v5829 = vpack.c.b16 %v5800, %v5799
      %v5830 = vpack.c.b16 %v5802, %v5801
      %v5831 = vpack.c.b16 %v5804, %v5803
      %v5832 = vpack.c.b16 %v5806, %v5805
      %v5833 = vpack.c.b16 %v5808, %v5807
      %v5834 = vpack.c.b16 %v5810, %v5809
      %v5835 = vpack.c.b16 %v5812, %v5811
      %v5836 = vpack.c.b16 %v5814, %v5813
      %v5837 = vpack.c.b16 %v5816, %v5815
      %v5838 = vpack.c.b16 %v5818, %v5817
      %v5839 = vpack.c.b16 %v5820, %v5819
      %v5840 = vpack.c.b16 %v5822, %v5821
      %v5841 = vpack.c.b16 %v5824, %v5823
      %v5842 = vpack.c.b16 %v5826, %v5825
      %v5844 = vsel %vm1524, %v5827, 0
      %v5847 = vsel %vm1524, %v5828, 0
      %v5850 = vsel %vm1524, %v5829, 0
      %v5853 = vsel %vm1524, %v5830, 0
      %v5856 = vsel %vm1524, %v5831, 0
      %v5859 = vsel %vm1524, %v5832, 0
      %v5862 = vsel %vm1524, %v5833, 0
      %v5865 = vsel %vm1524, %v5834, 0
      %v5868 = vsel %vm1524, %v5835, 0
      %v5871 = vsel %vm1524, %v5836, 0
      %v5874 = vsel %vm1524, %v5837, 0
      %v5877 = vsel %vm1524, %v5838, 0
      %v5880 = vsel %vm1524, %v5839, 0
      %v5883 = vsel %vm1524, %v5840, 0
      %v5886 = vsel %vm1524, %v5841, 0
      %v5889 = vsel %vm1524, %v5842, 0
      %v5892 = vsel %vm1573, %v5794, 0
      %5894 = vmatprep.subr.bf16.mxu0 0
      %5895 = vmatpush1.bf16.msra.mxu0 0
      %5896 = vmatprep.subr.bf16.mxu0 0
      %5897 = vmatpush1.bf16.msra.mxu0 0
      %5898 = vmatprep.subr.bf16.mxu0 0
      %5899 = vmatpush1.bf16.msra.mxu0 0
      %5900 = vmatprep.subr.bf16.mxu0 0
      %5901 = vmatpush1.bf16.msra.mxu0 0
      %5902 = vmatprep.subr.bf16.mxu0 0
      %5903 = vmatpush1.bf16.msra.mxu0 0
      %5904 = vmatprep.subr.bf16.mxu0 0
      %5905 = vmatpush1.bf16.msra.mxu0 0
      %5906 = vmatprep.subr.bf16.mxu0 0
      %5907 = vmatpush1.bf16.msra.mxu0 0
      %5908 = vmatprep.subr.bf16.mxu0 0
      %5909 = vmatpush1.bf16.msra.mxu0 %v5892
      %5910 = vmatprep.subr.bf16.mxu0 0
      %5911 = vmatpush2.bf16.msra.mxu0 0
      %5912 = vmatprep.subr.bf16.mxu0 0
      %5913 = vmatpush2.bf16.msra.mxu0 0
      %5914 = vmatprep.subr.bf16.mxu0 0
      %5915 = vmatpush2.bf16.msra.mxu0 0
      %5916 = vmatprep.subr.bf16.mxu0 0
      %5917 = vmatpush2.bf16.msra.mxu0 0
      %5918 = vmatprep.subr.bf16.mxu0 0
      %5919 = vmatpush2.bf16.msra.mxu0 0
      %5920 = vmatprep.subr.bf16.mxu0 0
      %5921 = vmatpush2.bf16.msra.mxu0 0
      %5922 = vmatprep.subr.bf16.mxu0 0
      %5923 = vmatpush2.bf16.msra.mxu0 0
      %5924 = vmatprep.subr.bf16.mxu0 0
      %5925 = vmatpush2.bf16.msra.mxu0 0
      %5926 = vmatprep.mubr.bf16.mxu0 0
      %5927 = vmatmul.mubr.bf16.gmra.mxu0 %v5844
      %v5928 = vpop.f32.mrf.mxu0
      %v5929 = vadd.f32 0.0, %v5928
      %v5930 = vpop.f32.mrf.mxu0
      %v5931 = vpop.f32.mrf.mxu0
      %v5932 = vadd.f32 0.0, %v5931
      %v5933 = vpop.f32.mrf.mxu0
      %5934 = vmatprep.mubr.bf16.mxu0 0
      %5935 = vmatmul.mubr.bf16.gmra.mxu0 %v5847
      %v5936 = vpop.f32.mrf.mxu0
      %v5937 = vadd.f32 0.0, %v5936
      %v5938 = vpop.f32.mrf.mxu0
      %v5939 = vpop.f32.mrf.mxu0
      %v5940 = vadd.f32 0.0, %v5939
      %v5941 = vpop.f32.mrf.mxu0
      %5942 = vmatprep.mubr.bf16.mxu0 0
      %5943 = vmatmul.mubr.bf16.gmra.mxu0 %v5850
      %v5944 = vpop.f32.mrf.mxu0
      %v5945 = vadd.f32 0.0, %v5944
      %v5946 = vpop.f32.mrf.mxu0
      %v5947 = vpop.f32.mrf.mxu0
      %v5948 = vadd.f32 0.0, %v5947
      %v5949 = vpop.f32.mrf.mxu0
      %5950 = vmatprep.mubr.bf16.mxu0 0
      %5951 = vmatmul.mubr.bf16.gmra.mxu0 %v5853
      %v5952 = vpop.f32.mrf.mxu0
      %v5953 = vadd.f32 0.0, %v5952
      %v5954 = vpop.f32.mrf.mxu0
      %v5955 = vpop.f32.mrf.mxu0
      %v5956 = vadd.f32 0.0, %v5955
      %v5957 = vpop.f32.mrf.mxu0
      %5958 = vmatprep.mubr.bf16.mxu0 0
      %5959 = vmatmul.mubr.bf16.gmra.mxu0 %v5856
      %v5960 = vpop.f32.mrf.mxu0
      %v5961 = vadd.f32 0.0, %v5960
      %v5962 = vpop.f32.mrf.mxu0
      %v5963 = vpop.f32.mrf.mxu0
      %v5964 = vadd.f32 0.0, %v5963
      %v5965 = vpop.f32.mrf.mxu0
      %5966 = vmatprep.mubr.bf16.mxu0 0
      %5967 = vmatmul.mubr.bf16.gmra.mxu0 %v5859
      %v5968 = vpop.f32.mrf.mxu0
      %v5969 = vadd.f32 0.0, %v5968
      %v5970 = vpop.f32.mrf.mxu0
      %v5971 = vpop.f32.mrf.mxu0
      %v5972 = vadd.f32 0.0, %v5971
      %v5973 = vpop.f32.mrf.mxu0
      %5974 = vmatprep.mubr.bf16.mxu0 0
      %5975 = vmatmul.mubr.bf16.gmra.mxu0 %v5862
      %v5976 = vpop.f32.mrf.mxu0
      %v5977 = vadd.f32 0.0, %v5976
      %v5978 = vpop.f32.mrf.mxu0
      %v5979 = vpop.f32.mrf.mxu0
      %v5980 = vadd.f32 0.0, %v5979
      %v5981 = vpop.f32.mrf.mxu0
      %5982 = vmatprep.mubr.bf16.mxu0 0
      %5983 = vmatmul.mubr.bf16.gmra.mxu0 %v5865
      %v5984 = vpop.f32.mrf.mxu0
      %v5985 = vadd.f32 0.0, %v5984
      %v5986 = vpop.f32.mrf.mxu0
      %v5987 = vpop.f32.mrf.mxu0
      %v5988 = vadd.f32 0.0, %v5987
      %v5989 = vpop.f32.mrf.mxu0
      %5990 = vmatprep.mubr.bf16.mxu0 0
      %5991 = vmatmul.mubr.bf16.gmra.mxu0 %v5868
      %v5992 = vpop.f32.mrf.mxu0
      %v5993 = vadd.f32 0.0, %v5992
      %v5994 = vpop.f32.mrf.mxu0
      %v5995 = vpop.f32.mrf.mxu0
      %v5996 = vadd.f32 0.0, %v5995
      %v5997 = vpop.f32.mrf.mxu0
      %5998 = vmatprep.mubr.bf16.mxu0 0
      %5999 = vmatmul.mubr.bf16.gmra.mxu0 %v5871
      %v6000 = vpop.f32.mrf.mxu0
      %v6001 = vadd.f32 0.0, %v6000
      %v6002 = vpop.f32.mrf.mxu0
      %v6003 = vpop.f32.mrf.mxu0
      %v6004 = vadd.f32 0.0, %v6003
      %v6005 = vpop.f32.mrf.mxu0
      %6006 = vmatprep.mubr.bf16.mxu0 0
      %6007 = vmatmul.mubr.bf16.gmra.mxu0 %v5874
      %v6008 = vpop.f32.mrf.mxu0
      %v6009 = vadd.f32 0.0, %v6008
      %v6010 = vpop.f32.mrf.mxu0
      %v6011 = vpop.f32.mrf.mxu0
      %v6012 = vadd.f32 0.0, %v6011
      %v6013 = vpop.f32.mrf.mxu0
      %6014 = vmatprep.mubr.bf16.mxu0 0
      %6015 = vmatmul.mubr.bf16.gmra.mxu0 %v5877
      %v6016 = vpop.f32.mrf.mxu0
      %v6017 = vadd.f32 0.0, %v6016
      %v6018 = vpop.f32.mrf.mxu0
      %v6019 = vpop.f32.mrf.mxu0
      %v6020 = vadd.f32 0.0, %v6019
      %v6021 = vpop.f32.mrf.mxu0
      %6022 = vmatprep.mubr.bf16.mxu0 0
      %6023 = vmatmul.mubr.bf16.gmra.mxu0 %v5880
      %v6024 = vpop.f32.mrf.mxu0
      %v6025 = vadd.f32 0.0, %v6024
      %v6026 = vpop.f32.mrf.mxu0
      %v6027 = vpop.f32.mrf.mxu0
      %v6028 = vadd.f32 0.0, %v6027
      %v6029 = vpop.f32.mrf.mxu0
      %6030 = vmatprep.mubr.bf16.mxu0 0
      %6031 = vmatmul.mubr.bf16.gmra.mxu0 %v5883
      %v6032 = vpop.f32.mrf.mxu0
      %v6033 = vadd.f32 0.0, %v6032
      %v6034 = vpop.f32.mrf.mxu0
      %v6035 = vpop.f32.mrf.mxu0
      %v6036 = vadd.f32 0.0, %v6035
      %v6037 = vpop.f32.mrf.mxu0
      %6038 = vmatprep.mubr.bf16.mxu0 0
      %6039 = vmatmul.mubr.bf16.gmra.mxu0 %v5886
      %v6040 = vpop.f32.mrf.mxu0
      %v6041 = vadd.f32 0.0, %v6040
      %v6042 = vpop.f32.mrf.mxu0
      %v6043 = vpop.f32.mrf.mxu0
      %v6044 = vadd.f32 0.0, %v6043
      %v6045 = vpop.f32.mrf.mxu0
      %6046 = vmatprep.mubr.bf16.mxu0 0
      %6047 = vmatmul.mubr.bf16.gmra.mxu0 %v5889
      %v6048 = vpop.f32.mrf.mxu0
      %v6049 = vadd.f32 0.0, %v6048
      %v6050 = vpop.f32.mrf.mxu0
      %v6051 = vpop.f32.mrf.mxu0
      %v6052 = vadd.f32 0.0, %v6051
      %v6053 = vpop.f32.mrf.mxu0
      %6054 = vdwg.mxu0
      %v6055 = vadd.f32 %v5585, %v5929
      %v6056 = vadd.f32 %v5586, %v5932
      %v6057 = vadd.f32 %v5587, %v5937
      %v6058 = vadd.f32 %v5588, %v5940
      %v6059 = vadd.f32 %v5589, %v5945
      %v6060 = vadd.f32 %v5590, %v5948
      %v6061 = vadd.f32 %v5591, %v5953
      %v6062 = vadd.f32 %v5592, %v5956
      %v6063 = vadd.f32 %v5593, %v5961
      %v6064 = vadd.f32 %v5594, %v5964
      %v6065 = vadd.f32 %v5595, %v5969
      %v6066 = vadd.f32 %v5596, %v5972
      %v6067 = vadd.f32 %v5597, %v5977
      %v6068 = vadd.f32 %v5598, %v5980
      %v6069 = vadd.f32 %v5599, %v5985
      %v6070 = vadd.f32 %v5600, %v5988
      %v6071 = vadd.f32 %v5601, %v5993
      %v6072 = vadd.f32 %v5602, %v5996
      %v6073 = vadd.f32 %v5603, %v6001
      %v6074 = vadd.f32 %v5604, %v6004
      %v6075 = vadd.f32 %v5605, %v6009
      %v6076 = vadd.f32 %v5606, %v6012
      %v6077 = vadd.f32 %v5607, %v6017
      %v6078 = vadd.f32 %v5608, %v6020
      %v6079 = vadd.f32 %v5609, %v6025
      %v6080 = vadd.f32 %v5610, %v6028
      %v6081 = vadd.f32 %v5611, %v6033
      %v6082 = vadd.f32 %v5612, %v6036
      %v6083 = vadd.f32 %v5613, %v6041
      %v6084 = vadd.f32 %v5614, %v6044
      %v6085 = vadd.f32 %v5615, %v6049
      %v6086 = vadd.f32 %v5616, %v6052
      %v6087 = vmax.f32 %v6055, 0.0
      %v6088 = vmax.f32 %v6056, 0.0
      %v6089 = vmax.f32 %v6057, 0.0
      %v6090 = vmax.f32 %v6058, 0.0
      %v6091 = vmax.f32 %v6059, 0.0
      %v6092 = vmax.f32 %v6060, 0.0
      %v6093 = vmax.f32 %v6061, 0.0
      %v6094 = vmax.f32 %v6062, 0.0
      %v6095 = vmax.f32 %v6063, 0.0
      %v6096 = vmax.f32 %v6064, 0.0
      %v6097 = vmax.f32 %v6065, 0.0
      %v6098 = vmax.f32 %v6066, 0.0
      %v6099 = vmax.f32 %v6067, 0.0
      %v6100 = vmax.f32 %v6068, 0.0
      %v6101 = vmax.f32 %v6069, 0.0
      %v6102 = vmax.f32 %v6070, 0.0
      %v6103 = vmax.f32 %v6071, 0.0
      %v6104 = vmax.f32 %v6072, 0.0
      %v6105 = vmax.f32 %v6073, 0.0
      %v6106 = vmax.f32 %v6074, 0.0
      %v6107 = vmax.f32 %v6075, 0.0
      %v6108 = vmax.f32 %v6076, 0.0
      %v6109 = vmax.f32 %v6077, 0.0
      %v6110 = vmax.f32 %v6078, 0.0
      %v6111 = vmax.f32 %v6079, 0.0
      %v6112 = vmax.f32 %v6080, 0.0
      %v6113 = vmax.f32 %v6081, 0.0
      %v6114 = vmax.f32 %v6082, 0.0
      %v6115 = vmax.f32 %v6083, 0.0
      %v6116 = vmax.f32 %v6084, 0.0
      %v6117 = vmax.f32 %v6085, 0.0
      %v6118 = vmax.f32 %v6086, 0.0
      %v6119 = vld [vmem:[%s5] sm:$0xf]
      %v6120 = vld [vmem:[%s6] sm:$0x1]
      %v6121 = vpack.c.bf16 %v6088, %v6087
      %v6122 = vpack.c.bf16 %v6090, %v6089
      %v6123 = vpack.c.bf16 %v6092, %v6091
      %v6124 = vpack.c.bf16 %v6094, %v6093
      %v6125 = vpack.c.bf16 %v6096, %v6095
      %v6126 = vpack.c.bf16 %v6098, %v6097
      %v6127 = vpack.c.bf16 %v6100, %v6099
      %v6128 = vpack.c.bf16 %v6102, %v6101
      %v6129 = vpack.c.bf16 %v6104, %v6103
      %v6130 = vpack.c.bf16 %v6106, %v6105
      %v6131 = vpack.c.bf16 %v6108, %v6107
      %v6132 = vpack.c.bf16 %v6110, %v6109
      %v6133 = vpack.c.bf16 %v6112, %v6111
      %v6134 = vpack.c.bf16 %v6114, %v6113
      %v6135 = vpack.c.bf16 %v6116, %v6115
      %v6136 = vpack.c.bf16 %v6118, %v6117
      %v6138 = vlaneseq
      %v6139 = vshrl.u32 %v6138, 7
      %v6140 = vsub.s32 0, %v6139
      %v6141 = vrot.slane %v6120, %v6140
      %v6144 = vsel %vm1524, %v6121, 0
      %v6147 = vsel %vm1524, %v6122, 0
      %v6150 = vsel %vm1524, %v6123, 0
      %v6153 = vsel %vm1524, %v6124, 0
      %v6156 = vsel %vm1524, %v6125, 0
      %v6159 = vsel %vm1524, %v6126, 0
      %v6162 = vsel %vm1524, %v6127, 0
      %v6165 = vsel %vm1524, %v6128, 0
      %v6168 = vsel %vm1524, %v6129, 0
      %v6171 = vsel %vm1524, %v6130, 0
      %v6174 = vsel %vm1524, %v6131, 0
      %v6177 = vsel %vm1524, %v6132, 0
      %v6180 = vsel %vm1524, %v6133, 0
      %v6183 = vsel %vm1524, %v6134, 0
      %v6186 = vsel %vm1524, %v6135, 0
      %v6189 = vsel %vm1524, %v6136, 0
      %v6192 = vsel %vm1573, %v6119, 0
      %6194 = vmatprep.subr.bf16.mxu0 0
      %6195 = vmatpush1.bf16.msra.mxu0 0
      %6196 = vmatprep.subr.bf16.mxu0 0
      %6197 = vmatpush1.bf16.msra.mxu0 0
      %6198 = vmatprep.subr.bf16.mxu0 0
      %6199 = vmatpush1.bf16.msra.mxu0 0
      %6200 = vmatprep.subr.bf16.mxu0 0
      %6201 = vmatpush1.bf16.msra.mxu0 0
      %6202 = vmatprep.subr.bf16.mxu0 0
      %6203 = vmatpush1.bf16.msra.mxu0 0
      %6204 = vmatprep.subr.bf16.mxu0 0
      %6205 = vmatpush1.bf16.msra.mxu0 0
      %6206 = vmatprep.subr.bf16.mxu0 0
      %6207 = vmatpush1.bf16.msra.mxu0 0
      %6208 = vmatprep.subr.bf16.mxu0 0
      %6209 = vmatpush1.bf16.msra.mxu0 %v6192
      %6210 = vmatprep.subr.bf16.mxu0 0
      %6211 = vmatpush2.bf16.msra.mxu0 0
      %6212 = vmatprep.subr.bf16.mxu0 0
      %6213 = vmatpush2.bf16.msra.mxu0 0
      %6214 = vmatprep.subr.bf16.mxu0 0
      %6215 = vmatpush2.bf16.msra.mxu0 0
      %6216 = vmatprep.subr.bf16.mxu0 0
      %6217 = vmatpush2.bf16.msra.mxu0 0
      %6218 = vmatprep.subr.bf16.mxu0 0
      %6219 = vmatpush2.bf16.msra.mxu0 0
      %6220 = vmatprep.subr.bf16.mxu0 0
      %6221 = vmatpush2.bf16.msra.mxu0 0
      %6222 = vmatprep.subr.bf16.mxu0 0
      %6223 = vmatpush2.bf16.msra.mxu0 0
      %6224 = vmatprep.subr.bf16.mxu0 0
      %6225 = vmatpush2.bf16.msra.mxu0 0
      %6226 = vmatprep.mubr.bf16.mxu0 0
      %6227 = vmatmul.mubr.bf16.gmra.mxu0 %v6144
      %v6228 = vpop.f32.mrf.mxu0
      %v6229 = vadd.f32 %v6141, %v6228
      %v6230 = vpop.f32.mrf.mxu0
      %v6231 = vpop.f32.mrf.mxu0
      %v6232 = vadd.f32 %v6141, %v6231
      %v6233 = vpop.f32.mrf.mxu0
      %6234 = vmatprep.mubr.bf16.mxu0 0
      %6235 = vmatmul.mubr.bf16.gmra.mxu0 %v6147
      %v6236 = vpop.f32.mrf.mxu0
      %v6237 = vadd.f32 %v6141, %v6236
      %v6238 = vpop.f32.mrf.mxu0
      %v6239 = vpop.f32.mrf.mxu0
      %v6240 = vadd.f32 %v6141, %v6239
      %v6241 = vpop.f32.mrf.mxu0
      %6242 = vmatprep.mubr.bf16.mxu0 0
      %6243 = vmatmul.mubr.bf16.gmra.mxu0 %v6150
      %v6244 = vpop.f32.mrf.mxu0
      %v6245 = vadd.f32 %v6141, %v6244
      %v6246 = vpop.f32.mrf.mxu0
      %v6247 = vpop.f32.mrf.mxu0
      %v6248 = vadd.f32 %v6141, %v6247
      %v6249 = vpop.f32.mrf.mxu0
      %6250 = vmatprep.mubr.bf16.mxu0 0
      %6251 = vmatmul.mubr.bf16.gmra.mxu0 %v6153
      %v6252 = vpop.f32.mrf.mxu0
      %v6253 = vadd.f32 %v6141, %v6252
      %v6254 = vpop.f32.mrf.mxu0
      %v6255 = vpop.f32.mrf.mxu0
      %v6256 = vadd.f32 %v6141, %v6255
      %v6257 = vpop.f32.mrf.mxu0
      %6258 = vmatprep.mubr.bf16.mxu0 0
      %6259 = vmatmul.mubr.bf16.gmra.mxu0 %v6156
      %v6260 = vpop.f32.mrf.mxu0
      %v6261 = vadd.f32 %v6141, %v6260
      %v6262 = vpop.f32.mrf.mxu0
      %v6263 = vpop.f32.mrf.mxu0
      %v6264 = vadd.f32 %v6141, %v6263
      %v6265 = vpop.f32.mrf.mxu0
      %6266 = vmatprep.mubr.bf16.mxu0 0
      %6267 = vmatmul.mubr.bf16.gmra.mxu0 %v6159
      %v6268 = vpop.f32.mrf.mxu0
      %v6269 = vadd.f32 %v6141, %v6268
      %v6270 = vpop.f32.mrf.mxu0
      %v6271 = vpop.f32.mrf.mxu0
      %v6272 = vadd.f32 %v6141, %v6271
      %v6273 = vpop.f32.mrf.mxu0
      %6274 = vmatprep.mubr.bf16.mxu0 0
      %6275 = vmatmul.mubr.bf16.gmra.mxu0 %v6162
      %v6276 = vpop.f32.mrf.mxu0
      %v6277 = vadd.f32 %v6141, %v6276
      %v6278 = vpop.f32.mrf.mxu0
      %v6279 = vpop.f32.mrf.mxu0
      %v6280 = vadd.f32 %v6141, %v6279
      %v6281 = vpop.f32.mrf.mxu0
      %6282 = vmatprep.mubr.bf16.mxu0 0
      %6283 = vmatmul.mubr.bf16.gmra.mxu0 %v6165
      %v6284 = vpop.f32.mrf.mxu0
      %v6285 = vadd.f32 %v6141, %v6284
      %v6286 = vpop.f32.mrf.mxu0
      %v6287 = vpop.f32.mrf.mxu0
      %v6288 = vadd.f32 %v6141, %v6287
      %v6289 = vpop.f32.mrf.mxu0
      %6290 = vmatprep.mubr.bf16.mxu0 0
      %6291 = vmatmul.mubr.bf16.gmra.mxu0 %v6168
      %v6292 = vpop.f32.mrf.mxu0
      %v6293 = vadd.f32 %v6141, %v6292
      %v6294 = vpop.f32.mrf.mxu0
      %v6295 = vpop.f32.mrf.mxu0
      %v6296 = vadd.f32 %v6141, %v6295
      %v6297 = vpop.f32.mrf.mxu0
      %6298 = vmatprep.mubr.bf16.mxu0 0
      %6299 = vmatmul.mubr.bf16.gmra.mxu0 %v6171
      %v6300 = vpop.f32.mrf.mxu0
      %v6301 = vadd.f32 %v6141, %v6300
      %v6302 = vpop.f32.mrf.mxu0
      %v6303 = vpop.f32.mrf.mxu0
      %v6304 = vadd.f32 %v6141, %v6303
      %v6305 = vpop.f32.mrf.mxu0
      %6306 = vmatprep.mubr.bf16.mxu0 0
      %6307 = vmatmul.mubr.bf16.gmra.mxu0 %v6174
      %v6308 = vpop.f32.mrf.mxu0
      %v6309 = vadd.f32 %v6141, %v6308
      %v6310 = vpop.f32.mrf.mxu0
      %v6311 = vpop.f32.mrf.mxu0
      %v6312 = vadd.f32 %v6141, %v6311
      %v6313 = vpop.f32.mrf.mxu0
      %6314 = vmatprep.mubr.bf16.mxu0 0
      %6315 = vmatmul.mubr.bf16.gmra.mxu0 %v6177
      %v6316 = vpop.f32.mrf.mxu0
      %v6317 = vadd.f32 %v6141, %v6316
      %v6318 = vpop.f32.mrf.mxu0
      %v6319 = vpop.f32.mrf.mxu0
      %v6320 = vadd.f32 %v6141, %v6319
      %v6321 = vpop.f32.mrf.mxu0
      %6322 = vmatprep.mubr.bf16.mxu0 0
      %6323 = vmatmul.mubr.bf16.gmra.mxu0 %v6180
      %v6324 = vpop.f32.mrf.mxu0
      %v6325 = vadd.f32 %v6141, %v6324
      %v6326 = vpop.f32.mrf.mxu0
      %v6327 = vpop.f32.mrf.mxu0
      %v6328 = vadd.f32 %v6141, %v6327
      %v6329 = vpop.f32.mrf.mxu0
      %6330 = vmatprep.mubr.bf16.mxu0 0
      %6331 = vmatmul.mubr.bf16.gmra.mxu0 %v6183
      %v6332 = vpop.f32.mrf.mxu0
      %v6333 = vadd.f32 %v6141, %v6332
      %v6334 = vpop.f32.mrf.mxu0
      %v6335 = vpop.f32.mrf.mxu0
      %v6336 = vadd.f32 %v6141, %v6335
      %v6337 = vpop.f32.mrf.mxu0
      %6338 = vmatprep.mubr.bf16.mxu0 0
      %6339 = vmatmul.mubr.bf16.gmra.mxu0 %v6186
      %v6340 = vpop.f32.mrf.mxu0
      %v6341 = vadd.f32 %v6141, %v6340
      %v6342 = vpop.f32.mrf.mxu0
      %v6343 = vpop.f32.mrf.mxu0
      %v6344 = vadd.f32 %v6141, %v6343
      %v6345 = vpop.f32.mrf.mxu0
      %6346 = vmatprep.mubr.bf16.mxu0 0
      %6347 = vmatmul.mubr.bf16.gmra.mxu0 %v6189
      %v6348 = vpop.f32.mrf.mxu0
      %v6349 = vadd.f32 %v6141, %v6348
      %v6350 = vpop.f32.mrf.mxu0
      %v6351 = vpop.f32.mrf.mxu0
      %v6352 = vadd.f32 %v6141, %v6351
      %v6353 = vpop.f32.mrf.mxu0
      %6354 = vdwg.mxu0
      %v6355 = vadd.f32 %v6229, %v564
      %v6356 = vadd.f32 %v6232, %v565
      %v6357 = vadd.f32 %v6237, %v566
      %v6358 = vadd.f32 %v6240, %v567
      %v6359 = vadd.f32 %v6245, %v568
      %v6360 = vadd.f32 %v6248, %v569
      %v6361 = vadd.f32 %v6253, %v570
      %v6362 = vadd.f32 %v6256, %v571
      %v6363 = vadd.f32 %v6261, %v572
      %v6364 = vadd.f32 %v6264, %v573
      %v6365 = vadd.f32 %v6269, %v574
      %v6366 = vadd.f32 %v6272, %v575
      %v6367 = vadd.f32 %v6277, %v576
      %v6368 = vadd.f32 %v6280, %v577
      %v6369 = vadd.f32 %v6285, %v578
      %v6370 = vadd.f32 %v6288, %v579
      %v6371 = vadd.f32 %v6293, %v580
      %v6372 = vadd.f32 %v6296, %v581
      %v6373 = vadd.f32 %v6301, %v582
      %v6374 = vadd.f32 %v6304, %v583
      %v6375 = vadd.f32 %v6309, %v584
      %v6376 = vadd.f32 %v6312, %v585
      %v6377 = vadd.f32 %v6317, %v586
      %v6378 = vadd.f32 %v6320, %v587
      %v6379 = vadd.f32 %v6325, %v588
      %v6380 = vadd.f32 %v6328, %v589
      %v6381 = vadd.f32 %v6333, %v590
      %v6382 = vadd.f32 %v6336, %v591
      %v6383 = vadd.f32 %v6341, %v592
      %v6384 = vadd.f32 %v6344, %v593
      %v6385 = vadd.f32 %v6349, %v594
      %v6386 = vadd.f32 %v6352, %v595
      %v6387 = vmax.f32 %v6355, 0.0
      %v6388 = vmax.f32 %v6356, 0.0
      %v6389 = vmax.f32 %v6357, 0.0
      %v6390 = vmax.f32 %v6358, 0.0
      %v6391 = vmax.f32 %v6359, 0.0
      %v6392 = vmax.f32 %v6360, 0.0
      %v6393 = vmax.f32 %v6361, 0.0
      %v6394 = vmax.f32 %v6362, 0.0
      %v6395 = vmax.f32 %v6363, 0.0
      %v6396 = vmax.f32 %v6364, 0.0
      %v6397 = vmax.f32 %v6365, 0.0
      %v6398 = vmax.f32 %v6366, 0.0
      %v6399 = vmax.f32 %v6367, 0.0
      %v6400 = vmax.f32 %v6368, 0.0
      %v6401 = vmax.f32 %v6369, 0.0
      %v6402 = vmax.f32 %v6370, 0.0
      %v6403 = vmax.f32 %v6371, 0.0
      %v6404 = vmax.f32 %v6372, 0.0
      %v6405 = vmax.f32 %v6373, 0.0
      %v6406 = vmax.f32 %v6374, 0.0
      %v6407 = vmax.f32 %v6375, 0.0
      %v6408 = vmax.f32 %v6376, 0.0
      %v6409 = vmax.f32 %v6377, 0.0
      %v6410 = vmax.f32 %v6378, 0.0
      %v6411 = vmax.f32 %v6379, 0.0
      %v6412 = vmax.f32 %v6380, 0.0
      %v6413 = vmax.f32 %v6381, 0.0
      %v6414 = vmax.f32 %v6382, 0.0
      %v6415 = vmax.f32 %v6383, 0.0
      %v6416 = vmax.f32 %v6384, 0.0
      %v6417 = vmax.f32 %v6385, 0.0
      %v6418 = vmax.f32 %v6386, 0.0
      %v6419 = vld [vmem:[%s7] sm:$0xf]
      %v6420 = vld [vmem:[%s7 + $0x4] sm:$0xf]
      %v6421 = vld [vmem:[%s7 + $0x8] sm:$0xf]
      %v6422 = vld [vmem:[%s7 + $0xc] sm:$0xf]
      %v6423 = vld [vmem:[%s8] sm:$0x1]
      %v6424 = vpack.c.bf16 %v6388, %v6387
      %v6425 = vpack.c.bf16 %v6390, %v6389
      %v6426 = vpack.c.bf16 %v6392, %v6391
      %v6427 = vpack.c.bf16 %v6394, %v6393
      %v6428 = vpack.c.bf16 %v6396, %v6395
      %v6429 = vpack.c.bf16 %v6398, %v6397
      %v6430 = vpack.c.bf16 %v6400, %v6399
      %v6431 = vpack.c.bf16 %v6402, %v6401
      %v6432 = vpack.c.bf16 %v6404, %v6403
      %v6433 = vpack.c.bf16 %v6406, %v6405
      %v6434 = vpack.c.bf16 %v6408, %v6407
      %v6435 = vpack.c.bf16 %v6410, %v6409
      %v6436 = vpack.c.bf16 %v6412, %v6411
      %v6437 = vpack.c.bf16 %v6414, %v6413
      %v6438 = vpack.c.bf16 %v6416, %v6415
      %v6439 = vpack.c.bf16 %v6418, %v6417
      %v6441 = vlaneseq
      %v6442 = vshrl.u32 %v6441, 7
      %v6443 = vsub.s32 0, %v6442
      %v6444 = vrot.slane %v6423, %v6443
      %v6450 = vunpack.c.l.b16 %v6419
      %v6451 = vunpack.c.l.b16 %v6420
      %v6452 = vunpack.c.l.b16 %v6421
      %v6453 = vunpack.c.l.b16 %v6422
      %v6454 = vpack.c.b16 %v6451, %v6450
      %v6455 = vpack.c.b16 %v6453, %v6452
      %v6459 = vsel %vm635, %v6424, 0
      %v6462 = vsel %vm635, %v6425, 0
      %v6465 = vsel %vm635, %v6426, 0
      %v6468 = vsel %vm635, %v6427, 0
      %v6471 = vsel %vm635, %v6428, 0
      %v6474 = vsel %vm635, %v6429, 0
      %v6477 = vsel %vm635, %v6430, 0
      %v6480 = vsel %vm635, %v6431, 0
      %v6483 = vsel %vm635, %v6432, 0
      %v6486 = vsel %vm635, %v6433, 0
      %v6489 = vsel %vm635, %v6434, 0
      %v6492 = vsel %vm635, %v6435, 0
      %v6495 = vsel %vm635, %v6436, 0
      %v6498 = vsel %vm635, %v6437, 0
      %v6501 = vsel %vm635, %v6438, 0
      %v6504 = vsel %vm635, %v6439, 0
      %6506 = vmatprep.subr.bf16.mxu0 0
      %6507 = vmatpush1.bf16.msra.mxu0 0
      %6508 = vmatprep.subr.bf16.mxu0 0
      %6509 = vmatpush1.bf16.msra.mxu0 0
      %6510 = vmatprep.subr.bf16.mxu0 0
      %6511 = vmatpush1.bf16.msra.mxu0 0
      %6512 = vmatprep.subr.bf16.mxu0 0
      %6513 = vmatpush1.bf16.msra.mxu0 0
      %6514 = vmatprep.subr.bf16.mxu0 0
      %6515 = vmatpush1.bf16.msra.mxu0 0
      %6516 = vmatprep.subr.bf16.mxu0 0
      %6517 = vmatpush1.bf16.msra.mxu0 0
      %6518 = vmatprep.subr.bf16.mxu0 0
      %6519 = vmatpush1.bf16.msra.mxu0 %v6455
      %6520 = vmatprep.subr.bf16.mxu0 0
      %6521 = vmatpush1.bf16.msra.mxu0 %v6454
      %6522 = vmatprep.subr.bf16.mxu0 0
      %6523 = vmatpush2.bf16.msra.mxu0 0
      %6524 = vmatprep.subr.bf16.mxu0 0
      %6525 = vmatpush2.bf16.msra.mxu0 0
      %6526 = vmatprep.subr.bf16.mxu0 0
      %6527 = vmatpush2.bf16.msra.mxu0 0
      %6528 = vmatprep.subr.bf16.mxu0 0
      %6529 = vmatpush2.bf16.msra.mxu0 0
      %6530 = vmatprep.subr.bf16.mxu0 0
      %6531 = vmatpush2.bf16.msra.mxu0 0
      %6532 = vmatprep.subr.bf16.mxu0 0
      %6533 = vmatpush2.bf16.msra.mxu0 0
      %6534 = vmatprep.subr.bf16.mxu0 0
      %6535 = vmatpush2.bf16.msra.mxu0 0
      %6536 = vmatprep.subr.bf16.mxu0 0
      %6537 = vmatpush2.bf16.msra.mxu0 0
      %6538 = vmatprep.mubr.bf16.mxu0 0
      %6539 = vmatmul.mubr.bf16.gmra.mxu0 %v6459
      %v6540 = vpop.f32.mrf.mxu0
      %v6541 = vadd.f32 %v6444, %v6540
      %v6542 = vpop.f32.mrf.mxu0
      %v6543 = vpop.f32.mrf.mxu0
      %v6544 = vadd.f32 %v6444, %v6543
      %v6545 = vpop.f32.mrf.mxu0
      %6546 = vmatprep.mubr.bf16.mxu0 0
      %6547 = vmatmul.mubr.bf16.gmra.mxu0 %v6462
      %v6548 = vpop.f32.mrf.mxu0
      %v6549 = vadd.f32 %v6444, %v6548
      %v6550 = vpop.f32.mrf.mxu0
      %v6551 = vpop.f32.mrf.mxu0
      %v6552 = vadd.f32 %v6444, %v6551
      %v6553 = vpop.f32.mrf.mxu0
      %6554 = vmatprep.mubr.bf16.mxu0 0
      %6555 = vmatmul.mubr.bf16.gmra.mxu0 %v6465
      %v6556 = vpop.f32.mrf.mxu0
      %v6557 = vadd.f32 %v6444, %v6556
      %v6558 = vpop.f32.mrf.mxu0
      %v6559 = vpop.f32.mrf.mxu0
      %v6560 = vadd.f32 %v6444, %v6559
      %v6561 = vpop.f32.mrf.mxu0
      %6562 = vmatprep.mubr.bf16.mxu0 0
      %6563 = vmatmul.mubr.bf16.gmra.mxu0 %v6468
      %v6564 = vpop.f32.mrf.mxu0
      %v6565 = vadd.f32 %v6444, %v6564
      %v6566 = vpop.f32.mrf.mxu0
      %v6567 = vpop.f32.mrf.mxu0
      %v6568 = vadd.f32 %v6444, %v6567
      %v6569 = vpop.f32.mrf.mxu0
      %6570 = vmatprep.mubr.bf16.mxu0 0
      %6571 = vmatmul.mubr.bf16.gmra.mxu0 %v6471
      %v6572 = vpop.f32.mrf.mxu0
      %v6573 = vadd.f32 %v6444, %v6572
      %v6574 = vpop.f32.mrf.mxu0
      %v6575 = vpop.f32.mrf.mxu0
      %v6576 = vadd.f32 %v6444, %v6575
      %v6577 = vpop.f32.mrf.mxu0
      %6578 = vmatprep.mubr.bf16.mxu0 0
      %6579 = vmatmul.mubr.bf16.gmra.mxu0 %v6474
      %v6580 = vpop.f32.mrf.mxu0
      %v6581 = vadd.f32 %v6444, %v6580
      %v6582 = vpop.f32.mrf.mxu0
      %v6583 = vpop.f32.mrf.mxu0
      %v6584 = vadd.f32 %v6444, %v6583
      %v6585 = vpop.f32.mrf.mxu0
      %6586 = vmatprep.mubr.bf16.mxu0 0
      %6587 = vmatmul.mubr.bf16.gmra.mxu0 %v6477
      %v6588 = vpop.f32.mrf.mxu0
      %v6589 = vadd.f32 %v6444, %v6588
      %v6590 = vpop.f32.mrf.mxu0
      %v6591 = vpop.f32.mrf.mxu0
      %v6592 = vadd.f32 %v6444, %v6591
      %v6593 = vpop.f32.mrf.mxu0
      %6594 = vmatprep.mubr.bf16.mxu0 0
      %6595 = vmatmul.mubr.bf16.gmra.mxu0 %v6480
      %v6596 = vpop.f32.mrf.mxu0
      %v6597 = vadd.f32 %v6444, %v6596
      %v6598 = vpop.f32.mrf.mxu0
      %v6599 = vpop.f32.mrf.mxu0
      %v6600 = vadd.f32 %v6444, %v6599
      %v6601 = vpop.f32.mrf.mxu0
      %6602 = vmatprep.mubr.bf16.mxu0 0
      %6603 = vmatmul.mubr.bf16.gmra.mxu0 %v6483
      %v6604 = vpop.f32.mrf.mxu0
      %v6605 = vadd.f32 %v6444, %v6604
      %v6606 = vpop.f32.mrf.mxu0
      %v6607 = vpop.f32.mrf.mxu0
      %v6608 = vadd.f32 %v6444, %v6607
      %v6609 = vpop.f32.mrf.mxu0
      %6610 = vmatprep.mubr.bf16.mxu0 0
      %6611 = vmatmul.mubr.bf16.gmra.mxu0 %v6486
      %v6612 = vpop.f32.mrf.mxu0
      %v6613 = vadd.f32 %v6444, %v6612
      %v6614 = vpop.f32.mrf.mxu0
      %v6615 = vpop.f32.mrf.mxu0
      %v6616 = vadd.f32 %v6444, %v6615
      %v6617 = vpop.f32.mrf.mxu0
      %6618 = vmatprep.mubr.bf16.mxu0 0
      %6619 = vmatmul.mubr.bf16.gmra.mxu0 %v6489
      %v6620 = vpop.f32.mrf.mxu0
      %v6621 = vadd.f32 %v6444, %v6620
      %v6622 = vpop.f32.mrf.mxu0
      %v6623 = vpop.f32.mrf.mxu0
      %v6624 = vadd.f32 %v6444, %v6623
      %v6625 = vpop.f32.mrf.mxu0
      %6626 = vmatprep.mubr.bf16.mxu0 0
      %6627 = vmatmul.mubr.bf16.gmra.mxu0 %v6492
      %v6628 = vpop.f32.mrf.mxu0
      %v6629 = vadd.f32 %v6444, %v6628
      %v6630 = vpop.f32.mrf.mxu0
      %v6631 = vpop.f32.mrf.mxu0
      %v6632 = vadd.f32 %v6444, %v6631
      %v6633 = vpop.f32.mrf.mxu0
      %6634 = vmatprep.mubr.bf16.mxu0 0
      %6635 = vmatmul.mubr.bf16.gmra.mxu0 %v6495
      %v6636 = vpop.f32.mrf.mxu0
      %v6637 = vadd.f32 %v6444, %v6636
      %v6638 = vpop.f32.mrf.mxu0
      %v6639 = vpop.f32.mrf.mxu0
      %v6640 = vadd.f32 %v6444, %v6639
      %v6641 = vpop.f32.mrf.mxu0
      %6642 = vmatprep.mubr.bf16.mxu0 0
      %6643 = vmatmul.mubr.bf16.gmra.mxu0 %v6498
      %v6644 = vpop.f32.mrf.mxu0
      %v6645 = vadd.f32 %v6444, %v6644
      %v6646 = vpop.f32.mrf.mxu0
      %v6647 = vpop.f32.mrf.mxu0
      %v6648 = vadd.f32 %v6444, %v6647
      %v6649 = vpop.f32.mrf.mxu0
      %6650 = vmatprep.mubr.bf16.mxu0 0
      %6651 = vmatmul.mubr.bf16.gmra.mxu0 %v6501
      %v6652 = vpop.f32.mrf.mxu0
      %v6653 = vadd.f32 %v6444, %v6652
      %v6654 = vpop.f32.mrf.mxu0
      %v6655 = vpop.f32.mrf.mxu0
      %v6656 = vadd.f32 %v6444, %v6655
      %v6657 = vpop.f32.mrf.mxu0
      %6658 = vmatprep.mubr.bf16.mxu0 0
      %6659 = vmatmul.mubr.bf16.gmra.mxu0 %v6504
      %v6660 = vpop.f32.mrf.mxu0
      %v6661 = vadd.f32 %v6444, %v6660
      %v6662 = vpop.f32.mrf.mxu0
      %v6663 = vpop.f32.mrf.mxu0
      %v6664 = vadd.f32 %v6444, %v6663
      %v6665 = vpop.f32.mrf.mxu0
      %6666 = vdwg.mxu0
      %v6667 = vmax.f32 %v6541, 0.0
      %v6668 = vmax.f32 %v6544, 0.0
      %v6669 = vmax.f32 %v6549, 0.0
      %v6670 = vmax.f32 %v6552, 0.0
      %v6671 = vmax.f32 %v6557, 0.0
      %v6672 = vmax.f32 %v6560, 0.0
      %v6673 = vmax.f32 %v6565, 0.0
      %v6674 = vmax.f32 %v6568, 0.0
      %v6675 = vmax.f32 %v6573, 0.0
      %v6676 = vmax.f32 %v6576, 0.0
      %v6677 = vmax.f32 %v6581, 0.0
      %v6678 = vmax.f32 %v6584, 0.0
      %v6679 = vmax.f32 %v6589, 0.0
      %v6680 = vmax.f32 %v6592, 0.0
      %v6681 = vmax.f32 %v6597, 0.0
      %v6682 = vmax.f32 %v6600, 0.0
      %v6683 = vmax.f32 %v6605, 0.0
      %v6684 = vmax.f32 %v6608, 0.0
      %v6685 = vmax.f32 %v6613, 0.0
      %v6686 = vmax.f32 %v6616, 0.0
      %v6687 = vmax.f32 %v6621, 0.0
      %v6688 = vmax.f32 %v6624, 0.0
      %v6689 = vmax.f32 %v6629, 0.0
      %v6690 = vmax.f32 %v6632, 0.0
      %v6691 = vmax.f32 %v6637, 0.0
      %v6692 = vmax.f32 %v6640, 0.0
      %v6693 = vmax.f32 %v6645, 0.0
      %v6694 = vmax.f32 %v6648, 0.0
      %v6695 = vmax.f32 %v6653, 0.0
      %v6696 = vmax.f32 %v6656, 0.0
      %v6697 = vmax.f32 %v6661, 0.0
      %v6698 = vmax.f32 %v6664, 0.0
      %v6699 = vld [vmem:[%s10] sm:$0x1]
      %v6700 = vpack.c.bf16 %v6668, %v6667
      %v6701 = vpack.c.bf16 %v6670, %v6669
      %v6702 = vpack.c.bf16 %v6672, %v6671
      %v6703 = vpack.c.bf16 %v6674, %v6673
      %v6704 = vpack.c.bf16 %v6676, %v6675
      %v6705 = vpack.c.bf16 %v6678, %v6677
      %v6706 = vpack.c.bf16 %v6680, %v6679
      %v6707 = vpack.c.bf16 %v6682, %v6681
      %v6708 = vpack.c.bf16 %v6684, %v6683
      %v6709 = vpack.c.bf16 %v6686, %v6685
      %v6710 = vpack.c.bf16 %v6688, %v6687
      %v6711 = vpack.c.bf16 %v6690, %v6689
      %v6712 = vpack.c.bf16 %v6692, %v6691
      %v6713 = vpack.c.bf16 %v6694, %v6693
      %v6714 = vpack.c.bf16 %v6696, %v6695
      %v6715 = vpack.c.bf16 %v6698, %v6697
      %v6732 = vunpack.c.l.b16 %v6700
      %v6733 = vunpack.c.h.b16 %v6700
      %v6734 = vunpack.c.l.b16 %v6701
      %v6735 = vunpack.c.h.b16 %v6701
      %v6736 = vunpack.c.l.b16 %v6702
      %v6737 = vunpack.c.h.b16 %v6702
      %v6738 = vunpack.c.l.b16 %v6703
      %v6739 = vunpack.c.h.b16 %v6703
      %v6740 = vunpack.c.l.b16 %v6704
      %v6741 = vunpack.c.h.b16 %v6704
      %v6742 = vunpack.c.l.b16 %v6705
      %v6743 = vunpack.c.h.b16 %v6705
      %v6744 = vunpack.c.l.b16 %v6706
      %v6745 = vunpack.c.h.b16 %v6706
      %v6746 = vunpack.c.l.b16 %v6707
      %v6747 = vunpack.c.h.b16 %v6707
      %v6748 = vunpack.c.l.b16 %v6708
      %v6749 = vunpack.c.h.b16 %v6708
      %v6750 = vunpack.c.l.b16 %v6709
      %v6751 = vunpack.c.h.b16 %v6709
      %v6752 = vunpack.c.l.b16 %v6710
      %v6753 = vunpack.c.h.b16 %v6710
      %v6754 = vunpack.c.l.b16 %v6711
      %v6755 = vunpack.c.h.b16 %v6711
      %v6756 = vunpack.c.l.b16 %v6712
      %v6757 = vunpack.c.h.b16 %v6712
      %v6758 = vunpack.c.l.b16 %v6713
      %v6759 = vunpack.c.h.b16 %v6713
      %v6760 = vunpack.c.l.b16 %v6714
      %v6761 = vunpack.c.h.b16 %v6714
      %v6762 = vunpack.c.l.b16 %v6715
      %v6763 = vunpack.c.h.b16 %v6715
      %v6764 = vpack.c.b16 %v6732, %v6732
      %v6765 = vpack.c.b16 %v6733, %v6733
      %v6766 = vpack.c.b16 %v6734, %v6734
      %v6767 = vpack.c.b16 %v6735, %v6735
      %v6768 = vpack.c.b16 %v6736, %v6736
      %v6769 = vpack.c.b16 %v6737, %v6737
      %v6770 = vpack.c.b16 %v6738, %v6738
      %v6771 = vpack.c.b16 %v6739, %v6739
      %v6772 = vpack.c.b16 %v6740, %v6740
      %v6773 = vpack.c.b16 %v6741, %v6741
      %v6774 = vpack.c.b16 %v6742, %v6742
      %v6775 = vpack.c.b16 %v6743, %v6743
      %v6776 = vpack.c.b16 %v6744, %v6744
      %v6777 = vpack.c.b16 %v6745, %v6745
      %v6778 = vpack.c.b16 %v6746, %v6746
      %v6779 = vpack.c.b16 %v6747, %v6747
      %v6780 = vpack.c.b16 %v6748, %v6748
      %v6781 = vpack.c.b16 %v6749, %v6749
      %v6782 = vpack.c.b16 %v6750, %v6750
      %v6783 = vpack.c.b16 %v6751, %v6751
      %v6784 = vpack.c.b16 %v6752, %v6752
      %v6785 = vpack.c.b16 %v6753, %v6753
      %v6786 = vpack.c.b16 %v6754, %v6754
      %v6787 = vpack.c.b16 %v6755, %v6755
      %v6788 = vpack.c.b16 %v6756, %v6756
      %v6789 = vpack.c.b16 %v6757, %v6757
      %v6790 = vpack.c.b16 %v6758, %v6758
      %v6791 = vpack.c.b16 %v6759, %v6759
      %v6792 = vpack.c.b16 %v6760, %v6760
      %v6793 = vpack.c.b16 %v6761, %v6761
      %v6794 = vpack.c.b16 %v6762, %v6762
      %v6795 = vpack.c.b16 %v6763, %v6763
      %v6797 = vshrl.u32 %v6764, 16
      %v6799 = vrot.slane %v6797, 7
      %v6800 = vshll.u32 %v6764, 16
      %v6802 = vor.u32 %v6799, %v6800
      %v6803 = vrot.slane %v6799, 4
      %v6805 = vshrl.u32 %v6765, 16
      %v6807 = vrot.slane %v6805, 7
      %v6808 = vshll.u32 %v6765, 16
      %v6810 = vor.u32 %v6807, %v6808
      %v6811 = vsel %vm975, %v6803, %v6810
      %v6812 = vrot.slane %v6807, 4
      %v6814 = vshrl.u32 %v6766, 16
      %v6816 = vrot.slane %v6814, 7
      %v6817 = vshll.u32 %v6766, 16
      %v6819 = vor.u32 %v6816, %v6817
      %v6820 = vrot.slane %v6816, 4
      %v6822 = vshrl.u32 %v6767, 16
      %v6824 = vrot.slane %v6822, 7
      %v6825 = vshll.u32 %v6767, 16
      %v6827 = vor.u32 %v6824, %v6825
      %v6828 = vsel %vm975, %v6820, %v6827
      %v6829 = vrot.slane %v6824, 4
      %v6831 = vshrl.u32 %v6768, 16
      %v6833 = vrot.slane %v6831, 7
      %v6834 = vshll.u32 %v6768, 16
      %v6836 = vor.u32 %v6833, %v6834
      %v6837 = vrot.slane %v6833, 4
      %v6839 = vshrl.u32 %v6769, 16
      %v6841 = vrot.slane %v6839, 7
      %v6842 = vshll.u32 %v6769, 16
      %v6844 = vor.u32 %v6841, %v6842
      %v6845 = vsel %vm975, %v6837, %v6844
      %v6846 = vrot.slane %v6841, 4
      %v6848 = vshrl.u32 %v6770, 16
      %v6850 = vrot.slane %v6848, 7
      %v6851 = vshll.u32 %v6770, 16
      %v6853 = vor.u32 %v6850, %v6851
      %v6854 = vrot.slane %v6850, 4
      %v6856 = vshrl.u32 %v6771, 16
      %v6858 = vrot.slane %v6856, 7
      %v6859 = vshll.u32 %v6771, 16
      %v6861 = vor.u32 %v6858, %v6859
      %v6862 = vsel %vm975, %v6854, %v6861
      %v6863 = vrot.slane %v6858, 4
      %v6865 = vshrl.u32 %v6772, 16
      %v6867 = vrot.slane %v6865, 7
      %v6868 = vshll.u32 %v6772, 16
      %v6870 = vor.u32 %v6867, %v6868
      %v6871 = vrot.slane %v6867, 4
      %v6873 = vshrl.u32 %v6773, 16
      %v6875 = vrot.slane %v6873, 7
      %v6876 = vshll.u32 %v6773, 16
      %v6878 = vor.u32 %v6875, %v6876
      %v6879 = vsel %vm975, %v6871, %v6878
      %v6880 = vrot.slane %v6875, 4
      %v6882 = vshrl.u32 %v6774, 16
      %v6884 = vrot.slane %v6882, 7
      %v6885 = vshll.u32 %v6774, 16
      %v6887 = vor.u32 %v6884, %v6885
      %v6888 = vrot.slane %v6884, 4
      %v6890 = vshrl.u32 %v6775, 16
      %v6892 = vrot.slane %v6890, 7
      %v6893 = vshll.u32 %v6775, 16
      %v6895 = vor.u32 %v6892, %v6893
      %v6896 = vsel %vm975, %v6888, %v6895
      %v6897 = vrot.slane %v6892, 4
      %v6899 = vshrl.u32 %v6776, 16
      %v6901 = vrot.slane %v6899, 7
      %v6902 = vshll.u32 %v6776, 16
      %v6904 = vor.u32 %v6901, %v6902
      %v6905 = vrot.slane %v6901, 4
      %v6907 = vshrl.u32 %v6777, 16
      %v6909 = vrot.slane %v6907, 7
      %v6910 = vshll.u32 %v6777, 16
      %v6912 = vor.u32 %v6909, %v6910
      %v6913 = vsel %vm975, %v6905, %v6912
      %v6914 = vrot.slane %v6909, 4
      %v6916 = vshrl.u32 %v6778, 16
      %v6918 = vrot.slane %v6916, 7
      %v6919 = vshll.u32 %v6778, 16
      %v6921 = vor.u32 %v6918, %v6919
      %v6922 = vrot.slane %v6918, 4
      %v6924 = vshrl.u32 %v6779, 16
      %v6926 = vrot.slane %v6924, 7
      %v6927 = vshll.u32 %v6779, 16
      %v6929 = vor.u32 %v6926, %v6927
      %v6930 = vsel %vm975, %v6922, %v6929
      %v6931 = vrot.slane %v6926, 4
      %v6933 = vshrl.u32 %v6780, 16
      %v6935 = vrot.slane %v6933, 7
      %v6936 = vshll.u32 %v6780, 16
      %v6938 = vor.u32 %v6935, %v6936
      %v6939 = vrot.slane %v6935, 4
      %v6941 = vshrl.u32 %v6781, 16
      %v6943 = vrot.slane %v6941, 7
      %v6944 = vshll.u32 %v6781, 16
      %v6946 = vor.u32 %v6943, %v6944
      %v6947 = vsel %vm975, %v6939, %v6946
      %v6948 = vrot.slane %v6943, 4
      %v6950 = vshrl.u32 %v6782, 16
      %v6952 = vrot.slane %v6950, 7
      %v6953 = vshll.u32 %v6782, 16
      %v6955 = vor.u32 %v6952, %v6953
      %v6956 = vrot.slane %v6952, 4
      %v6958 = vshrl.u32 %v6783, 16
      %v6960 = vrot.slane %v6958, 7
      %v6961 = vshll.u32 %v6783, 16
      %v6963 = vor.u32 %v6960, %v6961
      %v6964 = vsel %vm975, %v6956, %v6963
      %v6965 = vrot.slane %v6960, 4
      %v6967 = vshrl.u32 %v6784, 16
      %v6969 = vrot.slane %v6967, 7
      %v6970 = vshll.u32 %v6784, 16
      %v6972 = vor.u32 %v6969, %v6970
      %v6973 = vrot.slane %v6969, 4
      %v6975 = vshrl.u32 %v6785, 16
      %v6977 = vrot.slane %v6975, 7
      %v6978 = vshll.u32 %v6785, 16
      %v6980 = vor.u32 %v6977, %v6978
      %v6981 = vsel %vm975, %v6973, %v6980
      %v6982 = vrot.slane %v6977, 4
      %v6984 = vshrl.u32 %v6786, 16
      %v6986 = vrot.slane %v6984, 7
      %v6987 = vshll.u32 %v6786, 16
      %v6989 = vor.u32 %v6986, %v6987
      %v6990 = vrot.slane %v6986, 4
      %v6992 = vshrl.u32 %v6787, 16
      %v6994 = vrot.slane %v6992, 7
      %v6995 = vshll.u32 %v6787, 16
      %v6997 = vor.u32 %v6994, %v6995
      %v6998 = vsel %vm975, %v6990, %v6997
      %v6999 = vrot.slane %v6994, 4
      %v7001 = vshrl.u32 %v6788, 16
      %v7003 = vrot.slane %v7001, 7
      %v7004 = vshll.u32 %v6788, 16
      %v7006 = vor.u32 %v7003, %v7004
      %v7007 = vrot.slane %v7003, 4
      %v7009 = vshrl.u32 %v6789, 16
      %v7011 = vrot.slane %v7009, 7
      %v7012 = vshll.u32 %v6789, 16
      %v7014 = vor.u32 %v7011, %v7012
      %v7015 = vsel %vm975, %v7007, %v7014
      %v7016 = vrot.slane %v7011, 4
      %v7018 = vshrl.u32 %v6790, 16
      %v7020 = vrot.slane %v7018, 7
      %v7021 = vshll.u32 %v6790, 16
      %v7023 = vor.u32 %v7020, %v7021
      %v7024 = vrot.slane %v7020, 4
      %v7026 = vshrl.u32 %v6791, 16
      %v7028 = vrot.slane %v7026, 7
      %v7029 = vshll.u32 %v6791, 16
      %v7031 = vor.u32 %v7028, %v7029
      %v7032 = vsel %vm975, %v7024, %v7031
      %v7033 = vrot.slane %v7028, 4
      %v7035 = vshrl.u32 %v6792, 16
      %v7037 = vrot.slane %v7035, 7
      %v7038 = vshll.u32 %v6792, 16
      %v7040 = vor.u32 %v7037, %v7038
      %v7041 = vrot.slane %v7037, 4
      %v7043 = vshrl.u32 %v6793, 16
      %v7045 = vrot.slane %v7043, 7
      %v7046 = vshll.u32 %v6793, 16
      %v7048 = vor.u32 %v7045, %v7046
      %v7049 = vsel %vm975, %v7041, %v7048
      %v7050 = vrot.slane %v7045, 4
      %v7052 = vshrl.u32 %v6794, 16
      %v7054 = vrot.slane %v7052, 7
      %v7055 = vshll.u32 %v6794, 16
      %v7057 = vor.u32 %v7054, %v7055
      %v7058 = vrot.slane %v7054, 4
      %v7060 = vshrl.u32 %v6795, 16
      %v7062 = vrot.slane %v7060, 7
      %v7063 = vshll.u32 %v6795, 16
      %v7065 = vor.u32 %v7062, %v7063
      %v7066 = vsel %vm975, %v7058, %v7065
      %v7067 = vrot.slane %v7062, 4
      %v7116 = vsel %vm1298, %v6802, %v3336
      %7117 = vst [vmem:[%s1296] sm:$0xf] %v7116
      %7118 = vst.msk [vmem:[%s1296 + $0x4] sm:$0xf] %vm442, %v6811
      %v7119 = vld [vmem:[%s1296 + $0x8] sm:$0x1]
      %v7120 = vsel %vm453, %v6812, %v7119
      %7121 = vst [vmem:[%s1296 + $0x8] sm:$0x1] %v7120
      %v7122 = vld [vmem:[%s1296 + $0xc] sm:$0xf]
      %v7123 = vsel %vm1298, %v6819, %v7122
      %7124 = vst [vmem:[%s1296 + $0xc] sm:$0xf] %v7123
      %7125 = vst.msk [vmem:[%s1296 + $0x10] sm:$0xf] %vm442, %v6828
      %v7126 = vld [vmem:[%s1296 + $0x14] sm:$0x1]
      %v7127 = vsel %vm453, %v6829, %v7126
      %7128 = vst [vmem:[%s1296 + $0x14] sm:$0x1] %v7127
      %v7129 = vld [vmem:[%s1296 + $0x18] sm:$0xf]
      %v7130 = vsel %vm1298, %v6836, %v7129
      %7131 = vst [vmem:[%s1296 + $0x18] sm:$0xf] %v7130
      %7132 = vst.msk [vmem:[%s1296 + $0x1c] sm:$0xf] %vm442, %v6845
      %v7133 = vld [vmem:[%s1296 + $0x20] sm:$0x1]
      %v7134 = vsel %vm453, %v6846, %v7133
      %7135 = vst [vmem:[%s1296 + $0x20] sm:$0x1] %v7134
      %v7136 = vld [vmem:[%s1296 + $0x24] sm:$0xf]
      %v7137 = vsel %vm1298, %v6853, %v7136
      %7138 = vst [vmem:[%s1296 + $0x24] sm:$0xf] %v7137
      %7139 = vst.msk [vmem:[%s1296 + $0x28] sm:$0xf] %vm442, %v6862
      %v7140 = vld [vmem:[%s1296 + $0x2c] sm:$0x1]
      %v7141 = vsel %vm453, %v6863, %v7140
      %7142 = vst [vmem:[%s1296 + $0x2c] sm:$0x1] %v7141
      %v7143 = vld [vmem:[%s1296 + $0x30] sm:$0xf]
      %v7144 = vsel %vm1298, %v6870, %v7143
      %7145 = vst [vmem:[%s1296 + $0x30] sm:$0xf] %v7144
      %7146 = vst.msk [vmem:[%s1296 + $0x34] sm:$0xf] %vm442, %v6879
      %v7147 = vld [vmem:[%s1296 + $0x38] sm:$0x1]
      %v7148 = vsel %vm453, %v6880, %v7147
      %7149 = vst [vmem:[%s1296 + $0x38] sm:$0x1] %v7148
      %v7150 = vld [vmem:[%s1296 + $0x3c] sm:$0xf]
      %v7151 = vsel %vm1298, %v6887, %v7150
      %7152 = vst [vmem:[%s1296 + $0x3c] sm:$0xf] %v7151
      %7153 = vst.msk [vmem:[%s1296 + $0x40] sm:$0xf] %vm442, %v6896
      %v7154 = vld [vmem:[%s1296 + $0x44] sm:$0x1]
      %v7155 = vsel %vm453, %v6897, %v7154
      %7156 = vst [vmem:[%s1296 + $0x44] sm:$0x1] %v7155
      %v7157 = vld [vmem:[%s1296 + $0x48] sm:$0xf]
      %v7158 = vsel %vm1298, %v6904, %v7157
      %7159 = vst [vmem:[%s1296 + $0x48] sm:$0xf] %v7158
      %7160 = vst.msk [vmem:[%s1296 + $0x4c] sm:$0xf] %vm442, %v6913
      %v7161 = vld [vmem:[%s1296 + $0x50] sm:$0x1]
      %v7162 = vsel %vm453, %v6914, %v7161
      %7163 = vst [vmem:[%s1296 + $0x50] sm:$0x1] %v7162
      %v7164 = vld [vmem:[%s1296 + $0x54] sm:$0xf]
      %v7165 = vsel %vm1298, %v6921, %v7164
      %7166 = vst [vmem:[%s1296 + $0x54] sm:$0xf] %v7165
      %7167 = vst.msk [vmem:[%s1296 + $0x58] sm:$0xf] %vm442, %v6930
      %v7168 = vld [vmem:[%s1296 + $0x5c] sm:$0x1]
      %v7169 = vsel %vm453, %v6931, %v7168
      %7170 = vst [vmem:[%s1296 + $0x5c] sm:$0x1] %v7169
      %v7171 = vld [vmem:[%s1296 + $0x60] sm:$0xf]
      %v7172 = vsel %vm1298, %v6938, %v7171
      %7173 = vst [vmem:[%s1296 + $0x60] sm:$0xf] %v7172
      %7174 = vst.msk [vmem:[%s1296 + $0x64] sm:$0xf] %vm442, %v6947
      %v7175 = vld [vmem:[%s1296 + $0x68] sm:$0x1]
      %v7176 = vsel %vm453, %v6948, %v7175
      %7177 = vst [vmem:[%s1296 + $0x68] sm:$0x1] %v7176
      %v7178 = vld [vmem:[%s1296 + $0x6c] sm:$0xf]
      %v7179 = vsel %vm1298, %v6955, %v7178
      %7180 = vst [vmem:[%s1296 + $0x6c] sm:$0xf] %v7179
      %7181 = vst.msk [vmem:[%s1296 + $0x70] sm:$0xf] %vm442, %v6964
      %v7182 = vld [vmem:[%s1296 + $0x74] sm:$0x1]
      %v7183 = vsel %vm453, %v6965, %v7182
      %7184 = vst [vmem:[%s1296 + $0x74] sm:$0x1] %v7183
      %v7185 = vld [vmem:[%s1296 + $0x78] sm:$0xf]
      %v7186 = vsel %vm1298, %v6972, %v7185
      %7187 = vst [vmem:[%s1296 + $0x78] sm:$0xf] %v7186
      %7188 = vst.msk [vmem:[%s1296 + $0x7c] sm:$0xf] %vm442, %v6981
      %v7189 = vld [vmem:[%s1296 + $0x80] sm:$0x1]
      %v7190 = vsel %vm453, %v6982, %v7189
      %7191 = vst [vmem:[%s1296 + $0x80] sm:$0x1] %v7190
      %v7192 = vld [vmem:[%s1296 + $0x84] sm:$0xf]
      %v7193 = vsel %vm1298, %v6989, %v7192
      %7194 = vst [vmem:[%s1296 + $0x84] sm:$0xf] %v7193
      %7195 = vst.msk [vmem:[%s1296 + $0x88] sm:$0xf] %vm442, %v6998
      %v7196 = vld [vmem:[%s1296 + $0x8c] sm:$0x1]
      %v7197 = vsel %vm453, %v6999, %v7196
      %7198 = vst [vmem:[%s1296 + $0x8c] sm:$0x1] %v7197
      %v7199 = vld [vmem:[%s1296 + $0x90] sm:$0xf]
      %v7200 = vsel %vm1298, %v7006, %v7199
      %7201 = vst [vmem:[%s1296 + $0x90] sm:$0xf] %v7200
      %7202 = vst.msk [vmem:[%s1296 + $0x94] sm:$0xf] %vm442, %v7015
      %v7203 = vld [vmem:[%s1296 + $0x98] sm:$0x1]
      %v7204 = vsel %vm453, %v7016, %v7203
      %7205 = vst [vmem:[%s1296 + $0x98] sm:$0x1] %v7204
      %v7206 = vld [vmem:[%s1296 + $0x9c] sm:$0xf]
      %v7207 = vsel %vm1298, %v7023, %v7206
      %7208 = vst [vmem:[%s1296 + $0x9c] sm:$0xf] %v7207
      %7209 = vst.msk [vmem:[%s1296 + $0xa0] sm:$0xf] %vm442, %v7032
      %v7210 = vld [vmem:[%s1296 + $0xa4] sm:$0x1]
      %v7211 = vsel %vm453, %v7033, %v7210
      %7212 = vst [vmem:[%s1296 + $0xa4] sm:$0x1] %v7211
      %v7213 = vld [vmem:[%s1296 + $0xa8] sm:$0xf]
      %v7214 = vsel %vm1298, %v7040, %v7213
      %7215 = vst [vmem:[%s1296 + $0xa8] sm:$0xf] %v7214
      %7216 = vst.msk [vmem:[%s1296 + $0xac] sm:$0xf] %vm442, %v7049
      %v7217 = vld [vmem:[%s1296 + $0xb0] sm:$0x1]
      %v7218 = vsel %vm453, %v7050, %v7217
      %7219 = vst [vmem:[%s1296 + $0xb0] sm:$0x1] %v7218
      %v7220 = vld [vmem:[%s1296 + $0xb4] sm:$0xf]
      %v7221 = vsel %vm1298, %v7057, %v7220
      %7222 = vst [vmem:[%s1296 + $0xb4] sm:$0xf] %v7221
      %7223 = vst.msk [vmem:[%s1296 + $0xb8] sm:$0xf] %vm442, %v7066
      %v7224 = vld [vmem:[%s1296 + $0xbc] sm:$0x1]
      %v7225 = vsel %vm453, %v7067, %v7224
      %7226 = vst [vmem:[%s1296 + $0xbc] sm:$0x1] %v7225
      %v7227 = vld [vmem:[#allocation2] sm:$0xf]
      %v7228 = vld [vmem:[#allocation2 + $0x4] sm:$0xf]
      %v7229 = vld [vmem:[#allocation2 + $0xc] sm:$0xf]
      %v7230 = vld [vmem:[#allocation2 + $0x10] sm:$0xf]
      %v7231 = vld [vmem:[#allocation2 + $0x18] sm:$0xf]
      %v7232 = vld [vmem:[#allocation2 + $0x1c] sm:$0xf]
      %v7233 = vld [vmem:[#allocation2 + $0x24] sm:$0xf]
      %v7234 = vld [vmem:[#allocation2 + $0x28] sm:$0xf]
      %v7235 = vld [vmem:[#allocation2 + $0x30] sm:$0xf]
      %v7236 = vld [vmem:[#allocation2 + $0x34] sm:$0xf]
      %v7237 = vld [vmem:[#allocation2 + $0x3c] sm:$0xf]
      %v7238 = vld [vmem:[#allocation2 + $0x40] sm:$0xf]
      %v7239 = vld [vmem:[#allocation2 + $0x48] sm:$0xf]
      %v7240 = vld [vmem:[#allocation2 + $0x4c] sm:$0xf]
      %v7241 = vld [vmem:[#allocation2 + $0x54] sm:$0xf]
      %v7242 = vld [vmem:[#allocation2 + $0x58] sm:$0xf]
      %v7243 = vld [vmem:[#allocation2 + $0x60] sm:$0xf]
      %v7244 = vld [vmem:[#allocation2 + $0x64] sm:$0xf]
      %v7245 = vld [vmem:[#allocation2 + $0x6c] sm:$0xf]
      %v7246 = vld [vmem:[#allocation2 + $0x70] sm:$0xf]
      %v7247 = vld [vmem:[#allocation2 + $0x78] sm:$0xf]
      %v7248 = vld [vmem:[#allocation2 + $0x7c] sm:$0xf]
      %v7249 = vld [vmem:[#allocation2 + $0x84] sm:$0xf]
      %v7250 = vld [vmem:[#allocation2 + $0x88] sm:$0xf]
      %v7251 = vld [vmem:[#allocation2 + $0x90] sm:$0xf]
      %v7252 = vld [vmem:[#allocation2 + $0x94] sm:$0xf]
      %v7253 = vld [vmem:[#allocation2 + $0x9c] sm:$0xf]
      %v7254 = vld [vmem:[#allocation2 + $0xa0] sm:$0xf]
      %v7255 = vld [vmem:[#allocation2 + $0xa8] sm:$0xf]
      %v7256 = vld [vmem:[#allocation2 + $0xac] sm:$0xf]
      %v7257 = vld [vmem:[#allocation2 + $0xb4] sm:$0xf]
      %v7258 = vld [vmem:[#allocation2 + $0xb8] sm:$0xf]
      %v7259 = vld [vmem:[%s9] sm:$0xf]
      %v7292 = vunpack.c.l.b16 %v7227
      %v7293 = vunpack.c.l.b16 %v7228
      %v7294 = vunpack.c.l.b16 %v7229
      %v7295 = vunpack.c.l.b16 %v7230
      %v7296 = vunpack.c.l.b16 %v7231
      %v7297 = vunpack.c.l.b16 %v7232
      %v7298 = vunpack.c.l.b16 %v7233
      %v7299 = vunpack.c.l.b16 %v7234
      %v7300 = vunpack.c.l.b16 %v7235
      %v7301 = vunpack.c.l.b16 %v7236
      %v7302 = vunpack.c.l.b16 %v7237
      %v7303 = vunpack.c.l.b16 %v7238
      %v7304 = vunpack.c.l.b16 %v7239
      %v7305 = vunpack.c.l.b16 %v7240
      %v7306 = vunpack.c.l.b16 %v7241
      %v7307 = vunpack.c.l.b16 %v7242
      %v7308 = vunpack.c.l.b16 %v7243
      %v7309 = vunpack.c.l.b16 %v7244
      %v7310 = vunpack.c.l.b16 %v7245
      %v7311 = vunpack.c.l.b16 %v7246
      %v7312 = vunpack.c.l.b16 %v7247
      %v7313 = vunpack.c.l.b16 %v7248
      %v7314 = vunpack.c.l.b16 %v7249
      %v7315 = vunpack.c.l.b16 %v7250
      %v7316 = vunpack.c.l.b16 %v7251
      %v7317 = vunpack.c.l.b16 %v7252
      %v7318 = vunpack.c.l.b16 %v7253
      %v7319 = vunpack.c.l.b16 %v7254
      %v7320 = vunpack.c.l.b16 %v7255
      %v7321 = vunpack.c.l.b16 %v7256
      %v7322 = vunpack.c.l.b16 %v7257
      %v7323 = vunpack.c.l.b16 %v7258
      %v7324 = vpack.c.b16 %v7293, %v7292
      %v7325 = vpack.c.b16 %v7295, %v7294
      %v7326 = vpack.c.b16 %v7297, %v7296
      %v7327 = vpack.c.b16 %v7299, %v7298
      %v7328 = vpack.c.b16 %v7301, %v7300
      %v7329 = vpack.c.b16 %v7303, %v7302
      %v7330 = vpack.c.b16 %v7305, %v7304
      %v7331 = vpack.c.b16 %v7307, %v7306
      %v7332 = vpack.c.b16 %v7309, %v7308
      %v7333 = vpack.c.b16 %v7311, %v7310
      %v7334 = vpack.c.b16 %v7313, %v7312
      %v7335 = vpack.c.b16 %v7315, %v7314
      %v7336 = vpack.c.b16 %v7317, %v7316
      %v7337 = vpack.c.b16 %v7319, %v7318
      %v7338 = vpack.c.b16 %v7321, %v7320
      %v7339 = vpack.c.b16 %v7323, %v7322
      %v7341 = vsel %vm1524, %v7324, 0
      %v7344 = vsel %vm1524, %v7325, 0
      %v7347 = vsel %vm1524, %v7326, 0
      %v7350 = vsel %vm1524, %v7327, 0
      %v7353 = vsel %vm1524, %v7328, 0
      %v7356 = vsel %vm1524, %v7329, 0
      %v7359 = vsel %vm1524, %v7330, 0
      %v7362 = vsel %vm1524, %v7331, 0
      %v7365 = vsel %vm1524, %v7332, 0
      %v7368 = vsel %vm1524, %v7333, 0
      %v7371 = vsel %vm1524, %v7334, 0
      %v7374 = vsel %vm1524, %v7335, 0
      %v7377 = vsel %vm1524, %v7336, 0
      %v7380 = vsel %vm1524, %v7337, 0
      %v7383 = vsel %vm1524, %v7338, 0
      %v7386 = vsel %vm1524, %v7339, 0
      %v7389 = vsel %vm1573, %v7259, 0
      %7391 = vmatprep.subr.bf16.mxu0 0
      %7392 = vmatpush1.bf16.msra.mxu0 0
      %7393 = vmatprep.subr.bf16.mxu0 0
      %7394 = vmatpush1.bf16.msra.mxu0 0
      %7395 = vmatprep.subr.bf16.mxu0 0
      %7396 = vmatpush1.bf16.msra.mxu0 0
      %7397 = vmatprep.subr.bf16.mxu0 0
      %7398 = vmatpush1.bf16.msra.mxu0 0
      %7399 = vmatprep.subr.bf16.mxu0 0
      %7400 = vmatpush1.bf16.msra.mxu0 0
      %7401 = vmatprep.subr.bf16.mxu0 0
      %7402 = vmatpush1.bf16.msra.mxu0 0
      %7403 = vmatprep.subr.bf16.mxu0 0
      %7404 = vmatpush1.bf16.msra.mxu0 0
      %7405 = vmatprep.subr.bf16.mxu0 0
      %7406 = vmatpush1.bf16.msra.mxu0 %v7389
      %7407 = vmatprep.subr.bf16.mxu0 0
      %7408 = vmatpush2.bf16.msra.mxu0 0
      %7409 = vmatprep.subr.bf16.mxu0 0
      %7410 = vmatpush2.bf16.msra.mxu0 0
      %7411 = vmatprep.subr.bf16.mxu0 0
      %7412 = vmatpush2.bf16.msra.mxu0 0
      %7413 = vmatprep.subr.bf16.mxu0 0
      %7414 = vmatpush2.bf16.msra.mxu0 0
      %7415 = vmatprep.subr.bf16.mxu0 0
      %7416 = vmatpush2.bf16.msra.mxu0 0
      %7417 = vmatprep.subr.bf16.mxu0 0
      %7418 = vmatpush2.bf16.msra.mxu0 0
      %7419 = vmatprep.subr.bf16.mxu0 0
      %7420 = vmatpush2.bf16.msra.mxu0 0
      %7421 = vmatprep.subr.bf16.mxu0 0
      %7422 = vmatpush2.bf16.msra.mxu0 0
      %7423 = vmatprep.mubr.bf16.mxu0 0
      %7424 = vmatmul.mubr.bf16.gmra.mxu0 %v7341
      %v7425 = vpop.f32.mrf.mxu0
      %v7426 = vadd.f32 0.0, %v7425
      %v7427 = vpop.f32.mrf.mxu0
      %v7428 = vpop.f32.mrf.mxu0
      %v7429 = vadd.f32 0.0, %v7428
      %v7430 = vpop.f32.mrf.mxu0
      %7431 = vmatprep.mubr.bf16.mxu0 0
      %7432 = vmatmul.mubr.bf16.gmra.mxu0 %v7344
      %v7433 = vpop.f32.mrf.mxu0
      %v7434 = vadd.f32 0.0, %v7433
      %v7435 = vpop.f32.mrf.mxu0
      %v7436 = vpop.f32.mrf.mxu0
      %v7437 = vadd.f32 0.0, %v7436
      %v7438 = vpop.f32.mrf.mxu0
      %7439 = vmatprep.mubr.bf16.mxu0 0
      %7440 = vmatmul.mubr.bf16.gmra.mxu0 %v7347
      %v7441 = vpop.f32.mrf.mxu0
      %v7442 = vadd.f32 0.0, %v7441
      %v7443 = vpop.f32.mrf.mxu0
      %v7444 = vpop.f32.mrf.mxu0
      %v7445 = vadd.f32 0.0, %v7444
      %v7446 = vpop.f32.mrf.mxu0
      %7447 = vmatprep.mubr.bf16.mxu0 0
      %7448 = vmatmul.mubr.bf16.gmra.mxu0 %v7350
      %v7449 = vpop.f32.mrf.mxu0
      %v7450 = vadd.f32 0.0, %v7449
      %v7451 = vpop.f32.mrf.mxu0
      %v7452 = vpop.f32.mrf.mxu0
      %v7453 = vadd.f32 0.0, %v7452
      %v7454 = vpop.f32.mrf.mxu0
      %7455 = vmatprep.mubr.bf16.mxu0 0
      %7456 = vmatmul.mubr.bf16.gmra.mxu0 %v7353
      %v7457 = vpop.f32.mrf.mxu0
      %v7458 = vadd.f32 0.0, %v7457
      %v7459 = vpop.f32.mrf.mxu0
      %v7460 = vpop.f32.mrf.mxu0
      %v7461 = vadd.f32 0.0, %v7460
      %v7462 = vpop.f32.mrf.mxu0
      %7463 = vmatprep.mubr.bf16.mxu0 0
      %7464 = vmatmul.mubr.bf16.gmra.mxu0 %v7356
      %v7465 = vpop.f32.mrf.mxu0
      %v7466 = vadd.f32 0.0, %v7465
      %v7467 = vpop.f32.mrf.mxu0
      %v7468 = vpop.f32.mrf.mxu0
      %v7469 = vadd.f32 0.0, %v7468
      %v7470 = vpop.f32.mrf.mxu0
      %7471 = vmatprep.mubr.bf16.mxu0 0
      %7472 = vmatmul.mubr.bf16.gmra.mxu0 %v7359
      %v7473 = vpop.f32.mrf.mxu0
      %v7474 = vadd.f32 0.0, %v7473
      %v7475 = vpop.f32.mrf.mxu0
      %v7476 = vpop.f32.mrf.mxu0
      %v7477 = vadd.f32 0.0, %v7476
      %v7478 = vpop.f32.mrf.mxu0
      %7479 = vmatprep.mubr.bf16.mxu0 0
      %7480 = vmatmul.mubr.bf16.gmra.mxu0 %v7362
      %v7481 = vpop.f32.mrf.mxu0
      %v7482 = vadd.f32 0.0, %v7481
      %v7483 = vpop.f32.mrf.mxu0
      %v7484 = vpop.f32.mrf.mxu0
      %v7485 = vadd.f32 0.0, %v7484
      %v7486 = vpop.f32.mrf.mxu0
      %7487 = vmatprep.mubr.bf16.mxu0 0
      %7488 = vmatmul.mubr.bf16.gmra.mxu0 %v7365
      %v7489 = vpop.f32.mrf.mxu0
      %v7490 = vadd.f32 0.0, %v7489
      %v7491 = vpop.f32.mrf.mxu0
      %v7492 = vpop.f32.mrf.mxu0
      %v7493 = vadd.f32 0.0, %v7492
      %v7494 = vpop.f32.mrf.mxu0
      %7495 = vmatprep.mubr.bf16.mxu0 0
      %7496 = vmatmul.mubr.bf16.gmra.mxu0 %v7368
      %v7497 = vpop.f32.mrf.mxu0
      %v7498 = vadd.f32 0.0, %v7497
      %v7499 = vpop.f32.mrf.mxu0
      %v7500 = vpop.f32.mrf.mxu0
      %v7501 = vadd.f32 0.0, %v7500
      %v7502 = vpop.f32.mrf.mxu0
      %7503 = vmatprep.mubr.bf16.mxu0 0
      %7504 = vmatmul.mubr.bf16.gmra.mxu0 %v7371
      %v7505 = vpop.f32.mrf.mxu0
      %v7506 = vadd.f32 0.0, %v7505
      %v7507 = vpop.f32.mrf.mxu0
      %v7508 = vpop.f32.mrf.mxu0
      %v7509 = vadd.f32 0.0, %v7508
      %v7510 = vpop.f32.mrf.mxu0
      %7511 = vmatprep.mubr.bf16.mxu0 0
      %7512 = vmatmul.mubr.bf16.gmra.mxu0 %v7374
      %v7513 = vpop.f32.mrf.mxu0
      %v7514 = vadd.f32 0.0, %v7513
      %v7515 = vpop.f32.mrf.mxu0
      %v7516 = vpop.f32.mrf.mxu0
      %v7517 = vadd.f32 0.0, %v7516
      %v7518 = vpop.f32.mrf.mxu0
      %7519 = vmatprep.mubr.bf16.mxu0 0
      %7520 = vmatmul.mubr.bf16.gmra.mxu0 %v7377
      %v7521 = vpop.f32.mrf.mxu0
      %v7522 = vadd.f32 0.0, %v7521
      %v7523 = vpop.f32.mrf.mxu0
      %v7524 = vpop.f32.mrf.mxu0
      %v7525 = vadd.f32 0.0, %v7524
      %v7526 = vpop.f32.mrf.mxu0
      %7527 = vmatprep.mubr.bf16.mxu0 0
      %7528 = vmatmul.mubr.bf16.gmra.mxu0 %v7380
      %v7529 = vpop.f32.mrf.mxu0
      %v7530 = vadd.f32 0.0, %v7529
      %v7531 = vpop.f32.mrf.mxu0
      %v7532 = vpop.f32.mrf.mxu0
      %v7533 = vadd.f32 0.0, %v7532
      %v7534 = vpop.f32.mrf.mxu0
      %7535 = vmatprep.mubr.bf16.mxu0 0
      %7536 = vmatmul.mubr.bf16.gmra.mxu0 %v7383
      %v7537 = vpop.f32.mrf.mxu0
      %v7538 = vadd.f32 0.0, %v7537
      %v7539 = vpop.f32.mrf.mxu0
      %v7540 = vpop.f32.mrf.mxu0
      %v7541 = vadd.f32 0.0, %v7540
      %v7542 = vpop.f32.mrf.mxu0
      %7543 = vmatprep.mubr.bf16.mxu0 0
      %7544 = vmatmul.mubr.bf16.gmra.mxu0 %v7386
      %v7545 = vpop.f32.mrf.mxu0
      %v7546 = vadd.f32 0.0, %v7545
      %v7547 = vpop.f32.mrf.mxu0
      %v7548 = vpop.f32.mrf.mxu0
      %v7549 = vadd.f32 0.0, %v7548
      %v7550 = vpop.f32.mrf.mxu0
      %7551 = vdwg.mxu0
      %v7553 = vlaneseq
      %v7554 = vshrl.u32 %v7553, 7
      %v7555 = vsub.s32 0, %v7554
      %v7556 = vrot.slane %v6699, %v7555
      %v7558 = vadd.f32 %v7556, %v7426
      %v7559 = vadd.f32 %v7556, %v7429
      %v7560 = vadd.f32 %v7556, %v7434
      %v7561 = vadd.f32 %v7556, %v7437
      %v7562 = vadd.f32 %v7556, %v7442
      %v7563 = vadd.f32 %v7556, %v7445
      %v7564 = vadd.f32 %v7556, %v7450
      %v7565 = vadd.f32 %v7556, %v7453
      %v7566 = vadd.f32 %v7556, %v7458
      %v7567 = vadd.f32 %v7556, %v7461
      %v7568 = vadd.f32 %v7556, %v7466
      %v7569 = vadd.f32 %v7556, %v7469
      %v7570 = vadd.f32 %v7556, %v7474
      %v7571 = vadd.f32 %v7556, %v7477
      %v7572 = vadd.f32 %v7556, %v7482
      %v7573 = vadd.f32 %v7556, %v7485
      %v7574 = vadd.f32 %v7556, %v7490
      %v7575 = vadd.f32 %v7556, %v7493
      %v7576 = vadd.f32 %v7556, %v7498
      %v7577 = vadd.f32 %v7556, %v7501
      %v7578 = vadd.f32 %v7556, %v7506
      %v7579 = vadd.f32 %v7556, %v7509
      %v7580 = vadd.f32 %v7556, %v7514
      %v7581 = vadd.f32 %v7556, %v7517
      %v7582 = vadd.f32 %v7556, %v7522
      %v7583 = vadd.f32 %v7556, %v7525
      %v7584 = vadd.f32 %v7556, %v7530
      %v7585 = vadd.f32 %v7556, %v7533
      %v7586 = vadd.f32 %v7556, %v7538
      %v7587 = vadd.f32 %v7556, %v7541
      %v7588 = vadd.f32 %v7556, %v7546
      %v7589 = vadd.f32 %v7556, %v7549
      %v7590 = vld [vmem:[#allocation2] sm:$0xf]
      %v7591 = vld [vmem:[#allocation2 + $0x4] sm:$0xf]
      %v7592 = vld [vmem:[#allocation2 + $0x8] sm:$0x1]
      %v7593 = vld [vmem:[#allocation2 + $0xc] sm:$0xf]
      %v7594 = vld [vmem:[#allocation2 + $0x10] sm:$0xf]
      %v7595 = vld [vmem:[#allocation2 + $0x14] sm:$0x1]
      %v7596 = vld [vmem:[#allocation2 + $0x18] sm:$0xf]
      %v7597 = vld [vmem:[#allocation2 + $0x1c] sm:$0xf]
      %v7598 = vld [vmem:[#allocation2 + $0x20] sm:$0x1]
      %v7599 = vld [vmem:[#allocation2 + $0x24] sm:$0xf]
      %v7600 = vld [vmem:[#allocation2 + $0x28] sm:$0xf]
      %v7601 = vld [vmem:[#allocation2 + $0x2c] sm:$0x1]
      %v7602 = vld [vmem:[#allocation2 + $0x30] sm:$0xf]
      %v7603 = vld [vmem:[#allocation2 + $0x34] sm:$0xf]
      %v7604 = vld [vmem:[#allocation2 + $0x38] sm:$0x1]
      %v7605 = vld [vmem:[#allocation2 + $0x3c] sm:$0xf]
      %v7606 = vld [vmem:[#allocation2 + $0x40] sm:$0xf]
      %v7607 = vld [vmem:[#allocation2 + $0x44] sm:$0x1]
      %v7608 = vld [vmem:[#allocation2 + $0x48] sm:$0xf]
      %v7609 = vld [vmem:[#allocation2 + $0x4c] sm:$0xf]
      %v7610 = vld [vmem:[#allocation2 + $0x50] sm:$0x1]
      %v7611 = vld [vmem:[#allocation2 + $0x54] sm:$0xf]
      %v7612 = vld [vmem:[#allocation2 + $0x58] sm:$0xf]
      %v7613 = vld [vmem:[#allocation2 + $0x5c] sm:$0x1]
      %v7614 = vld [vmem:[#allocation2 + $0x60] sm:$0xf]
      %v7615 = vld [vmem:[#allocation2 + $0x64] sm:$0xf]
      %v7616 = vld [vmem:[#allocation2 + $0x68] sm:$0x1]
      %v7617 = vld [vmem:[#allocation2 + $0x6c] sm:$0xf]
      %v7618 = vld [vmem:[#allocation2 + $0x70] sm:$0xf]
      %v7619 = vld [vmem:[#allocation2 + $0x74] sm:$0x1]
      %v7620 = vld [vmem:[#allocation2 + $0x78] sm:$0xf]
      %v7621 = vld [vmem:[#allocation2 + $0x7c] sm:$0xf]
      %v7622 = vld [vmem:[#allocation2 + $0x80] sm:$0x1]
      %v7623 = vld [vmem:[#allocation2 + $0x84] sm:$0xf]
      %v7624 = vld [vmem:[#allocation2 + $0x88] sm:$0xf]
      %v7625 = vld [vmem:[#allocation2 + $0x8c] sm:$0x1]
      %v7626 = vld [vmem:[#allocation2 + $0x90] sm:$0xf]
      %v7627 = vld [vmem:[#allocation2 + $0x94] sm:$0xf]
      %v7628 = vld [vmem:[#allocation2 + $0x98] sm:$0x1]
      %v7629 = vld [vmem:[#allocation2 + $0x9c] sm:$0xf]
      %v7630 = vld [vmem:[#allocation2 + $0xa0] sm:$0xf]
      %v7631 = vld [vmem:[#allocation2 + $0xa4] sm:$0x1]
      %v7632 = vld [vmem:[#allocation2 + $0xa8] sm:$0xf]
      %v7633 = vld [vmem:[#allocation2 + $0xac] sm:$0xf]
      %v7634 = vld [vmem:[#allocation2 + $0xb0] sm:$0x1]
      %v7635 = vld [vmem:[#allocation2 + $0xb4] sm:$0xf]
      %v7636 = vld [vmem:[#allocation2 + $0xb8] sm:$0xf]
      %v7637 = vld [vmem:[#allocation2 + $0xbc] sm:$0x1]
      %v7639 = vshrl.u32 %v7590, 16
      %v7641 = vrot.slane %v7639, 4
      %v7642 = vshll.u32 %v7590, 16
      %v7644 = vrot.slane %v7642, 5
      %v7645 = vor.u32 %v7641, %v7644
      %v7646 = vrot.slane %v7645, 4
      %v7648 = vshll.u32 %v7591, 16
      %v7650 = vrot.slane %v7648, 5
      %v7651 = vsel %vm1826, %v7646, %v7650
      %v7652 = vshrl.u32 %v7591, 16
      %v7654 = vrot.slane %v7652, 4
      %v7655 = vor.u32 %v7654, %v7650
      %v7656 = vrot.slane %v7655, 4
      %v7658 = vshll.u32 %v7592, 16
      %v7660 = vrot.slane %v7658, 5
      %v7661 = vsel %vm1826, %v7656, %v7660
      %v7663 = vshrl.u32 %v7593, 16
      %v7665 = vrot.slane %v7663, 4
      %v7666 = vshll.u32 %v7593, 16
      %v7668 = vrot.slane %v7666, 5
      %v7669 = vor.u32 %v7665, %v7668
      %v7670 = vrot.slane %v7669, 4
      %v7672 = vshll.u32 %v7594, 16
      %v7674 = vrot.slane %v7672, 5
      %v7675 = vsel %vm1826, %v7670, %v7674
      %v7676 = vshrl.u32 %v7594, 16
      %v7678 = vrot.slane %v7676, 4
      %v7679 = vor.u32 %v7678, %v7674
      %v7680 = vrot.slane %v7679, 4
      %v7682 = vshll.u32 %v7595, 16
      %v7684 = vrot.slane %v7682, 5
      %v7685 = vsel %vm1826, %v7680, %v7684
      %v7687 = vshrl.u32 %v7596, 16
      %v7689 = vrot.slane %v7687, 4
      %v7690 = vshll.u32 %v7596, 16
      %v7692 = vrot.slane %v7690, 5
      %v7693 = vor.u32 %v7689, %v7692
      %v7694 = vrot.slane %v7693, 4
      %v7696 = vshll.u32 %v7597, 16
      %v7698 = vrot.slane %v7696, 5
      %v7699 = vsel %vm1826, %v7694, %v7698
      %v7700 = vshrl.u32 %v7597, 16
      %v7702 = vrot.slane %v7700, 4
      %v7703 = vor.u32 %v7702, %v7698
      %v7704 = vrot.slane %v7703, 4
      %v7706 = vshll.u32 %v7598, 16
      %v7708 = vrot.slane %v7706, 5
      %v7709 = vsel %vm1826, %v7704, %v7708
      %v7711 = vshrl.u32 %v7599, 16
      %v7713 = vrot.slane %v7711, 4
      %v7714 = vshll.u32 %v7599, 16
      %v7716 = vrot.slane %v7714, 5
      %v7717 = vor.u32 %v7713, %v7716
      %v7718 = vrot.slane %v7717, 4
      %v7720 = vshll.u32 %v7600, 16
      %v7722 = vrot.slane %v7720, 5
      %v7723 = vsel %vm1826, %v7718, %v7722
      %v7724 = vshrl.u32 %v7600, 16
      %v7726 = vrot.slane %v7724, 4
      %v7727 = vor.u32 %v7726, %v7722
      %v7728 = vrot.slane %v7727, 4
      %v7730 = vshll.u32 %v7601, 16
      %v7732 = vrot.slane %v7730, 5
      %v7733 = vsel %vm1826, %v7728, %v7732
      %v7735 = vshrl.u32 %v7602, 16
      %v7737 = vrot.slane %v7735, 4
      %v7738 = vshll.u32 %v7602, 16
      %v7740 = vrot.slane %v7738, 5
      %v7741 = vor.u32 %v7737, %v7740
      %v7742 = vrot.slane %v7741, 4
      %v7744 = vshll.u32 %v7603, 16
      %v7746 = vrot.slane %v7744, 5
      %v7747 = vsel %vm1826, %v7742, %v7746
      %v7748 = vshrl.u32 %v7603, 16
      %v7750 = vrot.slane %v7748, 4
      %v7751 = vor.u32 %v7750, %v7746
      %v7752 = vrot.slane %v7751, 4
      %v7754 = vshll.u32 %v7604, 16
      %v7756 = vrot.slane %v7754, 5
      %v7757 = vsel %vm1826, %v7752, %v7756
      %v7759 = vshrl.u32 %v7605, 16
      %v7761 = vrot.slane %v7759, 4
      %v7762 = vshll.u32 %v7605, 16
      %v7764 = vrot.slane %v7762, 5
      %v7765 = vor.u32 %v7761, %v7764
      %v7766 = vrot.slane %v7765, 4
      %v7768 = vshll.u32 %v7606, 16
      %v7770 = vrot.slane %v7768, 5
      %v7771 = vsel %vm1826, %v7766, %v7770
      %v7772 = vshrl.u32 %v7606, 16
      %v7774 = vrot.slane %v7772, 4
      %v7775 = vor.u32 %v7774, %v7770
      %v7776 = vrot.slane %v7775, 4
      %v7778 = vshll.u32 %v7607, 16
      %v7780 = vrot.slane %v7778, 5
      %v7781 = vsel %vm1826, %v7776, %v7780
      %v7783 = vshrl.u32 %v7608, 16
      %v7785 = vrot.slane %v7783, 4
      %v7786 = vshll.u32 %v7608, 16
      %v7788 = vrot.slane %v7786, 5
      %v7789 = vor.u32 %v7785, %v7788
      %v7790 = vrot.slane %v7789, 4
      %v7792 = vshll.u32 %v7609, 16
      %v7794 = vrot.slane %v7792, 5
      %v7795 = vsel %vm1826, %v7790, %v7794
      %v7796 = vshrl.u32 %v7609, 16
      %v7798 = vrot.slane %v7796, 4
      %v7799 = vor.u32 %v7798, %v7794
      %v7800 = vrot.slane %v7799, 4
      %v7802 = vshll.u32 %v7610, 16
      %v7804 = vrot.slane %v7802, 5
      %v7805 = vsel %vm1826, %v7800, %v7804
      %v7807 = vshrl.u32 %v7611, 16
      %v7809 = vrot.slane %v7807, 4
      %v7810 = vshll.u32 %v7611, 16
      %v7812 = vrot.slane %v7810, 5
      %v7813 = vor.u32 %v7809, %v7812
      %v7814 = vrot.slane %v7813, 4
      %v7816 = vshll.u32 %v7612, 16
      %v7818 = vrot.slane %v7816, 5
      %v7819 = vsel %vm1826, %v7814, %v7818
      %v7820 = vshrl.u32 %v7612, 16
      %v7822 = vrot.slane %v7820, 4
      %v7823 = vor.u32 %v7822, %v7818
      %v7824 = vrot.slane %v7823, 4
      %v7826 = vshll.u32 %v7613, 16
      %v7828 = vrot.slane %v7826, 5
      %v7829 = vsel %vm1826, %v7824, %v7828
      %v7831 = vshrl.u32 %v7614, 16
      %v7833 = vrot.slane %v7831, 4
      %v7834 = vshll.u32 %v7614, 16
      %v7836 = vrot.slane %v7834, 5
      %v7837 = vor.u32 %v7833, %v7836
      %v7838 = vrot.slane %v7837, 4
      %v7840 = vshll.u32 %v7615, 16
      %v7842 = vrot.slane %v7840, 5
      %v7843 = vsel %vm1826, %v7838, %v7842
      %v7844 = vshrl.u32 %v7615, 16
      %v7846 = vrot.slane %v7844, 4
      %v7847 = vor.u32 %v7846, %v7842
      %v7848 = vrot.slane %v7847, 4
      %v7850 = vshll.u32 %v7616, 16
      %v7852 = vrot.slane %v7850, 5
      %v7853 = vsel %vm1826, %v7848, %v7852
      %v7855 = vshrl.u32 %v7617, 16
      %v7857 = vrot.slane %v7855, 4
      %v7858 = vshll.u32 %v7617, 16
      %v7860 = vrot.slane %v7858, 5
      %v7861 = vor.u32 %v7857, %v7860
      %v7862 = vrot.slane %v7861, 4
      %v7864 = vshll.u32 %v7618, 16
      %v7866 = vrot.slane %v7864, 5
      %v7867 = vsel %vm1826, %v7862, %v7866
      %v7868 = vshrl.u32 %v7618, 16
      %v7870 = vrot.slane %v7868, 4
      %v7871 = vor.u32 %v7870, %v7866
      %v7872 = vrot.slane %v7871, 4
      %v7874 = vshll.u32 %v7619, 16
      %v7876 = vrot.slane %v7874, 5
      %v7877 = vsel %vm1826, %v7872, %v7876
      %v7879 = vshrl.u32 %v7620, 16
      %v7881 = vrot.slane %v7879, 4
      %v7882 = vshll.u32 %v7620, 16
      %v7884 = vrot.slane %v7882, 5
      %v7885 = vor.u32 %v7881, %v7884
      %v7886 = vrot.slane %v7885, 4
      %v7888 = vshll.u32 %v7621, 16
      %v7890 = vrot.slane %v7888, 5
      %v7891 = vsel %vm1826, %v7886, %v7890
      %v7892 = vshrl.u32 %v7621, 16
      %v7894 = vrot.slane %v7892, 4
      %v7895 = vor.u32 %v7894, %v7890
      %v7896 = vrot.slane %v7895, 4
      %v7898 = vshll.u32 %v7622, 16
      %v7900 = vrot.slane %v7898, 5
      %v7901 = vsel %vm1826, %v7896, %v7900
      %v7903 = vshrl.u32 %v7623, 16
      %v7905 = vrot.slane %v7903, 4
      %v7906 = vshll.u32 %v7623, 16
      %v7908 = vrot.slane %v7906, 5
      %v7909 = vor.u32 %v7905, %v7908
      %v7910 = vrot.slane %v7909, 4
      %v7912 = vshll.u32 %v7624, 16
      %v7914 = vrot.slane %v7912, 5
      %v7915 = vsel %vm1826, %v7910, %v7914
      %v7916 = vshrl.u32 %v7624, 16
      %v7918 = vrot.slane %v7916, 4
      %v7919 = vor.u32 %v7918, %v7914
      %v7920 = vrot.slane %v7919, 4
      %v7922 = vshll.u32 %v7625, 16
      %v7924 = vrot.slane %v7922, 5
      %v7925 = vsel %vm1826, %v7920, %v7924
      %v7927 = vshrl.u32 %v7626, 16
      %v7929 = vrot.slane %v7927, 4
      %v7930 = vshll.u32 %v7626, 16
      %v7932 = vrot.slane %v7930, 5
      %v7933 = vor.u32 %v7929, %v7932
      %v7934 = vrot.slane %v7933, 4
      %v7936 = vshll.u32 %v7627, 16
      %v7938 = vrot.slane %v7936, 5
      %v7939 = vsel %vm1826, %v7934, %v7938
      %v7940 = vshrl.u32 %v7627, 16
      %v7942 = vrot.slane %v7940, 4
      %v7943 = vor.u32 %v7942, %v7938
      %v7944 = vrot.slane %v7943, 4
      %v7946 = vshll.u32 %v7628, 16
      %v7948 = vrot.slane %v7946, 5
      %v7949 = vsel %vm1826, %v7944, %v7948
      %v7951 = vshrl.u32 %v7629, 16
      %v7953 = vrot.slane %v7951, 4
      %v7954 = vshll.u32 %v7629, 16
      %v7956 = vrot.slane %v7954, 5
      %v7957 = vor.u32 %v7953, %v7956
      %v7958 = vrot.slane %v7957, 4
      %v7960 = vshll.u32 %v7630, 16
      %v7962 = vrot.slane %v7960, 5
      %v7963 = vsel %vm1826, %v7958, %v7962
      %v7964 = vshrl.u32 %v7630, 16
      %v7966 = vrot.slane %v7964, 4
      %v7967 = vor.u32 %v7966, %v7962
      %v7968 = vrot.slane %v7967, 4
      %v7970 = vshll.u32 %v7631, 16
      %v7972 = vrot.slane %v7970, 5
      %v7973 = vsel %vm1826, %v7968, %v7972
      %v7975 = vshrl.u32 %v7632, 16
      %v7977 = vrot.slane %v7975, 4
      %v7978 = vshll.u32 %v7632, 16
      %v7980 = vrot.slane %v7978, 5
      %v7981 = vor.u32 %v7977, %v7980
      %v7982 = vrot.slane %v7981, 4
      %v7984 = vshll.u32 %v7633, 16
      %v7986 = vrot.slane %v7984, 5
      %v7987 = vsel %vm1826, %v7982, %v7986
      %v7988 = vshrl.u32 %v7633, 16
      %v7990 = vrot.slane %v7988, 4
      %v7991 = vor.u32 %v7990, %v7986
      %v7992 = vrot.slane %v7991, 4
      %v7994 = vshll.u32 %v7634, 16
      %v7996 = vrot.slane %v7994, 5
      %v7997 = vsel %vm1826, %v7992, %v7996
      %v7999 = vshrl.u32 %v7635, 16
      %v8001 = vrot.slane %v7999, 4
      %v8002 = vshll.u32 %v7635, 16
      %v8004 = vrot.slane %v8002, 5
      %v8005 = vor.u32 %v8001, %v8004
      %v8006 = vrot.slane %v8005, 4
      %v8008 = vshll.u32 %v7636, 16
      %v8010 = vrot.slane %v8008, 5
      %v8011 = vsel %vm1826, %v8006, %v8010
      %v8012 = vshrl.u32 %v7636, 16
      %v8014 = vrot.slane %v8012, 4
      %v8015 = vor.u32 %v8014, %v8010
      %v8016 = vrot.slane %v8015, 4
      %v8018 = vshll.u32 %v7637, 16
      %v8020 = vrot.slane %v8018, 5
      %v8021 = vsel %vm1826, %v8016, %v8020
      %s8022 = scalar_lea.vmem %s9, 4
      %v8023 = vld [vmem:[%s8022] sm:$0xf]
      %v8024 = vunpack.c.l.b16 %v7651
      %v8025 = vunpack.c.l.b16 %v7661
      %v8026 = vunpack.c.l.b16 %v7675
      %v8027 = vunpack.c.l.b16 %v7685
      %v8028 = vunpack.c.l.b16 %v7699
      %v8029 = vunpack.c.l.b16 %v7709
      %v8030 = vunpack.c.l.b16 %v7723
      %v8031 = vunpack.c.l.b16 %v7733
      %v8032 = vunpack.c.l.b16 %v7747
      %v8033 = vunpack.c.l.b16 %v7757
      %v8034 = vunpack.c.l.b16 %v7771
      %v8035 = vunpack.c.l.b16 %v7781
      %v8036 = vunpack.c.l.b16 %v7795
      %v8037 = vunpack.c.l.b16 %v7805
      %v8038 = vunpack.c.l.b16 %v7819
      %v8039 = vunpack.c.l.b16 %v7829
      %v8040 = vunpack.c.l.b16 %v7843
      %v8041 = vunpack.c.l.b16 %v7853
      %v8042 = vunpack.c.l.b16 %v7867
      %v8043 = vunpack.c.l.b16 %v7877
      %v8044 = vunpack.c.l.b16 %v7891
      %v8045 = vunpack.c.l.b16 %v7901
      %v8046 = vunpack.c.l.b16 %v7915
      %v8047 = vunpack.c.l.b16 %v7925
      %v8048 = vunpack.c.l.b16 %v7939
      %v8049 = vunpack.c.l.b16 %v7949
      %v8050 = vunpack.c.l.b16 %v7963
      %v8051 = vunpack.c.l.b16 %v7973
      %v8052 = vunpack.c.l.b16 %v7987
      %v8053 = vunpack.c.l.b16 %v7997
      %v8054 = vunpack.c.l.b16 %v8011
      %v8055 = vunpack.c.l.b16 %v8021
      %v8056 = vpack.c.b16 %v8025, %v8024
      %v8057 = vpack.c.b16 %v8027, %v8026
      %v8058 = vpack.c.b16 %v8029, %v8028
      %v8059 = vpack.c.b16 %v8031, %v8030
      %v8060 = vpack.c.b16 %v8033, %v8032
      %v8061 = vpack.c.b16 %v8035, %v8034
      %v8062 = vpack.c.b16 %v8037, %v8036
      %v8063 = vpack.c.b16 %v8039, %v8038
      %v8064 = vpack.c.b16 %v8041, %v8040
      %v8065 = vpack.c.b16 %v8043, %v8042
      %v8066 = vpack.c.b16 %v8045, %v8044
      %v8067 = vpack.c.b16 %v8047, %v8046
      %v8068 = vpack.c.b16 %v8049, %v8048
      %v8069 = vpack.c.b16 %v8051, %v8050
      %v8070 = vpack.c.b16 %v8053, %v8052
      %v8071 = vpack.c.b16 %v8055, %v8054
      %v8073 = vsel %vm1524, %v8056, 0
      %v8076 = vsel %vm1524, %v8057, 0
      %v8079 = vsel %vm1524, %v8058, 0
      %v8082 = vsel %vm1524, %v8059, 0
      %v8085 = vsel %vm1524, %v8060, 0
      %v8088 = vsel %vm1524, %v8061, 0
      %v8091 = vsel %vm1524, %v8062, 0
      %v8094 = vsel %vm1524, %v8063, 0
      %v8097 = vsel %vm1524, %v8064, 0
      %v8100 = vsel %vm1524, %v8065, 0
      %v8103 = vsel %vm1524, %v8066, 0
      %v8106 = vsel %vm1524, %v8067, 0
      %v8109 = vsel %vm1524, %v8068, 0
      %v8112 = vsel %vm1524, %v8069, 0
      %v8115 = vsel %vm1524, %v8070, 0
      %v8118 = vsel %vm1524, %v8071, 0
      %v8121 = vsel %vm1573, %v8023, 0
      %8123 = vmatprep.subr.bf16.mxu0 0
      %8124 = vmatpush1.bf16.msra.mxu0 0
      %8125 = vmatprep.subr.bf16.mxu0 0
      %8126 = vmatpush1.bf16.msra.mxu0 0
      %8127 = vmatprep.subr.bf16.mxu0 0
      %8128 = vmatpush1.bf16.msra.mxu0 0
      %8129 = vmatprep.subr.bf16.mxu0 0
      %8130 = vmatpush1.bf16.msra.mxu0 0
      %8131 = vmatprep.subr.bf16.mxu0 0
      %8132 = vmatpush1.bf16.msra.mxu0 0
      %8133 = vmatprep.subr.bf16.mxu0 0
      %8134 = vmatpush1.bf16.msra.mxu0 0
      %8135 = vmatprep.subr.bf16.mxu0 0
      %8136 = vmatpush1.bf16.msra.mxu0 0
      %8137 = vmatprep.subr.bf16.mxu0 0
      %8138 = vmatpush1.bf16.msra.mxu0 %v8121
      %8139 = vmatprep.subr.bf16.mxu0 0
      %8140 = vmatpush2.bf16.msra.mxu0 0
      %8141 = vmatprep.subr.bf16.mxu0 0
      %8142 = vmatpush2.bf16.msra.mxu0 0
      %8143 = vmatprep.subr.bf16.mxu0 0
      %8144 = vmatpush2.bf16.msra.mxu0 0
      %8145 = vmatprep.subr.bf16.mxu0 0
      %8146 = vmatpush2.bf16.msra.mxu0 0
      %8147 = vmatprep.subr.bf16.mxu0 0
      %8148 = vmatpush2.bf16.msra.mxu0 0
      %8149 = vmatprep.subr.bf16.mxu0 0
      %8150 = vmatpush2.bf16.msra.mxu0 0
      %8151 = vmatprep.subr.bf16.mxu0 0
      %8152 = vmatpush2.bf16.msra.mxu0 0
      %8153 = vmatprep.subr.bf16.mxu0 0
      %8154 = vmatpush2.bf16.msra.mxu0 0
      %8155 = vmatprep.mubr.bf16.mxu0 0
      %8156 = vmatmul.mubr.bf16.gmra.mxu0 %v8073
      %v8157 = vpop.f32.mrf.mxu0
      %v8158 = vadd.f32 0.0, %v8157
      %v8159 = vpop.f32.mrf.mxu0
      %v8160 = vpop.f32.mrf.mxu0
      %v8161 = vadd.f32 0.0, %v8160
      %v8162 = vpop.f32.mrf.mxu0
      %8163 = vmatprep.mubr.bf16.mxu0 0
      %8164 = vmatmul.mubr.bf16.gmra.mxu0 %v8076
      %v8165 = vpop.f32.mrf.mxu0
      %v8166 = vadd.f32 0.0, %v8165
      %v8167 = vpop.f32.mrf.mxu0
      %v8168 = vpop.f32.mrf.mxu0
      %v8169 = vadd.f32 0.0, %v8168
      %v8170 = vpop.f32.mrf.mxu0
      %8171 = vmatprep.mubr.bf16.mxu0 0
      %8172 = vmatmul.mubr.bf16.gmra.mxu0 %v8079
      %v8173 = vpop.f32.mrf.mxu0
      %v8174 = vadd.f32 0.0, %v8173
      %v8175 = vpop.f32.mrf.mxu0
      %v8176 = vpop.f32.mrf.mxu0
      %v8177 = vadd.f32 0.0, %v8176
      %v8178 = vpop.f32.mrf.mxu0
      %8179 = vmatprep.mubr.bf16.mxu0 0
      %8180 = vmatmul.mubr.bf16.gmra.mxu0 %v8082
      %v8181 = vpop.f32.mrf.mxu0
      %v8182 = vadd.f32 0.0, %v8181
      %v8183 = vpop.f32.mrf.mxu0
      %v8184 = vpop.f32.mrf.mxu0
      %v8185 = vadd.f32 0.0, %v8184
      %v8186 = vpop.f32.mrf.mxu0
      %8187 = vmatprep.mubr.bf16.mxu0 0
      %8188 = vmatmul.mubr.bf16.gmra.mxu0 %v8085
      %v8189 = vpop.f32.mrf.mxu0
      %v8190 = vadd.f32 0.0, %v8189
      %v8191 = vpop.f32.mrf.mxu0
      %v8192 = vpop.f32.mrf.mxu0
      %v8193 = vadd.f32 0.0, %v8192
      %v8194 = vpop.f32.mrf.mxu0
      %8195 = vmatprep.mubr.bf16.mxu0 0
      %8196 = vmatmul.mubr.bf16.gmra.mxu0 %v8088
      %v8197 = vpop.f32.mrf.mxu0
      %v8198 = vadd.f32 0.0, %v8197
      %v8199 = vpop.f32.mrf.mxu0
      %v8200 = vpop.f32.mrf.mxu0
      %v8201 = vadd.f32 0.0, %v8200
      %v8202 = vpop.f32.mrf.mxu0
      %8203 = vmatprep.mubr.bf16.mxu0 0
      %8204 = vmatmul.mubr.bf16.gmra.mxu0 %v8091
      %v8205 = vpop.f32.mrf.mxu0
      %v8206 = vadd.f32 0.0, %v8205
      %v8207 = vpop.f32.mrf.mxu0
      %v8208 = vpop.f32.mrf.mxu0
      %v8209 = vadd.f32 0.0, %v8208
      %v8210 = vpop.f32.mrf.mxu0
      %8211 = vmatprep.mubr.bf16.mxu0 0
      %8212 = vmatmul.mubr.bf16.gmra.mxu0 %v8094
      %v8213 = vpop.f32.mrf.mxu0
      %v8214 = vadd.f32 0.0, %v8213
      %v8215 = vpop.f32.mrf.mxu0
      %v8216 = vpop.f32.mrf.mxu0
      %v8217 = vadd.f32 0.0, %v8216
      %v8218 = vpop.f32.mrf.mxu0
      %8219 = vmatprep.mubr.bf16.mxu0 0
      %8220 = vmatmul.mubr.bf16.gmra.mxu0 %v8097
      %v8221 = vpop.f32.mrf.mxu0
      %v8222 = vadd.f32 0.0, %v8221
      %v8223 = vpop.f32.mrf.mxu0
      %v8224 = vpop.f32.mrf.mxu0
      %v8225 = vadd.f32 0.0, %v8224
      %v8226 = vpop.f32.mrf.mxu0
      %8227 = vmatprep.mubr.bf16.mxu0 0
      %8228 = vmatmul.mubr.bf16.gmra.mxu0 %v8100
      %v8229 = vpop.f32.mrf.mxu0
      %v8230 = vadd.f32 0.0, %v8229
      %v8231 = vpop.f32.mrf.mxu0
      %v8232 = vpop.f32.mrf.mxu0
      %v8233 = vadd.f32 0.0, %v8232
      %v8234 = vpop.f32.mrf.mxu0
      %8235 = vmatprep.mubr.bf16.mxu0 0
      %8236 = vmatmul.mubr.bf16.gmra.mxu0 %v8103
      %v8237 = vpop.f32.mrf.mxu0
      %v8238 = vadd.f32 0.0, %v8237
      %v8239 = vpop.f32.mrf.mxu0
      %v8240 = vpop.f32.mrf.mxu0
      %v8241 = vadd.f32 0.0, %v8240
      %v8242 = vpop.f32.mrf.mxu0
      %8243 = vmatprep.mubr.bf16.mxu0 0
      %8244 = vmatmul.mubr.bf16.gmra.mxu0 %v8106
      %v8245 = vpop.f32.mrf.mxu0
      %v8246 = vadd.f32 0.0, %v8245
      %v8247 = vpop.f32.mrf.mxu0
      %v8248 = vpop.f32.mrf.mxu0
      %v8249 = vadd.f32 0.0, %v8248
      %v8250 = vpop.f32.mrf.mxu0
      %8251 = vmatprep.mubr.bf16.mxu0 0
      %8252 = vmatmul.mubr.bf16.gmra.mxu0 %v8109
      %v8253 = vpop.f32.mrf.mxu0
      %v8254 = vadd.f32 0.0, %v8253
      %v8255 = vpop.f32.mrf.mxu0
      %v8256 = vpop.f32.mrf.mxu0
      %v8257 = vadd.f32 0.0, %v8256
      %v8258 = vpop.f32.mrf.mxu0
      %8259 = vmatprep.mubr.bf16.mxu0 0
      %8260 = vmatmul.mubr.bf16.gmra.mxu0 %v8112
      %v8261 = vpop.f32.mrf.mxu0
      %v8262 = vadd.f32 0.0, %v8261
      %v8263 = vpop.f32.mrf.mxu0
      %v8264 = vpop.f32.mrf.mxu0
      %v8265 = vadd.f32 0.0, %v8264
      %v8266 = vpop.f32.mrf.mxu0
      %8267 = vmatprep.mubr.bf16.mxu0 0
      %8268 = vmatmul.mubr.bf16.gmra.mxu0 %v8115
      %v8269 = vpop.f32.mrf.mxu0
      %v8270 = vadd.f32 0.0, %v8269
      %v8271 = vpop.f32.mrf.mxu0
      %v8272 = vpop.f32.mrf.mxu0
      %v8273 = vadd.f32 0.0, %v8272
      %v8274 = vpop.f32.mrf.mxu0
      %8275 = vmatprep.mubr.bf16.mxu0 0
      %8276 = vmatmul.mubr.bf16.gmra.mxu0 %v8118
      %v8277 = vpop.f32.mrf.mxu0
      %v8278 = vadd.f32 0.0, %v8277
      %v8279 = vpop.f32.mrf.mxu0
      %v8280 = vpop.f32.mrf.mxu0
      %v8281 = vadd.f32 0.0, %v8280
      %v8282 = vpop.f32.mrf.mxu0
      %8283 = vdwg.mxu0
      %v8284 = vadd.f32 %v7558, %v8158
      %v8285 = vadd.f32 %v7559, %v8161
      %v8286 = vadd.f32 %v7560, %v8166
      %v8287 = vadd.f32 %v7561, %v8169
      %v8288 = vadd.f32 %v7562, %v8174
      %v8289 = vadd.f32 %v7563, %v8177
      %v8290 = vadd.f32 %v7564, %v8182
      %v8291 = vadd.f32 %v7565, %v8185
      %v8292 = vadd.f32 %v7566, %v8190
      %v8293 = vadd.f32 %v7567, %v8193
      %v8294 = vadd.f32 %v7568, %v8198
      %v8295 = vadd.f32 %v7569, %v8201
      %v8296 = vadd.f32 %v7570, %v8206
      %v8297 = vadd.f32 %v7571, %v8209
      %v8298 = vadd.f32 %v7572, %v8214
      %v8299 = vadd.f32 %v7573, %v8217
      %v8300 = vadd.f32 %v7574, %v8222
      %v8301 = vadd.f32 %v7575, %v8225
      %v8302 = vadd.f32 %v7576, %v8230
      %v8303 = vadd.f32 %v7577, %v8233
      %v8304 = vadd.f32 %v7578, %v8238
      %v8305 = vadd.f32 %v7579, %v8241
      %v8306 = vadd.f32 %v7580, %v8246
      %v8307 = vadd.f32 %v7581, %v8249
      %v8308 = vadd.f32 %v7582, %v8254
      %v8309 = vadd.f32 %v7583, %v8257
      %v8310 = vadd.f32 %v7584, %v8262
      %v8311 = vadd.f32 %v7585, %v8265
      %v8312 = vadd.f32 %v7586, %v8270
      %v8313 = vadd.f32 %v7587, %v8273
      %v8314 = vadd.f32 %v7588, %v8278
      %v8315 = vadd.f32 %v7589, %v8281
      %v8316 = vld [vmem:[#allocation2] sm:$0xe]
      %v8317 = vld [vmem:[#allocation2 + $0xc] sm:$0xe]
      %v8318 = vld [vmem:[#allocation2 + $0x18] sm:$0xe]
      %v8319 = vld [vmem:[#allocation2 + $0x24] sm:$0xe]
      %v8320 = vld [vmem:[#allocation2 + $0x30] sm:$0xe]
      %v8321 = vld [vmem:[#allocation2 + $0x3c] sm:$0xe]
      %v8322 = vld [vmem:[#allocation2 + $0x48] sm:$0xe]
      %v8323 = vld [vmem:[#allocation2 + $0x54] sm:$0xe]
      %v8324 = vld [vmem:[#allocation2 + $0x60] sm:$0xe]
      %v8325 = vld [vmem:[#allocation2 + $0x6c] sm:$0xe]
      %v8326 = vld [vmem:[#allocation2 + $0x78] sm:$0xe]
      %v8327 = vld [vmem:[#allocation2 + $0x84] sm:$0xe]
      %v8328 = vld [vmem:[#allocation2 + $0x90] sm:$0xe]
      %v8329 = vld [vmem:[#allocation2 + $0x9c] sm:$0xe]
      %v8330 = vld [vmem:[#allocation2 + $0xa8] sm:$0xe]
      %v8331 = vld [vmem:[#allocation2 + $0xb4] sm:$0xe]
      %v8380 = vrot.slane %v8316, 5
      %v8381 = vrot.slane %v8380, 4
      %v8382 = vrot.slane %v7591, 5
      %v8383 = vsel %vm2571, %v8381, %v8382
      %v8384 = vrot.slane %v8382, 4
      %v8385 = vrot.slane %v7592, 5
      %v8386 = vsel %vm2571, %v8384, %v8385
      %v8387 = vrot.slane %v8317, 5
      %v8388 = vrot.slane %v8387, 4
      %v8389 = vrot.slane %v7594, 5
      %v8390 = vsel %vm2571, %v8388, %v8389
      %v8391 = vrot.slane %v8389, 4
      %v8392 = vrot.slane %v7595, 5
      %v8393 = vsel %vm2571, %v8391, %v8392
      %v8394 = vrot.slane %v8318, 5
      %v8395 = vrot.slane %v8394, 4
      %v8396 = vrot.slane %v7597, 5
      %v8397 = vsel %vm2571, %v8395, %v8396
      %v8398 = vrot.slane %v8396, 4
      %v8399 = vrot.slane %v7598, 5
      %v8400 = vsel %vm2571, %v8398, %v8399
      %v8401 = vrot.slane %v8319, 5
      %v8402 = vrot.slane %v8401, 4
      %v8403 = vrot.slane %v7600, 5
      %v8404 = vsel %vm2571, %v8402, %v8403
      %v8405 = vrot.slane %v8403, 4
      %v8406 = vrot.slane %v7601, 5
      %v8407 = vsel %vm2571, %v8405, %v8406
      %v8408 = vrot.slane %v8320, 5
      %v8409 = vrot.slane %v8408, 4
      %v8410 = vrot.slane %v7603, 5
      %v8411 = vsel %vm2571, %v8409, %v8410
      %v8412 = vrot.slane %v8410, 4
      %v8413 = vrot.slane %v7604, 5
      %v8414 = vsel %vm2571, %v8412, %v8413
      %v8415 = vrot.slane %v8321, 5
      %v8416 = vrot.slane %v8415, 4
      %v8417 = vrot.slane %v7606, 5
      %v8418 = vsel %vm2571, %v8416, %v8417
      %v8419 = vrot.slane %v8417, 4
      %v8420 = vrot.slane %v7607, 5
      %v8421 = vsel %vm2571, %v8419, %v8420
      %v8422 = vrot.slane %v8322, 5
      %v8423 = vrot.slane %v8422, 4
      %v8424 = vrot.slane %v7609, 5
      %v8425 = vsel %vm2571, %v8423, %v8424
      %v8426 = vrot.slane %v8424, 4
      %v8427 = vrot.slane %v7610, 5
      %v8428 = vsel %vm2571, %v8426, %v8427
      %v8429 = vrot.slane %v8323, 5
      %v8430 = vrot.slane %v8429, 4
      %v8431 = vrot.slane %v7612, 5
      %v8432 = vsel %vm2571, %v8430, %v8431
      %v8433 = vrot.slane %v8431, 4
      %v8434 = vrot.slane %v7613, 5
      %v8435 = vsel %vm2571, %v8433, %v8434
      %v8436 = vrot.slane %v8324, 5
      %v8437 = vrot.slane %v8436, 4
      %v8438 = vrot.slane %v7615, 5
      %v8439 = vsel %vm2571, %v8437, %v8438
      %v8440 = vrot.slane %v8438, 4
      %v8441 = vrot.slane %v7616, 5
      %v8442 = vsel %vm2571, %v8440, %v8441
      %v8443 = vrot.slane %v8325, 5
      %v8444 = vrot.slane %v8443, 4
      %v8445 = vrot.slane %v7618, 5
      %v8446 = vsel %vm2571, %v8444, %v8445
      %v8447 = vrot.slane %v8445, 4
      %v8448 = vrot.slane %v7619, 5
      %v8449 = vsel %vm2571, %v8447, %v8448
      %v8450 = vrot.slane %v8326, 5
      %v8451 = vrot.slane %v8450, 4
      %v8452 = vrot.slane %v7621, 5
      %v8453 = vsel %vm2571, %v8451, %v8452
      %v8454 = vrot.slane %v8452, 4
      %v8455 = vrot.slane %v7622, 5
      %v8456 = vsel %vm2571, %v8454, %v8455
      %v8457 = vrot.slane %v8327, 5
      %v8458 = vrot.slane %v8457, 4
      %v8459 = vrot.slane %v7624, 5
      %v8460 = vsel %vm2571, %v8458, %v8459
      %v8461 = vrot.slane %v8459, 4
      %v8462 = vrot.slane %v7625, 5
      %v8463 = vsel %vm2571, %v8461, %v8462
      %v8464 = vrot.slane %v8328, 5
      %v8465 = vrot.slane %v8464, 4
      %v8466 = vrot.slane %v7627, 5
      %v8467 = vsel %vm2571, %v8465, %v8466
      %v8468 = vrot.slane %v8466, 4
      %v8469 = vrot.slane %v7628, 5
      %v8470 = vsel %vm2571, %v8468, %v8469
      %v8471 = vrot.slane %v8329, 5
      %v8472 = vrot.slane %v8471, 4
      %v8473 = vrot.slane %v7630, 5
      %v8474 = vsel %vm2571, %v8472, %v8473
      %v8475 = vrot.slane %v8473, 4
      %v8476 = vrot.slane %v7631, 5
      %v8477 = vsel %vm2571, %v8475, %v8476
      %v8478 = vrot.slane %v8330, 5
      %v8479 = vrot.slane %v8478, 4
      %v8480 = vrot.slane %v7633, 5
      %v8481 = vsel %vm2571, %v8479, %v8480
      %v8482 = vrot.slane %v8480, 4
      %v8483 = vrot.slane %v7634, 5
      %v8484 = vsel %vm2571, %v8482, %v8483
      %v8485 = vrot.slane %v8331, 5
      %v8486 = vrot.slane %v8485, 4
      %v8487 = vrot.slane %v7636, 5
      %v8488 = vsel %vm2571, %v8486, %v8487
      %v8489 = vrot.slane %v8487, 4
      %v8490 = vrot.slane %v7637, 5
      %v8491 = vsel %vm2571, %v8489, %v8490
      %s8492 = scalar_lea.vmem %s9, 8
      %v8493 = vld [vmem:[%s8492] sm:$0xf]
      %v8494 = vunpack.c.l.b16 %v8383
      %v8495 = vunpack.c.l.b16 %v8386
      %v8496 = vunpack.c.l.b16 %v8390
      %v8497 = vunpack.c.l.b16 %v8393
      %v8498 = vunpack.c.l.b16 %v8397
      %v8499 = vunpack.c.l.b16 %v8400
      %v8500 = vunpack.c.l.b16 %v8404
      %v8501 = vunpack.c.l.b16 %v8407
      %v8502 = vunpack.c.l.b16 %v8411
      %v8503 = vunpack.c.l.b16 %v8414
      %v8504 = vunpack.c.l.b16 %v8418
      %v8505 = vunpack.c.l.b16 %v8421
      %v8506 = vunpack.c.l.b16 %v8425
      %v8507 = vunpack.c.l.b16 %v8428
      %v8508 = vunpack.c.l.b16 %v8432
      %v8509 = vunpack.c.l.b16 %v8435
      %v8510 = vunpack.c.l.b16 %v8439
      %v8511 = vunpack.c.l.b16 %v8442
      %v8512 = vunpack.c.l.b16 %v8446
      %v8513 = vunpack.c.l.b16 %v8449
      %v8514 = vunpack.c.l.b16 %v8453
      %v8515 = vunpack.c.l.b16 %v8456
      %v8516 = vunpack.c.l.b16 %v8460
      %v8517 = vunpack.c.l.b16 %v8463
      %v8518 = vunpack.c.l.b16 %v8467
      %v8519 = vunpack.c.l.b16 %v8470
      %v8520 = vunpack.c.l.b16 %v8474
      %v8521 = vunpack.c.l.b16 %v8477
      %v8522 = vunpack.c.l.b16 %v8481
      %v8523 = vunpack.c.l.b16 %v8484
      %v8524 = vunpack.c.l.b16 %v8488
      %v8525 = vunpack.c.l.b16 %v8491
      %v8526 = vpack.c.b16 %v8495, %v8494
      %v8527 = vpack.c.b16 %v8497, %v8496
      %v8528 = vpack.c.b16 %v8499, %v8498
      %v8529 = vpack.c.b16 %v8501, %v8500
      %v8530 = vpack.c.b16 %v8503, %v8502
      %v8531 = vpack.c.b16 %v8505, %v8504
      %v8532 = vpack.c.b16 %v8507, %v8506
      %v8533 = vpack.c.b16 %v8509, %v8508
      %v8534 = vpack.c.b16 %v8511, %v8510
      %v8535 = vpack.c.b16 %v8513, %v8512
      %v8536 = vpack.c.b16 %v8515, %v8514
      %v8537 = vpack.c.b16 %v8517, %v8516
      %v8538 = vpack.c.b16 %v8519, %v8518
      %v8539 = vpack.c.b16 %v8521, %v8520
      %v8540 = vpack.c.b16 %v8523, %v8522
      %v8541 = vpack.c.b16 %v8525, %v8524
      %v8543 = vsel %vm1524, %v8526, 0
      %v8546 = vsel %vm1524, %v8527, 0
      %v8549 = vsel %vm1524, %v8528, 0
      %v8552 = vsel %vm1524, %v8529, 0
      %v8555 = vsel %vm1524, %v8530, 0
      %v8558 = vsel %vm1524, %v8531, 0
      %v8561 = vsel %vm1524, %v8532, 0
      %v8564 = vsel %vm1524, %v8533, 0
      %v8567 = vsel %vm1524, %v8534, 0
      %v8570 = vsel %vm1524, %v8535, 0
      %v8573 = vsel %vm1524, %v8536, 0
      %v8576 = vsel %vm1524, %v8537, 0
      %v8579 = vsel %vm1524, %v8538, 0
      %v8582 = vsel %vm1524, %v8539, 0
      %v8585 = vsel %vm1524, %v8540, 0
      %v8588 = vsel %vm1524, %v8541, 0
      %v8591 = vsel %vm1573, %v8493, 0
      %8593 = vmatprep.subr.bf16.mxu0 0
      %8594 = vmatpush1.bf16.msra.mxu0 0
      %8595 = vmatprep.subr.bf16.mxu0 0
      %8596 = vmatpush1.bf16.msra.mxu0 0
      %8597 = vmatprep.subr.bf16.mxu0 0
      %8598 = vmatpush1.bf16.msra.mxu0 0
      %8599 = vmatprep.subr.bf16.mxu0 0
      %8600 = vmatpush1.bf16.msra.mxu0 0
      %8601 = vmatprep.subr.bf16.mxu0 0
      %8602 = vmatpush1.bf16.msra.mxu0 0
      %8603 = vmatprep.subr.bf16.mxu0 0
      %8604 = vmatpush1.bf16.msra.mxu0 0
      %8605 = vmatprep.subr.bf16.mxu0 0
      %8606 = vmatpush1.bf16.msra.mxu0 0
      %8607 = vmatprep.subr.bf16.mxu0 0
      %8608 = vmatpush1.bf16.msra.mxu0 %v8591
      %8609 = vmatprep.subr.bf16.mxu0 0
      %8610 = vmatpush2.bf16.msra.mxu0 0
      %8611 = vmatprep.subr.bf16.mxu0 0
      %8612 = vmatpush2.bf16.msra.mxu0 0
      %8613 = vmatprep.subr.bf16.mxu0 0
      %8614 = vmatpush2.bf16.msra.mxu0 0
      %8615 = vmatprep.subr.bf16.mxu0 0
      %8616 = vmatpush2.bf16.msra.mxu0 0
      %8617 = vmatprep.subr.bf16.mxu0 0
      %8618 = vmatpush2.bf16.msra.mxu0 0
      %8619 = vmatprep.subr.bf16.mxu0 0
      %8620 = vmatpush2.bf16.msra.mxu0 0
      %8621 = vmatprep.subr.bf16.mxu0 0
      %8622 = vmatpush2.bf16.msra.mxu0 0
      %8623 = vmatprep.subr.bf16.mxu0 0
      %8624 = vmatpush2.bf16.msra.mxu0 0
      %8625 = vmatprep.mubr.bf16.mxu0 0
      %8626 = vmatmul.mubr.bf16.gmra.mxu0 %v8543
      %v8627 = vpop.f32.mrf.mxu0
      %v8628 = vadd.f32 0.0, %v8627
      %v8629 = vpop.f32.mrf.mxu0
      %v8630 = vpop.f32.mrf.mxu0
      %v8631 = vadd.f32 0.0, %v8630
      %v8632 = vpop.f32.mrf.mxu0
      %8633 = vmatprep.mubr.bf16.mxu0 0
      %8634 = vmatmul.mubr.bf16.gmra.mxu0 %v8546
      %v8635 = vpop.f32.mrf.mxu0
      %v8636 = vadd.f32 0.0, %v8635
      %v8637 = vpop.f32.mrf.mxu0
      %v8638 = vpop.f32.mrf.mxu0
      %v8639 = vadd.f32 0.0, %v8638
      %v8640 = vpop.f32.mrf.mxu0
      %8641 = vmatprep.mubr.bf16.mxu0 0
      %8642 = vmatmul.mubr.bf16.gmra.mxu0 %v8549
      %v8643 = vpop.f32.mrf.mxu0
      %v8644 = vadd.f32 0.0, %v8643
      %v8645 = vpop.f32.mrf.mxu0
      %v8646 = vpop.f32.mrf.mxu0
      %v8647 = vadd.f32 0.0, %v8646
      %v8648 = vpop.f32.mrf.mxu0
      %8649 = vmatprep.mubr.bf16.mxu0 0
      %8650 = vmatmul.mubr.bf16.gmra.mxu0 %v8552
      %v8651 = vpop.f32.mrf.mxu0
      %v8652 = vadd.f32 0.0, %v8651
      %v8653 = vpop.f32.mrf.mxu0
      %v8654 = vpop.f32.mrf.mxu0
      %v8655 = vadd.f32 0.0, %v8654
      %v8656 = vpop.f32.mrf.mxu0
      %8657 = vmatprep.mubr.bf16.mxu0 0
      %8658 = vmatmul.mubr.bf16.gmra.mxu0 %v8555
      %v8659 = vpop.f32.mrf.mxu0
      %v8660 = vadd.f32 0.0, %v8659
      %v8661 = vpop.f32.mrf.mxu0
      %v8662 = vpop.f32.mrf.mxu0
      %v8663 = vadd.f32 0.0, %v8662
      %v8664 = vpop.f32.mrf.mxu0
      %8665 = vmatprep.mubr.bf16.mxu0 0
      %8666 = vmatmul.mubr.bf16.gmra.mxu0 %v8558
      %v8667 = vpop.f32.mrf.mxu0
      %v8668 = vadd.f32 0.0, %v8667
      %v8669 = vpop.f32.mrf.mxu0
      %v8670 = vpop.f32.mrf.mxu0
      %v8671 = vadd.f32 0.0, %v8670
      %v8672 = vpop.f32.mrf.mxu0
      %8673 = vmatprep.mubr.bf16.mxu0 0
      %8674 = vmatmul.mubr.bf16.gmra.mxu0 %v8561
      %v8675 = vpop.f32.mrf.mxu0
      %v8676 = vadd.f32 0.0, %v8675
      %v8677 = vpop.f32.mrf.mxu0
      %v8678 = vpop.f32.mrf.mxu0
      %v8679 = vadd.f32 0.0, %v8678
      %v8680 = vpop.f32.mrf.mxu0
      %8681 = vmatprep.mubr.bf16.mxu0 0
      %8682 = vmatmul.mubr.bf16.gmra.mxu0 %v8564
      %v8683 = vpop.f32.mrf.mxu0
      %v8684 = vadd.f32 0.0, %v8683
      %v8685 = vpop.f32.mrf.mxu0
      %v8686 = vpop.f32.mrf.mxu0
      %v8687 = vadd.f32 0.0, %v8686
      %v8688 = vpop.f32.mrf.mxu0
      %8689 = vmatprep.mubr.bf16.mxu0 0
      %8690 = vmatmul.mubr.bf16.gmra.mxu0 %v8567
      %v8691 = vpop.f32.mrf.mxu0
      %v8692 = vadd.f32 0.0, %v8691
      %v8693 = vpop.f32.mrf.mxu0
      %v8694 = vpop.f32.mrf.mxu0
      %v8695 = vadd.f32 0.0, %v8694
      %v8696 = vpop.f32.mrf.mxu0
      %8697 = vmatprep.mubr.bf16.mxu0 0
      %8698 = vmatmul.mubr.bf16.gmra.mxu0 %v8570
      %v8699 = vpop.f32.mrf.mxu0
      %v8700 = vadd.f32 0.0, %v8699
      %v8701 = vpop.f32.mrf.mxu0
      %v8702 = vpop.f32.mrf.mxu0
      %v8703 = vadd.f32 0.0, %v8702
      %v8704 = vpop.f32.mrf.mxu0
      %8705 = vmatprep.mubr.bf16.mxu0 0
      %8706 = vmatmul.mubr.bf16.gmra.mxu0 %v8573
      %v8707 = vpop.f32.mrf.mxu0
      %v8708 = vadd.f32 0.0, %v8707
      %v8709 = vpop.f32.mrf.mxu0
      %v8710 = vpop.f32.mrf.mxu0
      %v8711 = vadd.f32 0.0, %v8710
      %v8712 = vpop.f32.mrf.mxu0
      %8713 = vmatprep.mubr.bf16.mxu0 0
      %8714 = vmatmul.mubr.bf16.gmra.mxu0 %v8576
      %v8715 = vpop.f32.mrf.mxu0
      %v8716 = vadd.f32 0.0, %v8715
      %v8717 = vpop.f32.mrf.mxu0
      %v8718 = vpop.f32.mrf.mxu0
      %v8719 = vadd.f32 0.0, %v8718
      %v8720 = vpop.f32.mrf.mxu0
      %8721 = vmatprep.mubr.bf16.mxu0 0
      %8722 = vmatmul.mubr.bf16.gmra.mxu0 %v8579
      %v8723 = vpop.f32.mrf.mxu0
      %v8724 = vadd.f32 0.0, %v8723
      %v8725 = vpop.f32.mrf.mxu0
      %v8726 = vpop.f32.mrf.mxu0
      %v8727 = vadd.f32 0.0, %v8726
      %v8728 = vpop.f32.mrf.mxu0
      %8729 = vmatprep.mubr.bf16.mxu0 0
      %8730 = vmatmul.mubr.bf16.gmra.mxu0 %v8582
      %v8731 = vpop.f32.mrf.mxu0
      %v8732 = vadd.f32 0.0, %v8731
      %v8733 = vpop.f32.mrf.mxu0
      %v8734 = vpop.f32.mrf.mxu0
      %v8735 = vadd.f32 0.0, %v8734
      %v8736 = vpop.f32.mrf.mxu0
      %8737 = vmatprep.mubr.bf16.mxu0 0
      %8738 = vmatmul.mubr.bf16.gmra.mxu0 %v8585
      %v8739 = vpop.f32.mrf.mxu0
      %v8740 = vadd.f32 0.0, %v8739
      %v8741 = vpop.f32.mrf.mxu0
      %v8742 = vpop.f32.mrf.mxu0
      %v8743 = vadd.f32 0.0, %v8742
      %v8744 = vpop.f32.mrf.mxu0
      %8745 = vmatprep.mubr.bf16.mxu0 0
      %8746 = vmatmul.mubr.bf16.gmra.mxu0 %v8588
      %v8747 = vpop.f32.mrf.mxu0
      %v8748 = vadd.f32 0.0, %v8747
      %v8749 = vpop.f32.mrf.mxu0
      %v8750 = vpop.f32.mrf.mxu0
      %v8751 = vadd.f32 0.0, %v8750
      %v8752 = vpop.f32.mrf.mxu0
      %8753 = vdwg.mxu0
      %v8754 = vadd.f32 %v8284, %v8628
      %v8755 = vadd.f32 %v8285, %v8631
      %v8756 = vadd.f32 %v8286, %v8636
      %v8757 = vadd.f32 %v8287, %v8639
      %v8758 = vadd.f32 %v8288, %v8644
      %v8759 = vadd.f32 %v8289, %v8647
      %v8760 = vadd.f32 %v8290, %v8652
      %v8761 = vadd.f32 %v8291, %v8655
      %v8762 = vadd.f32 %v8292, %v8660
      %v8763 = vadd.f32 %v8293, %v8663
      %v8764 = vadd.f32 %v8294, %v8668
      %v8765 = vadd.f32 %v8295, %v8671
      %v8766 = vadd.f32 %v8296, %v8676
      %v8767 = vadd.f32 %v8297, %v8679
      %v8768 = vadd.f32 %v8298, %v8684
      %v8769 = vadd.f32 %v8299, %v8687
      %v8770 = vadd.f32 %v8300, %v8692
      %v8771 = vadd.f32 %v8301, %v8695
      %v8772 = vadd.f32 %v8302, %v8700
      %v8773 = vadd.f32 %v8303, %v8703
      %v8774 = vadd.f32 %v8304, %v8708
      %v8775 = vadd.f32 %v8305, %v8711
      %v8776 = vadd.f32 %v8306, %v8716
      %v8777 = vadd.f32 %v8307, %v8719
      %v8778 = vadd.f32 %v8308, %v8724
      %v8779 = vadd.f32 %v8309, %v8727
      %v8780 = vadd.f32 %v8310, %v8732
      %v8781 = vadd.f32 %v8311, %v8735
      %v8782 = vadd.f32 %v8312, %v8740
      %v8783 = vadd.f32 %v8313, %v8743
      %v8784 = vadd.f32 %v8314, %v8748
      %v8785 = vadd.f32 %v8315, %v8751
      %v8786 = vld [vmem:[%s1296] sm:$0xf]
      %v8787 = vld [vmem:[%s1296 + $0x4] sm:$0xf]
      %v8788 = vld [vmem:[%s1296 + $0xc] sm:$0xf]
      %v8789 = vld [vmem:[%s1296 + $0x10] sm:$0xf]
      %v8790 = vld [vmem:[%s1296 + $0x18] sm:$0xf]
      %v8791 = vld [vmem:[%s1296 + $0x1c] sm:$0xf]
      %v8792 = vld [vmem:[%s1296 + $0x24] sm:$0xf]
      %v8793 = vld [vmem:[%s1296 + $0x28] sm:$0xf]
      %v8794 = vld [vmem:[%s1296 + $0x30] sm:$0xf]
      %v8795 = vld [vmem:[%s1296 + $0x34] sm:$0xf]
      %v8796 = vld [vmem:[%s1296 + $0x3c] sm:$0xf]
      %v8797 = vld [vmem:[%s1296 + $0x40] sm:$0xf]
      %v8798 = vld [vmem:[%s1296 + $0x48] sm:$0xf]
      %v8799 = vld [vmem:[%s1296 + $0x4c] sm:$0xf]
      %v8800 = vld [vmem:[%s1296 + $0x54] sm:$0xf]
      %v8801 = vld [vmem:[%s1296 + $0x58] sm:$0xf]
      %v8802 = vld [vmem:[%s1296 + $0x60] sm:$0xf]
      %v8803 = vld [vmem:[%s1296 + $0x64] sm:$0xf]
      %v8804 = vld [vmem:[%s1296 + $0x6c] sm:$0xf]
      %v8805 = vld [vmem:[%s1296 + $0x70] sm:$0xf]
      %v8806 = vld [vmem:[%s1296 + $0x78] sm:$0xf]
      %v8807 = vld [vmem:[%s1296 + $0x7c] sm:$0xf]
      %v8808 = vld [vmem:[%s1296 + $0x84] sm:$0xf]
      %v8809 = vld [vmem:[%s1296 + $0x88] sm:$0xf]
      %v8810 = vld [vmem:[%s1296 + $0x90] sm:$0xf]
      %v8811 = vld [vmem:[%s1296 + $0x94] sm:$0xf]
      %v8812 = vld [vmem:[%s1296 + $0x9c] sm:$0xf]
      %v8813 = vld [vmem:[%s1296 + $0xa0] sm:$0xf]
      %v8814 = vld [vmem:[%s1296 + $0xa8] sm:$0xf]
      %v8815 = vld [vmem:[%s1296 + $0xac] sm:$0xf]
      %v8816 = vld [vmem:[%s1296 + $0xb4] sm:$0xf]
      %v8817 = vld [vmem:[%s1296 + $0xb8] sm:$0xf]
      %s8818 = scalar_lea.vmem %s9, 12
      %v8819 = vld [vmem:[%s8818] sm:$0xf]
      %v8852 = vunpack.c.l.b16 %v8786
      %v8853 = vunpack.c.l.b16 %v8787
      %v8854 = vunpack.c.l.b16 %v8788
      %v8855 = vunpack.c.l.b16 %v8789
      %v8856 = vunpack.c.l.b16 %v8790
      %v8857 = vunpack.c.l.b16 %v8791
      %v8858 = vunpack.c.l.b16 %v8792
      %v8859 = vunpack.c.l.b16 %v8793
      %v8860 = vunpack.c.l.b16 %v8794
      %v8861 = vunpack.c.l.b16 %v8795
      %v8862 = vunpack.c.l.b16 %v8796
      %v8863 = vunpack.c.l.b16 %v8797
      %v8864 = vunpack.c.l.b16 %v8798
      %v8865 = vunpack.c.l.b16 %v8799
      %v8866 = vunpack.c.l.b16 %v8800
      %v8867 = vunpack.c.l.b16 %v8801
      %v8868 = vunpack.c.l.b16 %v8802
      %v8869 = vunpack.c.l.b16 %v8803
      %v8870 = vunpack.c.l.b16 %v8804
      %v8871 = vunpack.c.l.b16 %v8805
      %v8872 = vunpack.c.l.b16 %v8806
      %v8873 = vunpack.c.l.b16 %v8807
      %v8874 = vunpack.c.l.b16 %v8808
      %v8875 = vunpack.c.l.b16 %v8809
      %v8876 = vunpack.c.l.b16 %v8810
      %v8877 = vunpack.c.l.b16 %v8811
      %v8878 = vunpack.c.l.b16 %v8812
      %v8879 = vunpack.c.l.b16 %v8813
      %v8880 = vunpack.c.l.b16 %v8814
      %v8881 = vunpack.c.l.b16 %v8815
      %v8882 = vunpack.c.l.b16 %v8816
      %v8883 = vunpack.c.l.b16 %v8817
      %v8884 = vpack.c.b16 %v8853, %v8852
      %v8885 = vpack.c.b16 %v8855, %v8854
      %v8886 = vpack.c.b16 %v8857, %v8856
      %v8887 = vpack.c.b16 %v8859, %v8858
      %v8888 = vpack.c.b16 %v8861, %v8860
      %v8889 = vpack.c.b16 %v8863, %v8862
      %v8890 = vpack.c.b16 %v8865, %v8864
      %v8891 = vpack.c.b16 %v8867, %v8866
      %v8892 = vpack.c.b16 %v8869, %v8868
      %v8893 = vpack.c.b16 %v8871, %v8870
      %v8894 = vpack.c.b16 %v8873, %v8872
      %v8895 = vpack.c.b16 %v8875, %v8874
      %v8896 = vpack.c.b16 %v8877, %v8876
      %v8897 = vpack.c.b16 %v8879, %v8878
      %v8898 = vpack.c.b16 %v8881, %v8880
      %v8899 = vpack.c.b16 %v8883, %v8882
      %v8901 = vsel %vm1524, %v8884, 0
      %v8904 = vsel %vm1524, %v8885, 0
      %v8907 = vsel %vm1524, %v8886, 0
      %v8910 = vsel %vm1524, %v8887, 0
      %v8913 = vsel %vm1524, %v8888, 0
      %v8916 = vsel %vm1524, %v8889, 0
      %v8919 = vsel %vm1524, %v8890, 0
      %v8922 = vsel %vm1524, %v8891, 0
      %v8925 = vsel %vm1524, %v8892, 0
      %v8928 = vsel %vm1524, %v8893, 0
      %v8931 = vsel %vm1524, %v8894, 0
      %v8934 = vsel %vm1524, %v8895, 0
      %v8937 = vsel %vm1524, %v8896, 0
      %v8940 = vsel %vm1524, %v8897, 0
      %v8943 = vsel %vm1524, %v8898, 0
      %v8946 = vsel %vm1524, %v8899, 0
      %v8949 = vsel %vm1573, %v8819, 0
      %8951 = vmatprep.subr.bf16.mxu0 0
      %8952 = vmatpush1.bf16.msra.mxu0 0
      %8953 = vmatprep.subr.bf16.mxu0 0
      %8954 = vmatpush1.bf16.msra.mxu0 0
      %8955 = vmatprep.subr.bf16.mxu0 0
      %8956 = vmatpush1.bf16.msra.mxu0 0
      %8957 = vmatprep.subr.bf16.mxu0 0
      %8958 = vmatpush1.bf16.msra.mxu0 0
      %8959 = vmatprep.subr.bf16.mxu0 0
      %8960 = vmatpush1.bf16.msra.mxu0 0
      %8961 = vmatprep.subr.bf16.mxu0 0
      %8962 = vmatpush1.bf16.msra.mxu0 0
      %8963 = vmatprep.subr.bf16.mxu0 0
      %8964 = vmatpush1.bf16.msra.mxu0 0
      %8965 = vmatprep.subr.bf16.mxu0 0
      %8966 = vmatpush1.bf16.msra.mxu0 %v8949
      %8967 = vmatprep.subr.bf16.mxu0 0
      %8968 = vmatpush2.bf16.msra.mxu0 0
      %8969 = vmatprep.subr.bf16.mxu0 0
      %8970 = vmatpush2.bf16.msra.mxu0 0
      %8971 = vmatprep.subr.bf16.mxu0 0
      %8972 = vmatpush2.bf16.msra.mxu0 0
      %8973 = vmatprep.subr.bf16.mxu0 0
      %8974 = vmatpush2.bf16.msra.mxu0 0
      %8975 = vmatprep.subr.bf16.mxu0 0
      %8976 = vmatpush2.bf16.msra.mxu0 0
      %8977 = vmatprep.subr.bf16.mxu0 0
      %8978 = vmatpush2.bf16.msra.mxu0 0
      %8979 = vmatprep.subr.bf16.mxu0 0
      %8980 = vmatpush2.bf16.msra.mxu0 0
      %8981 = vmatprep.subr.bf16.mxu0 0
      %8982 = vmatpush2.bf16.msra.mxu0 0
      %8983 = vmatprep.mubr.bf16.mxu0 0
      %8984 = vmatmul.mubr.bf16.gmra.mxu0 %v8901
      %v8985 = vpop.f32.mrf.mxu0
      %v8986 = vadd.f32 0.0, %v8985
      %v8987 = vpop.f32.mrf.mxu0
      %v8988 = vpop.f32.mrf.mxu0
      %v8989 = vadd.f32 0.0, %v8988
      %v8990 = vpop.f32.mrf.mxu0
      %8991 = vmatprep.mubr.bf16.mxu0 0
      %8992 = vmatmul.mubr.bf16.gmra.mxu0 %v8904
      %v8993 = vpop.f32.mrf.mxu0
      %v8994 = vadd.f32 0.0, %v8993
      %v8995 = vpop.f32.mrf.mxu0
      %v8996 = vpop.f32.mrf.mxu0
      %v8997 = vadd.f32 0.0, %v8996
      %v8998 = vpop.f32.mrf.mxu0
      %8999 = vmatprep.mubr.bf16.mxu0 0
      %9000 = vmatmul.mubr.bf16.gmra.mxu0 %v8907
      %v9001 = vpop.f32.mrf.mxu0
      %v9002 = vadd.f32 0.0, %v9001
      %v9003 = vpop.f32.mrf.mxu0
      %v9004 = vpop.f32.mrf.mxu0
      %v9005 = vadd.f32 0.0, %v9004
      %v9006 = vpop.f32.mrf.mxu0
      %9007 = vmatprep.mubr.bf16.mxu0 0
      %9008 = vmatmul.mubr.bf16.gmra.mxu0 %v8910
      %v9009 = vpop.f32.mrf.mxu0
      %v9010 = vadd.f32 0.0, %v9009
      %v9011 = vpop.f32.mrf.mxu0
      %v9012 = vpop.f32.mrf.mxu0
      %v9013 = vadd.f32 0.0, %v9012
      %v9014 = vpop.f32.mrf.mxu0
      %9015 = vmatprep.mubr.bf16.mxu0 0
      %9016 = vmatmul.mubr.bf16.gmra.mxu0 %v8913
      %v9017 = vpop.f32.mrf.mxu0
      %v9018 = vadd.f32 0.0, %v9017
      %v9019 = vpop.f32.mrf.mxu0
      %v9020 = vpop.f32.mrf.mxu0
      %v9021 = vadd.f32 0.0, %v9020
      %v9022 = vpop.f32.mrf.mxu0
      %9023 = vmatprep.mubr.bf16.mxu0 0
      %9024 = vmatmul.mubr.bf16.gmra.mxu0 %v8916
      %v9025 = vpop.f32.mrf.mxu0
      %v9026 = vadd.f32 0.0, %v9025
      %v9027 = vpop.f32.mrf.mxu0
      %v9028 = vpop.f32.mrf.mxu0
      %v9029 = vadd.f32 0.0, %v9028
      %v9030 = vpop.f32.mrf.mxu0
      %9031 = vmatprep.mubr.bf16.mxu0 0
      %9032 = vmatmul.mubr.bf16.gmra.mxu0 %v8919
      %v9033 = vpop.f32.mrf.mxu0
      %v9034 = vadd.f32 0.0, %v9033
      %v9035 = vpop.f32.mrf.mxu0
      %v9036 = vpop.f32.mrf.mxu0
      %v9037 = vadd.f32 0.0, %v9036
      %v9038 = vpop.f32.mrf.mxu0
      %9039 = vmatprep.mubr.bf16.mxu0 0
      %9040 = vmatmul.mubr.bf16.gmra.mxu0 %v8922
      %v9041 = vpop.f32.mrf.mxu0
      %v9042 = vadd.f32 0.0, %v9041
      %v9043 = vpop.f32.mrf.mxu0
      %v9044 = vpop.f32.mrf.mxu0
      %v9045 = vadd.f32 0.0, %v9044
      %v9046 = vpop.f32.mrf.mxu0
      %9047 = vmatprep.mubr.bf16.mxu0 0
      %9048 = vmatmul.mubr.bf16.gmra.mxu0 %v8925
      %v9049 = vpop.f32.mrf.mxu0
      %v9050 = vadd.f32 0.0, %v9049
      %v9051 = vpop.f32.mrf.mxu0
      %v9052 = vpop.f32.mrf.mxu0
      %v9053 = vadd.f32 0.0, %v9052
      %v9054 = vpop.f32.mrf.mxu0
      %9055 = vmatprep.mubr.bf16.mxu0 0
      %9056 = vmatmul.mubr.bf16.gmra.mxu0 %v8928
      %v9057 = vpop.f32.mrf.mxu0
      %v9058 = vadd.f32 0.0, %v9057
      %v9059 = vpop.f32.mrf.mxu0
      %v9060 = vpop.f32.mrf.mxu0
      %v9061 = vadd.f32 0.0, %v9060
      %v9062 = vpop.f32.mrf.mxu0
      %9063 = vmatprep.mubr.bf16.mxu0 0
      %9064 = vmatmul.mubr.bf16.gmra.mxu0 %v8931
      %v9065 = vpop.f32.mrf.mxu0
      %v9066 = vadd.f32 0.0, %v9065
      %v9067 = vpop.f32.mrf.mxu0
      %v9068 = vpop.f32.mrf.mxu0
      %v9069 = vadd.f32 0.0, %v9068
      %v9070 = vpop.f32.mrf.mxu0
      %9071 = vmatprep.mubr.bf16.mxu0 0
      %9072 = vmatmul.mubr.bf16.gmra.mxu0 %v8934
      %v9073 = vpop.f32.mrf.mxu0
      %v9074 = vadd.f32 0.0, %v9073
      %v9075 = vpop.f32.mrf.mxu0
      %v9076 = vpop.f32.mrf.mxu0
      %v9077 = vadd.f32 0.0, %v9076
      %v9078 = vpop.f32.mrf.mxu0
      %9079 = vmatprep.mubr.bf16.mxu0 0
      %9080 = vmatmul.mubr.bf16.gmra.mxu0 %v8937
      %v9081 = vpop.f32.mrf.mxu0
      %v9082 = vadd.f32 0.0, %v9081
      %v9083 = vpop.f32.mrf.mxu0
      %v9084 = vpop.f32.mrf.mxu0
      %v9085 = vadd.f32 0.0, %v9084
      %v9086 = vpop.f32.mrf.mxu0
      %9087 = vmatprep.mubr.bf16.mxu0 0
      %9088 = vmatmul.mubr.bf16.gmra.mxu0 %v8940
      %v9089 = vpop.f32.mrf.mxu0
      %v9090 = vadd.f32 0.0, %v9089
      %v9091 = vpop.f32.mrf.mxu0
      %v9092 = vpop.f32.mrf.mxu0
      %v9093 = vadd.f32 0.0, %v9092
      %v9094 = vpop.f32.mrf.mxu0
      %9095 = vmatprep.mubr.bf16.mxu0 0
      %9096 = vmatmul.mubr.bf16.gmra.mxu0 %v8943
      %v9097 = vpop.f32.mrf.mxu0
      %v9098 = vadd.f32 0.0, %v9097
      %v9099 = vpop.f32.mrf.mxu0
      %v9100 = vpop.f32.mrf.mxu0
      %v9101 = vadd.f32 0.0, %v9100
      %v9102 = vpop.f32.mrf.mxu0
      %9103 = vmatprep.mubr.bf16.mxu0 0
      %9104 = vmatmul.mubr.bf16.gmra.mxu0 %v8946
      %v9105 = vpop.f32.mrf.mxu0
      %v9106 = vadd.f32 0.0, %v9105
      %v9107 = vpop.f32.mrf.mxu0
      %v9108 = vpop.f32.mrf.mxu0
      %v9109 = vadd.f32 0.0, %v9108
      %v9110 = vpop.f32.mrf.mxu0
      %9111 = vdwg.mxu0
      %v9112 = vadd.f32 %v8754, %v8986
      %v9113 = vadd.f32 %v8755, %v8989
      %v9114 = vadd.f32 %v8756, %v8994
      %v9115 = vadd.f32 %v8757, %v8997
      %v9116 = vadd.f32 %v8758, %v9002
      %v9117 = vadd.f32 %v8759, %v9005
      %v9118 = vadd.f32 %v8760, %v9010
      %v9119 = vadd.f32 %v8761, %v9013
      %v9120 = vadd.f32 %v8762, %v9018
      %v9121 = vadd.f32 %v8763, %v9021
      %v9122 = vadd.f32 %v8764, %v9026
      %v9123 = vadd.f32 %v8765, %v9029
      %v9124 = vadd.f32 %v8766, %v9034
      %v9125 = vadd.f32 %v8767, %v9037
      %v9126 = vadd.f32 %v8768, %v9042
      %v9127 = vadd.f32 %v8769, %v9045
      %v9128 = vadd.f32 %v8770, %v9050
      %v9129 = vadd.f32 %v8771, %v9053
      %v9130 = vadd.f32 %v8772, %v9058
      %v9131 = vadd.f32 %v8773, %v9061
      %v9132 = vadd.f32 %v8774, %v9066
      %v9133 = vadd.f32 %v8775, %v9069
      %v9134 = vadd.f32 %v8776, %v9074
      %v9135 = vadd.f32 %v8777, %v9077
      %v9136 = vadd.f32 %v8778, %v9082
      %v9137 = vadd.f32 %v8779, %v9085
      %v9138 = vadd.f32 %v8780, %v9090
      %v9139 = vadd.f32 %v8781, %v9093
      %v9140 = vadd.f32 %v8782, %v9098
      %v9141 = vadd.f32 %v8783, %v9101
      %v9142 = vadd.f32 %v8784, %v9106
      %v9143 = vadd.f32 %v8785, %v9109
      %v9144 = vld [vmem:[%s1296] sm:$0xf]
      %v9145 = vld [vmem:[%s1296 + $0x4] sm:$0xf]
      %v9146 = vld [vmem:[%s1296 + $0x8] sm:$0x1]
      %v9147 = vld [vmem:[%s1296 + $0xc] sm:$0xf]
      %v9148 = vld [vmem:[%s1296 + $0x10] sm:$0xf]
      %v9149 = vld [vmem:[%s1296 + $0x14] sm:$0x1]
      %v9150 = vld [vmem:[%s1296 + $0x18] sm:$0xf]
      %v9151 = vld [vmem:[%s1296 + $0x1c] sm:$0xf]
      %v9152 = vld [vmem:[%s1296 + $0x20] sm:$0x1]
      %v9153 = vld [vmem:[%s1296 + $0x24] sm:$0xf]
      %v9154 = vld [vmem:[%s1296 + $0x28] sm:$0xf]
      %v9155 = vld [vmem:[%s1296 + $0x2c] sm:$0x1]
      %v9156 = vld [vmem:[%s1296 + $0x30] sm:$0xf]
      %v9157 = vld [vmem:[%s1296 + $0x34] sm:$0xf]
      %v9158 = vld [vmem:[%s1296 + $0x38] sm:$0x1]
      %v9159 = vld [vmem:[%s1296 + $0x3c] sm:$0xf]
      %v9160 = vld [vmem:[%s1296 + $0x40] sm:$0xf]
      %v9161 = vld [vmem:[%s1296 + $0x44] sm:$0x1]
      %v9162 = vld [vmem:[%s1296 + $0x48] sm:$0xf]
      %v9163 = vld [vmem:[%s1296 + $0x4c] sm:$0xf]
      %v9164 = vld [vmem:[%s1296 + $0x50] sm:$0x1]
      %v9165 = vld [vmem:[%s1296 + $0x54] sm:$0xf]
      %v9166 = vld [vmem:[%s1296 + $0x58] sm:$0xf]
      %v9167 = vld [vmem:[%s1296 + $0x5c] sm:$0x1]
      %v9168 = vld [vmem:[%s1296 + $0x60] sm:$0xf]
      %v9169 = vld [vmem:[%s1296 + $0x64] sm:$0xf]
      %v9170 = vld [vmem:[%s1296 + $0x68] sm:$0x1]
      %v9171 = vld [vmem:[%s1296 + $0x6c] sm:$0xf]
      %v9172 = vld [vmem:[%s1296 + $0x70] sm:$0xf]
      %v9173 = vld [vmem:[%s1296 + $0x74] sm:$0x1]
      %v9174 = vld [vmem:[%s1296 + $0x78] sm:$0xf]
      %v9175 = vld [vmem:[%s1296 + $0x7c] sm:$0xf]
      %v9176 = vld [vmem:[%s1296 + $0x80] sm:$0x1]
      %v9177 = vld [vmem:[%s1296 + $0x84] sm:$0xf]
      %v9178 = vld [vmem:[%s1296 + $0x88] sm:$0xf]
      %v9179 = vld [vmem:[%s1296 + $0x8c] sm:$0x1]
      %v9180 = vld [vmem:[%s1296 + $0x90] sm:$0xf]
      %v9181 = vld [vmem:[%s1296 + $0x94] sm:$0xf]
      %v9182 = vld [vmem:[%s1296 + $0x98] sm:$0x1]
      %v9183 = vld [vmem:[%s1296 + $0x9c] sm:$0xf]
      %v9184 = vld [vmem:[%s1296 + $0xa0] sm:$0xf]
      %v9185 = vld [vmem:[%s1296 + $0xa4] sm:$0x1]
      %v9186 = vld [vmem:[%s1296 + $0xa8] sm:$0xf]
      %v9187 = vld [vmem:[%s1296 + $0xac] sm:$0xf]
      %v9188 = vld [vmem:[%s1296 + $0xb0] sm:$0x1]
      %v9189 = vld [vmem:[%s1296 + $0xb4] sm:$0xf]
      %v9190 = vld [vmem:[%s1296 + $0xb8] sm:$0xf]
      %v9191 = vld [vmem:[%s1296 + $0xbc] sm:$0x1]
      %v9193 = vshrl.u32 %v9144, 16
      %v9195 = vrot.slane %v9193, 4
      %v9196 = vshll.u32 %v9144, 16
      %v9198 = vrot.slane %v9196, 5
      %v9199 = vor.u32 %v9195, %v9198
      %v9200 = vrot.slane %v9199, 4
      %v9202 = vshll.u32 %v9145, 16
      %v9204 = vrot.slane %v9202, 5
      %v9205 = vsel %vm1826, %v9200, %v9204
      %v9206 = vshrl.u32 %v9145, 16
      %v9208 = vrot.slane %v9206, 4
      %v9209 = vor.u32 %v9208, %v9204
      %v9210 = vrot.slane %v9209, 4
      %v9212 = vshll.u32 %v9146, 16
      %v9214 = vrot.slane %v9212, 5
      %v9215 = vsel %vm1826, %v9210, %v9214
      %v9217 = vshrl.u32 %v9147, 16
      %v9219 = vrot.slane %v9217, 4
      %v9220 = vshll.u32 %v9147, 16
      %v9222 = vrot.slane %v9220, 5
      %v9223 = vor.u32 %v9219, %v9222
      %v9224 = vrot.slane %v9223, 4
      %v9226 = vshll.u32 %v9148, 16
      %v9228 = vrot.slane %v9226, 5
      %v9229 = vsel %vm1826, %v9224, %v9228
      %v9230 = vshrl.u32 %v9148, 16
      %v9232 = vrot.slane %v9230, 4
      %v9233 = vor.u32 %v9232, %v9228
      %v9234 = vrot.slane %v9233, 4
      %v9236 = vshll.u32 %v9149, 16
      %v9238 = vrot.slane %v9236, 5
      %v9239 = vsel %vm1826, %v9234, %v9238
      %v9241 = vshrl.u32 %v9150, 16
      %v9243 = vrot.slane %v9241, 4
      %v9244 = vshll.u32 %v9150, 16
      %v9246 = vrot.slane %v9244, 5
      %v9247 = vor.u32 %v9243, %v9246
      %v9248 = vrot.slane %v9247, 4
      %v9250 = vshll.u32 %v9151, 16
      %v9252 = vrot.slane %v9250, 5
      %v9253 = vsel %vm1826, %v9248, %v9252
      %v9254 = vshrl.u32 %v9151, 16
      %v9256 = vrot.slane %v9254, 4
      %v9257 = vor.u32 %v9256, %v9252
      %v9258 = vrot.slane %v9257, 4
      %v9260 = vshll.u32 %v9152, 16
      %v9262 = vrot.slane %v9260, 5
      %v9263 = vsel %vm1826, %v9258, %v9262
      %v9265 = vshrl.u32 %v9153, 16
      %v9267 = vrot.slane %v9265, 4
      %v9268 = vshll.u32 %v9153, 16
      %v9270 = vrot.slane %v9268, 5
      %v9271 = vor.u32 %v9267, %v9270
      %v9272 = vrot.slane %v9271, 4
      %v9274 = vshll.u32 %v9154, 16
      %v9276 = vrot.slane %v9274, 5
      %v9277 = vsel %vm1826, %v9272, %v9276
      %v9278 = vshrl.u32 %v9154, 16
      %v9280 = vrot.slane %v9278, 4
      %v9281 = vor.u32 %v9280, %v9276
      %v9282 = vrot.slane %v9281, 4
      %v9284 = vshll.u32 %v9155, 16
      %v9286 = vrot.slane %v9284, 5
      %v9287 = vsel %vm1826, %v9282, %v9286
      %v9289 = vshrl.u32 %v9156, 16
      %v9291 = vrot.slane %v9289, 4
      %v9292 = vshll.u32 %v9156, 16
      %v9294 = vrot.slane %v9292, 5
      %v9295 = vor.u32 %v9291, %v9294
      %v9296 = vrot.slane %v9295, 4
      %v9298 = vshll.u32 %v9157, 16
      %v9300 = vrot.slane %v9298, 5
      %v9301 = vsel %vm1826, %v9296, %v9300
      %v9302 = vshrl.u32 %v9157, 16
      %v9304 = vrot.slane %v9302, 4
      %v9305 = vor.u32 %v9304, %v9300
      %v9306 = vrot.slane %v9305, 4
      %v9308 = vshll.u32 %v9158, 16
      %v9310 = vrot.slane %v9308, 5
      %v9311 = vsel %vm1826, %v9306, %v9310
      %v9313 = vshrl.u32 %v9159, 16
      %v9315 = vrot.slane %v9313, 4
      %v9316 = vshll.u32 %v9159, 16
      %v9318 = vrot.slane %v9316, 5
      %v9319 = vor.u32 %v9315, %v9318
      %v9320 = vrot.slane %v9319, 4
      %v9322 = vshll.u32 %v9160, 16
      %v9324 = vrot.slane %v9322, 5
      %v9325 = vsel %vm1826, %v9320, %v9324
      %v9326 = vshrl.u32 %v9160, 16
      %v9328 = vrot.slane %v9326, 4
      %v9329 = vor.u32 %v9328, %v9324
      %v9330 = vrot.slane %v9329, 4
      %v9332 = vshll.u32 %v9161, 16
      %v9334 = vrot.slane %v9332, 5
      %v9335 = vsel %vm1826, %v9330, %v9334
      %v9337 = vshrl.u32 %v9162, 16
      %v9339 = vrot.slane %v9337, 4
      %v9340 = vshll.u32 %v9162, 16
      %v9342 = vrot.slane %v9340, 5
      %v9343 = vor.u32 %v9339, %v9342
      %v9344 = vrot.slane %v9343, 4
      %v9346 = vshll.u32 %v9163, 16
      %v9348 = vrot.slane %v9346, 5
      %v9349 = vsel %vm1826, %v9344, %v9348
      %v9350 = vshrl.u32 %v9163, 16
      %v9352 = vrot.slane %v9350, 4
      %v9353 = vor.u32 %v9352, %v9348
      %v9354 = vrot.slane %v9353, 4
      %v9356 = vshll.u32 %v9164, 16
      %v9358 = vrot.slane %v9356, 5
      %v9359 = vsel %vm1826, %v9354, %v9358
      %v9361 = vshrl.u32 %v9165, 16
      %v9363 = vrot.slane %v9361, 4
      %v9364 = vshll.u32 %v9165, 16
      %v9366 = vrot.slane %v9364, 5
      %v9367 = vor.u32 %v9363, %v9366
      %v9368 = vrot.slane %v9367, 4
      %v9370 = vshll.u32 %v9166, 16
      %v9372 = vrot.slane %v9370, 5
      %v9373 = vsel %vm1826, %v9368, %v9372
      %v9374 = vshrl.u32 %v9166, 16
      %v9376 = vrot.slane %v9374, 4
      %v9377 = vor.u32 %v9376, %v9372
      %v9378 = vrot.slane %v9377, 4
      %v9380 = vshll.u32 %v9167, 16
      %v9382 = vrot.slane %v9380, 5
      %v9383 = vsel %vm1826, %v9378, %v9382
      %v9385 = vshrl.u32 %v9168, 16
      %v9387 = vrot.slane %v9385, 4
      %v9388 = vshll.u32 %v9168, 16
      %v9390 = vrot.slane %v9388, 5
      %v9391 = vor.u32 %v9387, %v9390
      %v9392 = vrot.slane %v9391, 4
      %v9394 = vshll.u32 %v9169, 16
      %v9396 = vrot.slane %v9394, 5
      %v9397 = vsel %vm1826, %v9392, %v9396
      %v9398 = vshrl.u32 %v9169, 16
      %v9400 = vrot.slane %v9398, 4
      %v9401 = vor.u32 %v9400, %v9396
      %v9402 = vrot.slane %v9401, 4
      %v9404 = vshll.u32 %v9170, 16
      %v9406 = vrot.slane %v9404, 5
      %v9407 = vsel %vm1826, %v9402, %v9406
      %v9409 = vshrl.u32 %v9171, 16
      %v9411 = vrot.slane %v9409, 4
      %v9412 = vshll.u32 %v9171, 16
      %v9414 = vrot.slane %v9412, 5
      %v9415 = vor.u32 %v9411, %v9414
      %v9416 = vrot.slane %v9415, 4
      %v9418 = vshll.u32 %v9172, 16
      %v9420 = vrot.slane %v9418, 5
      %v9421 = vsel %vm1826, %v9416, %v9420
      %v9422 = vshrl.u32 %v9172, 16
      %v9424 = vrot.slane %v9422, 4
      %v9425 = vor.u32 %v9424, %v9420
      %v9426 = vrot.slane %v9425, 4
      %v9428 = vshll.u32 %v9173, 16
      %v9430 = vrot.slane %v9428, 5
      %v9431 = vsel %vm1826, %v9426, %v9430
      %v9433 = vshrl.u32 %v9174, 16
      %v9435 = vrot.slane %v9433, 4
      %v9436 = vshll.u32 %v9174, 16
      %v9438 = vrot.slane %v9436, 5
      %v9439 = vor.u32 %v9435, %v9438
      %v9440 = vrot.slane %v9439, 4
      %v9442 = vshll.u32 %v9175, 16
      %v9444 = vrot.slane %v9442, 5
      %v9445 = vsel %vm1826, %v9440, %v9444
      %v9446 = vshrl.u32 %v9175, 16
      %v9448 = vrot.slane %v9446, 4
      %v9449 = vor.u32 %v9448, %v9444
      %v9450 = vrot.slane %v9449, 4
      %v9452 = vshll.u32 %v9176, 16
      %v9454 = vrot.slane %v9452, 5
      %v9455 = vsel %vm1826, %v9450, %v9454
      %v9457 = vshrl.u32 %v9177, 16
      %v9459 = vrot.slane %v9457, 4
      %v9460 = vshll.u32 %v9177, 16
      %v9462 = vrot.slane %v9460, 5
      %v9463 = vor.u32 %v9459, %v9462
      %v9464 = vrot.slane %v9463, 4
      %v9466 = vshll.u32 %v9178, 16
      %v9468 = vrot.slane %v9466, 5
      %v9469 = vsel %vm1826, %v9464, %v9468
      %v9470 = vshrl.u32 %v9178, 16
      %v9472 = vrot.slane %v9470, 4
      %v9473 = vor.u32 %v9472, %v9468
      %v9474 = vrot.slane %v9473, 4
      %v9476 = vshll.u32 %v9179, 16
      %v9478 = vrot.slane %v9476, 5
      %v9479 = vsel %vm1826, %v9474, %v9478
      %v9481 = vshrl.u32 %v9180, 16
      %v9483 = vrot.slane %v9481, 4
      %v9484 = vshll.u32 %v9180, 16
      %v9486 = vrot.slane %v9484, 5
      %v9487 = vor.u32 %v9483, %v9486
      %v9488 = vrot.slane %v9487, 4
      %v9490 = vshll.u32 %v9181, 16
      %v9492 = vrot.slane %v9490, 5
      %v9493 = vsel %vm1826, %v9488, %v9492
      %v9494 = vshrl.u32 %v9181, 16
      %v9496 = vrot.slane %v9494, 4
      %v9497 = vor.u32 %v9496, %v9492
      %v9498 = vrot.slane %v9497, 4
      %v9500 = vshll.u32 %v9182, 16
      %v9502 = vrot.slane %v9500, 5
      %v9503 = vsel %vm1826, %v9498, %v9502
      %v9505 = vshrl.u32 %v9183, 16
      %v9507 = vrot.slane %v9505, 4
      %v9508 = vshll.u32 %v9183, 16
      %v9510 = vrot.slane %v9508, 5
      %v9511 = vor.u32 %v9507, %v9510
      %v9512 = vrot.slane %v9511, 4
      %v9514 = vshll.u32 %v9184, 16
      %v9516 = vrot.slane %v9514, 5
      %v9517 = vsel %vm1826, %v9512, %v9516
      %v9518 = vshrl.u32 %v9184, 16
      %v9520 = vrot.slane %v9518, 4
      %v9521 = vor.u32 %v9520, %v9516
      %v9522 = vrot.slane %v9521, 4
      %v9524 = vshll.u32 %v9185, 16
      %v9526 = vrot.slane %v9524, 5
      %v9527 = vsel %vm1826, %v9522, %v9526
      %v9529 = vshrl.u32 %v9186, 16
      %v9531 = vrot.slane %v9529, 4
      %v9532 = vshll.u32 %v9186, 16
      %v9534 = vrot.slane %v9532, 5
      %v9535 = vor.u32 %v9531, %v9534
      %v9536 = vrot.slane %v9535, 4
      %v9538 = vshll.u32 %v9187, 16
      %v9540 = vrot.slane %v9538, 5
      %v9541 = vsel %vm1826, %v9536, %v9540
      %v9542 = vshrl.u32 %v9187, 16
      %v9544 = vrot.slane %v9542, 4
      %v9545 = vor.u32 %v9544, %v9540
      %v9546 = vrot.slane %v9545, 4
      %v9548 = vshll.u32 %v9188, 16
      %v9550 = vrot.slane %v9548, 5
      %v9551 = vsel %vm1826, %v9546, %v9550
      %v9553 = vshrl.u32 %v9189, 16
      %v9555 = vrot.slane %v9553, 4
      %v9556 = vshll.u32 %v9189, 16
      %v9558 = vrot.slane %v9556, 5
      %v9559 = vor.u32 %v9555, %v9558
      %v9560 = vrot.slane %v9559, 4
      %v9562 = vshll.u32 %v9190, 16
      %v9564 = vrot.slane %v9562, 5
      %v9565 = vsel %vm1826, %v9560, %v9564
      %v9566 = vshrl.u32 %v9190, 16
      %v9568 = vrot.slane %v9566, 4
      %v9569 = vor.u32 %v9568, %v9564
      %v9570 = vrot.slane %v9569, 4
      %v9572 = vshll.u32 %v9191, 16
      %v9574 = vrot.slane %v9572, 5
      %v9575 = vsel %vm1826, %v9570, %v9574
      %s9576 = scalar_lea.vmem %s9, 16
      %v9577 = vld [vmem:[%s9576] sm:$0xf]
      %v9578 = vunpack.c.l.b16 %v9205
      %v9579 = vunpack.c.l.b16 %v9215
      %v9580 = vunpack.c.l.b16 %v9229
      %v9581 = vunpack.c.l.b16 %v9239
      %v9582 = vunpack.c.l.b16 %v9253
      %v9583 = vunpack.c.l.b16 %v9263
      %v9584 = vunpack.c.l.b16 %v9277
      %v9585 = vunpack.c.l.b16 %v9287
      %v9586 = vunpack.c.l.b16 %v9301
      %v9587 = vunpack.c.l.b16 %v9311
      %v9588 = vunpack.c.l.b16 %v9325
      %v9589 = vunpack.c.l.b16 %v9335
      %v9590 = vunpack.c.l.b16 %v9349
      %v9591 = vunpack.c.l.b16 %v9359
      %v9592 = vunpack.c.l.b16 %v9373
      %v9593 = vunpack.c.l.b16 %v9383
      %v9594 = vunpack.c.l.b16 %v9397
      %v9595 = vunpack.c.l.b16 %v9407
      %v9596 = vunpack.c.l.b16 %v9421
      %v9597 = vunpack.c.l.b16 %v9431
      %v9598 = vunpack.c.l.b16 %v9445
      %v9599 = vunpack.c.l.b16 %v9455
      %v9600 = vunpack.c.l.b16 %v9469
      %v9601 = vunpack.c.l.b16 %v9479
      %v9602 = vunpack.c.l.b16 %v9493
      %v9603 = vunpack.c.l.b16 %v9503
      %v9604 = vunpack.c.l.b16 %v9517
      %v9605 = vunpack.c.l.b16 %v9527
      %v9606 = vunpack.c.l.b16 %v9541
      %v9607 = vunpack.c.l.b16 %v9551
      %v9608 = vunpack.c.l.b16 %v9565
      %v9609 = vunpack.c.l.b16 %v9575
      %v9610 = vpack.c.b16 %v9579, %v9578
      %v9611 = vpack.c.b16 %v9581, %v9580
      %v9612 = vpack.c.b16 %v9583, %v9582
      %v9613 = vpack.c.b16 %v9585, %v9584
      %v9614 = vpack.c.b16 %v9587, %v9586
      %v9615 = vpack.c.b16 %v9589, %v9588
      %v9616 = vpack.c.b16 %v9591, %v9590
      %v9617 = vpack.c.b16 %v9593, %v9592
      %v9618 = vpack.c.b16 %v9595, %v9594
      %v9619 = vpack.c.b16 %v9597, %v9596
      %v9620 = vpack.c.b16 %v9599, %v9598
      %v9621 = vpack.c.b16 %v9601, %v9600
      %v9622 = vpack.c.b16 %v9603, %v9602
      %v9623 = vpack.c.b16 %v9605, %v9604
      %v9624 = vpack.c.b16 %v9607, %v9606
      %v9625 = vpack.c.b16 %v9609, %v9608
      %v9627 = vsel %vm1524, %v9610, 0
      %v9630 = vsel %vm1524, %v9611, 0
      %v9633 = vsel %vm1524, %v9612, 0
      %v9636 = vsel %vm1524, %v9613, 0
      %v9639 = vsel %vm1524, %v9614, 0
      %v9642 = vsel %vm1524, %v9615, 0
      %v9645 = vsel %vm1524, %v9616, 0
      %v9648 = vsel %vm1524, %v9617, 0
      %v9651 = vsel %vm1524, %v9618, 0
      %v9654 = vsel %vm1524, %v9619, 0
      %v9657 = vsel %vm1524, %v9620, 0
      %v9660 = vsel %vm1524, %v9621, 0
      %v9663 = vsel %vm1524, %v9622, 0
      %v9666 = vsel %vm1524, %v9623, 0
      %v9669 = vsel %vm1524, %v9624, 0
      %v9672 = vsel %vm1524, %v9625, 0
      %v9675 = vsel %vm1573, %v9577, 0
      %9677 = vmatprep.subr.bf16.mxu0 0
      %9678 = vmatpush1.bf16.msra.mxu0 0
      %9679 = vmatprep.subr.bf16.mxu0 0
      %9680 = vmatpush1.bf16.msra.mxu0 0
      %9681 = vmatprep.subr.bf16.mxu0 0
      %9682 = vmatpush1.bf16.msra.mxu0 0
      %9683 = vmatprep.subr.bf16.mxu0 0
      %9684 = vmatpush1.bf16.msra.mxu0 0
      %9685 = vmatprep.subr.bf16.mxu0 0
      %9686 = vmatpush1.bf16.msra.mxu0 0
      %9687 = vmatprep.subr.bf16.mxu0 0
      %9688 = vmatpush1.bf16.msra.mxu0 0
      %9689 = vmatprep.subr.bf16.mxu0 0
      %9690 = vmatpush1.bf16.msra.mxu0 0
      %9691 = vmatprep.subr.bf16.mxu0 0
      %9692 = vmatpush1.bf16.msra.mxu0 %v9675
      %9693 = vmatprep.subr.bf16.mxu0 0
      %9694 = vmatpush2.bf16.msra.mxu0 0
      %9695 = vmatprep.subr.bf16.mxu0 0
      %9696 = vmatpush2.bf16.msra.mxu0 0
      %9697 = vmatprep.subr.bf16.mxu0 0
      %9698 = vmatpush2.bf16.msra.mxu0 0
      %9699 = vmatprep.subr.bf16.mxu0 0
      %9700 = vmatpush2.bf16.msra.mxu0 0
      %9701 = vmatprep.subr.bf16.mxu0 0
      %9702 = vmatpush2.bf16.msra.mxu0 0
      %9703 = vmatprep.subr.bf16.mxu0 0
      %9704 = vmatpush2.bf16.msra.mxu0 0
      %9705 = vmatprep.subr.bf16.mxu0 0
      %9706 = vmatpush2.bf16.msra.mxu0 0
      %9707 = vmatprep.subr.bf16.mxu0 0
      %9708 = vmatpush2.bf16.msra.mxu0 0
      %9709 = vmatprep.mubr.bf16.mxu0 0
      %9710 = vmatmul.mubr.bf16.gmra.mxu0 %v9627
      %v9711 = vpop.f32.mrf.mxu0
      %v9712 = vadd.f32 0.0, %v9711
      %v9713 = vpop.f32.mrf.mxu0
      %v9714 = vpop.f32.mrf.mxu0
      %v9715 = vadd.f32 0.0, %v9714
      %v9716 = vpop.f32.mrf.mxu0
      %9717 = vmatprep.mubr.bf16.mxu0 0
      %9718 = vmatmul.mubr.bf16.gmra.mxu0 %v9630
      %v9719 = vpop.f32.mrf.mxu0
      %v9720 = vadd.f32 0.0, %v9719
      %v9721 = vpop.f32.mrf.mxu0
      %v9722 = vpop.f32.mrf.mxu0
      %v9723 = vadd.f32 0.0, %v9722
      %v9724 = vpop.f32.mrf.mxu0
      %9725 = vmatprep.mubr.bf16.mxu0 0
      %9726 = vmatmul.mubr.bf16.gmra.mxu0 %v9633
      %v9727 = vpop.f32.mrf.mxu0
      %v9728 = vadd.f32 0.0, %v9727
      %v9729 = vpop.f32.mrf.mxu0
      %v9730 = vpop.f32.mrf.mxu0
      %v9731 = vadd.f32 0.0, %v9730
      %v9732 = vpop.f32.mrf.mxu0
      %9733 = vmatprep.mubr.bf16.mxu0 0
      %9734 = vmatmul.mubr.bf16.gmra.mxu0 %v9636
      %v9735 = vpop.f32.mrf.mxu0
      %v9736 = vadd.f32 0.0, %v9735
      %v9737 = vpop.f32.mrf.mxu0
      %v9738 = vpop.f32.mrf.mxu0
      %v9739 = vadd.f32 0.0, %v9738
      %v9740 = vpop.f32.mrf.mxu0
      %9741 = vmatprep.mubr.bf16.mxu0 0
      %9742 = vmatmul.mubr.bf16.gmra.mxu0 %v9639
      %v9743 = vpop.f32.mrf.mxu0
      %v9744 = vadd.f32 0.0, %v9743
      %v9745 = vpop.f32.mrf.mxu0
      %v9746 = vpop.f32.mrf.mxu0
      %v9747 = vadd.f32 0.0, %v9746
      %v9748 = vpop.f32.mrf.mxu0
      %9749 = vmatprep.mubr.bf16.mxu0 0
      %9750 = vmatmul.mubr.bf16.gmra.mxu0 %v9642
      %v9751 = vpop.f32.mrf.mxu0
      %v9752 = vadd.f32 0.0, %v9751
      %v9753 = vpop.f32.mrf.mxu0
      %v9754 = vpop.f32.mrf.mxu0
      %v9755 = vadd.f32 0.0, %v9754
      %v9756 = vpop.f32.mrf.mxu0
      %9757 = vmatprep.mubr.bf16.mxu0 0
      %9758 = vmatmul.mubr.bf16.gmra.mxu0 %v9645
      %v9759 = vpop.f32.mrf.mxu0
      %v9760 = vadd.f32 0.0, %v9759
      %v9761 = vpop.f32.mrf.mxu0
      %v9762 = vpop.f32.mrf.mxu0
      %v9763 = vadd.f32 0.0, %v9762
      %v9764 = vpop.f32.mrf.mxu0
      %9765 = vmatprep.mubr.bf16.mxu0 0
      %9766 = vmatmul.mubr.bf16.gmra.mxu0 %v9648
      %v9767 = vpop.f32.mrf.mxu0
      %v9768 = vadd.f32 0.0, %v9767
      %v9769 = vpop.f32.mrf.mxu0
      %v9770 = vpop.f32.mrf.mxu0
      %v9771 = vadd.f32 0.0, %v9770
      %v9772 = vpop.f32.mrf.mxu0
      %9773 = vmatprep.mubr.bf16.mxu0 0
      %9774 = vmatmul.mubr.bf16.gmra.mxu0 %v9651
      %v9775 = vpop.f32.mrf.mxu0
      %v9776 = vadd.f32 0.0, %v9775
      %v9777 = vpop.f32.mrf.mxu0
      %v9778 = vpop.f32.mrf.mxu0
      %v9779 = vadd.f32 0.0, %v9778
      %v9780 = vpop.f32.mrf.mxu0
      %9781 = vmatprep.mubr.bf16.mxu0 0
      %9782 = vmatmul.mubr.bf16.gmra.mxu0 %v9654
      %v9783 = vpop.f32.mrf.mxu0
      %v9784 = vadd.f32 0.0, %v9783
      %v9785 = vpop.f32.mrf.mxu0
      %v9786 = vpop.f32.mrf.mxu0
      %v9787 = vadd.f32 0.0, %v9786
      %v9788 = vpop.f32.mrf.mxu0
      %9789 = vmatprep.mubr.bf16.mxu0 0
      %9790 = vmatmul.mubr.bf16.gmra.mxu0 %v9657
      %v9791 = vpop.f32.mrf.mxu0
      %v9792 = vadd.f32 0.0, %v9791
      %v9793 = vpop.f32.mrf.mxu0
      %v9794 = vpop.f32.mrf.mxu0
      %v9795 = vadd.f32 0.0, %v9794
      %v9796 = vpop.f32.mrf.mxu0
      %9797 = vmatprep.mubr.bf16.mxu0 0
      %9798 = vmatmul.mubr.bf16.gmra.mxu0 %v9660
      %v9799 = vpop.f32.mrf.mxu0
      %v9800 = vadd.f32 0.0, %v9799
      %v9801 = vpop.f32.mrf.mxu0
      %v9802 = vpop.f32.mrf.mxu0
      %v9803 = vadd.f32 0.0, %v9802
      %v9804 = vpop.f32.mrf.mxu0
      %9805 = vmatprep.mubr.bf16.mxu0 0
      %9806 = vmatmul.mubr.bf16.gmra.mxu0 %v9663
      %v9807 = vpop.f32.mrf.mxu0
      %v9808 = vadd.f32 0.0, %v9807
      %v9809 = vpop.f32.mrf.mxu0
      %v9810 = vpop.f32.mrf.mxu0
      %v9811 = vadd.f32 0.0, %v9810
      %v9812 = vpop.f32.mrf.mxu0
      %9813 = vmatprep.mubr.bf16.mxu0 0
      %9814 = vmatmul.mubr.bf16.gmra.mxu0 %v9666
      %v9815 = vpop.f32.mrf.mxu0
      %v9816 = vadd.f32 0.0, %v9815
      %v9817 = vpop.f32.mrf.mxu0
      %v9818 = vpop.f32.mrf.mxu0
      %v9819 = vadd.f32 0.0, %v9818
      %v9820 = vpop.f32.mrf.mxu0
      %9821 = vmatprep.mubr.bf16.mxu0 0
      %9822 = vmatmul.mubr.bf16.gmra.mxu0 %v9669
      %v9823 = vpop.f32.mrf.mxu0
      %v9824 = vadd.f32 0.0, %v9823
      %v9825 = vpop.f32.mrf.mxu0
      %v9826 = vpop.f32.mrf.mxu0
      %v9827 = vadd.f32 0.0, %v9826
      %v9828 = vpop.f32.mrf.mxu0
      %9829 = vmatprep.mubr.bf16.mxu0 0
      %9830 = vmatmul.mubr.bf16.gmra.mxu0 %v9672
      %v9831 = vpop.f32.mrf.mxu0
      %v9832 = vadd.f32 0.0, %v9831
      %v9833 = vpop.f32.mrf.mxu0
      %v9834 = vpop.f32.mrf.mxu0
      %v9835 = vadd.f32 0.0, %v9834
      %v9836 = vpop.f32.mrf.mxu0
      %9837 = vdwg.mxu0
      %v9838 = vadd.f32 %v9112, %v9712
      %v9839 = vadd.f32 %v9113, %v9715
      %v9840 = vadd.f32 %v9114, %v9720
      %v9841 = vadd.f32 %v9115, %v9723
      %v9842 = vadd.f32 %v9116, %v9728
      %v9843 = vadd.f32 %v9117, %v9731
      %v9844 = vadd.f32 %v9118, %v9736
      %v9845 = vadd.f32 %v9119, %v9739
      %v9846 = vadd.f32 %v9120, %v9744
      %v9847 = vadd.f32 %v9121, %v9747
      %v9848 = vadd.f32 %v9122, %v9752
      %v9849 = vadd.f32 %v9123, %v9755
      %v9850 = vadd.f32 %v9124, %v9760
      %v9851 = vadd.f32 %v9125, %v9763
      %v9852 = vadd.f32 %v9126, %v9768
      %v9853 = vadd.f32 %v9127, %v9771
      %v9854 = vadd.f32 %v9128, %v9776
      %v9855 = vadd.f32 %v9129, %v9779
      %v9856 = vadd.f32 %v9130, %v9784
      %v9857 = vadd.f32 %v9131, %v9787
      %v9858 = vadd.f32 %v9132, %v9792
      %v9859 = vadd.f32 %v9133, %v9795
      %v9860 = vadd.f32 %v9134, %v9800
      %v9861 = vadd.f32 %v9135, %v9803
      %v9862 = vadd.f32 %v9136, %v9808
      %v9863 = vadd.f32 %v9137, %v9811
      %v9864 = vadd.f32 %v9138, %v9816
      %v9865 = vadd.f32 %v9139, %v9819
      %v9866 = vadd.f32 %v9140, %v9824
      %v9867 = vadd.f32 %v9141, %v9827
      %v9868 = vadd.f32 %v9142, %v9832
      %v9869 = vadd.f32 %v9143, %v9835
      %v9870 = vld [vmem:[%s1296] sm:$0xe]
      %v9871 = vld [vmem:[%s1296 + $0xc] sm:$0xe]
      %v9872 = vld [vmem:[%s1296 + $0x18] sm:$0xe]
      %v9873 = vld [vmem:[%s1296 + $0x24] sm:$0xe]
      %v9874 = vld [vmem:[%s1296 + $0x30] sm:$0xe]
      %v9875 = vld [vmem:[%s1296 + $0x3c] sm:$0xe]
      %v9876 = vld [vmem:[%s1296 + $0x48] sm:$0xe]
      %v9877 = vld [vmem:[%s1296 + $0x54] sm:$0xe]
      %v9878 = vld [vmem:[%s1296 + $0x60] sm:$0xe]
      %v9879 = vld [vmem:[%s1296 + $0x6c] sm:$0xe]
      %v9880 = vld [vmem:[%s1296 + $0x78] sm:$0xe]
      %v9881 = vld [vmem:[%s1296 + $0x84] sm:$0xe]
      %v9882 = vld [vmem:[%s1296 + $0x90] sm:$0xe]
      %v9883 = vld [vmem:[%s1296 + $0x9c] sm:$0xe]
      %v9884 = vld [vmem:[%s1296 + $0xa8] sm:$0xe]
      %v9885 = vld [vmem:[%s1296 + $0xb4] sm:$0xe]
      %v9934 = vrot.slane %v9870, 5
      %v9935 = vrot.slane %v9934, 4
      %v9936 = vrot.slane %v9145, 5
      %v9937 = vsel %vm2571, %v9935, %v9936
      %v9938 = vrot.slane %v9936, 4
      %v9939 = vrot.slane %v9146, 5
      %v9940 = vsel %vm2571, %v9938, %v9939
      %v9941 = vrot.slane %v9871, 5
      %v9942 = vrot.slane %v9941, 4
      %v9943 = vrot.slane %v9148, 5
      %v9944 = vsel %vm2571, %v9942, %v9943
      %v9945 = vrot.slane %v9943, 4
      %v9946 = vrot.slane %v9149, 5
      %v9947 = vsel %vm2571, %v9945, %v9946
      %v9948 = vrot.slane %v9872, 5
      %v9949 = vrot.slane %v9948, 4
      %v9950 = vrot.slane %v9151, 5
      %v9951 = vsel %vm2571, %v9949, %v9950
      %v9952 = vrot.slane %v9950, 4
      %v9953 = vrot.slane %v9152, 5
      %v9954 = vsel %vm2571, %v9952, %v9953
      %v9955 = vrot.slane %v9873, 5
      %v9956 = vrot.slane %v9955, 4
      %v9957 = vrot.slane %v9154, 5
      %v9958 = vsel %vm2571, %v9956, %v9957
      %v9959 = vrot.slane %v9957, 4
      %v9960 = vrot.slane %v9155, 5
      %v9961 = vsel %vm2571, %v9959, %v9960
      %v9962 = vrot.slane %v9874, 5
      %v9963 = vrot.slane %v9962, 4
      %v9964 = vrot.slane %v9157, 5
      %v9965 = vsel %vm2571, %v9963, %v9964
      %v9966 = vrot.slane %v9964, 4
      %v9967 = vrot.slane %v9158, 5
      %v9968 = vsel %vm2571, %v9966, %v9967
      %v9969 = vrot.slane %v9875, 5
      %v9970 = vrot.slane %v9969, 4
      %v9971 = vrot.slane %v9160, 5
      %v9972 = vsel %vm2571, %v9970, %v9971
      %v9973 = vrot.slane %v9971, 4
      %v9974 = vrot.slane %v9161, 5
      %v9975 = vsel %vm2571, %v9973, %v9974
      %v9976 = vrot.slane %v9876, 5
      %v9977 = vrot.slane %v9976, 4
      %v9978 = vrot.slane %v9163, 5
      %v9979 = vsel %vm2571, %v9977, %v9978
      %v9980 = vrot.slane %v9978, 4
      %v9981 = vrot.slane %v9164, 5
      %v9982 = vsel %vm2571, %v9980, %v9981
      %v9983 = vrot.slane %v9877, 5
      %v9984 = vrot.slane %v9983, 4
      %v9985 = vrot.slane %v9166, 5
      %v9986 = vsel %vm2571, %v9984, %v9985
      %v9987 = vrot.slane %v9985, 4
      %v9988 = vrot.slane %v9167, 5
      %v9989 = vsel %vm2571, %v9987, %v9988
      %v9990 = vrot.slane %v9878, 5
      %v9991 = vrot.slane %v9990, 4
      %v9992 = vrot.slane %v9169, 5
      %v9993 = vsel %vm2571, %v9991, %v9992
      %v9994 = vrot.slane %v9992, 4
      %v9995 = vrot.slane %v9170, 5
      %v9996 = vsel %vm2571, %v9994, %v9995
      %v9997 = vrot.slane %v9879, 5
      %v9998 = vrot.slane %v9997, 4
      %v9999 = vrot.slane %v9172, 5
      %v10000 = vsel %vm2571, %v9998, %v9999
      %v10001 = vrot.slane %v9999, 4
      %v10002 = vrot.slane %v9173, 5
      %v10003 = vsel %vm2571, %v10001, %v10002
      %v10004 = vrot.slane %v9880, 5
      %v10005 = vrot.slane %v10004, 4
      %v10006 = vrot.slane %v9175, 5
      %v10007 = vsel %vm2571, %v10005, %v10006
      %v10008 = vrot.slane %v10006, 4
      %v10009 = vrot.slane %v9176, 5
      %v10010 = vsel %vm2571, %v10008, %v10009
      %v10011 = vrot.slane %v9881, 5
      %v10012 = vrot.slane %v10011, 4
      %v10013 = vrot.slane %v9178, 5
      %v10014 = vsel %vm2571, %v10012, %v10013
      %v10015 = vrot.slane %v10013, 4
      %v10016 = vrot.slane %v9179, 5
      %v10017 = vsel %vm2571, %v10015, %v10016
      %v10018 = vrot.slane %v9882, 5
      %v10019 = vrot.slane %v10018, 4
      %v10020 = vrot.slane %v9181, 5
      %v10021 = vsel %vm2571, %v10019, %v10020
      %v10022 = vrot.slane %v10020, 4
      %v10023 = vrot.slane %v9182, 5
      %v10024 = vsel %vm2571, %v10022, %v10023
      %v10025 = vrot.slane %v9883, 5
      %v10026 = vrot.slane %v10025, 4
      %v10027 = vrot.slane %v9184, 5
      %v10028 = vsel %vm2571, %v10026, %v10027
      %v10029 = vrot.slane %v10027, 4
      %v10030 = vrot.slane %v9185, 5
      %v10031 = vsel %vm2571, %v10029, %v10030
      %v10032 = vrot.slane %v9884, 5
      %v10033 = vrot.slane %v10032, 4
      %v10034 = vrot.slane %v9187, 5
      %v10035 = vsel %vm2571, %v10033, %v10034
      %v10036 = vrot.slane %v10034, 4
      %v10037 = vrot.slane %v9188, 5
      %v10038 = vsel %vm2571, %v10036, %v10037
      %v10039 = vrot.slane %v9885, 5
      %v10040 = vrot.slane %v10039, 4
      %v10041 = vrot.slane %v9190, 5
      %v10042 = vsel %vm2571, %v10040, %v10041
      %v10043 = vrot.slane %v10041, 4
      %v10044 = vrot.slane %v9191, 5
      %v10045 = vsel %vm2571, %v10043, %v10044
      %s10046 = scalar_lea.vmem %s9, 20
      %v10047 = vld [vmem:[%s10046] sm:$0xf]
      %v10048 = vunpack.c.l.b16 %v9937
      %v10049 = vunpack.c.l.b16 %v9940
      %v10050 = vunpack.c.l.b16 %v9944
      %v10051 = vunpack.c.l.b16 %v9947
      %v10052 = vunpack.c.l.b16 %v9951
      %v10053 = vunpack.c.l.b16 %v9954
      %v10054 = vunpack.c.l.b16 %v9958
      %v10055 = vunpack.c.l.b16 %v9961
      %v10056 = vunpack.c.l.b16 %v9965
      %v10057 = vunpack.c.l.b16 %v9968
      %v10058 = vunpack.c.l.b16 %v9972
      %v10059 = vunpack.c.l.b16 %v9975
      %v10060 = vunpack.c.l.b16 %v9979
      %v10061 = vunpack.c.l.b16 %v9982
      %v10062 = vunpack.c.l.b16 %v9986
      %v10063 = vunpack.c.l.b16 %v9989
      %v10064 = vunpack.c.l.b16 %v9993
      %v10065 = vunpack.c.l.b16 %v9996
      %v10066 = vunpack.c.l.b16 %v10000
      %v10067 = vunpack.c.l.b16 %v10003
      %v10068 = vunpack.c.l.b16 %v10007
      %v10069 = vunpack.c.l.b16 %v10010
      %v10070 = vunpack.c.l.b16 %v10014
      %v10071 = vunpack.c.l.b16 %v10017
      %v10072 = vunpack.c.l.b16 %v10021
      %v10073 = vunpack.c.l.b16 %v10024
      %v10074 = vunpack.c.l.b16 %v10028
      %v10075 = vunpack.c.l.b16 %v10031
      %v10076 = vunpack.c.l.b16 %v10035
      %v10077 = vunpack.c.l.b16 %v10038
      %v10078 = vunpack.c.l.b16 %v10042
      %v10079 = vunpack.c.l.b16 %v10045
      %v10080 = vpack.c.b16 %v10049, %v10048
      %v10081 = vpack.c.b16 %v10051, %v10050
      %v10082 = vpack.c.b16 %v10053, %v10052
      %v10083 = vpack.c.b16 %v10055, %v10054
      %v10084 = vpack.c.b16 %v10057, %v10056
      %v10085 = vpack.c.b16 %v10059, %v10058
      %v10086 = vpack.c.b16 %v10061, %v10060
      %v10087 = vpack.c.b16 %v10063, %v10062
      %v10088 = vpack.c.b16 %v10065, %v10064
      %v10089 = vpack.c.b16 %v10067, %v10066
      %v10090 = vpack.c.b16 %v10069, %v10068
      %v10091 = vpack.c.b16 %v10071, %v10070
      %v10092 = vpack.c.b16 %v10073, %v10072
      %v10093 = vpack.c.b16 %v10075, %v10074
      %v10094 = vpack.c.b16 %v10077, %v10076
      %v10095 = vpack.c.b16 %v10079, %v10078
      %v10097 = vsel %vm1524, %v10080, 0
      %v10100 = vsel %vm1524, %v10081, 0
      %v10103 = vsel %vm1524, %v10082, 0
      %v10106 = vsel %vm1524, %v10083, 0
      %v10109 = vsel %vm1524, %v10084, 0
      %v10112 = vsel %vm1524, %v10085, 0
      %v10115 = vsel %vm1524, %v10086, 0
      %v10118 = vsel %vm1524, %v10087, 0
      %v10121 = vsel %vm1524, %v10088, 0
      %v10124 = vsel %vm1524, %v10089, 0
      %v10127 = vsel %vm1524, %v10090, 0
      %v10130 = vsel %vm1524, %v10091, 0
      %v10133 = vsel %vm1524, %v10092, 0
      %v10136 = vsel %vm1524, %v10093, 0
      %v10139 = vsel %vm1524, %v10094, 0
      %v10142 = vsel %vm1524, %v10095, 0
      %v10145 = vsel %vm1573, %v10047, 0
      %10147 = vmatprep.subr.bf16.mxu0 0
      %10148 = vmatpush1.bf16.msra.mxu0 0
      %10149 = vmatprep.subr.bf16.mxu0 0
      %10150 = vmatpush1.bf16.msra.mxu0 0
      %10151 = vmatprep.subr.bf16.mxu0 0
      %10152 = vmatpush1.bf16.msra.mxu0 0
      %10153 = vmatprep.subr.bf16.mxu0 0
      %10154 = vmatpush1.bf16.msra.mxu0 0
      %10155 = vmatprep.subr.bf16.mxu0 0
      %10156 = vmatpush1.bf16.msra.mxu0 0
      %10157 = vmatprep.subr.bf16.mxu0 0
      %10158 = vmatpush1.bf16.msra.mxu0 0
      %10159 = vmatprep.subr.bf16.mxu0 0
      %10160 = vmatpush1.bf16.msra.mxu0 0
      %10161 = vmatprep.subr.bf16.mxu0 0
      %10162 = vmatpush1.bf16.msra.mxu0 %v10145
      %10163 = vmatprep.subr.bf16.mxu0 0
      %10164 = vmatpush2.bf16.msra.mxu0 0
      %10165 = vmatprep.subr.bf16.mxu0 0
      %10166 = vmatpush2.bf16.msra.mxu0 0
      %10167 = vmatprep.subr.bf16.mxu0 0
      %10168 = vmatpush2.bf16.msra.mxu0 0
      %10169 = vmatprep.subr.bf16.mxu0 0
      %10170 = vmatpush2.bf16.msra.mxu0 0
      %10171 = vmatprep.subr.bf16.mxu0 0
      %10172 = vmatpush2.bf16.msra.mxu0 0
      %10173 = vmatprep.subr.bf16.mxu0 0
      %10174 = vmatpush2.bf16.msra.mxu0 0
      %10175 = vmatprep.subr.bf16.mxu0 0
      %10176 = vmatpush2.bf16.msra.mxu0 0
      %10177 = vmatprep.subr.bf16.mxu0 0
      %10178 = vmatpush2.bf16.msra.mxu0 0
      %10179 = vmatprep.mubr.bf16.mxu0 0
      %10180 = vmatmul.mubr.bf16.gmra.mxu0 %v10097
      %v10181 = vpop.f32.mrf.mxu0
      %v10182 = vadd.f32 0.0, %v10181
      %v10183 = vpop.f32.mrf.mxu0
      %v10184 = vpop.f32.mrf.mxu0
      %v10185 = vadd.f32 0.0, %v10184
      %v10186 = vpop.f32.mrf.mxu0
      %10187 = vmatprep.mubr.bf16.mxu0 0
      %10188 = vmatmul.mubr.bf16.gmra.mxu0 %v10100
      %v10189 = vpop.f32.mrf.mxu0
      %v10190 = vadd.f32 0.0, %v10189
      %v10191 = vpop.f32.mrf.mxu0
      %v10192 = vpop.f32.mrf.mxu0
      %v10193 = vadd.f32 0.0, %v10192
      %v10194 = vpop.f32.mrf.mxu0
      %10195 = vmatprep.mubr.bf16.mxu0 0
      %10196 = vmatmul.mubr.bf16.gmra.mxu0 %v10103
      %v10197 = vpop.f32.mrf.mxu0
      %v10198 = vadd.f32 0.0, %v10197
      %v10199 = vpop.f32.mrf.mxu0
      %v10200 = vpop.f32.mrf.mxu0
      %v10201 = vadd.f32 0.0, %v10200
      %v10202 = vpop.f32.mrf.mxu0
      %10203 = vmatprep.mubr.bf16.mxu0 0
      %10204 = vmatmul.mubr.bf16.gmra.mxu0 %v10106
      %v10205 = vpop.f32.mrf.mxu0
      %v10206 = vadd.f32 0.0, %v10205
      %v10207 = vpop.f32.mrf.mxu0
      %v10208 = vpop.f32.mrf.mxu0
      %v10209 = vadd.f32 0.0, %v10208
      %v10210 = vpop.f32.mrf.mxu0
      %10211 = vmatprep.mubr.bf16.mxu0 0
      %10212 = vmatmul.mubr.bf16.gmra.mxu0 %v10109
      %v10213 = vpop.f32.mrf.mxu0
      %v10214 = vadd.f32 0.0, %v10213
      %v10215 = vpop.f32.mrf.mxu0
      %v10216 = vpop.f32.mrf.mxu0
      %v10217 = vadd.f32 0.0, %v10216
      %v10218 = vpop.f32.mrf.mxu0
      %10219 = vmatprep.mubr.bf16.mxu0 0
      %10220 = vmatmul.mubr.bf16.gmra.mxu0 %v10112
      %v10221 = vpop.f32.mrf.mxu0
      %v10222 = vadd.f32 0.0, %v10221
      %v10223 = vpop.f32.mrf.mxu0
      %v10224 = vpop.f32.mrf.mxu0
      %v10225 = vadd.f32 0.0, %v10224
      %v10226 = vpop.f32.mrf.mxu0
      %10227 = vmatprep.mubr.bf16.mxu0 0
      %10228 = vmatmul.mubr.bf16.gmra.mxu0 %v10115
      %v10229 = vpop.f32.mrf.mxu0
      %v10230 = vadd.f32 0.0, %v10229
      %v10231 = vpop.f32.mrf.mxu0
      %v10232 = vpop.f32.mrf.mxu0
      %v10233 = vadd.f32 0.0, %v10232
      %v10234 = vpop.f32.mrf.mxu0
      %10235 = vmatprep.mubr.bf16.mxu0 0
      %10236 = vmatmul.mubr.bf16.gmra.mxu0 %v10118
      %v10237 = vpop.f32.mrf.mxu0
      %v10238 = vadd.f32 0.0, %v10237
      %v10239 = vpop.f32.mrf.mxu0
      %v10240 = vpop.f32.mrf.mxu0
      %v10241 = vadd.f32 0.0, %v10240
      %v10242 = vpop.f32.mrf.mxu0
      %10243 = vmatprep.mubr.bf16.mxu0 0
      %10244 = vmatmul.mubr.bf16.gmra.mxu0 %v10121
      %v10245 = vpop.f32.mrf.mxu0
      %v10246 = vadd.f32 0.0, %v10245
      %v10247 = vpop.f32.mrf.mxu0
      %v10248 = vpop.f32.mrf.mxu0
      %v10249 = vadd.f32 0.0, %v10248
      %v10250 = vpop.f32.mrf.mxu0
      %10251 = vmatprep.mubr.bf16.mxu0 0
      %10252 = vmatmul.mubr.bf16.gmra.mxu0 %v10124
      %v10253 = vpop.f32.mrf.mxu0
      %v10254 = vadd.f32 0.0, %v10253
      %v10255 = vpop.f32.mrf.mxu0
      %v10256 = vpop.f32.mrf.mxu0
      %v10257 = vadd.f32 0.0, %v10256
      %v10258 = vpop.f32.mrf.mxu0
      %10259 = vmatprep.mubr.bf16.mxu0 0
      %10260 = vmatmul.mubr.bf16.gmra.mxu0 %v10127
      %v10261 = vpop.f32.mrf.mxu0
      %v10262 = vadd.f32 0.0, %v10261
      %v10263 = vpop.f32.mrf.mxu0
      %v10264 = vpop.f32.mrf.mxu0
      %v10265 = vadd.f32 0.0, %v10264
      %v10266 = vpop.f32.mrf.mxu0
      %10267 = vmatprep.mubr.bf16.mxu0 0
      %10268 = vmatmul.mubr.bf16.gmra.mxu0 %v10130
      %v10269 = vpop.f32.mrf.mxu0
      %v10270 = vadd.f32 0.0, %v10269
      %v10271 = vpop.f32.mrf.mxu0
      %v10272 = vpop.f32.mrf.mxu0
      %v10273 = vadd.f32 0.0, %v10272
      %v10274 = vpop.f32.mrf.mxu0
      %10275 = vmatprep.mubr.bf16.mxu0 0
      %10276 = vmatmul.mubr.bf16.gmra.mxu0 %v10133
      %v10277 = vpop.f32.mrf.mxu0
      %v10278 = vadd.f32 0.0, %v10277
      %v10279 = vpop.f32.mrf.mxu0
      %v10280 = vpop.f32.mrf.mxu0
      %v10281 = vadd.f32 0.0, %v10280
      %v10282 = vpop.f32.mrf.mxu0
      %10283 = vmatprep.mubr.bf16.mxu0 0
      %10284 = vmatmul.mubr.bf16.gmra.mxu0 %v10136
      %v10285 = vpop.f32.mrf.mxu0
      %v10286 = vadd.f32 0.0, %v10285
      %v10287 = vpop.f32.mrf.mxu0
      %v10288 = vpop.f32.mrf.mxu0
      %v10289 = vadd.f32 0.0, %v10288
      %v10290 = vpop.f32.mrf.mxu0
      %10291 = vmatprep.mubr.bf16.mxu0 0
      %10292 = vmatmul.mubr.bf16.gmra.mxu0 %v10139
      %v10293 = vpop.f32.mrf.mxu0
      %v10294 = vadd.f32 0.0, %v10293
      %v10295 = vpop.f32.mrf.mxu0
      %v10296 = vpop.f32.mrf.mxu0
      %v10297 = vadd.f32 0.0, %v10296
      %v10298 = vpop.f32.mrf.mxu0
      %10299 = vmatprep.mubr.bf16.mxu0 0
      %10300 = vmatmul.mubr.bf16.gmra.mxu0 %v10142
      %v10301 = vpop.f32.mrf.mxu0
      %v10302 = vadd.f32 0.0, %v10301
      %v10303 = vpop.f32.mrf.mxu0
      %v10304 = vpop.f32.mrf.mxu0
      %v10305 = vadd.f32 0.0, %v10304
      %v10306 = vpop.f32.mrf.mxu0
      %10307 = vdwg.mxu0
      %v10308 = vadd.f32 %v9838, %v10182
      %v10309 = vadd.f32 %v9839, %v10185
      %v10310 = vadd.f32 %v9840, %v10190
      %v10311 = vadd.f32 %v9841, %v10193
      %v10312 = vadd.f32 %v9842, %v10198
      %v10313 = vadd.f32 %v9843, %v10201
      %v10314 = vadd.f32 %v9844, %v10206
      %v10315 = vadd.f32 %v9845, %v10209
      %v10316 = vadd.f32 %v9846, %v10214
      %v10317 = vadd.f32 %v9847, %v10217
      %v10318 = vadd.f32 %v9848, %v10222
      %v10319 = vadd.f32 %v9849, %v10225
      %v10320 = vadd.f32 %v9850, %v10230
      %v10321 = vadd.f32 %v9851, %v10233
      %v10322 = vadd.f32 %v9852, %v10238
      %v10323 = vadd.f32 %v9853, %v10241
      %v10324 = vadd.f32 %v9854, %v10246
      %v10325 = vadd.f32 %v9855, %v10249
      %v10326 = vadd.f32 %v9856, %v10254
      %v10327 = vadd.f32 %v9857, %v10257
      %v10328 = vadd.f32 %v9858, %v10262
      %v10329 = vadd.f32 %v9859, %v10265
      %v10330 = vadd.f32 %v9860, %v10270
      %v10331 = vadd.f32 %v9861, %v10273
      %v10332 = vadd.f32 %v9862, %v10278
      %v10333 = vadd.f32 %v9863, %v10281
      %v10334 = vadd.f32 %v9864, %v10286
      %v10335 = vadd.f32 %v9865, %v10289
      %v10336 = vadd.f32 %v9866, %v10294
      %v10337 = vadd.f32 %v9867, %v10297
      %v10338 = vadd.f32 %v9868, %v10302
      %v10339 = vadd.f32 %v9869, %v10305
      %v10340 = vld [vmem:[%s4532] sm:$0xf]
      %v10341 = vld [vmem:[%s4532 + $0x4] sm:$0xf]
      %v10342 = vld [vmem:[%s4532 + $0xc] sm:$0xf]
      %v10343 = vld [vmem:[%s4532 + $0x10] sm:$0xf]
      %v10344 = vld [vmem:[%s4532 + $0x18] sm:$0xf]
      %v10345 = vld [vmem:[%s4532 + $0x1c] sm:$0xf]
      %v10346 = vld [vmem:[%s4532 + $0x24] sm:$0xf]
      %v10347 = vld [vmem:[%s4532 + $0x28] sm:$0xf]
      %v10348 = vld [vmem:[%s4532 + $0x30] sm:$0xf]
      %v10349 = vld [vmem:[%s4532 + $0x34] sm:$0xf]
      %v10350 = vld [vmem:[%s4532 + $0x3c] sm:$0xf]
      %v10351 = vld [vmem:[%s4532 + $0x40] sm:$0xf]
      %v10352 = vld [vmem:[%s4532 + $0x48] sm:$0xf]
      %v10353 = vld [vmem:[%s4532 + $0x4c] sm:$0xf]
      %v10354 = vld [vmem:[%s4532 + $0x54] sm:$0xf]
      %v10355 = vld [vmem:[%s4532 + $0x58] sm:$0xf]
      %v10356 = vld [vmem:[%s4532 + $0x60] sm:$0xf]
      %v10357 = vld [vmem:[%s4532 + $0x64] sm:$0xf]
      %v10358 = vld [vmem:[%s4532 + $0x6c] sm:$0xf]
      %v10359 = vld [vmem:[%s4532 + $0x70] sm:$0xf]
      %v10360 = vld [vmem:[%s4532 + $0x78] sm:$0xf]
      %v10361 = vld [vmem:[%s4532 + $0x7c] sm:$0xf]
      %v10362 = vld [vmem:[%s4532 + $0x84] sm:$0xf]
      %v10363 = vld [vmem:[%s4532 + $0x88] sm:$0xf]
      %v10364 = vld [vmem:[%s4532 + $0x90] sm:$0xf]
      %v10365 = vld [vmem:[%s4532 + $0x94] sm:$0xf]
      %v10366 = vld [vmem:[%s4532 + $0x9c] sm:$0xf]
      %v10367 = vld [vmem:[%s4532 + $0xa0] sm:$0xf]
      %v10368 = vld [vmem:[%s4532 + $0xa8] sm:$0xf]
      %v10369 = vld [vmem:[%s4532 + $0xac] sm:$0xf]
      %v10370 = vld [vmem:[%s4532 + $0xb4] sm:$0xf]
      %v10371 = vld [vmem:[%s4532 + $0xb8] sm:$0xf]
      %s10372 = scalar_lea.vmem %s9, 24
      %v10373 = vld [vmem:[%s10372] sm:$0xf]
      %v10406 = vunpack.c.l.b16 %v10340
      %v10407 = vunpack.c.l.b16 %v10341
      %v10408 = vunpack.c.l.b16 %v10342
      %v10409 = vunpack.c.l.b16 %v10343
      %v10410 = vunpack.c.l.b16 %v10344
      %v10411 = vunpack.c.l.b16 %v10345
      %v10412 = vunpack.c.l.b16 %v10346
      %v10413 = vunpack.c.l.b16 %v10347
      %v10414 = vunpack.c.l.b16 %v10348
      %v10415 = vunpack.c.l.b16 %v10349
      %v10416 = vunpack.c.l.b16 %v10350
      %v10417 = vunpack.c.l.b16 %v10351
      %v10418 = vunpack.c.l.b16 %v10352
      %v10419 = vunpack.c.l.b16 %v10353
      %v10420 = vunpack.c.l.b16 %v10354
      %v10421 = vunpack.c.l.b16 %v10355
      %v10422 = vunpack.c.l.b16 %v10356
      %v10423 = vunpack.c.l.b16 %v10357
      %v10424 = vunpack.c.l.b16 %v10358
      %v10425 = vunpack.c.l.b16 %v10359
      %v10426 = vunpack.c.l.b16 %v10360
      %v10427 = vunpack.c.l.b16 %v10361
      %v10428 = vunpack.c.l.b16 %v10362
      %v10429 = vunpack.c.l.b16 %v10363
      %v10430 = vunpack.c.l.b16 %v10364
      %v10431 = vunpack.c.l.b16 %v10365
      %v10432 = vunpack.c.l.b16 %v10366
      %v10433 = vunpack.c.l.b16 %v10367
      %v10434 = vunpack.c.l.b16 %v10368
      %v10435 = vunpack.c.l.b16 %v10369
      %v10436 = vunpack.c.l.b16 %v10370
      %v10437 = vunpack.c.l.b16 %v10371
      %v10438 = vpack.c.b16 %v10407, %v10406
      %v10439 = vpack.c.b16 %v10409, %v10408
      %v10440 = vpack.c.b16 %v10411, %v10410
      %v10441 = vpack.c.b16 %v10413, %v10412
      %v10442 = vpack.c.b16 %v10415, %v10414
      %v10443 = vpack.c.b16 %v10417, %v10416
      %v10444 = vpack.c.b16 %v10419, %v10418
      %v10445 = vpack.c.b16 %v10421, %v10420
      %v10446 = vpack.c.b16 %v10423, %v10422
      %v10447 = vpack.c.b16 %v10425, %v10424
      %v10448 = vpack.c.b16 %v10427, %v10426
      %v10449 = vpack.c.b16 %v10429, %v10428
      %v10450 = vpack.c.b16 %v10431, %v10430
      %v10451 = vpack.c.b16 %v10433, %v10432
      %v10452 = vpack.c.b16 %v10435, %v10434
      %v10453 = vpack.c.b16 %v10437, %v10436
      %v10455 = vsel %vm1524, %v10438, 0
      %v10458 = vsel %vm1524, %v10439, 0
      %v10461 = vsel %vm1524, %v10440, 0
      %v10464 = vsel %vm1524, %v10441, 0
      %v10467 = vsel %vm1524, %v10442, 0
      %v10470 = vsel %vm1524, %v10443, 0
      %v10473 = vsel %vm1524, %v10444, 0
      %v10476 = vsel %vm1524, %v10445, 0
      %v10479 = vsel %vm1524, %v10446, 0
      %v10482 = vsel %vm1524, %v10447, 0
      %v10485 = vsel %vm1524, %v10448, 0
      %v10488 = vsel %vm1524, %v10449, 0
      %v10491 = vsel %vm1524, %v10450, 0
      %v10494 = vsel %vm1524, %v10451, 0
      %v10497 = vsel %vm1524, %v10452, 0
      %v10500 = vsel %vm1524, %v10453, 0
      %v10503 = vsel %vm1573, %v10373, 0
      %10505 = vmatprep.subr.bf16.mxu0 0
      %10506 = vmatpush1.bf16.msra.mxu0 0
      %10507 = vmatprep.subr.bf16.mxu0 0
      %10508 = vmatpush1.bf16.msra.mxu0 0
      %10509 = vmatprep.subr.bf16.mxu0 0
      %10510 = vmatpush1.bf16.msra.mxu0 0
      %10511 = vmatprep.subr.bf16.mxu0 0
      %10512 = vmatpush1.bf16.msra.mxu0 0
      %10513 = vmatprep.subr.bf16.mxu0 0
      %10514 = vmatpush1.bf16.msra.mxu0 0
      %10515 = vmatprep.subr.bf16.mxu0 0
      %10516 = vmatpush1.bf16.msra.mxu0 0
      %10517 = vmatprep.subr.bf16.mxu0 0
      %10518 = vmatpush1.bf16.msra.mxu0 0
      %10519 = vmatprep.subr.bf16.mxu0 0
      %10520 = vmatpush1.bf16.msra.mxu0 %v10503
      %10521 = vmatprep.subr.bf16.mxu0 0
      %10522 = vmatpush2.bf16.msra.mxu0 0
      %10523 = vmatprep.subr.bf16.mxu0 0
      %10524 = vmatpush2.bf16.msra.mxu0 0
      %10525 = vmatprep.subr.bf16.mxu0 0
      %10526 = vmatpush2.bf16.msra.mxu0 0
      %10527 = vmatprep.subr.bf16.mxu0 0
      %10528 = vmatpush2.bf16.msra.mxu0 0
      %10529 = vmatprep.subr.bf16.mxu0 0
      %10530 = vmatpush2.bf16.msra.mxu0 0
      %10531 = vmatprep.subr.bf16.mxu0 0
      %10532 = vmatpush2.bf16.msra.mxu0 0
      %10533 = vmatprep.subr.bf16.mxu0 0
      %10534 = vmatpush2.bf16.msra.mxu0 0
      %10535 = vmatprep.subr.bf16.mxu0 0
      %10536 = vmatpush2.bf16.msra.mxu0 0
      %10537 = vmatprep.mubr.bf16.mxu0 0
      %10538 = vmatmul.mubr.bf16.gmra.mxu0 %v10455
      %v10539 = vpop.f32.mrf.mxu0
      %v10540 = vadd.f32 0.0, %v10539
      %v10541 = vpop.f32.mrf.mxu0
      %v10542 = vpop.f32.mrf.mxu0
      %v10543 = vadd.f32 0.0, %v10542
      %v10544 = vpop.f32.mrf.mxu0
      %10545 = vmatprep.mubr.bf16.mxu0 0
      %10546 = vmatmul.mubr.bf16.gmra.mxu0 %v10458
      %v10547 = vpop.f32.mrf.mxu0
      %v10548 = vadd.f32 0.0, %v10547
      %v10549 = vpop.f32.mrf.mxu0
      %v10550 = vpop.f32.mrf.mxu0
      %v10551 = vadd.f32 0.0, %v10550
      %v10552 = vpop.f32.mrf.mxu0
      %10553 = vmatprep.mubr.bf16.mxu0 0
      %10554 = vmatmul.mubr.bf16.gmra.mxu0 %v10461
      %v10555 = vpop.f32.mrf.mxu0
      %v10556 = vadd.f32 0.0, %v10555
      %v10557 = vpop.f32.mrf.mxu0
      %v10558 = vpop.f32.mrf.mxu0
      %v10559 = vadd.f32 0.0, %v10558
      %v10560 = vpop.f32.mrf.mxu0
      %10561 = vmatprep.mubr.bf16.mxu0 0
      %10562 = vmatmul.mubr.bf16.gmra.mxu0 %v10464
      %v10563 = vpop.f32.mrf.mxu0
      %v10564 = vadd.f32 0.0, %v10563
      %v10565 = vpop.f32.mrf.mxu0
      %v10566 = vpop.f32.mrf.mxu0
      %v10567 = vadd.f32 0.0, %v10566
      %v10568 = vpop.f32.mrf.mxu0
      %10569 = vmatprep.mubr.bf16.mxu0 0
      %10570 = vmatmul.mubr.bf16.gmra.mxu0 %v10467
      %v10571 = vpop.f32.mrf.mxu0
      %v10572 = vadd.f32 0.0, %v10571
      %v10573 = vpop.f32.mrf.mxu0
      %v10574 = vpop.f32.mrf.mxu0
      %v10575 = vadd.f32 0.0, %v10574
      %v10576 = vpop.f32.mrf.mxu0
      %10577 = vmatprep.mubr.bf16.mxu0 0
      %10578 = vmatmul.mubr.bf16.gmra.mxu0 %v10470
      %v10579 = vpop.f32.mrf.mxu0
      %v10580 = vadd.f32 0.0, %v10579
      %v10581 = vpop.f32.mrf.mxu0
      %v10582 = vpop.f32.mrf.mxu0
      %v10583 = vadd.f32 0.0, %v10582
      %v10584 = vpop.f32.mrf.mxu0
      %10585 = vmatprep.mubr.bf16.mxu0 0
      %10586 = vmatmul.mubr.bf16.gmra.mxu0 %v10473
      %v10587 = vpop.f32.mrf.mxu0
      %v10588 = vadd.f32 0.0, %v10587
      %v10589 = vpop.f32.mrf.mxu0
      %v10590 = vpop.f32.mrf.mxu0
      %v10591 = vadd.f32 0.0, %v10590
      %v10592 = vpop.f32.mrf.mxu0
      %10593 = vmatprep.mubr.bf16.mxu0 0
      %10594 = vmatmul.mubr.bf16.gmra.mxu0 %v10476
      %v10595 = vpop.f32.mrf.mxu0
      %v10596 = vadd.f32 0.0, %v10595
      %v10597 = vpop.f32.mrf.mxu0
      %v10598 = vpop.f32.mrf.mxu0
      %v10599 = vadd.f32 0.0, %v10598
      %v10600 = vpop.f32.mrf.mxu0
      %10601 = vmatprep.mubr.bf16.mxu0 0
      %10602 = vmatmul.mubr.bf16.gmra.mxu0 %v10479
      %v10603 = vpop.f32.mrf.mxu0
      %v10604 = vadd.f32 0.0, %v10603
      %v10605 = vpop.f32.mrf.mxu0
      %v10606 = vpop.f32.mrf.mxu0
      %v10607 = vadd.f32 0.0, %v10606
      %v10608 = vpop.f32.mrf.mxu0
      %10609 = vmatprep.mubr.bf16.mxu0 0
      %10610 = vmatmul.mubr.bf16.gmra.mxu0 %v10482
      %v10611 = vpop.f32.mrf.mxu0
      %v10612 = vadd.f32 0.0, %v10611
      %v10613 = vpop.f32.mrf.mxu0
      %v10614 = vpop.f32.mrf.mxu0
      %v10615 = vadd.f32 0.0, %v10614
      %v10616 = vpop.f32.mrf.mxu0
      %10617 = vmatprep.mubr.bf16.mxu0 0
      %10618 = vmatmul.mubr.bf16.gmra.mxu0 %v10485
      %v10619 = vpop.f32.mrf.mxu0
      %v10620 = vadd.f32 0.0, %v10619
      %v10621 = vpop.f32.mrf.mxu0
      %v10622 = vpop.f32.mrf.mxu0
      %v10623 = vadd.f32 0.0, %v10622
      %v10624 = vpop.f32.mrf.mxu0
      %10625 = vmatprep.mubr.bf16.mxu0 0
      %10626 = vmatmul.mubr.bf16.gmra.mxu0 %v10488
      %v10627 = vpop.f32.mrf.mxu0
      %v10628 = vadd.f32 0.0, %v10627
      %v10629 = vpop.f32.mrf.mxu0
      %v10630 = vpop.f32.mrf.mxu0
      %v10631 = vadd.f32 0.0, %v10630
      %v10632 = vpop.f32.mrf.mxu0
      %10633 = vmatprep.mubr.bf16.mxu0 0
      %10634 = vmatmul.mubr.bf16.gmra.mxu0 %v10491
      %v10635 = vpop.f32.mrf.mxu0
      %v10636 = vadd.f32 0.0, %v10635
      %v10637 = vpop.f32.mrf.mxu0
      %v10638 = vpop.f32.mrf.mxu0
      %v10639 = vadd.f32 0.0, %v10638
      %v10640 = vpop.f32.mrf.mxu0
      %10641 = vmatprep.mubr.bf16.mxu0 0
      %10642 = vmatmul.mubr.bf16.gmra.mxu0 %v10494
      %v10643 = vpop.f32.mrf.mxu0
      %v10644 = vadd.f32 0.0, %v10643
      %v10645 = vpop.f32.mrf.mxu0
      %v10646 = vpop.f32.mrf.mxu0
      %v10647 = vadd.f32 0.0, %v10646
      %v10648 = vpop.f32.mrf.mxu0
      %10649 = vmatprep.mubr.bf16.mxu0 0
      %10650 = vmatmul.mubr.bf16.gmra.mxu0 %v10497
      %v10651 = vpop.f32.mrf.mxu0
      %v10652 = vadd.f32 0.0, %v10651
      %v10653 = vpop.f32.mrf.mxu0
      %v10654 = vpop.f32.mrf.mxu0
      %v10655 = vadd.f32 0.0, %v10654
      %v10656 = vpop.f32.mrf.mxu0
      %10657 = vmatprep.mubr.bf16.mxu0 0
      %10658 = vmatmul.mubr.bf16.gmra.mxu0 %v10500
      %v10659 = vpop.f32.mrf.mxu0
      %v10660 = vadd.f32 0.0, %v10659
      %v10661 = vpop.f32.mrf.mxu0
      %v10662 = vpop.f32.mrf.mxu0
      %v10663 = vadd.f32 0.0, %v10662
      %v10664 = vpop.f32.mrf.mxu0
      %10665 = vdwg.mxu0
      %v10666 = vadd.f32 %v10308, %v10540
      %v10667 = vadd.f32 %v10309, %v10543
      %v10668 = vadd.f32 %v10310, %v10548
      %v10669 = vadd.f32 %v10311, %v10551
      %v10670 = vadd.f32 %v10312, %v10556
      %v10671 = vadd.f32 %v10313, %v10559
      %v10672 = vadd.f32 %v10314, %v10564
      %v10673 = vadd.f32 %v10315, %v10567
      %v10674 = vadd.f32 %v10316, %v10572
      %v10675 = vadd.f32 %v10317, %v10575
      %v10676 = vadd.f32 %v10318, %v10580
      %v10677 = vadd.f32 %v10319, %v10583
      %v10678 = vadd.f32 %v10320, %v10588
      %v10679 = vadd.f32 %v10321, %v10591
      %v10680 = vadd.f32 %v10322, %v10596
      %v10681 = vadd.f32 %v10323, %v10599
      %v10682 = vadd.f32 %v10324, %v10604
      %v10683 = vadd.f32 %v10325, %v10607
      %v10684 = vadd.f32 %v10326, %v10612
      %v10685 = vadd.f32 %v10327, %v10615
      %v10686 = vadd.f32 %v10328, %v10620
      %v10687 = vadd.f32 %v10329, %v10623
      %v10688 = vadd.f32 %v10330, %v10628
      %v10689 = vadd.f32 %v10331, %v10631
      %v10690 = vadd.f32 %v10332, %v10636
      %v10691 = vadd.f32 %v10333, %v10639
      %v10692 = vadd.f32 %v10334, %v10644
      %v10693 = vadd.f32 %v10335, %v10647
      %v10694 = vadd.f32 %v10336, %v10652
      %v10695 = vadd.f32 %v10337, %v10655
      %v10696 = vadd.f32 %v10338, %v10660
      %v10697 = vadd.f32 %v10339, %v10663
      %v10698 = vld [vmem:[%s4532] sm:$0xf]
      %v10699 = vld [vmem:[%s4532 + $0x4] sm:$0xf]
      %v10700 = vld [vmem:[%s4532 + $0x8] sm:$0x1]
      %v10701 = vld [vmem:[%s4532 + $0xc] sm:$0xf]
      %v10702 = vld [vmem:[%s4532 + $0x10] sm:$0xf]
      %v10703 = vld [vmem:[%s4532 + $0x14] sm:$0x1]
      %v10704 = vld [vmem:[%s4532 + $0x18] sm:$0xf]
      %v10705 = vld [vmem:[%s4532 + $0x1c] sm:$0xf]
      %v10706 = vld [vmem:[%s4532 + $0x20] sm:$0x1]
      %v10707 = vld [vmem:[%s4532 + $0x24] sm:$0xf]
      %v10708 = vld [vmem:[%s4532 + $0x28] sm:$0xf]
      %v10709 = vld [vmem:[%s4532 + $0x2c] sm:$0x1]
      %v10710 = vld [vmem:[%s4532 + $0x30] sm:$0xf]
      %v10711 = vld [vmem:[%s4532 + $0x34] sm:$0xf]
      %v10712 = vld [vmem:[%s4532 + $0x38] sm:$0x1]
      %v10713 = vld [vmem:[%s4532 + $0x3c] sm:$0xf]
      %v10714 = vld [vmem:[%s4532 + $0x40] sm:$0xf]
      %v10715 = vld [vmem:[%s4532 + $0x44] sm:$0x1]
      %v10716 = vld [vmem:[%s4532 + $0x48] sm:$0xf]
      %v10717 = vld [vmem:[%s4532 + $0x4c] sm:$0xf]
      %v10718 = vld [vmem:[%s4532 + $0x50] sm:$0x1]
      %v10719 = vld [vmem:[%s4532 + $0x54] sm:$0xf]
      %v10720 = vld [vmem:[%s4532 + $0x58] sm:$0xf]
      %v10721 = vld [vmem:[%s4532 + $0x5c] sm:$0x1]
      %v10722 = vld [vmem:[%s4532 + $0x60] sm:$0xf]
      %v10723 = vld [vmem:[%s4532 + $0x64] sm:$0xf]
      %v10724 = vld [vmem:[%s4532 + $0x68] sm:$0x1]
      %v10725 = vld [vmem:[%s4532 + $0x6c] sm:$0xf]
      %v10726 = vld [vmem:[%s4532 + $0x70] sm:$0xf]
      %v10727 = vld [vmem:[%s4532 + $0x74] sm:$0x1]
      %v10728 = vld [vmem:[%s4532 + $0x78] sm:$0xf]
      %v10729 = vld [vmem:[%s4532 + $0x7c] sm:$0xf]
      %v10730 = vld [vmem:[%s4532 + $0x80] sm:$0x1]
      %v10731 = vld [vmem:[%s4532 + $0x84] sm:$0xf]
      %v10732 = vld [vmem:[%s4532 + $0x88] sm:$0xf]
      %v10733 = vld [vmem:[%s4532 + $0x8c] sm:$0x1]
      %v10734 = vld [vmem:[%s4532 + $0x90] sm:$0xf]
      %v10735 = vld [vmem:[%s4532 + $0x94] sm:$0xf]
      %v10736 = vld [vmem:[%s4532 + $0x98] sm:$0x1]
      %v10737 = vld [vmem:[%s4532 + $0x9c] sm:$0xf]
      %v10738 = vld [vmem:[%s4532 + $0xa0] sm:$0xf]
      %v10739 = vld [vmem:[%s4532 + $0xa4] sm:$0x1]
      %v10740 = vld [vmem:[%s4532 + $0xa8] sm:$0xf]
      %v10741 = vld [vmem:[%s4532 + $0xac] sm:$0xf]
      %v10742 = vld [vmem:[%s4532 + $0xb0] sm:$0x1]
      %v10743 = vld [vmem:[%s4532 + $0xb4] sm:$0xf]
      %v10744 = vld [vmem:[%s4532 + $0xb8] sm:$0xf]
      %v10745 = vld [vmem:[%s4532 + $0xbc] sm:$0x1]
      %v10747 = vshrl.u32 %v10698, 16
      %v10749 = vrot.slane %v10747, 4
      %v10750 = vshll.u32 %v10698, 16
      %v10752 = vrot.slane %v10750, 5
      %v10753 = vor.u32 %v10749, %v10752
      %v10754 = vrot.slane %v10753, 4
      %v10756 = vshll.u32 %v10699, 16
      %v10758 = vrot.slane %v10756, 5
      %v10759 = vsel %vm1826, %v10754, %v10758
      %v10760 = vshrl.u32 %v10699, 16
      %v10762 = vrot.slane %v10760, 4
      %v10763 = vor.u32 %v10762, %v10758
      %v10764 = vrot.slane %v10763, 4
      %v10766 = vshll.u32 %v10700, 16
      %v10768 = vrot.slane %v10766, 5
      %v10769 = vsel %vm1826, %v10764, %v10768
      %v10771 = vshrl.u32 %v10701, 16
      %v10773 = vrot.slane %v10771, 4
      %v10774 = vshll.u32 %v10701, 16
      %v10776 = vrot.slane %v10774, 5
      %v10777 = vor.u32 %v10773, %v10776
      %v10778 = vrot.slane %v10777, 4
      %v10780 = vshll.u32 %v10702, 16
      %v10782 = vrot.slane %v10780, 5
      %v10783 = vsel %vm1826, %v10778, %v10782
      %v10784 = vshrl.u32 %v10702, 16
      %v10786 = vrot.slane %v10784, 4
      %v10787 = vor.u32 %v10786, %v10782
      %v10788 = vrot.slane %v10787, 4
      %v10790 = vshll.u32 %v10703, 16
      %v10792 = vrot.slane %v10790, 5
      %v10793 = vsel %vm1826, %v10788, %v10792
      %v10795 = vshrl.u32 %v10704, 16
      %v10797 = vrot.slane %v10795, 4
      %v10798 = vshll.u32 %v10704, 16
      %v10800 = vrot.slane %v10798, 5
      %v10801 = vor.u32 %v10797, %v10800
      %v10802 = vrot.slane %v10801, 4
      %v10804 = vshll.u32 %v10705, 16
      %v10806 = vrot.slane %v10804, 5
      %v10807 = vsel %vm1826, %v10802, %v10806
      %v10808 = vshrl.u32 %v10705, 16
      %v10810 = vrot.slane %v10808, 4
      %v10811 = vor.u32 %v10810, %v10806
      %v10812 = vrot.slane %v10811, 4
      %v10814 = vshll.u32 %v10706, 16
      %v10816 = vrot.slane %v10814, 5
      %v10817 = vsel %vm1826, %v10812, %v10816
      %v10819 = vshrl.u32 %v10707, 16
      %v10821 = vrot.slane %v10819, 4
      %v10822 = vshll.u32 %v10707, 16
      %v10824 = vrot.slane %v10822, 5
      %v10825 = vor.u32 %v10821, %v10824
      %v10826 = vrot.slane %v10825, 4
      %v10828 = vshll.u32 %v10708, 16
      %v10830 = vrot.slane %v10828, 5
      %v10831 = vsel %vm1826, %v10826, %v10830
      %v10832 = vshrl.u32 %v10708, 16
      %v10834 = vrot.slane %v10832, 4
      %v10835 = vor.u32 %v10834, %v10830
      %v10836 = vrot.slane %v10835, 4
      %v10838 = vshll.u32 %v10709, 16
      %v10840 = vrot.slane %v10838, 5
      %v10841 = vsel %vm1826, %v10836, %v10840
      %v10843 = vshrl.u32 %v10710, 16
      %v10845 = vrot.slane %v10843, 4
      %v10846 = vshll.u32 %v10710, 16
      %v10848 = vrot.slane %v10846, 5
      %v10849 = vor.u32 %v10845, %v10848
      %v10850 = vrot.slane %v10849, 4
      %v10852 = vshll.u32 %v10711, 16
      %v10854 = vrot.slane %v10852, 5
      %v10855 = vsel %vm1826, %v10850, %v10854
      %v10856 = vshrl.u32 %v10711, 16
      %v10858 = vrot.slane %v10856, 4
      %v10859 = vor.u32 %v10858, %v10854
      %v10860 = vrot.slane %v10859, 4
      %v10862 = vshll.u32 %v10712, 16
      %v10864 = vrot.slane %v10862, 5
      %v10865 = vsel %vm1826, %v10860, %v10864
      %v10867 = vshrl.u32 %v10713, 16
      %v10869 = vrot.slane %v10867, 4
      %v10870 = vshll.u32 %v10713, 16
      %v10872 = vrot.slane %v10870, 5
      %v10873 = vor.u32 %v10869, %v10872
      %v10874 = vrot.slane %v10873, 4
      %v10876 = vshll.u32 %v10714, 16
      %v10878 = vrot.slane %v10876, 5
      %v10879 = vsel %vm1826, %v10874, %v10878
      %v10880 = vshrl.u32 %v10714, 16
      %v10882 = vrot.slane %v10880, 4
      %v10883 = vor.u32 %v10882, %v10878
      %v10884 = vrot.slane %v10883, 4
      %v10886 = vshll.u32 %v10715, 16
      %v10888 = vrot.slane %v10886, 5
      %v10889 = vsel %vm1826, %v10884, %v10888
      %v10891 = vshrl.u32 %v10716, 16
      %v10893 = vrot.slane %v10891, 4
      %v10894 = vshll.u32 %v10716, 16
      %v10896 = vrot.slane %v10894, 5
      %v10897 = vor.u32 %v10893, %v10896
      %v10898 = vrot.slane %v10897, 4
      %v10900 = vshll.u32 %v10717, 16
      %v10902 = vrot.slane %v10900, 5
      %v10903 = vsel %vm1826, %v10898, %v10902
      %v10904 = vshrl.u32 %v10717, 16
      %v10906 = vrot.slane %v10904, 4
      %v10907 = vor.u32 %v10906, %v10902
      %v10908 = vrot.slane %v10907, 4
      %v10910 = vshll.u32 %v10718, 16
      %v10912 = vrot.slane %v10910, 5
      %v10913 = vsel %vm1826, %v10908, %v10912
      %v10915 = vshrl.u32 %v10719, 16
      %v10917 = vrot.slane %v10915, 4
      %v10918 = vshll.u32 %v10719, 16
      %v10920 = vrot.slane %v10918, 5
      %v10921 = vor.u32 %v10917, %v10920
      %v10922 = vrot.slane %v10921, 4
      %v10924 = vshll.u32 %v10720, 16
      %v10926 = vrot.slane %v10924, 5
      %v10927 = vsel %vm1826, %v10922, %v10926
      %v10928 = vshrl.u32 %v10720, 16
      %v10930 = vrot.slane %v10928, 4
      %v10931 = vor.u32 %v10930, %v10926
      %v10932 = vrot.slane %v10931, 4
      %v10934 = vshll.u32 %v10721, 16
      %v10936 = vrot.slane %v10934, 5
      %v10937 = vsel %vm1826, %v10932, %v10936
      %v10939 = vshrl.u32 %v10722, 16
      %v10941 = vrot.slane %v10939, 4
      %v10942 = vshll.u32 %v10722, 16
      %v10944 = vrot.slane %v10942, 5
      %v10945 = vor.u32 %v10941, %v10944
      %v10946 = vrot.slane %v10945, 4
      %v10948 = vshll.u32 %v10723, 16
      %v10950 = vrot.slane %v10948, 5
      %v10951 = vsel %vm1826, %v10946, %v10950
      %v10952 = vshrl.u32 %v10723, 16
      %v10954 = vrot.slane %v10952, 4
      %v10955 = vor.u32 %v10954, %v10950
      %v10956 = vrot.slane %v10955, 4
      %v10958 = vshll.u32 %v10724, 16
      %v10960 = vrot.slane %v10958, 5
      %v10961 = vsel %vm1826, %v10956, %v10960
      %v10963 = vshrl.u32 %v10725, 16
      %v10965 = vrot.slane %v10963, 4
      %v10966 = vshll.u32 %v10725, 16
      %v10968 = vrot.slane %v10966, 5
      %v10969 = vor.u32 %v10965, %v10968
      %v10970 = vrot.slane %v10969, 4
      %v10972 = vshll.u32 %v10726, 16
      %v10974 = vrot.slane %v10972, 5
      %v10975 = vsel %vm1826, %v10970, %v10974
      %v10976 = vshrl.u32 %v10726, 16
      %v10978 = vrot.slane %v10976, 4
      %v10979 = vor.u32 %v10978, %v10974
      %v10980 = vrot.slane %v10979, 4
      %v10982 = vshll.u32 %v10727, 16
      %v10984 = vrot.slane %v10982, 5
      %v10985 = vsel %vm1826, %v10980, %v10984
      %v10987 = vshrl.u32 %v10728, 16
      %v10989 = vrot.slane %v10987, 4
      %v10990 = vshll.u32 %v10728, 16
      %v10992 = vrot.slane %v10990, 5
      %v10993 = vor.u32 %v10989, %v10992
      %v10994 = vrot.slane %v10993, 4
      %v10996 = vshll.u32 %v10729, 16
      %v10998 = vrot.slane %v10996, 5
      %v10999 = vsel %vm1826, %v10994, %v10998
      %v11000 = vshrl.u32 %v10729, 16
      %v11002 = vrot.slane %v11000, 4
      %v11003 = vor.u32 %v11002, %v10998
      %v11004 = vrot.slane %v11003, 4
      %v11006 = vshll.u32 %v10730, 16
      %v11008 = vrot.slane %v11006, 5
      %v11009 = vsel %vm1826, %v11004, %v11008
      %v11011 = vshrl.u32 %v10731, 16
      %v11013 = vrot.slane %v11011, 4
      %v11014 = vshll.u32 %v10731, 16
      %v11016 = vrot.slane %v11014, 5
      %v11017 = vor.u32 %v11013, %v11016
      %v11018 = vrot.slane %v11017, 4
      %v11020 = vshll.u32 %v10732, 16
      %v11022 = vrot.slane %v11020, 5
      %v11023 = vsel %vm1826, %v11018, %v11022
      %v11024 = vshrl.u32 %v10732, 16
      %v11026 = vrot.slane %v11024, 4
      %v11027 = vor.u32 %v11026, %v11022
      %v11028 = vrot.slane %v11027, 4
      %v11030 = vshll.u32 %v10733, 16
      %v11032 = vrot.slane %v11030, 5
      %v11033 = vsel %vm1826, %v11028, %v11032
      %v11035 = vshrl.u32 %v10734, 16
      %v11037 = vrot.slane %v11035, 4
      %v11038 = vshll.u32 %v10734, 16
      %v11040 = vrot.slane %v11038, 5
      %v11041 = vor.u32 %v11037, %v11040
      %v11042 = vrot.slane %v11041, 4
      %v11044 = vshll.u32 %v10735, 16
      %v11046 = vrot.slane %v11044, 5
      %v11047 = vsel %vm1826, %v11042, %v11046
      %v11048 = vshrl.u32 %v10735, 16
      %v11050 = vrot.slane %v11048, 4
      %v11051 = vor.u32 %v11050, %v11046
      %v11052 = vrot.slane %v11051, 4
      %v11054 = vshll.u32 %v10736, 16
      %v11056 = vrot.slane %v11054, 5
      %v11057 = vsel %vm1826, %v11052, %v11056
      %v11059 = vshrl.u32 %v10737, 16
      %v11061 = vrot.slane %v11059, 4
      %v11062 = vshll.u32 %v10737, 16
      %v11064 = vrot.slane %v11062, 5
      %v11065 = vor.u32 %v11061, %v11064
      %v11066 = vrot.slane %v11065, 4
      %v11068 = vshll.u32 %v10738, 16
      %v11070 = vrot.slane %v11068, 5
      %v11071 = vsel %vm1826, %v11066, %v11070
      %v11072 = vshrl.u32 %v10738, 16
      %v11074 = vrot.slane %v11072, 4
      %v11075 = vor.u32 %v11074, %v11070
      %v11076 = vrot.slane %v11075, 4
      %v11078 = vshll.u32 %v10739, 16
      %v11080 = vrot.slane %v11078, 5
      %v11081 = vsel %vm1826, %v11076, %v11080
      %v11083 = vshrl.u32 %v10740, 16
      %v11085 = vrot.slane %v11083, 4
      %v11086 = vshll.u32 %v10740, 16
      %v11088 = vrot.slane %v11086, 5
      %v11089 = vor.u32 %v11085, %v11088
      %v11090 = vrot.slane %v11089, 4
      %v11092 = vshll.u32 %v10741, 16
      %v11094 = vrot.slane %v11092, 5
      %v11095 = vsel %vm1826, %v11090, %v11094
      %v11096 = vshrl.u32 %v10741, 16
      %v11098 = vrot.slane %v11096, 4
      %v11099 = vor.u32 %v11098, %v11094
      %v11100 = vrot.slane %v11099, 4
      %v11102 = vshll.u32 %v10742, 16
      %v11104 = vrot.slane %v11102, 5
      %v11105 = vsel %vm1826, %v11100, %v11104
      %v11107 = vshrl.u32 %v10743, 16
      %v11109 = vrot.slane %v11107, 4
      %v11110 = vshll.u32 %v10743, 16
      %v11112 = vrot.slane %v11110, 5
      %v11113 = vor.u32 %v11109, %v11112
      %v11114 = vrot.slane %v11113, 4
      %v11116 = vshll.u32 %v10744, 16
      %v11118 = vrot.slane %v11116, 5
      %v11119 = vsel %vm1826, %v11114, %v11118
      %v11120 = vshrl.u32 %v10744, 16
      %v11122 = vrot.slane %v11120, 4
      %v11123 = vor.u32 %v11122, %v11118
      %v11124 = vrot.slane %v11123, 4
      %v11126 = vshll.u32 %v10745, 16
      %v11128 = vrot.slane %v11126, 5
      %v11129 = vsel %vm1826, %v11124, %v11128
      %s11130 = scalar_lea.vmem %s9, 28
      %v11131 = vld [vmem:[%s11130] sm:$0xf]
      %v11132 = vunpack.c.l.b16 %v10759
      %v11133 = vunpack.c.l.b16 %v10769
      %v11134 = vunpack.c.l.b16 %v10783
      %v11135 = vunpack.c.l.b16 %v10793
      %v11136 = vunpack.c.l.b16 %v10807
      %v11137 = vunpack.c.l.b16 %v10817
      %v11138 = vunpack.c.l.b16 %v10831
      %v11139 = vunpack.c.l.b16 %v10841
      %v11140 = vunpack.c.l.b16 %v10855
      %v11141 = vunpack.c.l.b16 %v10865
      %v11142 = vunpack.c.l.b16 %v10879
      %v11143 = vunpack.c.l.b16 %v10889
      %v11144 = vunpack.c.l.b16 %v10903
      %v11145 = vunpack.c.l.b16 %v10913
      %v11146 = vunpack.c.l.b16 %v10927
      %v11147 = vunpack.c.l.b16 %v10937
      %v11148 = vunpack.c.l.b16 %v10951
      %v11149 = vunpack.c.l.b16 %v10961
      %v11150 = vunpack.c.l.b16 %v10975
      %v11151 = vunpack.c.l.b16 %v10985
      %v11152 = vunpack.c.l.b16 %v10999
      %v11153 = vunpack.c.l.b16 %v11009
      %v11154 = vunpack.c.l.b16 %v11023
      %v11155 = vunpack.c.l.b16 %v11033
      %v11156 = vunpack.c.l.b16 %v11047
      %v11157 = vunpack.c.l.b16 %v11057
      %v11158 = vunpack.c.l.b16 %v11071
      %v11159 = vunpack.c.l.b16 %v11081
      %v11160 = vunpack.c.l.b16 %v11095
      %v11161 = vunpack.c.l.b16 %v11105
      %v11162 = vunpack.c.l.b16 %v11119
      %v11163 = vunpack.c.l.b16 %v11129
      %v11164 = vpack.c.b16 %v11133, %v11132
      %v11165 = vpack.c.b16 %v11135, %v11134
      %v11166 = vpack.c.b16 %v11137, %v11136
      %v11167 = vpack.c.b16 %v11139, %v11138
      %v11168 = vpack.c.b16 %v11141, %v11140
      %v11169 = vpack.c.b16 %v11143, %v11142
      %v11170 = vpack.c.b16 %v11145, %v11144
      %v11171 = vpack.c.b16 %v11147, %v11146
      %v11172 = vpack.c.b16 %v11149, %v11148
      %v11173 = vpack.c.b16 %v11151, %v11150
      %v11174 = vpack.c.b16 %v11153, %v11152
      %v11175 = vpack.c.b16 %v11155, %v11154
      %v11176 = vpack.c.b16 %v11157, %v11156
      %v11177 = vpack.c.b16 %v11159, %v11158
      %v11178 = vpack.c.b16 %v11161, %v11160
      %v11179 = vpack.c.b16 %v11163, %v11162
      %v11181 = vsel %vm1524, %v11164, 0
      %v11184 = vsel %vm1524, %v11165, 0
      %v11187 = vsel %vm1524, %v11166, 0
      %v11190 = vsel %vm1524, %v11167, 0
      %v11193 = vsel %vm1524, %v11168, 0
      %v11196 = vsel %vm1524, %v11169, 0
      %v11199 = vsel %vm1524, %v11170, 0
      %v11202 = vsel %vm1524, %v11171, 0
      %v11205 = vsel %vm1524, %v11172, 0
      %v11208 = vsel %vm1524, %v11173, 0
      %v11211 = vsel %vm1524, %v11174, 0
      %v11214 = vsel %vm1524, %v11175, 0
      %v11217 = vsel %vm1524, %v11176, 0
      %v11220 = vsel %vm1524, %v11177, 0
      %v11223 = vsel %vm1524, %v11178, 0
      %v11226 = vsel %vm1524, %v11179, 0
      %v11229 = vsel %vm1573, %v11131, 0
      %11231 = vmatprep.subr.bf16.mxu0 0
      %11232 = vmatpush1.bf16.msra.mxu0 0
      %11233 = vmatprep.subr.bf16.mxu0 0
      %11234 = vmatpush1.bf16.msra.mxu0 0
      %11235 = vmatprep.subr.bf16.mxu0 0
      %11236 = vmatpush1.bf16.msra.mxu0 0
      %11237 = vmatprep.subr.bf16.mxu0 0
      %11238 = vmatpush1.bf16.msra.mxu0 0
      %11239 = vmatprep.subr.bf16.mxu0 0
      %11240 = vmatpush1.bf16.msra.mxu0 0
      %11241 = vmatprep.subr.bf16.mxu0 0
      %11242 = vmatpush1.bf16.msra.mxu0 0
      %11243 = vmatprep.subr.bf16.mxu0 0
      %11244 = vmatpush1.bf16.msra.mxu0 0
      %11245 = vmatprep.subr.bf16.mxu0 0
      %11246 = vmatpush1.bf16.msra.mxu0 %v11229
      %11247 = vmatprep.subr.bf16.mxu0 0
      %11248 = vmatpush2.bf16.msra.mxu0 0
      %11249 = vmatprep.subr.bf16.mxu0 0
      %11250 = vmatpush2.bf16.msra.mxu0 0
      %11251 = vmatprep.subr.bf16.mxu0 0
      %11252 = vmatpush2.bf16.msra.mxu0 0
      %11253 = vmatprep.subr.bf16.mxu0 0
      %11254 = vmatpush2.bf16.msra.mxu0 0
      %11255 = vmatprep.subr.bf16.mxu0 0
      %11256 = vmatpush2.bf16.msra.mxu0 0
      %11257 = vmatprep.subr.bf16.mxu0 0
      %11258 = vmatpush2.bf16.msra.mxu0 0
      %11259 = vmatprep.subr.bf16.mxu0 0
      %11260 = vmatpush2.bf16.msra.mxu0 0
      %11261 = vmatprep.subr.bf16.mxu0 0
      %11262 = vmatpush2.bf16.msra.mxu0 0
      %11263 = vmatprep.mubr.bf16.mxu0 0
      %11264 = vmatmul.mubr.bf16.gmra.mxu0 %v11181
      %v11265 = vpop.f32.mrf.mxu0
      %v11266 = vadd.f32 0.0, %v11265
      %v11267 = vpop.f32.mrf.mxu0
      %v11268 = vpop.f32.mrf.mxu0
      %v11269 = vadd.f32 0.0, %v11268
      %v11270 = vpop.f32.mrf.mxu0
      %11271 = vmatprep.mubr.bf16.mxu0 0
      %11272 = vmatmul.mubr.bf16.gmra.mxu0 %v11184
      %v11273 = vpop.f32.mrf.mxu0
      %v11274 = vadd.f32 0.0, %v11273
      %v11275 = vpop.f32.mrf.mxu0
      %v11276 = vpop.f32.mrf.mxu0
      %v11277 = vadd.f32 0.0, %v11276
      %v11278 = vpop.f32.mrf.mxu0
      %11279 = vmatprep.mubr.bf16.mxu0 0
      %11280 = vmatmul.mubr.bf16.gmra.mxu0 %v11187
      %v11281 = vpop.f32.mrf.mxu0
      %v11282 = vadd.f32 0.0, %v11281
      %v11283 = vpop.f32.mrf.mxu0
      %v11284 = vpop.f32.mrf.mxu0
      %v11285 = vadd.f32 0.0, %v11284
      %v11286 = vpop.f32.mrf.mxu0
      %11287 = vmatprep.mubr.bf16.mxu0 0
      %11288 = vmatmul.mubr.bf16.gmra.mxu0 %v11190
      %v11289 = vpop.f32.mrf.mxu0
      %v11290 = vadd.f32 0.0, %v11289
      %v11291 = vpop.f32.mrf.mxu0
      %v11292 = vpop.f32.mrf.mxu0
      %v11293 = vadd.f32 0.0, %v11292
      %v11294 = vpop.f32.mrf.mxu0
      %11295 = vmatprep.mubr.bf16.mxu0 0
      %11296 = vmatmul.mubr.bf16.gmra.mxu0 %v11193
      %v11297 = vpop.f32.mrf.mxu0
      %v11298 = vadd.f32 0.0, %v11297
      %v11299 = vpop.f32.mrf.mxu0
      %v11300 = vpop.f32.mrf.mxu0
      %v11301 = vadd.f32 0.0, %v11300
      %v11302 = vpop.f32.mrf.mxu0
      %11303 = vmatprep.mubr.bf16.mxu0 0
      %11304 = vmatmul.mubr.bf16.gmra.mxu0 %v11196
      %v11305 = vpop.f32.mrf.mxu0
      %v11306 = vadd.f32 0.0, %v11305
      %v11307 = vpop.f32.mrf.mxu0
      %v11308 = vpop.f32.mrf.mxu0
      %v11309 = vadd.f32 0.0, %v11308
      %v11310 = vpop.f32.mrf.mxu0
      %11311 = vmatprep.mubr.bf16.mxu0 0
      %11312 = vmatmul.mubr.bf16.gmra.mxu0 %v11199
      %v11313 = vpop.f32.mrf.mxu0
      %v11314 = vadd.f32 0.0, %v11313
      %v11315 = vpop.f32.mrf.mxu0
      %v11316 = vpop.f32.mrf.mxu0
      %v11317 = vadd.f32 0.0, %v11316
      %v11318 = vpop.f32.mrf.mxu0
      %11319 = vmatprep.mubr.bf16.mxu0 0
      %11320 = vmatmul.mubr.bf16.gmra.mxu0 %v11202
      %v11321 = vpop.f32.mrf.mxu0
      %v11322 = vadd.f32 0.0, %v11321
      %v11323 = vpop.f32.mrf.mxu0
      %v11324 = vpop.f32.mrf.mxu0
      %v11325 = vadd.f32 0.0, %v11324
      %v11326 = vpop.f32.mrf.mxu0
      %11327 = vmatprep.mubr.bf16.mxu0 0
      %11328 = vmatmul.mubr.bf16.gmra.mxu0 %v11205
      %v11329 = vpop.f32.mrf.mxu0
      %v11330 = vadd.f32 0.0, %v11329
      %v11331 = vpop.f32.mrf.mxu0
      %v11332 = vpop.f32.mrf.mxu0
      %v11333 = vadd.f32 0.0, %v11332
      %v11334 = vpop.f32.mrf.mxu0
      %11335 = vmatprep.mubr.bf16.mxu0 0
      %11336 = vmatmul.mubr.bf16.gmra.mxu0 %v11208
      %v11337 = vpop.f32.mrf.mxu0
      %v11338 = vadd.f32 0.0, %v11337
      %v11339 = vpop.f32.mrf.mxu0
      %v11340 = vpop.f32.mrf.mxu0
      %v11341 = vadd.f32 0.0, %v11340
      %v11342 = vpop.f32.mrf.mxu0
      %11343 = vmatprep.mubr.bf16.mxu0 0
      %11344 = vmatmul.mubr.bf16.gmra.mxu0 %v11211
      %v11345 = vpop.f32.mrf.mxu0
      %v11346 = vadd.f32 0.0, %v11345
      %v11347 = vpop.f32.mrf.mxu0
      %v11348 = vpop.f32.mrf.mxu0
      %v11349 = vadd.f32 0.0, %v11348
      %v11350 = vpop.f32.mrf.mxu0
      %11351 = vmatprep.mubr.bf16.mxu0 0
      %11352 = vmatmul.mubr.bf16.gmra.mxu0 %v11214
      %v11353 = vpop.f32.mrf.mxu0
      %v11354 = vadd.f32 0.0, %v11353
      %v11355 = vpop.f32.mrf.mxu0
      %v11356 = vpop.f32.mrf.mxu0
      %v11357 = vadd.f32 0.0, %v11356
      %v11358 = vpop.f32.mrf.mxu0
      %11359 = vmatprep.mubr.bf16.mxu0 0
      %11360 = vmatmul.mubr.bf16.gmra.mxu0 %v11217
      %v11361 = vpop.f32.mrf.mxu0
      %v11362 = vadd.f32 0.0, %v11361
      %v11363 = vpop.f32.mrf.mxu0
      %v11364 = vpop.f32.mrf.mxu0
      %v11365 = vadd.f32 0.0, %v11364
      %v11366 = vpop.f32.mrf.mxu0
      %11367 = vmatprep.mubr.bf16.mxu0 0
      %11368 = vmatmul.mubr.bf16.gmra.mxu0 %v11220
      %v11369 = vpop.f32.mrf.mxu0
      %v11370 = vadd.f32 0.0, %v11369
      %v11371 = vpop.f32.mrf.mxu0
      %v11372 = vpop.f32.mrf.mxu0
      %v11373 = vadd.f32 0.0, %v11372
      %v11374 = vpop.f32.mrf.mxu0
      %11375 = vmatprep.mubr.bf16.mxu0 0
      %11376 = vmatmul.mubr.bf16.gmra.mxu0 %v11223
      %v11377 = vpop.f32.mrf.mxu0
      %v11378 = vadd.f32 0.0, %v11377
      %v11379 = vpop.f32.mrf.mxu0
      %v11380 = vpop.f32.mrf.mxu0
      %v11381 = vadd.f32 0.0, %v11380
      %v11382 = vpop.f32.mrf.mxu0
      %11383 = vmatprep.mubr.bf16.mxu0 0
      %11384 = vmatmul.mubr.bf16.gmra.mxu0 %v11226
      %v11385 = vpop.f32.mrf.mxu0
      %v11386 = vadd.f32 0.0, %v11385
      %v11387 = vpop.f32.mrf.mxu0
      %v11388 = vpop.f32.mrf.mxu0
      %v11389 = vadd.f32 0.0, %v11388
      %v11390 = vpop.f32.mrf.mxu0
      %11391 = vdwg.mxu0
      %v11392 = vadd.f32 %v10666, %v11266
      %v11393 = vadd.f32 %v10667, %v11269
      %v11394 = vadd.f32 %v10668, %v11274
      %v11395 = vadd.f32 %v10669, %v11277
      %v11396 = vadd.f32 %v10670, %v11282
      %v11397 = vadd.f32 %v10671, %v11285
      %v11398 = vadd.f32 %v10672, %v11290
      %v11399 = vadd.f32 %v10673, %v11293
      %v11400 = vadd.f32 %v10674, %v11298
      %v11401 = vadd.f32 %v10675, %v11301
      %v11402 = vadd.f32 %v10676, %v11306
      %v11403 = vadd.f32 %v10677, %v11309
      %v11404 = vadd.f32 %v10678, %v11314
      %v11405 = vadd.f32 %v10679, %v11317
      %v11406 = vadd.f32 %v10680, %v11322
      %v11407 = vadd.f32 %v10681, %v11325
      %v11408 = vadd.f32 %v10682, %v11330
      %v11409 = vadd.f32 %v10683, %v11333
      %v11410 = vadd.f32 %v10684, %v11338
      %v11411 = vadd.f32 %v10685, %v11341
      %v11412 = vadd.f32 %v10686, %v11346
      %v11413 = vadd.f32 %v10687, %v11349
      %v11414 = vadd.f32 %v10688, %v11354
      %v11415 = vadd.f32 %v10689, %v11357
      %v11416 = vadd.f32 %v10690, %v11362
      %v11417 = vadd.f32 %v10691, %v11365
      %v11418 = vadd.f32 %v10692, %v11370
      %v11419 = vadd.f32 %v10693, %v11373
      %v11420 = vadd.f32 %v10694, %v11378
      %v11421 = vadd.f32 %v10695, %v11381
      %v11422 = vadd.f32 %v10696, %v11386
      %v11423 = vadd.f32 %v10697, %v11389
      %v11424 = vld [vmem:[%s4532] sm:$0xe]
      %v11425 = vld [vmem:[%s4532 + $0xc] sm:$0xe]
      %v11426 = vld [vmem:[%s4532 + $0x18] sm:$0xe]
      %v11427 = vld [vmem:[%s4532 + $0x24] sm:$0xe]
      %v11428 = vld [vmem:[%s4532 + $0x30] sm:$0xe]
      %v11429 = vld [vmem:[%s4532 + $0x3c] sm:$0xe]
      %v11430 = vld [vmem:[%s4532 + $0x48] sm:$0xe]
      %v11431 = vld [vmem:[%s4532 + $0x54] sm:$0xe]
      %v11432 = vld [vmem:[%s4532 + $0x60] sm:$0xe]
      %v11433 = vld [vmem:[%s4532 + $0x6c] sm:$0xe]
      %v11434 = vld [vmem:[%s4532 + $0x78] sm:$0xe]
      %v11435 = vld [vmem:[%s4532 + $0x84] sm:$0xe]
      %v11436 = vld [vmem:[%s4532 + $0x90] sm:$0xe]
      %v11437 = vld [vmem:[%s4532 + $0x9c] sm:$0xe]
      %v11438 = vld [vmem:[%s4532 + $0xa8] sm:$0xe]
      %v11439 = vld [vmem:[%s4532 + $0xb4] sm:$0xe]
      %v11488 = vrot.slane %v11424, 5
      %v11489 = vrot.slane %v11488, 4
      %v11490 = vrot.slane %v10699, 5
      %v11491 = vsel %vm2571, %v11489, %v11490
      %v11492 = vrot.slane %v11490, 4
      %v11493 = vrot.slane %v10700, 5
      %v11494 = vsel %vm2571, %v11492, %v11493
      %v11495 = vrot.slane %v11425, 5
      %v11496 = vrot.slane %v11495, 4
      %v11497 = vrot.slane %v10702, 5
      %v11498 = vsel %vm2571, %v11496, %v11497
      %v11499 = vrot.slane %v11497, 4
      %v11500 = vrot.slane %v10703, 5
      %v11501 = vsel %vm2571, %v11499, %v11500
      %v11502 = vrot.slane %v11426, 5
      %v11503 = vrot.slane %v11502, 4
      %v11504 = vrot.slane %v10705, 5
      %v11505 = vsel %vm2571, %v11503, %v11504
      %v11506 = vrot.slane %v11504, 4
      %v11507 = vrot.slane %v10706, 5
      %v11508 = vsel %vm2571, %v11506, %v11507
      %v11509 = vrot.slane %v11427, 5
      %v11510 = vrot.slane %v11509, 4
      %v11511 = vrot.slane %v10708, 5
      %v11512 = vsel %vm2571, %v11510, %v11511
      %v11513 = vrot.slane %v11511, 4
      %v11514 = vrot.slane %v10709, 5
      %v11515 = vsel %vm2571, %v11513, %v11514
      %v11516 = vrot.slane %v11428, 5
      %v11517 = vrot.slane %v11516, 4
      %v11518 = vrot.slane %v10711, 5
      %v11519 = vsel %vm2571, %v11517, %v11518
      %v11520 = vrot.slane %v11518, 4
      %v11521 = vrot.slane %v10712, 5
      %v11522 = vsel %vm2571, %v11520, %v11521
      %v11523 = vrot.slane %v11429, 5
      %v11524 = vrot.slane %v11523, 4
      %v11525 = vrot.slane %v10714, 5
      %v11526 = vsel %vm2571, %v11524, %v11525
      %v11527 = vrot.slane %v11525, 4
      %v11528 = vrot.slane %v10715, 5
      %v11529 = vsel %vm2571, %v11527, %v11528
      %v11530 = vrot.slane %v11430, 5
      %v11531 = vrot.slane %v11530, 4
      %v11532 = vrot.slane %v10717, 5
      %v11533 = vsel %vm2571, %v11531, %v11532
      %v11534 = vrot.slane %v11532, 4
      %v11535 = vrot.slane %v10718, 5
      %v11536 = vsel %vm2571, %v11534, %v11535
      %v11537 = vrot.slane %v11431, 5
      %v11538 = vrot.slane %v11537, 4
      %v11539 = vrot.slane %v10720, 5
      %v11540 = vsel %vm2571, %v11538, %v11539
      %v11541 = vrot.slane %v11539, 4
      %v11542 = vrot.slane %v10721, 5
      %v11543 = vsel %vm2571, %v11541, %v11542
      %v11544 = vrot.slane %v11432, 5
      %v11545 = vrot.slane %v11544, 4
      %v11546 = vrot.slane %v10723, 5
      %v11547 = vsel %vm2571, %v11545, %v11546
      %v11548 = vrot.slane %v11546, 4
      %v11549 = vrot.slane %v10724, 5
      %v11550 = vsel %vm2571, %v11548, %v11549
      %v11551 = vrot.slane %v11433, 5
      %v11552 = vrot.slane %v11551, 4
      %v11553 = vrot.slane %v10726, 5
      %v11554 = vsel %vm2571, %v11552, %v11553
      %v11555 = vrot.slane %v11553, 4
      %v11556 = vrot.slane %v10727, 5
      %v11557 = vsel %vm2571, %v11555, %v11556
      %v11558 = vrot.slane %v11434, 5
      %v11559 = vrot.slane %v11558, 4
      %v11560 = vrot.slane %v10729, 5
      %v11561 = vsel %vm2571, %v11559, %v11560
      %v11562 = vrot.slane %v11560, 4
      %v11563 = vrot.slane %v10730, 5
      %v11564 = vsel %vm2571, %v11562, %v11563
      %v11565 = vrot.slane %v11435, 5
      %v11566 = vrot.slane %v11565, 4
      %v11567 = vrot.slane %v10732, 5
      %v11568 = vsel %vm2571, %v11566, %v11567
      %v11569 = vrot.slane %v11567, 4
      %v11570 = vrot.slane %v10733, 5
      %v11571 = vsel %vm2571, %v11569, %v11570
      %v11572 = vrot.slane %v11436, 5
      %v11573 = vrot.slane %v11572, 4
      %v11574 = vrot.slane %v10735, 5
      %v11575 = vsel %vm2571, %v11573, %v11574
      %v11576 = vrot.slane %v11574, 4
      %v11577 = vrot.slane %v10736, 5
      %v11578 = vsel %vm2571, %v11576, %v11577
      %v11579 = vrot.slane %v11437, 5
      %v11580 = vrot.slane %v11579, 4
      %v11581 = vrot.slane %v10738, 5
      %v11582 = vsel %vm2571, %v11580, %v11581
      %v11583 = vrot.slane %v11581, 4
      %v11584 = vrot.slane %v10739, 5
      %v11585 = vsel %vm2571, %v11583, %v11584
      %v11586 = vrot.slane %v11438, 5
      %v11587 = vrot.slane %v11586, 4
      %v11588 = vrot.slane %v10741, 5
      %v11589 = vsel %vm2571, %v11587, %v11588
      %v11590 = vrot.slane %v11588, 4
      %v11591 = vrot.slane %v10742, 5
      %v11592 = vsel %vm2571, %v11590, %v11591
      %v11593 = vrot.slane %v11439, 5
      %v11594 = vrot.slane %v11593, 4
      %v11595 = vrot.slane %v10744, 5
      %v11596 = vsel %vm2571, %v11594, %v11595
      %v11597 = vrot.slane %v11595, 4
      %v11598 = vrot.slane %v10745, 5
      %v11599 = vsel %vm2571, %v11597, %v11598
      %s11600 = scalar_lea.vmem %s9, 32
      %v11601 = vld [vmem:[%s11600] sm:$0xf]
      %v11602 = vunpack.c.l.b16 %v11491
      %v11603 = vunpack.c.l.b16 %v11494
      %v11604 = vunpack.c.l.b16 %v11498
      %v11605 = vunpack.c.l.b16 %v11501
      %v11606 = vunpack.c.l.b16 %v11505
      %v11607 = vunpack.c.l.b16 %v11508
      %v11608 = vunpack.c.l.b16 %v11512
      %v11609 = vunpack.c.l.b16 %v11515
      %v11610 = vunpack.c.l.b16 %v11519
      %v11611 = vunpack.c.l.b16 %v11522
      %v11612 = vunpack.c.l.b16 %v11526
      %v11613 = vunpack.c.l.b16 %v11529
      %v11614 = vunpack.c.l.b16 %v11533
      %v11615 = vunpack.c.l.b16 %v11536
      %v11616 = vunpack.c.l.b16 %v11540
      %v11617 = vunpack.c.l.b16 %v11543
      %v11618 = vunpack.c.l.b16 %v11547
      %v11619 = vunpack.c.l.b16 %v11550
      %v11620 = vunpack.c.l.b16 %v11554
      %v11621 = vunpack.c.l.b16 %v11557
      %v11622 = vunpack.c.l.b16 %v11561
      %v11623 = vunpack.c.l.b16 %v11564
      %v11624 = vunpack.c.l.b16 %v11568
      %v11625 = vunpack.c.l.b16 %v11571
      %v11626 = vunpack.c.l.b16 %v11575
      %v11627 = vunpack.c.l.b16 %v11578
      %v11628 = vunpack.c.l.b16 %v11582
      %v11629 = vunpack.c.l.b16 %v11585
      %v11630 = vunpack.c.l.b16 %v11589
      %v11631 = vunpack.c.l.b16 %v11592
      %v11632 = vunpack.c.l.b16 %v11596
      %v11633 = vunpack.c.l.b16 %v11599
      %v11634 = vpack.c.b16 %v11603, %v11602
      %v11635 = vpack.c.b16 %v11605, %v11604
      %v11636 = vpack.c.b16 %v11607, %v11606
      %v11637 = vpack.c.b16 %v11609, %v11608
      %v11638 = vpack.c.b16 %v11611, %v11610
      %v11639 = vpack.c.b16 %v11613, %v11612
      %v11640 = vpack.c.b16 %v11615, %v11614
      %v11641 = vpack.c.b16 %v11617, %v11616
      %v11642 = vpack.c.b16 %v11619, %v11618
      %v11643 = vpack.c.b16 %v11621, %v11620
      %v11644 = vpack.c.b16 %v11623, %v11622
      %v11645 = vpack.c.b16 %v11625, %v11624
      %v11646 = vpack.c.b16 %v11627, %v11626
      %v11647 = vpack.c.b16 %v11629, %v11628
      %v11648 = vpack.c.b16 %v11631, %v11630
      %v11649 = vpack.c.b16 %v11633, %v11632
      %v11651 = vsel %vm1524, %v11634, 0
      %v11654 = vsel %vm1524, %v11635, 0
      %v11657 = vsel %vm1524, %v11636, 0
      %v11660 = vsel %vm1524, %v11637, 0
      %v11663 = vsel %vm1524, %v11638, 0
      %v11666 = vsel %vm1524, %v11639, 0
      %v11669 = vsel %vm1524, %v11640, 0
      %v11672 = vsel %vm1524, %v11641, 0
      %v11675 = vsel %vm1524, %v11642, 0
      %v11678 = vsel %vm1524, %v11643, 0
      %v11681 = vsel %vm1524, %v11644, 0
      %v11684 = vsel %vm1524, %v11645, 0
      %v11687 = vsel %vm1524, %v11646, 0
      %v11690 = vsel %vm1524, %v11647, 0
      %v11693 = vsel %vm1524, %v11648, 0
      %v11696 = vsel %vm1524, %v11649, 0
      %v11699 = vsel %vm1573, %v11601, 0
      %11701 = vmatprep.subr.bf16.mxu0 0
      %11702 = vmatpush1.bf16.msra.mxu0 0
      %11703 = vmatprep.subr.bf16.mxu0 0
      %11704 = vmatpush1.bf16.msra.mxu0 0
      %11705 = vmatprep.subr.bf16.mxu0 0
      %11706 = vmatpush1.bf16.msra.mxu0 0
      %11707 = vmatprep.subr.bf16.mxu0 0
      %11708 = vmatpush1.bf16.msra.mxu0 0
      %11709 = vmatprep.subr.bf16.mxu0 0
      %11710 = vmatpush1.bf16.msra.mxu0 0
      %11711 = vmatprep.subr.bf16.mxu0 0
      %11712 = vmatpush1.bf16.msra.mxu0 0
      %11713 = vmatprep.subr.bf16.mxu0 0
      %11714 = vmatpush1.bf16.msra.mxu0 0
      %11715 = vmatprep.subr.bf16.mxu0 0
      %11716 = vmatpush1.bf16.msra.mxu0 %v11699
      %11717 = vmatprep.subr.bf16.mxu0 0
      %11718 = vmatpush2.bf16.msra.mxu0 0
      %11719 = vmatprep.subr.bf16.mxu0 0
      %11720 = vmatpush2.bf16.msra.mxu0 0
      %11721 = vmatprep.subr.bf16.mxu0 0
      %11722 = vmatpush2.bf16.msra.mxu0 0
      %11723 = vmatprep.subr.bf16.mxu0 0
      %11724 = vmatpush2.bf16.msra.mxu0 0
      %11725 = vmatprep.subr.bf16.mxu0 0
      %11726 = vmatpush2.bf16.msra.mxu0 0
      %11727 = vmatprep.subr.bf16.mxu0 0
      %11728 = vmatpush2.bf16.msra.mxu0 0
      %11729 = vmatprep.subr.bf16.mxu0 0
      %11730 = vmatpush2.bf16.msra.mxu0 0
      %11731 = vmatprep.subr.bf16.mxu0 0
      %11732 = vmatpush2.bf16.msra.mxu0 0
      %11733 = vmatprep.mubr.bf16.mxu0 0
      %11734 = vmatmul.mubr.bf16.gmra.mxu0 %v11651
      %v11735 = vpop.f32.mrf.mxu0
      %v11736 = vadd.f32 0.0, %v11735
      %v11737 = vpop.f32.mrf.mxu0
      %v11738 = vpop.f32.mrf.mxu0
      %v11739 = vadd.f32 0.0, %v11738
      %v11740 = vpop.f32.mrf.mxu0
      %11741 = vmatprep.mubr.bf16.mxu0 0
      %11742 = vmatmul.mubr.bf16.gmra.mxu0 %v11654
      %v11743 = vpop.f32.mrf.mxu0
      %v11744 = vadd.f32 0.0, %v11743
      %v11745 = vpop.f32.mrf.mxu0
      %v11746 = vpop.f32.mrf.mxu0
      %v11747 = vadd.f32 0.0, %v11746
      %v11748 = vpop.f32.mrf.mxu0
      %11749 = vmatprep.mubr.bf16.mxu0 0
      %11750 = vmatmul.mubr.bf16.gmra.mxu0 %v11657
      %v11751 = vpop.f32.mrf.mxu0
      %v11752 = vadd.f32 0.0, %v11751
      %v11753 = vpop.f32.mrf.mxu0
      %v11754 = vpop.f32.mrf.mxu0
      %v11755 = vadd.f32 0.0, %v11754
      %v11756 = vpop.f32.mrf.mxu0
      %11757 = vmatprep.mubr.bf16.mxu0 0
      %11758 = vmatmul.mubr.bf16.gmra.mxu0 %v11660
      %v11759 = vpop.f32.mrf.mxu0
      %v11760 = vadd.f32 0.0, %v11759
      %v11761 = vpop.f32.mrf.mxu0
      %v11762 = vpop.f32.mrf.mxu0
      %v11763 = vadd.f32 0.0, %v11762
      %v11764 = vpop.f32.mrf.mxu0
      %11765 = vmatprep.mubr.bf16.mxu0 0
      %11766 = vmatmul.mubr.bf16.gmra.mxu0 %v11663
      %v11767 = vpop.f32.mrf.mxu0
      %v11768 = vadd.f32 0.0, %v11767
      %v11769 = vpop.f32.mrf.mxu0
      %v11770 = vpop.f32.mrf.mxu0
      %v11771 = vadd.f32 0.0, %v11770
      %v11772 = vpop.f32.mrf.mxu0
      %11773 = vmatprep.mubr.bf16.mxu0 0
      %11774 = vmatmul.mubr.bf16.gmra.mxu0 %v11666
      %v11775 = vpop.f32.mrf.mxu0
      %v11776 = vadd.f32 0.0, %v11775
      %v11777 = vpop.f32.mrf.mxu0
      %v11778 = vpop.f32.mrf.mxu0
      %v11779 = vadd.f32 0.0, %v11778
      %v11780 = vpop.f32.mrf.mxu0
      %11781 = vmatprep.mubr.bf16.mxu0 0
      %11782 = vmatmul.mubr.bf16.gmra.mxu0 %v11669
      %v11783 = vpop.f32.mrf.mxu0
      %v11784 = vadd.f32 0.0, %v11783
      %v11785 = vpop.f32.mrf.mxu0
      %v11786 = vpop.f32.mrf.mxu0
      %v11787 = vadd.f32 0.0, %v11786
      %v11788 = vpop.f32.mrf.mxu0
      %11789 = vmatprep.mubr.bf16.mxu0 0
      %11790 = vmatmul.mubr.bf16.gmra.mxu0 %v11672
      %v11791 = vpop.f32.mrf.mxu0
      %v11792 = vadd.f32 0.0, %v11791
      %v11793 = vpop.f32.mrf.mxu0
      %v11794 = vpop.f32.mrf.mxu0
      %v11795 = vadd.f32 0.0, %v11794
      %v11796 = vpop.f32.mrf.mxu0
      %11797 = vmatprep.mubr.bf16.mxu0 0
      %11798 = vmatmul.mubr.bf16.gmra.mxu0 %v11675
      %v11799 = vpop.f32.mrf.mxu0
      %v11800 = vadd.f32 0.0, %v11799
      %v11801 = vpop.f32.mrf.mxu0
      %v11802 = vpop.f32.mrf.mxu0
      %v11803 = vadd.f32 0.0, %v11802
      %v11804 = vpop.f32.mrf.mxu0
      %11805 = vmatprep.mubr.bf16.mxu0 0
      %11806 = vmatmul.mubr.bf16.gmra.mxu0 %v11678
      %v11807 = vpop.f32.mrf.mxu0
      %v11808 = vadd.f32 0.0, %v11807
      %v11809 = vpop.f32.mrf.mxu0
      %v11810 = vpop.f32.mrf.mxu0
      %v11811 = vadd.f32 0.0, %v11810
      %v11812 = vpop.f32.mrf.mxu0
      %11813 = vmatprep.mubr.bf16.mxu0 0
      %11814 = vmatmul.mubr.bf16.gmra.mxu0 %v11681
      %v11815 = vpop.f32.mrf.mxu0
      %v11816 = vadd.f32 0.0, %v11815
      %v11817 = vpop.f32.mrf.mxu0
      %v11818 = vpop.f32.mrf.mxu0
      %v11819 = vadd.f32 0.0, %v11818
      %v11820 = vpop.f32.mrf.mxu0
      %11821 = vmatprep.mubr.bf16.mxu0 0
      %11822 = vmatmul.mubr.bf16.gmra.mxu0 %v11684
      %v11823 = vpop.f32.mrf.mxu0
      %v11824 = vadd.f32 0.0, %v11823
      %v11825 = vpop.f32.mrf.mxu0
      %v11826 = vpop.f32.mrf.mxu0
      %v11827 = vadd.f32 0.0, %v11826
      %v11828 = vpop.f32.mrf.mxu0
      %11829 = vmatprep.mubr.bf16.mxu0 0
      %11830 = vmatmul.mubr.bf16.gmra.mxu0 %v11687
      %v11831 = vpop.f32.mrf.mxu0
      %v11832 = vadd.f32 0.0, %v11831
      %v11833 = vpop.f32.mrf.mxu0
      %v11834 = vpop.f32.mrf.mxu0
      %v11835 = vadd.f32 0.0, %v11834
      %v11836 = vpop.f32.mrf.mxu0
      %11837 = vmatprep.mubr.bf16.mxu0 0
      %11838 = vmatmul.mubr.bf16.gmra.mxu0 %v11690
      %v11839 = vpop.f32.mrf.mxu0
      %v11840 = vadd.f32 0.0, %v11839
      %v11841 = vpop.f32.mrf.mxu0
      %v11842 = vpop.f32.mrf.mxu0
      %v11843 = vadd.f32 0.0, %v11842
      %v11844 = vpop.f32.mrf.mxu0
      %11845 = vmatprep.mubr.bf16.mxu0 0
      %11846 = vmatmul.mubr.bf16.gmra.mxu0 %v11693
      %v11847 = vpop.f32.mrf.mxu0
      %v11848 = vadd.f32 0.0, %v11847
      %v11849 = vpop.f32.mrf.mxu0
      %v11850 = vpop.f32.mrf.mxu0
      %v11851 = vadd.f32 0.0, %v11850
      %v11852 = vpop.f32.mrf.mxu0
      %11853 = vmatprep.mubr.bf16.mxu0 0
      %11854 = vmatmul.mubr.bf16.gmra.mxu0 %v11696
      %v11855 = vpop.f32.mrf.mxu0
      %v11856 = vadd.f32 0.0, %v11855
      %v11857 = vpop.f32.mrf.mxu0
      %v11858 = vpop.f32.mrf.mxu0
      %v11859 = vadd.f32 0.0, %v11858
      %v11860 = vpop.f32.mrf.mxu0
      %11861 = vdwg.mxu0
      %v11862 = vadd.f32 %v11392, %v11736
      %v11863 = vadd.f32 %v11393, %v11739
      %v11864 = vadd.f32 %v11394, %v11744
      %v11865 = vadd.f32 %v11395, %v11747
      %v11866 = vadd.f32 %v11396, %v11752
      %v11867 = vadd.f32 %v11397, %v11755
      %v11868 = vadd.f32 %v11398, %v11760
      %v11869 = vadd.f32 %v11399, %v11763
      %v11870 = vadd.f32 %v11400, %v11768
      %v11871 = vadd.f32 %v11401, %v11771
      %v11872 = vadd.f32 %v11402, %v11776
      %v11873 = vadd.f32 %v11403, %v11779
      %v11874 = vadd.f32 %v11404, %v11784
      %v11875 = vadd.f32 %v11405, %v11787
      %v11876 = vadd.f32 %v11406, %v11792
      %v11877 = vadd.f32 %v11407, %v11795
      %v11878 = vadd.f32 %v11408, %v11800
      %v11879 = vadd.f32 %v11409, %v11803
      %v11880 = vadd.f32 %v11410, %v11808
      %v11881 = vadd.f32 %v11411, %v11811
      %v11882 = vadd.f32 %v11412, %v11816
      %v11883 = vadd.f32 %v11413, %v11819
      %v11884 = vadd.f32 %v11414, %v11824
      %v11885 = vadd.f32 %v11415, %v11827
      %v11886 = vadd.f32 %v11416, %v11832
      %v11887 = vadd.f32 %v11417, %v11835
      %v11888 = vadd.f32 %v11418, %v11840
      %v11889 = vadd.f32 %v11419, %v11843
      %v11890 = vadd.f32 %v11420, %v11848
      %v11891 = vadd.f32 %v11421, %v11851
      %v11892 = vadd.f32 %v11422, %v11856
      %v11893 = vadd.f32 %v11423, %v11859
      %v11894 = vmax.f32 %v11862, 0.0
      %v11895 = vmax.f32 %v11863, 0.0
      %v11896 = vmax.f32 %v11864, 0.0
      %v11897 = vmax.f32 %v11865, 0.0
      %v11898 = vmax.f32 %v11866, 0.0
      %v11899 = vmax.f32 %v11867, 0.0
      %v11900 = vmax.f32 %v11868, 0.0
      %v11901 = vmax.f32 %v11869, 0.0
      %v11902 = vmax.f32 %v11870, 0.0
      %v11903 = vmax.f32 %v11871, 0.0
      %v11904 = vmax.f32 %v11872, 0.0
      %v11905 = vmax.f32 %v11873, 0.0
      %v11906 = vmax.f32 %v11874, 0.0
      %v11907 = vmax.f32 %v11875, 0.0
      %v11908 = vmax.f32 %v11876, 0.0
      %v11909 = vmax.f32 %v11877, 0.0
      %v11910 = vmax.f32 %v11878, 0.0
      %v11911 = vmax.f32 %v11879, 0.0
      %v11912 = vmax.f32 %v11880, 0.0
      %v11913 = vmax.f32 %v11881, 0.0
      %v11914 = vmax.f32 %v11882, 0.0
      %v11915 = vmax.f32 %v11883, 0.0
      %v11916 = vmax.f32 %v11884, 0.0
      %v11917 = vmax.f32 %v11885, 0.0
      %v11918 = vmax.f32 %v11886, 0.0
      %v11919 = vmax.f32 %v11887, 0.0
      %v11920 = vmax.f32 %v11888, 0.0
      %v11921 = vmax.f32 %v11889, 0.0
      %v11922 = vmax.f32 %v11890, 0.0
      %v11923 = vmax.f32 %v11891, 0.0
      %v11924 = vmax.f32 %v11892, 0.0
      %v11925 = vmax.f32 %v11893, 0.0
      %v11926 = vld [vmem:[%s11] sm:$0xf]
      %v11927 = vld [vmem:[%s12] sm:$0x1]
      %v11928 = vpack.c.bf16 %v11895, %v11894
      %v11929 = vpack.c.bf16 %v11897, %v11896
      %v11930 = vpack.c.bf16 %v11899, %v11898
      %v11931 = vpack.c.bf16 %v11901, %v11900
      %v11932 = vpack.c.bf16 %v11903, %v11902
      %v11933 = vpack.c.bf16 %v11905, %v11904
      %v11934 = vpack.c.bf16 %v11907, %v11906
      %v11935 = vpack.c.bf16 %v11909, %v11908
      %v11936 = vpack.c.bf16 %v11911, %v11910
      %v11937 = vpack.c.bf16 %v11913, %v11912
      %v11938 = vpack.c.bf16 %v11915, %v11914
      %v11939 = vpack.c.bf16 %v11917, %v11916
      %v11940 = vpack.c.bf16 %v11919, %v11918
      %v11941 = vpack.c.bf16 %v11921, %v11920
      %v11942 = vpack.c.bf16 %v11923, %v11922
      %v11943 = vpack.c.bf16 %v11925, %v11924
      %v11945 = vlaneseq
      %v11946 = vshrl.u32 %v11945, 7
      %v11947 = vsub.s32 0, %v11946
      %v11948 = vrot.slane %v11927, %v11947
      %v11951 = vsel %vm1524, %v11928, 0
      %v11954 = vsel %vm1524, %v11929, 0
      %v11957 = vsel %vm1524, %v11930, 0
      %v11960 = vsel %vm1524, %v11931, 0
      %v11963 = vsel %vm1524, %v11932, 0
      %v11966 = vsel %vm1524, %v11933, 0
      %v11969 = vsel %vm1524, %v11934, 0
      %v11972 = vsel %vm1524, %v11935, 0
      %v11975 = vsel %vm1524, %v11936, 0
      %v11978 = vsel %vm1524, %v11937, 0
      %v11981 = vsel %vm1524, %v11938, 0
      %v11984 = vsel %vm1524, %v11939, 0
      %v11987 = vsel %vm1524, %v11940, 0
      %v11990 = vsel %vm1524, %v11941, 0
      %v11993 = vsel %vm1524, %v11942, 0
      %v11996 = vsel %vm1524, %v11943, 0
      %v11999 = vsel %vm1573, %v11926, 0
      %12001 = vmatprep.subr.bf16.mxu0 0
      %12002 = vmatpush1.bf16.msra.mxu0 0
      %12003 = vmatprep.subr.bf16.mxu0 0
      %12004 = vmatpush1.bf16.msra.mxu0 0
      %12005 = vmatprep.subr.bf16.mxu0 0
      %12006 = vmatpush1.bf16.msra.mxu0 0
      %12007 = vmatprep.subr.bf16.mxu0 0
      %12008 = vmatpush1.bf16.msra.mxu0 0
      %12009 = vmatprep.subr.bf16.mxu0 0
      %12010 = vmatpush1.bf16.msra.mxu0 0
      %12011 = vmatprep.subr.bf16.mxu0 0
      %12012 = vmatpush1.bf16.msra.mxu0 0
      %12013 = vmatprep.subr.bf16.mxu0 0
      %12014 = vmatpush1.bf16.msra.mxu0 0
      %12015 = vmatprep.subr.bf16.mxu0 0
      %12016 = vmatpush1.bf16.msra.mxu0 %v11999
      %12017 = vmatprep.subr.bf16.mxu0 0
      %12018 = vmatpush2.bf16.msra.mxu0 0
      %12019 = vmatprep.subr.bf16.mxu0 0
      %12020 = vmatpush2.bf16.msra.mxu0 0
      %12021 = vmatprep.subr.bf16.mxu0 0
      %12022 = vmatpush2.bf16.msra.mxu0 0
      %12023 = vmatprep.subr.bf16.mxu0 0
      %12024 = vmatpush2.bf16.msra.mxu0 0
      %12025 = vmatprep.subr.bf16.mxu0 0
      %12026 = vmatpush2.bf16.msra.mxu0 0
      %12027 = vmatprep.subr.bf16.mxu0 0
      %12028 = vmatpush2.bf16.msra.mxu0 0
      %12029 = vmatprep.subr.bf16.mxu0 0
      %12030 = vmatpush2.bf16.msra.mxu0 0
      %12031 = vmatprep.subr.bf16.mxu0 0
      %12032 = vmatpush2.bf16.msra.mxu0 0
      %12033 = vmatprep.mubr.bf16.mxu0 0
      %12034 = vmatmul.mubr.bf16.gmra.mxu0 %v11951
      %v12035 = vpop.f32.mrf.mxu0
      %v12036 = vadd.f32 %v11948, %v12035
      %v12037 = vpop.f32.mrf.mxu0
      %v12038 = vpop.f32.mrf.mxu0
      %v12039 = vadd.f32 %v11948, %v12038
      %v12040 = vpop.f32.mrf.mxu0
      %12041 = vmatprep.mubr.bf16.mxu0 0
      %12042 = vmatmul.mubr.bf16.gmra.mxu0 %v11954
      %v12043 = vpop.f32.mrf.mxu0
      %v12044 = vadd.f32 %v11948, %v12043
      %v12045 = vpop.f32.mrf.mxu0
      %v12046 = vpop.f32.mrf.mxu0
      %v12047 = vadd.f32 %v11948, %v12046
      %v12048 = vpop.f32.mrf.mxu0
      %12049 = vmatprep.mubr.bf16.mxu0 0
      %12050 = vmatmul.mubr.bf16.gmra.mxu0 %v11957
      %v12051 = vpop.f32.mrf.mxu0
      %v12052 = vadd.f32 %v11948, %v12051
      %v12053 = vpop.f32.mrf.mxu0
      %v12054 = vpop.f32.mrf.mxu0
      %v12055 = vadd.f32 %v11948, %v12054
      %v12056 = vpop.f32.mrf.mxu0
      %12057 = vmatprep.mubr.bf16.mxu0 0
      %12058 = vmatmul.mubr.bf16.gmra.mxu0 %v11960
      %v12059 = vpop.f32.mrf.mxu0
      %v12060 = vadd.f32 %v11948, %v12059
      %v12061 = vpop.f32.mrf.mxu0
      %v12062 = vpop.f32.mrf.mxu0
      %v12063 = vadd.f32 %v11948, %v12062
      %v12064 = vpop.f32.mrf.mxu0
      %12065 = vmatprep.mubr.bf16.mxu0 0
      %12066 = vmatmul.mubr.bf16.gmra.mxu0 %v11963
      %v12067 = vpop.f32.mrf.mxu0
      %v12068 = vadd.f32 %v11948, %v12067
      %v12069 = vpop.f32.mrf.mxu0
      %v12070 = vpop.f32.mrf.mxu0
      %v12071 = vadd.f32 %v11948, %v12070
      %v12072 = vpop.f32.mrf.mxu0
      %12073 = vmatprep.mubr.bf16.mxu0 0
      %12074 = vmatmul.mubr.bf16.gmra.mxu0 %v11966
      %v12075 = vpop.f32.mrf.mxu0
      %v12076 = vadd.f32 %v11948, %v12075
      %v12077 = vpop.f32.mrf.mxu0
      %v12078 = vpop.f32.mrf.mxu0
      %v12079 = vadd.f32 %v11948, %v12078
      %v12080 = vpop.f32.mrf.mxu0
      %12081 = vmatprep.mubr.bf16.mxu0 0
      %12082 = vmatmul.mubr.bf16.gmra.mxu0 %v11969
      %v12083 = vpop.f32.mrf.mxu0
      %v12084 = vadd.f32 %v11948, %v12083
      %v12085 = vpop.f32.mrf.mxu0
      %v12086 = vpop.f32.mrf.mxu0
      %v12087 = vadd.f32 %v11948, %v12086
      %v12088 = vpop.f32.mrf.mxu0
      %12089 = vmatprep.mubr.bf16.mxu0 0
      %12090 = vmatmul.mubr.bf16.gmra.mxu0 %v11972
      %v12091 = vpop.f32.mrf.mxu0
      %v12092 = vadd.f32 %v11948, %v12091
      %v12093 = vpop.f32.mrf.mxu0
      %v12094 = vpop.f32.mrf.mxu0
      %v12095 = vadd.f32 %v11948, %v12094
      %v12096 = vpop.f32.mrf.mxu0
      %12097 = vmatprep.mubr.bf16.mxu0 0
      %12098 = vmatmul.mubr.bf16.gmra.mxu0 %v11975
      %v12099 = vpop.f32.mrf.mxu0
      %v12100 = vadd.f32 %v11948, %v12099
      %v12101 = vpop.f32.mrf.mxu0
      %v12102 = vpop.f32.mrf.mxu0
      %v12103 = vadd.f32 %v11948, %v12102
      %v12104 = vpop.f32.mrf.mxu0
      %12105 = vmatprep.mubr.bf16.mxu0 0
      %12106 = vmatmul.mubr.bf16.gmra.mxu0 %v11978
      %v12107 = vpop.f32.mrf.mxu0
      %v12108 = vadd.f32 %v11948, %v12107
      %v12109 = vpop.f32.mrf.mxu0
      %v12110 = vpop.f32.mrf.mxu0
      %v12111 = vadd.f32 %v11948, %v12110
      %v12112 = vpop.f32.mrf.mxu0
      %12113 = vmatprep.mubr.bf16.mxu0 0
      %12114 = vmatmul.mubr.bf16.gmra.mxu0 %v11981
      %v12115 = vpop.f32.mrf.mxu0
      %v12116 = vadd.f32 %v11948, %v12115
      %v12117 = vpop.f32.mrf.mxu0
      %v12118 = vpop.f32.mrf.mxu0
      %v12119 = vadd.f32 %v11948, %v12118
      %v12120 = vpop.f32.mrf.mxu0
      %12121 = vmatprep.mubr.bf16.mxu0 0
      %12122 = vmatmul.mubr.bf16.gmra.mxu0 %v11984
      %v12123 = vpop.f32.mrf.mxu0
      %v12124 = vadd.f32 %v11948, %v12123
      %v12125 = vpop.f32.mrf.mxu0
      %v12126 = vpop.f32.mrf.mxu0
      %v12127 = vadd.f32 %v11948, %v12126
      %v12128 = vpop.f32.mrf.mxu0
      %12129 = vmatprep.mubr.bf16.mxu0 0
      %12130 = vmatmul.mubr.bf16.gmra.mxu0 %v11987
      %v12131 = vpop.f32.mrf.mxu0
      %v12132 = vadd.f32 %v11948, %v12131
      %v12133 = vpop.f32.mrf.mxu0
      %v12134 = vpop.f32.mrf.mxu0
      %v12135 = vadd.f32 %v11948, %v12134
      %v12136 = vpop.f32.mrf.mxu0
      %12137 = vmatprep.mubr.bf16.mxu0 0
      %12138 = vmatmul.mubr.bf16.gmra.mxu0 %v11990
      %v12139 = vpop.f32.mrf.mxu0
      %v12140 = vadd.f32 %v11948, %v12139
      %v12141 = vpop.f32.mrf.mxu0
      %v12142 = vpop.f32.mrf.mxu0
      %v12143 = vadd.f32 %v11948, %v12142
      %v12144 = vpop.f32.mrf.mxu0
      %12145 = vmatprep.mubr.bf16.mxu0 0
      %12146 = vmatmul.mubr.bf16.gmra.mxu0 %v11993
      %v12147 = vpop.f32.mrf.mxu0
      %v12148 = vadd.f32 %v11948, %v12147
      %v12149 = vpop.f32.mrf.mxu0
      %v12150 = vpop.f32.mrf.mxu0
      %v12151 = vadd.f32 %v11948, %v12150
      %v12152 = vpop.f32.mrf.mxu0
      %12153 = vmatprep.mubr.bf16.mxu0 0
      %12154 = vmatmul.mubr.bf16.gmra.mxu0 %v11996
      %v12155 = vpop.f32.mrf.mxu0
      %v12156 = vadd.f32 %v11948, %v12155
      %v12157 = vpop.f32.mrf.mxu0
      %v12158 = vpop.f32.mrf.mxu0
      %v12159 = vadd.f32 %v11948, %v12158
      %v12160 = vpop.f32.mrf.mxu0
      %12161 = vdwg.mxu0
      %v12162 = vadd.f32 %v12036, %v6387
      %v12163 = vadd.f32 %v12039, %v6388
      %v12164 = vadd.f32 %v12044, %v6389
      %v12165 = vadd.f32 %v12047, %v6390
      %v12166 = vadd.f32 %v12052, %v6391
      %v12167 = vadd.f32 %v12055, %v6392
      %v12168 = vadd.f32 %v12060, %v6393
      %v12169 = vadd.f32 %v12063, %v6394
      %v12170 = vadd.f32 %v12068, %v6395
      %v12171 = vadd.f32 %v12071, %v6396
      %v12172 = vadd.f32 %v12076, %v6397
      %v12173 = vadd.f32 %v12079, %v6398
      %v12174 = vadd.f32 %v12084, %v6399
      %v12175 = vadd.f32 %v12087, %v6400
      %v12176 = vadd.f32 %v12092, %v6401
      %v12177 = vadd.f32 %v12095, %v6402
      %v12178 = vadd.f32 %v12100, %v6403
      %v12179 = vadd.f32 %v12103, %v6404
      %v12180 = vadd.f32 %v12108, %v6405
      %v12181 = vadd.f32 %v12111, %v6406
      %v12182 = vadd.f32 %v12116, %v6407
      %v12183 = vadd.f32 %v12119, %v6408
      %v12184 = vadd.f32 %v12124, %v6409
      %v12185 = vadd.f32 %v12127, %v6410
      %v12186 = vadd.f32 %v12132, %v6411
      %v12187 = vadd.f32 %v12135, %v6412
      %v12188 = vadd.f32 %v12140, %v6413
      %v12189 = vadd.f32 %v12143, %v6414
      %v12190 = vadd.f32 %v12148, %v6415
      %v12191 = vadd.f32 %v12151, %v6416
      %v12192 = vadd.f32 %v12156, %v6417
      %v12193 = vadd.f32 %v12159, %v6418
      %v12194 = vmax.f32 %v12162, 0.0
      %v12195 = vmax.f32 %v12163, 0.0
      %v12196 = vmax.f32 %v12164, 0.0
      %v12197 = vmax.f32 %v12165, 0.0
      %v12198 = vmax.f32 %v12166, 0.0
      %v12199 = vmax.f32 %v12167, 0.0
      %v12200 = vmax.f32 %v12168, 0.0
      %v12201 = vmax.f32 %v12169, 0.0
      %v12202 = vmax.f32 %v12170, 0.0
      %v12203 = vmax.f32 %v12171, 0.0
      %v12204 = vmax.f32 %v12172, 0.0
      %v12205 = vmax.f32 %v12173, 0.0
      %v12206 = vmax.f32 %v12174, 0.0
      %v12207 = vmax.f32 %v12175, 0.0
      %v12208 = vmax.f32 %v12176, 0.0
      %v12209 = vmax.f32 %v12177, 0.0
      %v12210 = vmax.f32 %v12178, 0.0
      %v12211 = vmax.f32 %v12179, 0.0
      %v12212 = vmax.f32 %v12180, 0.0
      %v12213 = vmax.f32 %v12181, 0.0
      %v12214 = vmax.f32 %v12182, 0.0
      %v12215 = vmax.f32 %v12183, 0.0
      %v12216 = vmax.f32 %v12184, 0.0
      %v12217 = vmax.f32 %v12185, 0.0
      %v12218 = vmax.f32 %v12186, 0.0
      %v12219 = vmax.f32 %v12187, 0.0
      %v12220 = vmax.f32 %v12188, 0.0
      %v12221 = vmax.f32 %v12189, 0.0
      %v12222 = vmax.f32 %v12190, 0.0
      %v12223 = vmax.f32 %v12191, 0.0
      %v12224 = vmax.f32 %v12192, 0.0
      %v12225 = vmax.f32 %v12193, 0.0
      %12226 = vst.msk [vmem:[%s440] sm:$0xff] %vm635, %v12194
      %12227 = vst.msk [vmem:[%s440 + $0x8] sm:$0xff] %vm635, %v12195
      %12228 = vst.msk [vmem:[%s440 + $0x10] sm:$0xff] %vm635, %v12196
      %12229 = vst.msk [vmem:[%s440 + $0x18] sm:$0xff] %vm635, %v12197
      %12230 = vst.msk [vmem:[%s440 + $0x20] sm:$0xff] %vm635, %v12198
      %12231 = vst.msk [vmem:[%s440 + $0x28] sm:$0xff] %vm635, %v12199
      %12232 = vst.msk [vmem:[%s440 + $0x30] sm:$0xff] %vm635, %v12200
      %12233 = vst.msk [vmem:[%s440 + $0x38] sm:$0xff] %vm635, %v12201
      %12234 = vst.msk [vmem:[%s440 + $0x40] sm:$0xff] %vm635, %v12202
      %12235 = vst.msk [vmem:[%s440 + $0x48] sm:$0xff] %vm635, %v12203
      %12236 = vst.msk [vmem:[%s440 + $0x50] sm:$0xff] %vm635, %v12204
      %12237 = vst.msk [vmem:[%s440 + $0x58] sm:$0xff] %vm635, %v12205
      %12238 = vst.msk [vmem:[%s440 + $0x60] sm:$0xff] %vm635, %v12206
      %12239 = vst.msk [vmem:[%s440 + $0x68] sm:$0xff] %vm635, %v12207
      %12240 = vst.msk [vmem:[%s440 + $0x70] sm:$0xff] %vm635, %v12208
      %12241 = vst.msk [vmem:[%s440 + $0x78] sm:$0xff] %vm635, %v12209
      %12242 = vst.msk [vmem:[%s440 + $0x80] sm:$0xff] %vm635, %v12210
      %12243 = vst.msk [vmem:[%s440 + $0x88] sm:$0xff] %vm635, %v12211
      %12244 = vst.msk [vmem:[%s440 + $0x90] sm:$0xff] %vm635, %v12212
      %12245 = vst.msk [vmem:[%s440 + $0x98] sm:$0xff] %vm635, %v12213
      %12246 = vst.msk [vmem:[%s440 + $0xa0] sm:$0xff] %vm635, %v12214
      %12247 = vst.msk [vmem:[%s440 + $0xa8] sm:$0xff] %vm635, %v12215
      %12248 = vst.msk [vmem:[%s440 + $0xb0] sm:$0xff] %vm635, %v12216
      %12249 = vst.msk [vmem:[%s440 + $0xb8] sm:$0xff] %vm635, %v12217
      %12250 = vst.msk [vmem:[%s440 + $0xc0] sm:$0xff] %vm635, %v12218
      %12251 = vst.msk [vmem:[%s440 + $0xc8] sm:$0xff] %vm635, %v12219
      %12252 = vst.msk [vmem:[%s440 + $0xd0] sm:$0xff] %vm635, %v12220
      %12253 = vst.msk [vmem:[%s440 + $0xd8] sm:$0xff] %vm635, %v12221
      %12254 = vst.msk [vmem:[%s440 + $0xe0] sm:$0xff] %vm635, %v12222
      %12255 = vst.msk [vmem:[%s440 + $0xe8] sm:$0xff] %vm635, %v12223
      %12256 = vst.msk [vmem:[%s440 + $0xf0] sm:$0xff] %vm635, %v12224
      %12257 = vst.msk [vmem:[%s440 + $0xf8] sm:$0xff] %vm635, %v12225
      %p12258 = scmp.lt.s32.totalorder %s24, 1
      %s12259 = scalar_select %p12258, %s24, 1
      %s12260 = smul.addr %s12259, 32
      %s12261 = smul.addr %s12260, 8
      %s12262 = scalar_lea.vmem %s13, %s12261
      // Predicated region
      $region73: #{tpu_custom_call.1} parent=71 // pred_check
        %p12263 = pneg %p320
      $region74: #{tpu_custom_call.1} parent=71 // pred_check_branch
        %12265 = sbr.rel (%p12263) target = $region76
      $region75: #{tpu_custom_call.1} parent=71 // pred_region
        _
      $region76: #{tpu_custom_call.1} parent=71 // pred_fallthru
        _
    $region72: #{tpu_custom_call.1} parent=5 // pred_fallthru
      _
    %p12266 = scmp.le.s32.totalorder 2, %s19
    // Predicated region
    $region77: #{tpu_custom_call.1} parent=5 // pred_check
      %p12267 = pneg %p12266
    $region78: #{tpu_custom_call.1} parent=5 // pred_check_branch
      %12269 = sbr.rel (%p12267) target = $region80
    $region79: #{tpu_custom_call.1} parent=5 // pred_region
      %s12270 = ssub.s32 %s19, 2
      // Predicated region
      $region81: #{tpu_custom_call.1} parent=79 // pred_check
        %p12271 = pneg %p326
      $region82: #{tpu_custom_call.1} parent=79 // pred_check_branch
        %12273 = sbr.rel (%p12271) target = $region84
      $region83: #{tpu_custom_call.1} parent=79 // pred_region
        %p12274 = scmp.lt.s32.totalorder %s25, 1
        %s12275 = scalar_select %p12274, %s25, 1
        %s12276 = smul.addr %s12275, 32
        %s12277 = smul.addr %s12276, 8
        %s12278 = scalar_lea.vmem %s13, %s12277
      $region84: #{tpu_custom_call.1} parent=79 // pred_fallthru
        _
    $region80: #{tpu_custom_call.1} parent=5 // pred_fallthru
      _
  $region6: #{tpu_custom_call.1} parent=0 // loop_footer
    %s23 = sadd.s32 1, %s19
  $region7: #{tpu_custom_call.1} parent=0 // loop_footer_branch
    %18 = sbr.rel target = $region3
  $region8: #{tpu_custom_call.1} parent=0 // loop_exit
    _

</llo_original>
